<compile_context>
chip_gen: v7x
topology: tpu7x:2x2x1
jax: 0.10.0
libtpu: 0.0.40
codegen_flags: <defaults>
</compile_context>

<pallas_src>
import functools

import jax
import jax.numpy as jnp
from jax import lax
from jax.experimental import pallas as pl
from jax.experimental.pallas import tpu as pltpu

SELU_ALPHA = 1.6732632423543772848170429916717
SELU_SCALE = 1.0507009873554804934193349852946
H = 24   # GRU hidden size
G3 = 3 * H   # fused gate width (r|z|n) = 72


def _selu(x):
    return SELU_SCALE * jnp.where(x > 0, x, SELU_ALPHA * (jnp.exp(x) - 1.0))


def _vmem():
    return pl.BlockSpec(memory_space=pltpu.MemorySpace.VMEM)


# ----------------------------------------------------------------------------------
# Fused forward kernel: MLP -> BiGRU x3 -> FC(+1e-5) -> loss_giw
# ----------------------------------------------------------------------------------
def fused_forward_kernel(
        # data
        x_ref, tgt_ref, wcls_ref,
        # linear_stack (3 -> 36 -> 36 -> 8, SELU)
        w1_ref, b1_ref, w2_ref, b2_ref, w3_ref, b3_ref,
        # GRU layers: per layer  wih (2, Din, 72), whh (2, 24, 72),
        #                        gib (2, 1, 72) = b_ih + [b_hr, b_hz, 0],
        #                        bhn (2, 1, 24) = b_hn
        wih0_ref, whh0_ref, gib0_ref, bhn0_ref,
        wih1_ref, whh1_ref, gib1_ref, bhn1_ref,
        wih2_ref, whh2_ref, gib2_ref, bhn2_ref,
        # fc (48 -> 3)
        wfc_ref, bfc_ref,
        # outputs
        logits_ref, loss_ref, l1_ref, l2_ref,
        *, B, T):
    f32 = jnp.float32

    def mm(a, b):
        return jnp.dot(a, b, preferred_element_type=f32)

    # -------------------- linear_stack (all T*B rows in one shot) --------------------
    h = _selu(mm(x_ref[...], w1_ref[...]) + b1_ref[...])
    h = _selu(mm(h, w2_ref[...]) + b2_ref[...])
    seq0 = _selu(mm(h, w3_ref[...]) + b3_ref[...])          # (T*B, 8), time-major rows
    # self.dp (p=0.1) and GRU inter-layer dropout: identity at inference.

    # -------------------- one bidirectional GRU layer ---------------------------------
    def bigru_layer(x_in, wih, whh, gib, bhn):
        """x_in: (T*B, Din) time-major.  wih: (2, Din, 72), whh: (2, 24, 72),
        gib: (2, 1, 72) input+folded-hidden(r,z) bias, bhn: (2, 1, 24) hidden n bias."""
        # Hoisted, gate-fused input pre-activations (one matmul per direction),
        # with the time-invariant b_hr / b_hz already folded in.
        gi_f = mm(x_in, wih[0]) + gib[0]                    # (T*B, 72)
        gi_b = mm(x_in, wih[1]) + gib[1]                    # (T*B, 72)
        whh_f, whh_b = whh[0], whh[1]                       # (24, 72) each
        bhn_f, bhn_b = bhn[0], bhn[1]                       # (1, 24) each

        def cell(h_prev, gi_t, whh_d, bhn_d):
            gh = mm(h_prev, whh_d)                          # (B, 72): ONE MXU push
            r = jax.nn.sigmoid(gi_t[:, 0:H] + gh[:, 0:H])
            z = jax.nn.sigmoid(gi_t[:, H:2 * H] + gh[:, H:2 * H])
            n = jnp.tanh(gi_t[:, 2 * H:3 * H] + r * (gh[:, 2 * H:3 * H] + bhn_d))
            return (1.0 - z) * n + z * h_prev

        h_f = jnp.zeros((B, H), f32)
        h_b = jnp.zeros((B, H), f32)
        outs_f = [None] * T
        outs_b = [None] * T
        for s in range(T):                       # fully unrolled (T small & static)
            tb = T - 1 - s
            rf = slice(s * B, (s + 1) * B)
            rb = slice(tb * B, (tb + 1) * B)
            h_f = cell(h_f, gi_f[rf, :], whh_f, bhn_f)
            h_b = cell(h_b, gi_b[rb, :], whh_b, bhn_b)
            outs_f[s] = h_f
            outs_b[tb] = h_b
        # Assemble time-major sequences as values (no scratch refs, no masked stores).
        sf = jnp.concatenate(outs_f, axis=0)                # (T*B, 24)
        sb = jnp.concatenate(outs_b, axis=0)                # (T*B, 24)
        return jnp.concatenate([sf, sb], axis=1)            # (T*B, 48) [fwd | bwd]

    x48 = bigru_layer(seq0, wih0_ref[...], whh0_ref[...], gib0_ref[...], bhn0_ref[...])
    x48 = bigru_layer(x48, wih1_ref[...], whh1_ref[...], gib1_ref[...], bhn1_ref[...])
    x48 = bigru_layer(x48, wih2_ref[...], whh2_ref[...], gib2_ref[...], bhn2_ref[...])

    # -------------------- fc (48 -> 3) + 1e-5, logits stay in VMEM -------------------
    logits = mm(x48, wfc_ref[...]) + bfc_ref[...] + 1e-5     # (T*B, 3)
    logits_ref[...] = logits

    # -------------------- loss_giw ----------------------------------------------------
    # TODO(synk): exact loss_giw source not provided; implemented as weighted
    #             cross-entropy (ignore_index=-1, mean reduction) + generalized soft-dice.
    tgt = tgt_ref[...]                                       # (T*B, 1) int32
    wcls = wcls_ref[...]                                     # (1, 3)
    n_rows, n_cls = logits.shape

    cls_ids = lax.broadcasted_iota(jnp.int32, (n_rows, n_cls), 1)
    onehot = (cls_ids == tgt).astype(f32)
    valid = (tgt != -1).astype(f32)

    m = jnp.max(logits, axis=-1, keepdims=True)
    ex = jnp.exp(logits - m)
    denom = jnp.sum(ex, axis=-1, keepdims=True)
    logp = (logits - m) - jnp.log(denom)
    probs = ex / denom

    w_per = jnp.sum(onehot * wcls, axis=-1, keepdims=True) * valid
    nll = -jnp.sum(onehot * logp, axis=-1, keepdims=True)
    ce = jnp.sum(w_per * nll, keepdims=True) / jnp.maximum(
        jnp.sum(w_per, keepdims=True), 1e-12)                # (1, 1)

    inter = jnp.sum(probs * onehot * valid, axis=0, keepdims=True)
    card = (jnp.sum(probs * valid, axis=0, keepdims=True)
            + jnp.sum(onehot * valid, axis=0, keepdims=True))
    dice = (2.0 * inter + 1e-6) / (card + 1e-6)
    dice_loss = 1.0 - jnp.mean(dice, keepdims=True)          # (1, 1)

    l1_ref[...] = ce
    l2_ref[...] = dice_loss
    loss_ref[...] = ce + dice_loss


def fused_forward(xs, tgt, wcls, params, *, B, T):
    N = B * T
    p = params
    inputs = (xs, tgt, wcls,
              *p["mlp"], *p["gru0"], *p["gru1"], *p["gru2"], *p["fc"])
    out_shape = (
        jax.ShapeDtypeStruct((N, 3), jnp.float32),   # logits (time-major rows)
        jax.ShapeDtypeStruct((1, 1), jnp.float32),   # loss
        jax.ShapeDtypeStruct((1, 1), jnp.float32),   # loss1 (weighted CE)
        jax.ShapeDtypeStruct((1, 1), jnp.float32),   # loss2 (dice)
    )
    return pl.pallas_call(
        functools.partial(fused_forward_kernel, B=B, T=T),
        out_shape=out_shape,
        in_specs=[_vmem() for _ in inputs],
        out_specs=(_vmem(),) * 4,
    )(*inputs)


# ----------------------------------------------------------------------------------
# Parameters (gate-fused, per-direction layout used by the kernel)
# ----------------------------------------------------------------------------------
def init_params(key):
    def uni(k, shape, bound):
        return jax.random.uniform(k, shape, jnp.float32, minval=-bound, maxval=bound)

    keys = iter(jax.random.split(key, 32))

    # linear_stack: 3 -> 36 -> 36 -> 8
    mlp = []
    for din, dout in ((3, 36), (36, 36), (36, 8)):
        b = 1.0 / (din ** 0.5)
        mlp.append(uni(next(keys), (din, dout), b))
        mlp.append(uni(next(keys), (1, dout), b))

    bnd = 1.0 / (H ** 0.5)

    def gru_layer(din):
        # Per direction (index 0 = fwd, 1 = bwd); gate columns fused as [r | z | n].
        # Matrices are stored transposed vs torch: (Din, 3H) / (H, 3H).
        wih = uni(next(keys), (2, din, G3), bnd)
        whh = uni(next(keys), (2, H, G3), bnd)
        bih = uni(next(keys), (2, 1, G3), bnd)
        bhh = uni(next(keys), (2, 1, G3), bnd)
        # Fold the time-invariant b_hh_r / b_hh_z into the hoisted gate bias; b_hh_n
        # stays separate (it must remain inside the r*(W_hn h + b_hn) term).
        gib = bih + jnp.concatenate(
            [bhh[:, :, :2 * H], jnp.zeros((2, 1, H), jnp.float32)], axis=2)
        bhn = bhh[:, :, 2 * H:]
        return (wih, whh, gib, bhn)

    gru0 = gru_layer(8)          # layer 0 input dim 8
    gru1 = gru_layer(2 * H)      # deep layers consume [fwd | bwd] = 48 features
    gru2 = gru_layer(2 * H)

    bfc = 1.0 / (2 * H) ** 0.5
    fc = (uni(next(keys), (2 * H, 3), bfc),      # single (48, 3) fc weight
          uni(next(keys), (1, 3), bfc))

    return {"mlp": tuple(mlp), "gru0": gru0, "gru1": gru1, "gru2": gru2, "fc": fc}


# ----------------------------------------------------------------------------------
# Forward wrapper (tiny glue: channel slice, time-major re-layout, output transpose)
# ----------------------------------------------------------------------------------
def forward(params, x, target, weight):
    B, T, _ = x.shape
    # x[:, :, 6:] and time-major flatten so GRU step t reads contiguous rows t*B:(t+1)*B.
    xs = jnp.transpose(x[:, :, 6:], (1, 0, 2)).reshape(T * B, 3).astype(jnp.float32)
    tgt = jnp.transpose(target, (1, 0)).reshape(T * B, 1).astype(jnp.int32)
    wcls = weight.reshape(1, 3).astype(jnp.float32)

    logits, loss, l1, l2 = fused_forward(xs, tgt, wcls, params, B=B, T=T)
    x_out = jnp.transpose(logits.reshape(T, B, 3), (1, 0, 2))      # (B, T, 3)
    return x_out, loss[0, 0], l1[0, 0], l2[0, 0]


if __name__ == "__main__":
    key = jax.random.PRNGKey(0)
    kx, kt, kp = jax.random.split(key, 3)

    B, T, F = 2, 8, 9
    x = jax.random.normal(kx, (B, T, F), dtype=jnp.float32)
    target = jax.random.randint(kt, (B, T), -1, 3).astype(jnp.int32)   # -1 = ignore
    weight = jnp.array([1.0, 2.0, 0.5], dtype=jnp.float32)

    params = init_params(kp)
    out, loss, loss1, loss2 = jax.jit(forward)(params, x, target, weight)
    jax.block_until_ready((out, loss, loss1, loss2))
    print("KERNEL_OK")
</pallas_src>

<mosaic_0001>
module attributes {stable_mosaic.version = 11 : i64} {
  func.func @fused_forward_kernel(%arg0: memref<16x3xf32, #tpu.memory_space<vmem>>, %arg1: memref<16x1xi32, #tpu.memory_space<vmem>>, %arg2: memref<1x3xf32, #tpu.memory_space<vmem>>, %arg3: memref<3x36xf32, #tpu.memory_space<vmem>>, %arg4: memref<1x36xf32, #tpu.memory_space<vmem>>, %arg5: memref<36x36xf32, #tpu.memory_space<vmem>>, %arg6: memref<1x36xf32, #tpu.memory_space<vmem>>, %arg7: memref<36x8xf32, #tpu.memory_space<vmem>>, %arg8: memref<1x8xf32, #tpu.memory_space<vmem>>, %arg9: memref<2x8x72xf32, #tpu.memory_space<vmem>>, %arg10: memref<2x24x72xf32, #tpu.memory_space<vmem>>, %arg11: memref<2x1x72xf32, #tpu.memory_space<vmem>>, %arg12: memref<2x1x24xf32, #tpu.memory_space<vmem>>, %arg13: memref<2x48x72xf32, #tpu.memory_space<vmem>>, %arg14: memref<2x24x72xf32, #tpu.memory_space<vmem>>, %arg15: memref<2x1x72xf32, #tpu.memory_space<vmem>>, %arg16: memref<2x1x24xf32, #tpu.memory_space<vmem>>, %arg17: memref<2x48x72xf32, #tpu.memory_space<vmem>>, %arg18: memref<2x24x72xf32, #tpu.memory_space<vmem>>, %arg19: memref<2x1x72xf32, #tpu.memory_space<vmem>>, %arg20: memref<2x1x24xf32, #tpu.memory_space<vmem>>, %arg21: memref<48x3xf32, #tpu.memory_space<vmem>>, %arg22: memref<1x3xf32, #tpu.memory_space<vmem>>, %arg23: memref<16x3xf32, #tpu.memory_space<vmem>>, %arg24: memref<1x1xf32, #tpu.memory_space<vmem>>, %arg25: memref<1x1xf32, #tpu.memory_space<vmem>>, %arg26: memref<1x1xf32, #tpu.memory_space<vmem>>) attributes {dimension_semantics = [], scalar_prefetch = 0 : i64, scratch_operands = 0 : i64, tpu.core_type = #tpu.core_type<tc>} {
    %c0 = arith.constant 0 : index
    %c0_0 = arith.constant 0 : index
    %0 = vector.load %arg0[%c0, %c0_0] : memref<16x3xf32, #tpu.memory_space<vmem>>, vector<16x3xf32>
    %c0_1 = arith.constant 0 : index
    %c0_2 = arith.constant 0 : index
    %1 = vector.load %arg3[%c0_1, %c0_2] : memref<3x36xf32, #tpu.memory_space<vmem>>, vector<3x36xf32>
    %cst = arith.constant dense<0.000000e+00> : vector<16x36xf32>
    %2 = tpu.matmul %0, %1, %cst {dimension_numbers = #tpu.dot_dimension_numbers<[1], [0], [0], [1], [0, 0, 1, 1], [], []>} : vector<16x3xf32>, vector<3x36xf32>, vector<16x36xf32> -> vector<16x36xf32>
    %c0_3 = arith.constant 0 : index
    %c0_4 = arith.constant 0 : index
    %3 = vector.load %arg4[%c0_3, %c0_4] : memref<1x36xf32, #tpu.memory_space<vmem>>, vector<1x36xf32>
    %4 = vector.broadcast %3 : vector<1x36xf32> to vector<16x36xf32>
    %5 = arith.addf %2, %4 : vector<16x36xf32>
    %cst_5 = arith.constant 0.000000e+00 : f32
    %6 = vector.broadcast %cst_5 : f32 to vector<16x36xf32>
    %7 = arith.cmpf ogt, %5, %6 : vector<16x36xf32>
    %8 = math.exp %5 : vector<16x36xf32>
    %cst_6 = arith.constant 1.000000e+00 : f32
    %9 = vector.broadcast %cst_6 : f32 to vector<16x36xf32>
    %10 = arith.subf %8, %9 : vector<16x36xf32>
    %cst_7 = arith.constant 1.67326319 : f32
    %11 = vector.broadcast %cst_7 : f32 to vector<16x36xf32>
    %12 = arith.mulf %11, %10 : vector<16x36xf32>
    %13 = arith.select %7, %5, %12 : vector<16x36xi1>, vector<16x36xf32>
    %cst_8 = arith.constant 1.05070102 : f32
    %14 = vector.broadcast %cst_8 : f32 to vector<16x36xf32>
    %15 = arith.mulf %14, %13 : vector<16x36xf32>
    %c0_9 = arith.constant 0 : index
    %c0_10 = arith.constant 0 : index
    %16 = vector.load %arg5[%c0_9, %c0_10] : memref<36x36xf32, #tpu.memory_space<vmem>>, vector<36x36xf32>
    %cst_11 = arith.constant dense<0.000000e+00> : vector<16x36xf32>
    %17 = tpu.matmul %15, %16, %cst_11 {dimension_numbers = #tpu.dot_dimension_numbers<[1], [0], [0], [1], [0, 0, 1, 1], [], []>} : vector<16x36xf32>, vector<36x36xf32>, vector<16x36xf32> -> vector<16x36xf32>
    %c0_12 = arith.constant 0 : index
    %c0_13 = arith.constant 0 : index
    %18 = vector.load %arg6[%c0_12, %c0_13] : memref<1x36xf32, #tpu.memory_space<vmem>>, vector<1x36xf32>
    %19 = vector.broadcast %18 : vector<1x36xf32> to vector<16x36xf32>
    %20 = arith.addf %17, %19 : vector<16x36xf32>
    %cst_14 = arith.constant 0.000000e+00 : f32
    %21 = vector.broadcast %cst_14 : f32 to vector<16x36xf32>
    %22 = arith.cmpf ogt, %20, %21 : vector<16x36xf32>
    %23 = math.exp %20 : vector<16x36xf32>
    %cst_15 = arith.constant 1.000000e+00 : f32
    %24 = vector.broadcast %cst_15 : f32 to vector<16x36xf32>
    %25 = arith.subf %23, %24 : vector<16x36xf32>
    %cst_16 = arith.constant 1.67326319 : f32
    %26 = vector.broadcast %cst_16 : f32 to vector<16x36xf32>
    %27 = arith.mulf %26, %25 : vector<16x36xf32>
    %28 = arith.select %22, %20, %27 : vector<16x36xi1>, vector<16x36xf32>
    %cst_17 = arith.constant 1.05070102 : f32
    %29 = vector.broadcast %cst_17 : f32 to vector<16x36xf32>
    %30 = arith.mulf %29, %28 : vector<16x36xf32>
    %c0_18 = arith.constant 0 : index
    %c0_19 = arith.constant 0 : index
    %31 = vector.load %arg7[%c0_18, %c0_19] : memref<36x8xf32, #tpu.memory_space<vmem>>, vector<36x8xf32>
    %cst_20 = arith.constant dense<0.000000e+00> : vector<16x8xf32>
    %32 = tpu.matmul %30, %31, %cst_20 {dimension_numbers = #tpu.dot_dimension_numbers<[1], [0], [0], [1], [0, 0, 1, 1], [], []>} : vector<16x36xf32>, vector<36x8xf32>, vector<16x8xf32> -> vector<16x8xf32>
    %c0_21 = arith.constant 0 : index
    %c0_22 = arith.constant 0 : index
    %33 = vector.load %arg8[%c0_21, %c0_22] : memref<1x8xf32, #tpu.memory_space<vmem>>, vector<1x8xf32>
    %34 = vector.broadcast %33 : vector<1x8xf32> to vector<16x8xf32>
    %35 = arith.addf %32, %34 : vector<16x8xf32>
    %cst_23 = arith.constant 0.000000e+00 : f32
    %36 = vector.broadcast %cst_23 : f32 to vector<16x8xf32>
    %37 = arith.cmpf ogt, %35, %36 : vector<16x8xf32>
    %38 = math.exp %35 : vector<16x8xf32>
    %cst_24 = arith.constant 1.000000e+00 : f32
    %39 = vector.broadcast %cst_24 : f32 to vector<16x8xf32>
    %40 = arith.subf %38, %39 : vector<16x8xf32>
    %cst_25 = arith.constant 1.67326319 : f32
    %41 = vector.broadcast %cst_25 : f32 to vector<16x8xf32>
    %42 = arith.mulf %41, %40 : vector<16x8xf32>
    %43 = arith.select %37, %35, %42 : vector<16x8xi1>, vector<16x8xf32>
    %cst_26 = arith.constant 1.05070102 : f32
    %44 = vector.broadcast %cst_26 : f32 to vector<16x8xf32>
    %45 = arith.mulf %44, %43 : vector<16x8xf32>
    %c0_27 = arith.constant 0 : index
    %c0_28 = arith.constant 0 : index
    %c0_29 = arith.constant 0 : index
    %46 = vector.load %arg9[%c0_27, %c0_28, %c0_29] : memref<2x8x72xf32, #tpu.memory_space<vmem>>, vector<2x8x72xf32>
    %c0_30 = arith.constant 0 : index
    %c0_31 = arith.constant 0 : index
    %c0_32 = arith.constant 0 : index
    %47 = vector.load %arg10[%c0_30, %c0_31, %c0_32] : memref<2x24x72xf32, #tpu.memory_space<vmem>>, vector<2x24x72xf32>
    %c0_33 = arith.constant 0 : index
    %c0_34 = arith.constant 0 : index
    %c0_35 = arith.constant 0 : index
    %48 = vector.load %arg11[%c0_33, %c0_34, %c0_35] : memref<2x1x72xf32, #tpu.memory_space<vmem>>, vector<2x1x72xf32>
    %c0_36 = arith.constant 0 : index
    %c0_37 = arith.constant 0 : index
    %c0_38 = arith.constant 0 : index
    %49 = vector.load %arg12[%c0_36, %c0_37, %c0_38] : memref<2x1x24xf32, #tpu.memory_space<vmem>>, vector<2x1x24xf32>
    %50 = vector.extract_strided_slice %46 {offsets = [0, 0, 0], sizes = [1, 8, 72], strides = [1, 1, 1]} : vector<2x8x72xf32> to vector<1x8x72xf32>
    %51 = vector.shape_cast %50 : vector<1x8x72xf32> to vector<8x72xf32>
    %cst_39 = arith.constant dense<0.000000e+00> : vector<16x72xf32>
    %52 = tpu.matmul %45, %51, %cst_39 {dimension_numbers = #tpu.dot_dimension_numbers<[1], [0], [0], [1], [0, 0, 1, 1], [], []>} : vector<16x8xf32>, vector<8x72xf32>, vector<16x72xf32> -> vector<16x72xf32>
    %53 = vector.extract_strided_slice %48 {offsets = [0, 0, 0], sizes = [1, 1, 72], strides = [1, 1, 1]} : vector<2x1x72xf32> to vector<1x1x72xf32>
    %54 = vector.shape_cast %53 : vector<1x1x72xf32> to vector<1x72xf32>
    %55 = vector.broadcast %54 : vector<1x72xf32> to vector<16x72xf32>
    %56 = arith.addf %52, %55 : vector<16x72xf32>
    %57 = vector.extract_strided_slice %46 {offsets = [1, 0, 0], sizes = [1, 8, 72], strides = [1, 1, 1]} : vector<2x8x72xf32> to vector<1x8x72xf32>
    %58 = vector.shape_cast %57 : vector<1x8x72xf32> to vector<8x72xf32>
    %cst_40 = arith.constant dense<0.000000e+00> : vector<16x72xf32>
    %59 = tpu.matmul %45, %58, %cst_40 {dimension_numbers = #tpu.dot_dimension_numbers<[1], [0], [0], [1], [0, 0, 1, 1], [], []>} : vector<16x8xf32>, vector<8x72xf32>, vector<16x72xf32> -> vector<16x72xf32>
    %60 = vector.extract_strided_slice %48 {offsets = [1, 0, 0], sizes = [1, 1, 72], strides = [1, 1, 1]} : vector<2x1x72xf32> to vector<1x1x72xf32>
    %61 = vector.shape_cast %60 : vector<1x1x72xf32> to vector<1x72xf32>
    %62 = vector.broadcast %61 : vector<1x72xf32> to vector<16x72xf32>
    %63 = arith.addf %59, %62 : vector<16x72xf32>
    %64 = vector.extract_strided_slice %47 {offsets = [0, 0, 0], sizes = [1, 24, 72], strides = [1, 1, 1]} : vector<2x24x72xf32> to vector<1x24x72xf32>
    %65 = vector.shape_cast %64 : vector<1x24x72xf32> to vector<24x72xf32>
    %66 = vector.extract_strided_slice %47 {offsets = [1, 0, 0], sizes = [1, 24, 72], strides = [1, 1, 1]} : vector<2x24x72xf32> to vector<1x24x72xf32>
    %67 = vector.shape_cast %66 : vector<1x24x72xf32> to vector<24x72xf32>
    %68 = vector.extract_strided_slice %49 {offsets = [0, 0, 0], sizes = [1, 1, 24], strides = [1, 1, 1]} : vector<2x1x24xf32> to vector<1x1x24xf32>
    %69 = vector.shape_cast %68 : vector<1x1x24xf32> to vector<1x24xf32>
    %70 = vector.extract_strided_slice %49 {offsets = [1, 0, 0], sizes = [1, 1, 24], strides = [1, 1, 1]} : vector<2x1x24xf32> to vector<1x1x24xf32>
    %71 = vector.shape_cast %70 : vector<1x1x24xf32> to vector<1x24xf32>
    %cst_41 = arith.constant 0.000000e+00 : f32
    %72 = vector.broadcast %cst_41 : f32 to vector<2x24xf32>
    %cst_42 = arith.constant 0.000000e+00 : f32
    %73 = vector.broadcast %cst_42 : f32 to vector<2x24xf32>
    %74 = vector.extract_strided_slice %56 {offsets = [0, 0], sizes = [2, 72], strides = [1, 1]} : vector<16x72xf32> to vector<2x72xf32>
    %cst_43 = arith.constant dense<0.000000e+00> : vector<2x72xf32>
    %75 = tpu.matmul %72, %65, %cst_43 {dimension_numbers = #tpu.dot_dimension_numbers<[1], [0], [0], [1], [0, 0, 1, 1], [], []>} : vector<2x24xf32>, vector<24x72xf32>, vector<2x72xf32> -> vector<2x72xf32>
    %76 = vector.extract_strided_slice %74 {offsets = [0, 0], sizes = [2, 24], strides = [1, 1]} : vector<2x72xf32> to vector<2x24xf32>
    %77 = vector.extract_strided_slice %75 {offsets = [0, 0], sizes = [2, 24], strides = [1, 1]} : vector<2x72xf32> to vector<2x24xf32>
    %78 = arith.addf %76, %77 : vector<2x24xf32>
    %79 = arith.negf %78 : vector<2x24xf32>
    %80 = math.exp %79 : vector<2x24xf32>
    %cst_44 = arith.constant 1.000000e+00 : f32
    %81 = vector.broadcast %cst_44 : f32 to vector<2x24xf32>
    %82 = arith.addf %81, %80 : vector<2x24xf32>
    %83 = arith.divf %81, %82 : vector<2x24xf32>
    %84 = vector.extract_strided_slice %74 {offsets = [0, 24], sizes = [2, 24], strides = [1, 1]} : vector<2x72xf32> to vector<2x24xf32>
    %85 = vector.extract_strided_slice %75 {offsets = [0, 24], sizes = [2, 24], strides = [1, 1]} : vector<2x72xf32> to vector<2x24xf32>
    %86 = arith.addf %84, %85 : vector<2x24xf32>
    %87 = arith.negf %86 : vector<2x24xf32>
    %88 = math.exp %87 : vector<2x24xf32>
    %cst_45 = arith.constant 1.000000e+00 : f32
    %89 = vector.broadcast %cst_45 : f32 to vector<2x24xf32>
    %90 = arith.addf %89, %88 : vector<2x24xf32>
    %91 = arith.divf %89, %90 : vector<2x24xf32>
    %92 = vector.extract_strided_slice %74 {offsets = [0, 48], sizes = [2, 24], strides = [1, 1]} : vector<2x72xf32> to vector<2x24xf32>
    %93 = vector.extract_strided_slice %75 {offsets = [0, 48], sizes = [2, 24], strides = [1, 1]} : vector<2x72xf32> to vector<2x24xf32>
    %94 = vector.broadcast %69 : vector<1x24xf32> to vector<2x24xf32>
    %95 = arith.addf %93, %94 : vector<2x24xf32>
    %96 = arith.mulf %83, %95 : vector<2x24xf32>
    %97 = arith.addf %92, %96 : vector<2x24xf32>
    %98 = math.tanh %97 : vector<2x24xf32>
    %cst_46 = arith.constant 1.000000e+00 : f32
    %99 = vector.broadcast %cst_46 : f32 to vector<2x24xf32>
    %100 = arith.subf %99, %91 : vector<2x24xf32>
    %101 = arith.mulf %100, %98 : vector<2x24xf32>
    %102 = arith.mulf %91, %72 : vector<2x24xf32>
    %103 = arith.addf %101, %102 : vector<2x24xf32>
    %104 = vector.extract_strided_slice %63 {offsets = [14, 0], sizes = [2, 72], strides = [1, 1]} : vector<16x72xf32> to vector<2x72xf32>
    %cst_47 = arith.constant dense<0.000000e+00> : vector<2x72xf32>
    %105 = tpu.matmul %73, %67, %cst_47 {dimension_numbers = #tpu.dot_dimension_numbers<[1], [0], [0], [1], [0, 0, 1, 1], [], []>} : vector<2x24xf32>, vector<24x72xf32>, vector<2x72xf32> -> vector<2x72xf32>
    %106 = vector.extract_strided_slice %104 {offsets = [0, 0], sizes = [2, 24], strides = [1, 1]} : vector<2x72xf32> to vector<2x24xf32>
    %107 = vector.extract_strided_slice %105 {offsets = [0, 0], sizes = [2, 24], strides = [1, 1]} : vector<2x72xf32> to vector<2x24xf32>
    %108 = arith.addf %106, %107 : vector<2x24xf32>
    %109 = arith.negf %108 : vector<2x24xf32>
    %110 = math.exp %109 : vector<2x24xf32>
    %cst_48 = arith.constant 1.000000e+00 : f32
    %111 = vector.broadcast %cst_48 : f32 to vector<2x24xf32>
    %112 = arith.addf %111, %110 : vector<2x24xf32>
    %113 = arith.divf %111, %112 : vector<2x24xf32>
    %114 = vector.extract_strided_slice %104 {offsets = [0, 24], sizes = [2, 24], strides = [1, 1]} : vector<2x72xf32> to vector<2x24xf32>
    %115 = vector.extract_strided_slice %105 {offsets = [0, 24], sizes = [2, 24], strides = [1, 1]} : vector<2x72xf32> to vector<2x24xf32>
    %116 = arith.addf %114, %115 : vector<2x24xf32>
    %117 = arith.negf %116 : vector<2x24xf32>
    %118 = math.exp %117 : vector<2x24xf32>
    %cst_49 = arith.constant 1.000000e+00 : f32
    %119 = vector.broadcast %cst_49 : f32 to vector<2x24xf32>
    %120 = arith.addf %119, %118 : vector<2x24xf32>
    %121 = arith.divf %119, %120 : vector<2x24xf32>
    %122 = vector.extract_strided_slice %104 {offsets = [0, 48], sizes = [2, 24], strides = [1, 1]} : vector<2x72xf32> to vector<2x24xf32>
    %123 = vector.extract_strided_slice %105 {offsets = [0, 48], sizes = [2, 24], strides = [1, 1]} : vector<2x72xf32> to vector<2x24xf32>
    %124 = vector.broadcast %71 : vector<1x24xf32> to vector<2x24xf32>
    %125 = arith.addf %123, %124 : vector<2x24xf32>
    %126 = arith.mulf %113, %125 : vector<2x24xf32>
    %127 = arith.addf %122, %126 : vector<2x24xf32>
    %128 = math.tanh %127 : vector<2x24xf32>
    %cst_50 = arith.constant 1.000000e+00 : f32
    %129 = vector.broadcast %cst_50 : f32 to vector<2x24xf32>
    %130 = arith.subf %129, %121 : vector<2x24xf32>
    %131 = arith.mulf %130, %128 : vector<2x24xf32>
    %132 = arith.mulf %121, %73 : vector<2x24xf32>
    %133 = arith.addf %131, %132 : vector<2x24xf32>
    %134 = vector.extract_strided_slice %56 {offsets = [2, 0], sizes = [2, 72], strides = [1, 1]} : vector<16x72xf32> to vector<2x72xf32>
    %cst_51 = arith.constant dense<0.000000e+00> : vector<2x72xf32>
    %135 = tpu.matmul %103, %65, %cst_51 {dimension_numbers = #tpu.dot_dimension_numbers<[1], [0], [0], [1], [0, 0, 1, 1], [], []>} : vector<2x24xf32>, vector<24x72xf32>, vector<2x72xf32> -> vector<2x72xf32>
    %136 = vector.extract_strided_slice %134 {offsets = [0, 0], sizes = [2, 24], strides = [1, 1]} : vector<2x72xf32> to vector<2x24xf32>
    %137 = vector.extract_strided_slice %135 {offsets = [0, 0], sizes = [2, 24], strides = [1, 1]} : vector<2x72xf32> to vector<2x24xf32>
    %138 = arith.addf %136, %137 : vector<2x24xf32>
    %139 = arith.negf %138 : vector<2x24xf32>
    %140 = math.exp %139 : vector<2x24xf32>
    %cst_52 = arith.constant 1.000000e+00 : f32
    %141 = vector.broadcast %cst_52 : f32 to vector<2x24xf32>
    %142 = arith.addf %141, %140 : vector<2x24xf32>
    %143 = arith.divf %141, %142 : vector<2x24xf32>
    %144 = vector.extract_strided_slice %134 {offsets = [0, 24], sizes = [2, 24], strides = [1, 1]} : vector<2x72xf32> to vector<2x24xf32>
    %145 = vector.extract_strided_slice %135 {offsets = [0, 24], sizes = [2, 24], strides = [1, 1]} : vector<2x72xf32> to vector<2x24xf32>
    %146 = arith.addf %144, %145 : vector<2x24xf32>
    %147 = arith.negf %146 : vector<2x24xf32>
    %148 = math.exp %147 : vector<2x24xf32>
    %cst_53 = arith.constant 1.000000e+00 : f32
    %149 = vector.broadcast %cst_53 : f32 to vector<2x24xf32>
    %150 = arith.addf %149, %148 : vector<2x24xf32>
    %151 = arith.divf %149, %150 : vector<2x24xf32>
    %152 = vector.extract_strided_slice %134 {offsets = [0, 48], sizes = [2, 24], strides = [1, 1]} : vector<2x72xf32> to vector<2x24xf32>
    %153 = vector.extract_strided_slice %135 {offsets = [0, 48], sizes = [2, 24], strides = [1, 1]} : vector<2x72xf32> to vector<2x24xf32>
    %154 = vector.broadcast %69 : vector<1x24xf32> to vector<2x24xf32>
    %155 = arith.addf %153, %154 : vector<2x24xf32>
    %156 = arith.mulf %143, %155 : vector<2x24xf32>
    %157 = arith.addf %152, %156 : vector<2x24xf32>
    %158 = math.tanh %157 : vector<2x24xf32>
    %cst_54 = arith.constant 1.000000e+00 : f32
    %159 = vector.broadcast %cst_54 : f32 to vector<2x24xf32>
    %160 = arith.subf %159, %151 : vector<2x24xf32>
    %161 = arith.mulf %160, %158 : vector<2x24xf32>
    %162 = arith.mulf %151, %103 : vector<2x24xf32>
    %163 = arith.addf %161, %162 : vector<2x24xf32>
    %164 = vector.extract_strided_slice %63 {offsets = [12, 0], sizes = [2, 72], strides = [1, 1]} : vector<16x72xf32> to vector<2x72xf32>
    %cst_55 = arith.constant dense<0.000000e+00> : vector<2x72xf32>
    %165 = tpu.matmul %133, %67, %cst_55 {dimension_numbers = #tpu.dot_dimension_numbers<[1], [0], [0], [1], [0, 0, 1, 1], [], []>} : vector<2x24xf32>, vector<24x72xf32>, vector<2x72xf32> -> vector<2x72xf32>
    %166 = vector.extract_strided_slice %164 {offsets = [0, 0], sizes = [2, 24], strides = [1, 1]} : vector<2x72xf32> to vector<2x24xf32>
    %167 = vector.extract_strided_slice %165 {offsets = [0, 0], sizes = [2, 24], strides = [1, 1]} : vector<2x72xf32> to vector<2x24xf32>
    %168 = arith.addf %166, %167 : vector<2x24xf32>
    %169 = arith.negf %168 : vector<2x24xf32>
    %170 = math.exp %169 : vector<2x24xf32>
    %cst_56 = arith.constant 1.000000e+00 : f32
    %171 = vector.broadcast %cst_56 : f32 to vector<2x24xf32>
    %172 = arith.addf %171, %170 : vector<2x24xf32>
    %173 = arith.divf %171, %172 : vector<2x24xf32>
    %174 = vector.extract_strided_slice %164 {offsets = [0, 24], sizes = [2, 24], strides = [1, 1]} : vector<2x72xf32> to vector<2x24xf32>
    %175 = vector.extract_strided_slice %165 {offsets = [0, 24], sizes = [2, 24], strides = [1, 1]} : vector<2x72xf32> to vector<2x24xf32>
    %176 = arith.addf %174, %175 : vector<2x24xf32>
    %177 = arith.negf %176 : vector<2x24xf32>
    %178 = math.exp %177 : vector<2x24xf32>
    %cst_57 = arith.constant 1.000000e+00 : f32
    %179 = vector.broadcast %cst_57 : f32 to vector<2x24xf32>
    %180 = arith.addf %179, %178 : vector<2x24xf32>
    %181 = arith.divf %179, %180 : vector<2x24xf32>
    %182 = vector.extract_strided_slice %164 {offsets = [0, 48], sizes = [2, 24], strides = [1, 1]} : vector<2x72xf32> to vector<2x24xf32>
    %183 = vector.extract_strided_slice %165 {offsets = [0, 48], sizes = [2, 24], strides = [1, 1]} : vector<2x72xf32> to vector<2x24xf32>
    %184 = vector.broadcast %71 : vector<1x24xf32> to vector<2x24xf32>
    %185 = arith.addf %183, %184 : vector<2x24xf32>
    %186 = arith.mulf %173, %185 : vector<2x24xf32>
    %187 = arith.addf %182, %186 : vector<2x24xf32>
    %188 = math.tanh %187 : vector<2x24xf32>
    %cst_58 = arith.constant 1.000000e+00 : f32
    %189 = vector.broadcast %cst_58 : f32 to vector<2x24xf32>
    %190 = arith.subf %189, %181 : vector<2x24xf32>
    %191 = arith.mulf %190, %188 : vector<2x24xf32>
    %192 = arith.mulf %181, %133 : vector<2x24xf32>
    %193 = arith.addf %191, %192 : vector<2x24xf32>
    %194 = vector.extract_strided_slice %56 {offsets = [4, 0], sizes = [2, 72], strides = [1, 1]} : vector<16x72xf32> to vector<2x72xf32>
    %cst_59 = arith.constant dense<0.000000e+00> : vector<2x72xf32>
    %195 = tpu.matmul %163, %65, %cst_59 {dimension_numbers = #tpu.dot_dimension_numbers<[1], [0], [0], [1], [0, 0, 1, 1], [], []>} : vector<2x24xf32>, vector<24x72xf32>, vector<2x72xf32> -> vector<2x72xf32>
    %196 = vector.extract_strided_slice %194 {offsets = [0, 0], sizes = [2, 24], strides = [1, 1]} : vector<2x72xf32> to vector<2x24xf32>
    %197 = vector.extract_strided_slice %195 {offsets = [0, 0], sizes = [2, 24], strides = [1, 1]} : vector<2x72xf32> to vector<2x24xf32>
    %198 = arith.addf %196, %197 : vector<2x24xf32>
    %199 = arith.negf %198 : vector<2x24xf32>
    %200 = math.exp %199 : vector<2x24xf32>
    %cst_60 = arith.constant 1.000000e+00 : f32
    %201 = vector.broadcast %cst_60 : f32 to vector<2x24xf32>
    %202 = arith.addf %201, %200 : vector<2x24xf32>
    %203 = arith.divf %201, %202 : vector<2x24xf32>
    %204 = vector.extract_strided_slice %194 {offsets = [0, 24], sizes = [2, 24], strides = [1, 1]} : vector<2x72xf32> to vector<2x24xf32>
    %205 = vector.extract_strided_slice %195 {offsets = [0, 24], sizes = [2, 24], strides = [1, 1]} : vector<2x72xf32> to vector<2x24xf32>
    %206 = arith.addf %204, %205 : vector<2x24xf32>
    %207 = arith.negf %206 : vector<2x24xf32>
    %208 = math.exp %207 : vector<2x24xf32>
    %cst_61 = arith.constant 1.000000e+00 : f32
    %209 = vector.broadcast %cst_61 : f32 to vector<2x24xf32>
    %210 = arith.addf %209, %208 : vector<2x24xf32>
    %211 = arith.divf %209, %210 : vector<2x24xf32>
    %212 = vector.extract_strided_slice %194 {offsets = [0, 48], sizes = [2, 24], strides = [1, 1]} : vector<2x72xf32> to vector<2x24xf32>
    %213 = vector.extract_strided_slice %195 {offsets = [0, 48], sizes = [2, 24], strides = [1, 1]} : vector<2x72xf32> to vector<2x24xf32>
    %214 = vector.broadcast %69 : vector<1x24xf32> to vector<2x24xf32>
    %215 = arith.addf %213, %214 : vector<2x24xf32>
    %216 = arith.mulf %203, %215 : vector<2x24xf32>
    %217 = arith.addf %212, %216 : vector<2x24xf32>
    %218 = math.tanh %217 : vector<2x24xf32>
    %cst_62 = arith.constant 1.000000e+00 : f32
    %219 = vector.broadcast %cst_62 : f32 to vector<2x24xf32>
    %220 = arith.subf %219, %211 : vector<2x24xf32>
    %221 = arith.mulf %220, %218 : vector<2x24xf32>
    %222 = arith.mulf %211, %163 : vector<2x24xf32>
    %223 = arith.addf %221, %222 : vector<2x24xf32>
    %224 = vector.extract_strided_slice %63 {offsets = [10, 0], sizes = [2, 72], strides = [1, 1]} : vector<16x72xf32> to vector<2x72xf32>
    %cst_63 = arith.constant dense<0.000000e+00> : vector<2x72xf32>
    %225 = tpu.matmul %193, %67, %cst_63 {dimension_numbers = #tpu.dot_dimension_numbers<[1], [0], [0], [1], [0, 0, 1, 1], [], []>} : vector<2x24xf32>, vector<24x72xf32>, vector<2x72xf32> -> vector<2x72xf32>
    %226 = vector.extract_strided_slice %224 {offsets = [0, 0], sizes = [2, 24], strides = [1, 1]} : vector<2x72xf32> to vector<2x24xf32>
    %227 = vector.extract_strided_slice %225 {offsets = [0, 0], sizes = [2, 24], strides = [1, 1]} : vector<2x72xf32> to vector<2x24xf32>
    %228 = arith.addf %226, %227 : vector<2x24xf32>
    %229 = arith.negf %228 : vector<2x24xf32>
    %230 = math.exp %229 : vector<2x24xf32>
    %cst_64 = arith.constant 1.000000e+00 : f32
    %231 = vector.broadcast %cst_64 : f32 to vector<2x24xf32>
    %232 = arith.addf %231, %230 : vector<2x24xf32>
    %233 = arith.divf %231, %232 : vector<2x24xf32>
    %234 = vector.extract_strided_slice %224 {offsets = [0, 24], sizes = [2, 24], strides = [1, 1]} : vector<2x72xf32> to vector<2x24xf32>
    %235 = vector.extract_strided_slice %225 {offsets = [0, 24], sizes = [2, 24], strides = [1, 1]} : vector<2x72xf32> to vector<2x24xf32>
    %236 = arith.addf %234, %235 : vector<2x24xf32>
    %237 = arith.negf %236 : vector<2x24xf32>
    %238 = math.exp %237 : vector<2x24xf32>
    %cst_65 = arith.constant 1.000000e+00 : f32
    %239 = vector.broadcast %cst_65 : f32 to vector<2x24xf32>
    %240 = arith.addf %239, %238 : vector<2x24xf32>
    %241 = arith.divf %239, %240 : vector<2x24xf32>
    %242 = vector.extract_strided_slice %224 {offsets = [0, 48], sizes = [2, 24], strides = [1, 1]} : vector<2x72xf32> to vector<2x24xf32>
    %243 = vector.extract_strided_slice %225 {offsets = [0, 48], sizes = [2, 24], strides = [1, 1]} : vector<2x72xf32> to vector<2x24xf32>
    %244 = vector.broadcast %71 : vector<1x24xf32> to vector<2x24xf32>
    %245 = arith.addf %243, %244 : vector<2x24xf32>
    %246 = arith.mulf %233, %245 : vector<2x24xf32>
    %247 = arith.addf %242, %246 : vector<2x24xf32>
    %248 = math.tanh %247 : vector<2x24xf32>
    %cst_66 = arith.constant 1.000000e+00 : f32
    %249 = vector.broadcast %cst_66 : f32 to vector<2x24xf32>
    %250 = arith.subf %249, %241 : vector<2x24xf32>
    %251 = arith.mulf %250, %248 : vector<2x24xf32>
    %252 = arith.mulf %241, %193 : vector<2x24xf32>
    %253 = arith.addf %251, %252 : vector<2x24xf32>
    %254 = vector.extract_strided_slice %56 {offsets = [6, 0], sizes = [2, 72], strides = [1, 1]} : vector<16x72xf32> to vector<2x72xf32>
    %cst_67 = arith.constant dense<0.000000e+00> : vector<2x72xf32>
    %255 = tpu.matmul %223, %65, %cst_67 {dimension_numbers = #tpu.dot_dimension_numbers<[1], [0], [0], [1], [0, 0, 1, 1], [], []>} : vector<2x24xf32>, vector<24x72xf32>, vector<2x72xf32> -> vector<2x72xf32>
    %256 = vector.extract_strided_slice %254 {offsets = [0, 0], sizes = [2, 24], strides = [1, 1]} : vector<2x72xf32> to vector<2x24xf32>
    %257 = vector.extract_strided_slice %255 {offsets = [0, 0], sizes = [2, 24], strides = [1, 1]} : vector<2x72xf32> to vector<2x24xf32>
    %258 = arith.addf %256, %257 : vector<2x24xf32>
    %259 = arith.negf %258 : vector<2x24xf32>
    %260 = math.exp %259 : vector<2x24xf32>
    %cst_68 = arith.constant 1.000000e+00 : f32
    %261 = vector.broadcast %cst_68 : f32 to vector<2x24xf32>
    %262 = arith.addf %261, %260 : vector<2x24xf32>
    %263 = arith.divf %261, %262 : vector<2x24xf32>
    %264 = vector.extract_strided_slice %254 {offsets = [0, 24], sizes = [2, 24], strides = [1, 1]} : vector<2x72xf32> to vector<2x24xf32>
    %265 = vector.extract_strided_slice %255 {offsets = [0, 24], sizes = [2, 24], strides = [1, 1]} : vector<2x72xf32> to vector<2x24xf32>
    %266 = arith.addf %264, %265 : vector<2x24xf32>
    %267 = arith.negf %266 : vector<2x24xf32>
    %268 = math.exp %267 : vector<2x24xf32>
    %cst_69 = arith.constant 1.000000e+00 : f32
    %269 = vector.broadcast %cst_69 : f32 to vector<2x24xf32>
    %270 = arith.addf %269, %268 : vector<2x24xf32>
    %271 = arith.divf %269, %270 : vector<2x24xf32>
    %272 = vector.extract_strided_slice %254 {offsets = [0, 48], sizes = [2, 24], strides = [1, 1]} : vector<2x72xf32> to vector<2x24xf32>
    %273 = vector.extract_strided_slice %255 {offsets = [0, 48], sizes = [2, 24], strides = [1, 1]} : vector<2x72xf32> to vector<2x24xf32>
    %274 = vector.broadcast %69 : vector<1x24xf32> to vector<2x24xf32>
    %275 = arith.addf %273, %274 : vector<2x24xf32>
    %276 = arith.mulf %263, %275 : vector<2x24xf32>
    %277 = arith.addf %272, %276 : vector<2x24xf32>
    %278 = math.tanh %277 : vector<2x24xf32>
    %cst_70 = arith.constant 1.000000e+00 : f32
    %279 = vector.broadcast %cst_70 : f32 to vector<2x24xf32>
    %280 = arith.subf %279, %271 : vector<2x24xf32>
    %281 = arith.mulf %280, %278 : vector<2x24xf32>
    %282 = arith.mulf %271, %223 : vector<2x24xf32>
    %283 = arith.addf %281, %282 : vector<2x24xf32>
    %284 = vector.extract_strided_slice %63 {offsets = [8, 0], sizes = [2, 72], strides = [1, 1]} : vector<16x72xf32> to vector<2x72xf32>
    %cst_71 = arith.constant dense<0.000000e+00> : vector<2x72xf32>
    %285 = tpu.matmul %253, %67, %cst_71 {dimension_numbers = #tpu.dot_dimension_numbers<[1], [0], [0], [1], [0, 0, 1, 1], [], []>} : vector<2x24xf32>, vector<24x72xf32>, vector<2x72xf32> -> vector<2x72xf32>
    %286 = vector.extract_strided_slice %284 {offsets = [0, 0], sizes = [2, 24], strides = [1, 1]} : vector<2x72xf32> to vector<2x24xf32>
    %287 = vector.extract_strided_slice %285 {offsets = [0, 0], sizes = [2, 24], strides = [1, 1]} : vector<2x72xf32> to vector<2x24xf32>
    %288 = arith.addf %286, %287 : vector<2x24xf32>
    %289 = arith.negf %288 : vector<2x24xf32>
    %290 = math.exp %289 : vector<2x24xf32>
    %cst_72 = arith.constant 1.000000e+00 : f32
    %291 = vector.broadcast %cst_72 : f32 to vector<2x24xf32>
    %292 = arith.addf %291, %290 : vector<2x24xf32>
    %293 = arith.divf %291, %292 : vector<2x24xf32>
    %294 = vector.extract_strided_slice %284 {offsets = [0, 24], sizes = [2, 24], strides = [1, 1]} : vector<2x72xf32> to vector<2x24xf32>
    %295 = vector.extract_strided_slice %285 {offsets = [0, 24], sizes = [2, 24], strides = [1, 1]} : vector<2x72xf32> to vector<2x24xf32>
    %296 = arith.addf %294, %295 : vector<2x24xf32>
    %297 = arith.negf %296 : vector<2x24xf32>
    %298 = math.exp %297 : vector<2x24xf32>
    %cst_73 = arith.constant 1.000000e+00 : f32
    %299 = vector.broadcast %cst_73 : f32 to vector<2x24xf32>
    %300 = arith.addf %299, %298 : vector<2x24xf32>
    %301 = arith.divf %299, %300 : vector<2x24xf32>
    %302 = vector.extract_strided_slice %284 {offsets = [0, 48], sizes = [2, 24], strides = [1, 1]} : vector<2x72xf32> to vector<2x24xf32>
    %303 = vector.extract_strided_slice %285 {offsets = [0, 48], sizes = [2, 24], strides = [1, 1]} : vector<2x72xf32> to vector<2x24xf32>
    %304 = vector.broadcast %71 : vector<1x24xf32> to vector<2x24xf32>
    %305 = arith.addf %303, %304 : vector<2x24xf32>
    %306 = arith.mulf %293, %305 : vector<2x24xf32>
    %307 = arith.addf %302, %306 : vector<2x24xf32>
    %308 = math.tanh %307 : vector<2x24xf32>
    %cst_74 = arith.constant 1.000000e+00 : f32
    %309 = vector.broadcast %cst_74 : f32 to vector<2x24xf32>
    %310 = arith.subf %309, %301 : vector<2x24xf32>
    %311 = arith.mulf %310, %308 : vector<2x24xf32>
    %312 = arith.mulf %301, %253 : vector<2x24xf32>
    %313 = arith.addf %311, %312 : vector<2x24xf32>
    %314 = vector.extract_strided_slice %56 {offsets = [8, 0], sizes = [2, 72], strides = [1, 1]} : vector<16x72xf32> to vector<2x72xf32>
    %cst_75 = arith.constant dense<0.000000e+00> : vector<2x72xf32>
    %315 = tpu.matmul %283, %65, %cst_75 {dimension_numbers = #tpu.dot_dimension_numbers<[1], [0], [0], [1], [0, 0, 1, 1], [], []>} : vector<2x24xf32>, vector<24x72xf32>, vector<2x72xf32> -> vector<2x72xf32>
    %316 = vector.extract_strided_slice %314 {offsets = [0, 0], sizes = [2, 24], strides = [1, 1]} : vector<2x72xf32> to vector<2x24xf32>
    %317 = vector.extract_strided_slice %315 {offsets = [0, 0], sizes = [2, 24], strides = [1, 1]} : vector<2x72xf32> to vector<2x24xf32>
    %318 = arith.addf %316, %317 : vector<2x24xf32>
    %319 = arith.negf %318 : vector<2x24xf32>
    %320 = math.exp %319 : vector<2x24xf32>
    %cst_76 = arith.constant 1.000000e+00 : f32
    %321 = vector.broadcast %cst_76 : f32 to vector<2x24xf32>
    %322 = arith.addf %321, %320 : vector<2x24xf32>
    %323 = arith.divf %321, %322 : vector<2x24xf32>
    %324 = vector.extract_strided_slice %314 {offsets = [0, 24], sizes = [2, 24], strides = [1, 1]} : vector<2x72xf32> to vector<2x24xf32>
    %325 = vector.extract_strided_slice %315 {offsets = [0, 24], sizes = [2, 24], strides = [1, 1]} : vector<2x72xf32> to vector<2x24xf32>
    %326 = arith.addf %324, %325 : vector<2x24xf32>
    %327 = arith.negf %326 : vector<2x24xf32>
    %328 = math.exp %327 : vector<2x24xf32>
    %cst_77 = arith.constant 1.000000e+00 : f32
    %329 = vector.broadcast %cst_77 : f32 to vector<2x24xf32>
    %330 = arith.addf %329, %328 : vector<2x24xf32>
    %331 = arith.divf %329, %330 : vector<2x24xf32>
    %332 = vector.extract_strided_slice %314 {offsets = [0, 48], sizes = [2, 24], strides = [1, 1]} : vector<2x72xf32> to vector<2x24xf32>
    %333 = vector.extract_strided_slice %315 {offsets = [0, 48], sizes = [2, 24], strides = [1, 1]} : vector<2x72xf32> to vector<2x24xf32>
    %334 = vector.broadcast %69 : vector<1x24xf32> to vector<2x24xf32>
    %335 = arith.addf %333, %334 : vector<2x24xf32>
    %336 = arith.mulf %323, %335 : vector<2x24xf32>
    %337 = arith.addf %332, %336 : vector<2x24xf32>
    %338 = math.tanh %337 : vector<2x24xf32>
    %cst_78 = arith.constant 1.000000e+00 : f32
    %339 = vector.broadcast %cst_78 : f32 to vector<2x24xf32>
    %340 = arith.subf %339, %331 : vector<2x24xf32>
    %341 = arith.mulf %340, %338 : vector<2x24xf32>
    %342 = arith.mulf %331, %283 : vector<2x24xf32>
    %343 = arith.addf %341, %342 : vector<2x24xf32>
    %344 = vector.extract_strided_slice %63 {offsets = [6, 0], sizes = [2, 72], strides = [1, 1]} : vector<16x72xf32> to vector<2x72xf32>
    %cst_79 = arith.constant dense<0.000000e+00> : vector<2x72xf32>
    %345 = tpu.matmul %313, %67, %cst_79 {dimension_numbers = #tpu.dot_dimension_numbers<[1], [0], [0], [1], [0, 0, 1, 1], [], []>} : vector<2x24xf32>, vector<24x72xf32>, vector<2x72xf32> -> vector<2x72xf32>
    %346 = vector.extract_strided_slice %344 {offsets = [0, 0], sizes = [2, 24], strides = [1, 1]} : vector<2x72xf32> to vector<2x24xf32>
    %347 = vector.extract_strided_slice %345 {offsets = [0, 0], sizes = [2, 24], strides = [1, 1]} : vector<2x72xf32> to vector<2x24xf32>
    %348 = arith.addf %346, %347 : vector<2x24xf32>
    %349 = arith.negf %348 : vector<2x24xf32>
    %350 = math.exp %349 : vector<2x24xf32>
    %cst_80 = arith.constant 1.000000e+00 : f32
    %351 = vector.broadcast %cst_80 : f32 to vector<2x24xf32>
    %352 = arith.addf %351, %350 : vector<2x24xf32>
    %353 = arith.divf %351, %352 : vector<2x24xf32>
    %354 = vector.extract_strided_slice %344 {offsets = [0, 24], sizes = [2, 24], strides = [1, 1]} : vector<2x72xf32> to vector<2x24xf32>
    %355 = vector.extract_strided_slice %345 {offsets = [0, 24], sizes = [2, 24], strides = [1, 1]} : vector<2x72xf32> to vector<2x24xf32>
    %356 = arith.addf %354, %355 : vector<2x24xf32>
    %357 = arith.negf %356 : vector<2x24xf32>
    %358 = math.exp %357 : vector<2x24xf32>
    %cst_81 = arith.constant 1.000000e+00 : f32
    %359 = vector.broadcast %cst_81 : f32 to vector<2x24xf32>
    %360 = arith.addf %359, %358 : vector<2x24xf32>
    %361 = arith.divf %359, %360 : vector<2x24xf32>
    %362 = vector.extract_strided_slice %344 {offsets = [0, 48], sizes = [2, 24], strides = [1, 1]} : vector<2x72xf32> to vector<2x24xf32>
    %363 = vector.extract_strided_slice %345 {offsets = [0, 48], sizes = [2, 24], strides = [1, 1]} : vector<2x72xf32> to vector<2x24xf32>
    %364 = vector.broadcast %71 : vector<1x24xf32> to vector<2x24xf32>
    %365 = arith.addf %363, %364 : vector<2x24xf32>
    %366 = arith.mulf %353, %365 : vector<2x24xf32>
    %367 = arith.addf %362, %366 : vector<2x24xf32>
    %368 = math.tanh %367 : vector<2x24xf32>
    %cst_82 = arith.constant 1.000000e+00 : f32
    %369 = vector.broadcast %cst_82 : f32 to vector<2x24xf32>
    %370 = arith.subf %369, %361 : vector<2x24xf32>
    %371 = arith.mulf %370, %368 : vector<2x24xf32>
    %372 = arith.mulf %361, %313 : vector<2x24xf32>
    %373 = arith.addf %371, %372 : vector<2x24xf32>
    %374 = vector.extract_strided_slice %56 {offsets = [10, 0], sizes = [2, 72], strides = [1, 1]} : vector<16x72xf32> to vector<2x72xf32>
    %cst_83 = arith.constant dense<0.000000e+00> : vector<2x72xf32>
    %375 = tpu.matmul %343, %65, %cst_83 {dimension_numbers = #tpu.dot_dimension_numbers<[1], [0], [0], [1], [0, 0, 1, 1], [], []>} : vector<2x24xf32>, vector<24x72xf32>, vector<2x72xf32> -> vector<2x72xf32>
    %376 = vector.extract_strided_slice %374 {offsets = [0, 0], sizes = [2, 24], strides = [1, 1]} : vector<2x72xf32> to vector<2x24xf32>
    %377 = vector.extract_strided_slice %375 {offsets = [0, 0], sizes = [2, 24], strides = [1, 1]} : vector<2x72xf32> to vector<2x24xf32>
    %378 = arith.addf %376, %377 : vector<2x24xf32>
    %379 = arith.negf %378 : vector<2x24xf32>
    %380 = math.exp %379 : vector<2x24xf32>
    %cst_84 = arith.constant 1.000000e+00 : f32
    %381 = vector.broadcast %cst_84 : f32 to vector<2x24xf32>
    %382 = arith.addf %381, %380 : vector<2x24xf32>
    %383 = arith.divf %381, %382 : vector<2x24xf32>
    %384 = vector.extract_strided_slice %374 {offsets = [0, 24], sizes = [2, 24], strides = [1, 1]} : vector<2x72xf32> to vector<2x24xf32>
    %385 = vector.extract_strided_slice %375 {offsets = [0, 24], sizes = [2, 24], strides = [1, 1]} : vector<2x72xf32> to vector<2x24xf32>
    %386 = arith.addf %384, %385 : vector<2x24xf32>
    %387 = arith.negf %386 : vector<2x24xf32>
    %388 = math.exp %387 : vector<2x24xf32>
    %cst_85 = arith.constant 1.000000e+00 : f32
    %389 = vector.broadcast %cst_85 : f32 to vector<2x24xf32>
    %390 = arith.addf %389, %388 : vector<2x24xf32>
    %391 = arith.divf %389, %390 : vector<2x24xf32>
    %392 = vector.extract_strided_slice %374 {offsets = [0, 48], sizes = [2, 24], strides = [1, 1]} : vector<2x72xf32> to vector<2x24xf32>
    %393 = vector.extract_strided_slice %375 {offsets = [0, 48], sizes = [2, 24], strides = [1, 1]} : vector<2x72xf32> to vector<2x24xf32>
    %394 = vector.broadcast %69 : vector<1x24xf32> to vector<2x24xf32>
    %395 = arith.addf %393, %394 : vector<2x24xf32>
    %396 = arith.mulf %383, %395 : vector<2x24xf32>
    %397 = arith.addf %392, %396 : vector<2x24xf32>
    %398 = math.tanh %397 : vector<2x24xf32>
    %cst_86 = arith.constant 1.000000e+00 : f32
    %399 = vector.broadcast %cst_86 : f32 to vector<2x24xf32>
    %400 = arith.subf %399, %391 : vector<2x24xf32>
    %401 = arith.mulf %400, %398 : vector<2x24xf32>
    %402 = arith.mulf %391, %343 : vector<2x24xf32>
    %403 = arith.addf %401, %402 : vector<2x24xf32>
    %404 = vector.extract_strided_slice %63 {offsets = [4, 0], sizes = [2, 72], strides = [1, 1]} : vector<16x72xf32> to vector<2x72xf32>
    %cst_87 = arith.constant dense<0.000000e+00> : vector<2x72xf32>
    %405 = tpu.matmul %373, %67, %cst_87 {dimension_numbers = #tpu.dot_dimension_numbers<[1], [0], [0], [1], [0, 0, 1, 1], [], []>} : vector<2x24xf32>, vector<24x72xf32>, vector<2x72xf32> -> vector<2x72xf32>
    %406 = vector.extract_strided_slice %404 {offsets = [0, 0], sizes = [2, 24], strides = [1, 1]} : vector<2x72xf32> to vector<2x24xf32>
    %407 = vector.extract_strided_slice %405 {offsets = [0, 0], sizes = [2, 24], strides = [1, 1]} : vector<2x72xf32> to vector<2x24xf32>
    %408 = arith.addf %406, %407 : vector<2x24xf32>
    %409 = arith.negf %408 : vector<2x24xf32>
    %410 = math.exp %409 : vector<2x24xf32>
    %cst_88 = arith.constant 1.000000e+00 : f32
    %411 = vector.broadcast %cst_88 : f32 to vector<2x24xf32>
    %412 = arith.addf %411, %410 : vector<2x24xf32>
    %413 = arith.divf %411, %412 : vector<2x24xf32>
    %414 = vector.extract_strided_slice %404 {offsets = [0, 24], sizes = [2, 24], strides = [1, 1]} : vector<2x72xf32> to vector<2x24xf32>
    %415 = vector.extract_strided_slice %405 {offsets = [0, 24], sizes = [2, 24], strides = [1, 1]} : vector<2x72xf32> to vector<2x24xf32>
    %416 = arith.addf %414, %415 : vector<2x24xf32>
    %417 = arith.negf %416 : vector<2x24xf32>
    %418 = math.exp %417 : vector<2x24xf32>
    %cst_89 = arith.constant 1.000000e+00 : f32
    %419 = vector.broadcast %cst_89 : f32 to vector<2x24xf32>
    %420 = arith.addf %419, %418 : vector<2x24xf32>
    %421 = arith.divf %419, %420 : vector<2x24xf32>
    %422 = vector.extract_strided_slice %404 {offsets = [0, 48], sizes = [2, 24], strides = [1, 1]} : vector<2x72xf32> to vector<2x24xf32>
    %423 = vector.extract_strided_slice %405 {offsets = [0, 48], sizes = [2, 24], strides = [1, 1]} : vector<2x72xf32> to vector<2x24xf32>
    %424 = vector.broadcast %71 : vector<1x24xf32> to vector<2x24xf32>
    %425 = arith.addf %423, %424 : vector<2x24xf32>
    %426 = arith.mulf %413, %425 : vector<2x24xf32>
    %427 = arith.addf %422, %426 : vector<2x24xf32>
    %428 = math.tanh %427 : vector<2x24xf32>
    %cst_90 = arith.constant 1.000000e+00 : f32
    %429 = vector.broadcast %cst_90 : f32 to vector<2x24xf32>
    %430 = arith.subf %429, %421 : vector<2x24xf32>
    %431 = arith.mulf %430, %428 : vector<2x24xf32>
    %432 = arith.mulf %421, %373 : vector<2x24xf32>
    %433 = arith.addf %431, %432 : vector<2x24xf32>
    %434 = vector.extract_strided_slice %56 {offsets = [12, 0], sizes = [2, 72], strides = [1, 1]} : vector<16x72xf32> to vector<2x72xf32>
    %cst_91 = arith.constant dense<0.000000e+00> : vector<2x72xf32>
    %435 = tpu.matmul %403, %65, %cst_91 {dimension_numbers = #tpu.dot_dimension_numbers<[1], [0], [0], [1], [0, 0, 1, 1], [], []>} : vector<2x24xf32>, vector<24x72xf32>, vector<2x72xf32> -> vector<2x72xf32>
    %436 = vector.extract_strided_slice %434 {offsets = [0, 0], sizes = [2, 24], strides = [1, 1]} : vector<2x72xf32> to vector<2x24xf32>
    %437 = vector.extract_strided_slice %435 {offsets = [0, 0], sizes = [2, 24], strides = [1, 1]} : vector<2x72xf32> to vector<2x24xf32>
    %438 = arith.addf %436, %437 : vector<2x24xf32>
    %439 = arith.negf %438 : vector<2x24xf32>
    %440 = math.exp %439 : vector<2x24xf32>
    %cst_92 = arith.constant 1.000000e+00 : f32
    %441 = vector.broadcast %cst_92 : f32 to vector<2x24xf32>
    %442 = arith.addf %441, %440 : vector<2x24xf32>
    %443 = arith.divf %441, %442 : vector<2x24xf32>
    %444 = vector.extract_strided_slice %434 {offsets = [0, 24], sizes = [2, 24], strides = [1, 1]} : vector<2x72xf32> to vector<2x24xf32>
    %445 = vector.extract_strided_slice %435 {offsets = [0, 24], sizes = [2, 24], strides = [1, 1]} : vector<2x72xf32> to vector<2x24xf32>
    %446 = arith.addf %444, %445 : vector<2x24xf32>
    %447 = arith.negf %446 : vector<2x24xf32>
    %448 = math.exp %447 : vector<2x24xf32>
    %cst_93 = arith.constant 1.000000e+00 : f32
    %449 = vector.broadcast %cst_93 : f32 to vector<2x24xf32>
    %450 = arith.addf %449, %448 : vector<2x24xf32>
    %451 = arith.divf %449, %450 : vector<2x24xf32>
    %452 = vector.extract_strided_slice %434 {offsets = [0, 48], sizes = [2, 24], strides = [1, 1]} : vector<2x72xf32> to vector<2x24xf32>
    %453 = vector.extract_strided_slice %435 {offsets = [0, 48], sizes = [2, 24], strides = [1, 1]} : vector<2x72xf32> to vector<2x24xf32>
    %454 = vector.broadcast %69 : vector<1x24xf32> to vector<2x24xf32>
    %455 = arith.addf %453, %454 : vector<2x24xf32>
    %456 = arith.mulf %443, %455 : vector<2x24xf32>
    %457 = arith.addf %452, %456 : vector<2x24xf32>
    %458 = math.tanh %457 : vector<2x24xf32>
    %cst_94 = arith.constant 1.000000e+00 : f32
    %459 = vector.broadcast %cst_94 : f32 to vector<2x24xf32>
    %460 = arith.subf %459, %451 : vector<2x24xf32>
    %461 = arith.mulf %460, %458 : vector<2x24xf32>
    %462 = arith.mulf %451, %403 : vector<2x24xf32>
    %463 = arith.addf %461, %462 : vector<2x24xf32>
    %464 = vector.extract_strided_slice %63 {offsets = [2, 0], sizes = [2, 72], strides = [1, 1]} : vector<16x72xf32> to vector<2x72xf32>
    %cst_95 = arith.constant dense<0.000000e+00> : vector<2x72xf32>
    %465 = tpu.matmul %433, %67, %cst_95 {dimension_numbers = #tpu.dot_dimension_numbers<[1], [0], [0], [1], [0, 0, 1, 1], [], []>} : vector<2x24xf32>, vector<24x72xf32>, vector<2x72xf32> -> vector<2x72xf32>
    %466 = vector.extract_strided_slice %464 {offsets = [0, 0], sizes = [2, 24], strides = [1, 1]} : vector<2x72xf32> to vector<2x24xf32>
    %467 = vector.extract_strided_slice %465 {offsets = [0, 0], sizes = [2, 24], strides = [1, 1]} : vector<2x72xf32> to vector<2x24xf32>
    %468 = arith.addf %466, %467 : vector<2x24xf32>
    %469 = arith.negf %468 : vector<2x24xf32>
    %470 = math.exp %469 : vector<2x24xf32>
    %cst_96 = arith.constant 1.000000e+00 : f32
    %471 = vector.broadcast %cst_96 : f32 to vector<2x24xf32>
    %472 = arith.addf %471, %470 : vector<2x24xf32>
    %473 = arith.divf %471, %472 : vector<2x24xf32>
    %474 = vector.extract_strided_slice %464 {offsets = [0, 24], sizes = [2, 24], strides = [1, 1]} : vector<2x72xf32> to vector<2x24xf32>
    %475 = vector.extract_strided_slice %465 {offsets = [0, 24], sizes = [2, 24], strides = [1, 1]} : vector<2x72xf32> to vector<2x24xf32>
    %476 = arith.addf %474, %475 : vector<2x24xf32>
    %477 = arith.negf %476 : vector<2x24xf32>
    %478 = math.exp %477 : vector<2x24xf32>
    %cst_97 = arith.constant 1.000000e+00 : f32
    %479 = vector.broadcast %cst_97 : f32 to vector<2x24xf32>
    %480 = arith.addf %479, %478 : vector<2x24xf32>
    %481 = arith.divf %479, %480 : vector<2x24xf32>
    %482 = vector.extract_strided_slice %464 {offsets = [0, 48], sizes = [2, 24], strides = [1, 1]} : vector<2x72xf32> to vector<2x24xf32>
    %483 = vector.extract_strided_slice %465 {offsets = [0, 48], sizes = [2, 24], strides = [1, 1]} : vector<2x72xf32> to vector<2x24xf32>
    %484 = vector.broadcast %71 : vector<1x24xf32> to vector<2x24xf32>
    %485 = arith.addf %483, %484 : vector<2x24xf32>
    %486 = arith.mulf %473, %485 : vector<2x24xf32>
    %487 = arith.addf %482, %486 : vector<2x24xf32>
    %488 = math.tanh %487 : vector<2x24xf32>
    %cst_98 = arith.constant 1.000000e+00 : f32
    %489 = vector.broadcast %cst_98 : f32 to vector<2x24xf32>
    %490 = arith.subf %489, %481 : vector<2x24xf32>
    %491 = arith.mulf %490, %488 : vector<2x24xf32>
    %492 = arith.mulf %481, %433 : vector<2x24xf32>
    %493 = arith.addf %491, %492 : vector<2x24xf32>
    %494 = vector.extract_strided_slice %56 {offsets = [14, 0], sizes = [2, 72], strides = [1, 1]} : vector<16x72xf32> to vector<2x72xf32>
    %cst_99 = arith.constant dense<0.000000e+00> : vector<2x72xf32>
    %495 = tpu.matmul %463, %65, %cst_99 {dimension_numbers = #tpu.dot_dimension_numbers<[1], [0], [0], [1], [0, 0, 1, 1], [], []>} : vector<2x24xf32>, vector<24x72xf32>, vector<2x72xf32> -> vector<2x72xf32>
    %496 = vector.extract_strided_slice %494 {offsets = [0, 0], sizes = [2, 24], strides = [1, 1]} : vector<2x72xf32> to vector<2x24xf32>
    %497 = vector.extract_strided_slice %495 {offsets = [0, 0], sizes = [2, 24], strides = [1, 1]} : vector<2x72xf32> to vector<2x24xf32>
    %498 = arith.addf %496, %497 : vector<2x24xf32>
    %499 = arith.negf %498 : vector<2x24xf32>
    %500 = math.exp %499 : vector<2x24xf32>
    %cst_100 = arith.constant 1.000000e+00 : f32
    %501 = vector.broadcast %cst_100 : f32 to vector<2x24xf32>
    %502 = arith.addf %501, %500 : vector<2x24xf32>
    %503 = arith.divf %501, %502 : vector<2x24xf32>
    %504 = vector.extract_strided_slice %494 {offsets = [0, 24], sizes = [2, 24], strides = [1, 1]} : vector<2x72xf32> to vector<2x24xf32>
    %505 = vector.extract_strided_slice %495 {offsets = [0, 24], sizes = [2, 24], strides = [1, 1]} : vector<2x72xf32> to vector<2x24xf32>
    %506 = arith.addf %504, %505 : vector<2x24xf32>
    %507 = arith.negf %506 : vector<2x24xf32>
    %508 = math.exp %507 : vector<2x24xf32>
    %cst_101 = arith.constant 1.000000e+00 : f32
    %509 = vector.broadcast %cst_101 : f32 to vector<2x24xf32>
    %510 = arith.addf %509, %508 : vector<2x24xf32>
    %511 = arith.divf %509, %510 : vector<2x24xf32>
    %512 = vector.extract_strided_slice %494 {offsets = [0, 48], sizes = [2, 24], strides = [1, 1]} : vector<2x72xf32> to vector<2x24xf32>
    %513 = vector.extract_strided_slice %495 {offsets = [0, 48], sizes = [2, 24], strides = [1, 1]} : vector<2x72xf32> to vector<2x24xf32>
    %514 = vector.broadcast %69 : vector<1x24xf32> to vector<2x24xf32>
    %515 = arith.addf %513, %514 : vector<2x24xf32>
    %516 = arith.mulf %503, %515 : vector<2x24xf32>
    %517 = arith.addf %512, %516 : vector<2x24xf32>
    %518 = math.tanh %517 : vector<2x24xf32>
    %cst_102 = arith.constant 1.000000e+00 : f32
    %519 = vector.broadcast %cst_102 : f32 to vector<2x24xf32>
    %520 = arith.subf %519, %511 : vector<2x24xf32>
    %521 = arith.mulf %520, %518 : vector<2x24xf32>
    %522 = arith.mulf %511, %463 : vector<2x24xf32>
    %523 = arith.addf %521, %522 : vector<2x24xf32>
    %524 = vector.extract_strided_slice %63 {offsets = [0, 0], sizes = [2, 72], strides = [1, 1]} : vector<16x72xf32> to vector<2x72xf32>
    %cst_103 = arith.constant dense<0.000000e+00> : vector<2x72xf32>
    %525 = tpu.matmul %493, %67, %cst_103 {dimension_numbers = #tpu.dot_dimension_numbers<[1], [0], [0], [1], [0, 0, 1, 1], [], []>} : vector<2x24xf32>, vector<24x72xf32>, vector<2x72xf32> -> vector<2x72xf32>
    %526 = vector.extract_strided_slice %524 {offsets = [0, 0], sizes = [2, 24], strides = [1, 1]} : vector<2x72xf32> to vector<2x24xf32>
    %527 = vector.extract_strided_slice %525 {offsets = [0, 0], sizes = [2, 24], strides = [1, 1]} : vector<2x72xf32> to vector<2x24xf32>
    %528 = arith.addf %526, %527 : vector<2x24xf32>
    %529 = arith.negf %528 : vector<2x24xf32>
    %530 = math.exp %529 : vector<2x24xf32>
    %cst_104 = arith.constant 1.000000e+00 : f32
    %531 = vector.broadcast %cst_104 : f32 to vector<2x24xf32>
    %532 = arith.addf %531, %530 : vector<2x24xf32>
    %533 = arith.divf %531, %532 : vector<2x24xf32>
    %534 = vector.extract_strided_slice %524 {offsets = [0, 24], sizes = [2, 24], strides = [1, 1]} : vector<2x72xf32> to vector<2x24xf32>
    %535 = vector.extract_strided_slice %525 {offsets = [0, 24], sizes = [2, 24], strides = [1, 1]} : vector<2x72xf32> to vector<2x24xf32>
    %536 = arith.addf %534, %535 : vector<2x24xf32>
    %537 = arith.negf %536 : vector<2x24xf32>
    %538 = math.exp %537 : vector<2x24xf32>
    %cst_105 = arith.constant 1.000000e+00 : f32
    %539 = vector.broadcast %cst_105 : f32 to vector<2x24xf32>
    %540 = arith.addf %539, %538 : vector<2x24xf32>
    %541 = arith.divf %539, %540 : vector<2x24xf32>
    %542 = vector.extract_strided_slice %524 {offsets = [0, 48], sizes = [2, 24], strides = [1, 1]} : vector<2x72xf32> to vector<2x24xf32>
    %543 = vector.extract_strided_slice %525 {offsets = [0, 48], sizes = [2, 24], strides = [1, 1]} : vector<2x72xf32> to vector<2x24xf32>
    %544 = vector.broadcast %71 : vector<1x24xf32> to vector<2x24xf32>
    %545 = arith.addf %543, %544 : vector<2x24xf32>
    %546 = arith.mulf %533, %545 : vector<2x24xf32>
    %547 = arith.addf %542, %546 : vector<2x24xf32>
    %548 = math.tanh %547 : vector<2x24xf32>
    %cst_106 = arith.constant 1.000000e+00 : f32
    %549 = vector.broadcast %cst_106 : f32 to vector<2x24xf32>
    %550 = arith.subf %549, %541 : vector<2x24xf32>
    %551 = arith.mulf %550, %548 : vector<2x24xf32>
    %552 = arith.mulf %541, %493 : vector<2x24xf32>
    %553 = arith.addf %551, %552 : vector<2x24xf32>
    %554 = tpu.concatenate %103, %163, %223, %283, %343, %403, %463, %523 in 0 : vector<2x24xf32>, vector<2x24xf32>, vector<2x24xf32>, vector<2x24xf32>, vector<2x24xf32>, vector<2x24xf32>, vector<2x24xf32>, vector<2x24xf32> -> vector<16x24xf32>
    %555 = tpu.concatenate %553, %493, %433, %373, %313, %253, %193, %133 in 0 : vector<2x24xf32>, vector<2x24xf32>, vector<2x24xf32>, vector<2x24xf32>, vector<2x24xf32>, vector<2x24xf32>, vector<2x24xf32>, vector<2x24xf32> -> vector<16x24xf32>
    %556 = tpu.concatenate %554, %555 in 1 : vector<16x24xf32>, vector<16x24xf32> -> vector<16x48xf32>
    %c0_107 = arith.constant 0 : index
    %c0_108 = arith.constant 0 : index
    %c0_109 = arith.constant 0 : index
    %557 = vector.load %arg13[%c0_107, %c0_108, %c0_109] : memref<2x48x72xf32, #tpu.memory_space<vmem>>, vector<2x48x72xf32>
    %c0_110 = arith.constant 0 : index
    %c0_111 = arith.constant 0 : index
    %c0_112 = arith.constant 0 : index
    %558 = vector.load %arg14[%c0_110, %c0_111, %c0_112] : memref<2x24x72xf32, #tpu.memory_space<vmem>>, vector<2x24x72xf32>
    %c0_113 = arith.constant 0 : index
    %c0_114 = arith.constant 0 : index
    %c0_115 = arith.constant 0 : index
    %559 = vector.load %arg15[%c0_113, %c0_114, %c0_115] : memref<2x1x72xf32, #tpu.memory_space<vmem>>, vector<2x1x72xf32>
    %c0_116 = arith.constant 0 : index
    %c0_117 = arith.constant 0 : index
    %c0_118 = arith.constant 0 : index
    %560 = vector.load %arg16[%c0_116, %c0_117, %c0_118] : memref<2x1x24xf32, #tpu.memory_space<vmem>>, vector<2x1x24xf32>
    %561 = vector.extract_strided_slice %557 {offsets = [0, 0, 0], sizes = [1, 48, 72], strides = [1, 1, 1]} : vector<2x48x72xf32> to vector<1x48x72xf32>
    %562 = vector.shape_cast %561 : vector<1x48x72xf32> to vector<48x72xf32>
    %cst_119 = arith.constant dense<0.000000e+00> : vector<16x72xf32>
    %563 = tpu.matmul %556, %562, %cst_119 {dimension_numbers = #tpu.dot_dimension_numbers<[1], [0], [0], [1], [0, 0, 1, 1], [], []>} : vector<16x48xf32>, vector<48x72xf32>, vector<16x72xf32> -> vector<16x72xf32>
    %564 = vector.extract_strided_slice %559 {offsets = [0, 0, 0], sizes = [1, 1, 72], strides = [1, 1, 1]} : vector<2x1x72xf32> to vector<1x1x72xf32>
    %565 = vector.shape_cast %564 : vector<1x1x72xf32> to vector<1x72xf32>
    %566 = vector.broadcast %565 : vector<1x72xf32> to vector<16x72xf32>
    %567 = arith.addf %563, %566 : vector<16x72xf32>
    %568 = vector.extract_strided_slice %557 {offsets = [1, 0, 0], sizes = [1, 48, 72], strides = [1, 1, 1]} : vector<2x48x72xf32> to vector<1x48x72xf32>
    %569 = vector.shape_cast %568 : vector<1x48x72xf32> to vector<48x72xf32>
    %cst_120 = arith.constant dense<0.000000e+00> : vector<16x72xf32>
    %570 = tpu.matmul %556, %569, %cst_120 {dimension_numbers = #tpu.dot_dimension_numbers<[1], [0], [0], [1], [0, 0, 1, 1], [], []>} : vector<16x48xf32>, vector<48x72xf32>, vector<16x72xf32> -> vector<16x72xf32>
    %571 = vector.extract_strided_slice %559 {offsets = [1, 0, 0], sizes = [1, 1, 72], strides = [1, 1, 1]} : vector<2x1x72xf32> to vector<1x1x72xf32>
    %572 = vector.shape_cast %571 : vector<1x1x72xf32> to vector<1x72xf32>
    %573 = vector.broadcast %572 : vector<1x72xf32> to vector<16x72xf32>
    %574 = arith.addf %570, %573 : vector<16x72xf32>
    %575 = vector.extract_strided_slice %558 {offsets = [0, 0, 0], sizes = [1, 24, 72], strides = [1, 1, 1]} : vector<2x24x72xf32> to vector<1x24x72xf32>
    %576 = vector.shape_cast %575 : vector<1x24x72xf32> to vector<24x72xf32>
    %577 = vector.extract_strided_slice %558 {offsets = [1, 0, 0], sizes = [1, 24, 72], strides = [1, 1, 1]} : vector<2x24x72xf32> to vector<1x24x72xf32>
    %578 = vector.shape_cast %577 : vector<1x24x72xf32> to vector<24x72xf32>
    %579 = vector.extract_strided_slice %560 {offsets = [0, 0, 0], sizes = [1, 1, 24], strides = [1, 1, 1]} : vector<2x1x24xf32> to vector<1x1x24xf32>
    %580 = vector.shape_cast %579 : vector<1x1x24xf32> to vector<1x24xf32>
    %581 = vector.extract_strided_slice %560 {offsets = [1, 0, 0], sizes = [1, 1, 24], strides = [1, 1, 1]} : vector<2x1x24xf32> to vector<1x1x24xf32>
    %582 = vector.shape_cast %581 : vector<1x1x24xf32> to vector<1x24xf32>
    %cst_121 = arith.constant 0.000000e+00 : f32
    %583 = vector.broadcast %cst_121 : f32 to vector<2x24xf32>
    %cst_122 = arith.constant 0.000000e+00 : f32
    %584 = vector.broadcast %cst_122 : f32 to vector<2x24xf32>
    %585 = vector.extract_strided_slice %567 {offsets = [0, 0], sizes = [2, 72], strides = [1, 1]} : vector<16x72xf32> to vector<2x72xf32>
    %cst_123 = arith.constant dense<0.000000e+00> : vector<2x72xf32>
    %586 = tpu.matmul %583, %576, %cst_123 {dimension_numbers = #tpu.dot_dimension_numbers<[1], [0], [0], [1], [0, 0, 1, 1], [], []>} : vector<2x24xf32>, vector<24x72xf32>, vector<2x72xf32> -> vector<2x72xf32>
    %587 = vector.extract_strided_slice %585 {offsets = [0, 0], sizes = [2, 24], strides = [1, 1]} : vector<2x72xf32> to vector<2x24xf32>
    %588 = vector.extract_strided_slice %586 {offsets = [0, 0], sizes = [2, 24], strides = [1, 1]} : vector<2x72xf32> to vector<2x24xf32>
    %589 = arith.addf %587, %588 : vector<2x24xf32>
    %590 = arith.negf %589 : vector<2x24xf32>
    %591 = math.exp %590 : vector<2x24xf32>
    %cst_124 = arith.constant 1.000000e+00 : f32
    %592 = vector.broadcast %cst_124 : f32 to vector<2x24xf32>
    %593 = arith.addf %592, %591 : vector<2x24xf32>
    %594 = arith.divf %592, %593 : vector<2x24xf32>
    %595 = vector.extract_strided_slice %585 {offsets = [0, 24], sizes = [2, 24], strides = [1, 1]} : vector<2x72xf32> to vector<2x24xf32>
    %596 = vector.extract_strided_slice %586 {offsets = [0, 24], sizes = [2, 24], strides = [1, 1]} : vector<2x72xf32> to vector<2x24xf32>
    %597 = arith.addf %595, %596 : vector<2x24xf32>
    %598 = arith.negf %597 : vector<2x24xf32>
    %599 = math.exp %598 : vector<2x24xf32>
    %cst_125 = arith.constant 1.000000e+00 : f32
    %600 = vector.broadcast %cst_125 : f32 to vector<2x24xf32>
    %601 = arith.addf %600, %599 : vector<2x24xf32>
    %602 = arith.divf %600, %601 : vector<2x24xf32>
    %603 = vector.extract_strided_slice %585 {offsets = [0, 48], sizes = [2, 24], strides = [1, 1]} : vector<2x72xf32> to vector<2x24xf32>
    %604 = vector.extract_strided_slice %586 {offsets = [0, 48], sizes = [2, 24], strides = [1, 1]} : vector<2x72xf32> to vector<2x24xf32>
    %605 = vector.broadcast %580 : vector<1x24xf32> to vector<2x24xf32>
    %606 = arith.addf %604, %605 : vector<2x24xf32>
    %607 = arith.mulf %594, %606 : vector<2x24xf32>
    %608 = arith.addf %603, %607 : vector<2x24xf32>
    %609 = math.tanh %608 : vector<2x24xf32>
    %cst_126 = arith.constant 1.000000e+00 : f32
    %610 = vector.broadcast %cst_126 : f32 to vector<2x24xf32>
    %611 = arith.subf %610, %602 : vector<2x24xf32>
    %612 = arith.mulf %611, %609 : vector<2x24xf32>
    %613 = arith.mulf %602, %583 : vector<2x24xf32>
    %614 = arith.addf %612, %613 : vector<2x24xf32>
    %615 = vector.extract_strided_slice %574 {offsets = [14, 0], sizes = [2, 72], strides = [1, 1]} : vector<16x72xf32> to vector<2x72xf32>
    %cst_127 = arith.constant dense<0.000000e+00> : vector<2x72xf32>
    %616 = tpu.matmul %584, %578, %cst_127 {dimension_numbers = #tpu.dot_dimension_numbers<[1], [0], [0], [1], [0, 0, 1, 1], [], []>} : vector<2x24xf32>, vector<24x72xf32>, vector<2x72xf32> -> vector<2x72xf32>
    %617 = vector.extract_strided_slice %615 {offsets = [0, 0], sizes = [2, 24], strides = [1, 1]} : vector<2x72xf32> to vector<2x24xf32>
    %618 = vector.extract_strided_slice %616 {offsets = [0, 0], sizes = [2, 24], strides = [1, 1]} : vector<2x72xf32> to vector<2x24xf32>
    %619 = arith.addf %617, %618 : vector<2x24xf32>
    %620 = arith.negf %619 : vector<2x24xf32>
    %621 = math.exp %620 : vector<2x24xf32>
    %cst_128 = arith.constant 1.000000e+00 : f32
    %622 = vector.broadcast %cst_128 : f32 to vector<2x24xf32>
    %623 = arith.addf %622, %621 : vector<2x24xf32>
    %624 = arith.divf %622, %623 : vector<2x24xf32>
    %625 = vector.extract_strided_slice %615 {offsets = [0, 24], sizes = [2, 24], strides = [1, 1]} : vector<2x72xf32> to vector<2x24xf32>
    %626 = vector.extract_strided_slice %616 {offsets = [0, 24], sizes = [2, 24], strides = [1, 1]} : vector<2x72xf32> to vector<2x24xf32>
    %627 = arith.addf %625, %626 : vector<2x24xf32>
    %628 = arith.negf %627 : vector<2x24xf32>
    %629 = math.exp %628 : vector<2x24xf32>
    %cst_129 = arith.constant 1.000000e+00 : f32
    %630 = vector.broadcast %cst_129 : f32 to vector<2x24xf32>
    %631 = arith.addf %630, %629 : vector<2x24xf32>
    %632 = arith.divf %630, %631 : vector<2x24xf32>
    %633 = vector.extract_strided_slice %615 {offsets = [0, 48], sizes = [2, 24], strides = [1, 1]} : vector<2x72xf32> to vector<2x24xf32>
    %634 = vector.extract_strided_slice %616 {offsets = [0, 48], sizes = [2, 24], strides = [1, 1]} : vector<2x72xf32> to vector<2x24xf32>
    %635 = vector.broadcast %582 : vector<1x24xf32> to vector<2x24xf32>
    %636 = arith.addf %634, %635 : vector<2x24xf32>
    %637 = arith.mulf %624, %636 : vector<2x24xf32>
    %638 = arith.addf %633, %637 : vector<2x24xf32>
    %639 = math.tanh %638 : vector<2x24xf32>
    %cst_130 = arith.constant 1.000000e+00 : f32
    %640 = vector.broadcast %cst_130 : f32 to vector<2x24xf32>
    %641 = arith.subf %640, %632 : vector<2x24xf32>
    %642 = arith.mulf %641, %639 : vector<2x24xf32>
    %643 = arith.mulf %632, %584 : vector<2x24xf32>
    %644 = arith.addf %642, %643 : vector<2x24xf32>
    %645 = vector.extract_strided_slice %567 {offsets = [2, 0], sizes = [2, 72], strides = [1, 1]} : vector<16x72xf32> to vector<2x72xf32>
    %cst_131 = arith.constant dense<0.000000e+00> : vector<2x72xf32>
    %646 = tpu.matmul %614, %576, %cst_131 {dimension_numbers = #tpu.dot_dimension_numbers<[1], [0], [0], [1], [0, 0, 1, 1], [], []>} : vector<2x24xf32>, vector<24x72xf32>, vector<2x72xf32> -> vector<2x72xf32>
    %647 = vector.extract_strided_slice %645 {offsets = [0, 0], sizes = [2, 24], strides = [1, 1]} : vector<2x72xf32> to vector<2x24xf32>
    %648 = vector.extract_strided_slice %646 {offsets = [0, 0], sizes = [2, 24], strides = [1, 1]} : vector<2x72xf32> to vector<2x24xf32>
    %649 = arith.addf %647, %648 : vector<2x24xf32>
    %650 = arith.negf %649 : vector<2x24xf32>
    %651 = math.exp %650 : vector<2x24xf32>
    %cst_132 = arith.constant 1.000000e+00 : f32
    %652 = vector.broadcast %cst_132 : f32 to vector<2x24xf32>
    %653 = arith.addf %652, %651 : vector<2x24xf32>
    %654 = arith.divf %652, %653 : vector<2x24xf32>
    %655 = vector.extract_strided_slice %645 {offsets = [0, 24], sizes = [2, 24], strides = [1, 1]} : vector<2x72xf32> to vector<2x24xf32>
    %656 = vector.extract_strided_slice %646 {offsets = [0, 24], sizes = [2, 24], strides = [1, 1]} : vector<2x72xf32> to vector<2x24xf32>
    %657 = arith.addf %655, %656 : vector<2x24xf32>
    %658 = arith.negf %657 : vector<2x24xf32>
    %659 = math.exp %658 : vector<2x24xf32>
    %cst_133 = arith.constant 1.000000e+00 : f32
    %660 = vector.broadcast %cst_133 : f32 to vector<2x24xf32>
    %661 = arith.addf %660, %659 : vector<2x24xf32>
    %662 = arith.divf %660, %661 : vector<2x24xf32>
    %663 = vector.extract_strided_slice %645 {offsets = [0, 48], sizes = [2, 24], strides = [1, 1]} : vector<2x72xf32> to vector<2x24xf32>
    %664 = vector.extract_strided_slice %646 {offsets = [0, 48], sizes = [2, 24], strides = [1, 1]} : vector<2x72xf32> to vector<2x24xf32>
    %665 = vector.broadcast %580 : vector<1x24xf32> to vector<2x24xf32>
    %666 = arith.addf %664, %665 : vector<2x24xf32>
    %667 = arith.mulf %654, %666 : vector<2x24xf32>
    %668 = arith.addf %663, %667 : vector<2x24xf32>
    %669 = math.tanh %668 : vector<2x24xf32>
    %cst_134 = arith.constant 1.000000e+00 : f32
    %670 = vector.broadcast %cst_134 : f32 to vector<2x24xf32>
    %671 = arith.subf %670, %662 : vector<2x24xf32>
    %672 = arith.mulf %671, %669 : vector<2x24xf32>
    %673 = arith.mulf %662, %614 : vector<2x24xf32>
    %674 = arith.addf %672, %673 : vector<2x24xf32>
    %675 = vector.extract_strided_slice %574 {offsets = [12, 0], sizes = [2, 72], strides = [1, 1]} : vector<16x72xf32> to vector<2x72xf32>
    %cst_135 = arith.constant dense<0.000000e+00> : vector<2x72xf32>
    %676 = tpu.matmul %644, %578, %cst_135 {dimension_numbers = #tpu.dot_dimension_numbers<[1], [0], [0], [1], [0, 0, 1, 1], [], []>} : vector<2x24xf32>, vector<24x72xf32>, vector<2x72xf32> -> vector<2x72xf32>
    %677 = vector.extract_strided_slice %675 {offsets = [0, 0], sizes = [2, 24], strides = [1, 1]} : vector<2x72xf32> to vector<2x24xf32>
    %678 = vector.extract_strided_slice %676 {offsets = [0, 0], sizes = [2, 24], strides = [1, 1]} : vector<2x72xf32> to vector<2x24xf32>
    %679 = arith.addf %677, %678 : vector<2x24xf32>
    %680 = arith.negf %679 : vector<2x24xf32>
    %681 = math.exp %680 : vector<2x24xf32>
    %cst_136 = arith.constant 1.000000e+00 : f32
    %682 = vector.broadcast %cst_136 : f32 to vector<2x24xf32>
    %683 = arith.addf %682, %681 : vector<2x24xf32>
    %684 = arith.divf %682, %683 : vector<2x24xf32>
    %685 = vector.extract_strided_slice %675 {offsets = [0, 24], sizes = [2, 24], strides = [1, 1]} : vector<2x72xf32> to vector<2x24xf32>
    %686 = vector.extract_strided_slice %676 {offsets = [0, 24], sizes = [2, 24], strides = [1, 1]} : vector<2x72xf32> to vector<2x24xf32>
    %687 = arith.addf %685, %686 : vector<2x24xf32>
    %688 = arith.negf %687 : vector<2x24xf32>
    %689 = math.exp %688 : vector<2x24xf32>
    %cst_137 = arith.constant 1.000000e+00 : f32
    %690 = vector.broadcast %cst_137 : f32 to vector<2x24xf32>
    %691 = arith.addf %690, %689 : vector<2x24xf32>
    %692 = arith.divf %690, %691 : vector<2x24xf32>
    %693 = vector.extract_strided_slice %675 {offsets = [0, 48], sizes = [2, 24], strides = [1, 1]} : vector<2x72xf32> to vector<2x24xf32>
    %694 = vector.extract_strided_slice %676 {offsets = [0, 48], sizes = [2, 24], strides = [1, 1]} : vector<2x72xf32> to vector<2x24xf32>
    %695 = vector.broadcast %582 : vector<1x24xf32> to vector<2x24xf32>
    %696 = arith.addf %694, %695 : vector<2x24xf32>
    %697 = arith.mulf %684, %696 : vector<2x24xf32>
    %698 = arith.addf %693, %697 : vector<2x24xf32>
    %699 = math.tanh %698 : vector<2x24xf32>
    %cst_138 = arith.constant 1.000000e+00 : f32
    %700 = vector.broadcast %cst_138 : f32 to vector<2x24xf32>
    %701 = arith.subf %700, %692 : vector<2x24xf32>
    %702 = arith.mulf %701, %699 : vector<2x24xf32>
    %703 = arith.mulf %692, %644 : vector<2x24xf32>
    %704 = arith.addf %702, %703 : vector<2x24xf32>
    %705 = vector.extract_strided_slice %567 {offsets = [4, 0], sizes = [2, 72], strides = [1, 1]} : vector<16x72xf32> to vector<2x72xf32>
    %cst_139 = arith.constant dense<0.000000e+00> : vector<2x72xf32>
    %706 = tpu.matmul %674, %576, %cst_139 {dimension_numbers = #tpu.dot_dimension_numbers<[1], [0], [0], [1], [0, 0, 1, 1], [], []>} : vector<2x24xf32>, vector<24x72xf32>, vector<2x72xf32> -> vector<2x72xf32>
    %707 = vector.extract_strided_slice %705 {offsets = [0, 0], sizes = [2, 24], strides = [1, 1]} : vector<2x72xf32> to vector<2x24xf32>
    %708 = vector.extract_strided_slice %706 {offsets = [0, 0], sizes = [2, 24], strides = [1, 1]} : vector<2x72xf32> to vector<2x24xf32>
    %709 = arith.addf %707, %708 : vector<2x24xf32>
    %710 = arith.negf %709 : vector<2x24xf32>
    %711 = math.exp %710 : vector<2x24xf32>
    %cst_140 = arith.constant 1.000000e+00 : f32
    %712 = vector.broadcast %cst_140 : f32 to vector<2x24xf32>
    %713 = arith.addf %712, %711 : vector<2x24xf32>
    %714 = arith.divf %712, %713 : vector<2x24xf32>
    %715 = vector.extract_strided_slice %705 {offsets = [0, 24], sizes = [2, 24], strides = [1, 1]} : vector<2x72xf32> to vector<2x24xf32>
    %716 = vector.extract_strided_slice %706 {offsets = [0, 24], sizes = [2, 24], strides = [1, 1]} : vector<2x72xf32> to vector<2x24xf32>
    %717 = arith.addf %715, %716 : vector<2x24xf32>
    %718 = arith.negf %717 : vector<2x24xf32>
    %719 = math.exp %718 : vector<2x24xf32>
    %cst_141 = arith.constant 1.000000e+00 : f32
    %720 = vector.broadcast %cst_141 : f32 to vector<2x24xf32>
    %721 = arith.addf %720, %719 : vector<2x24xf32>
    %722 = arith.divf %720, %721 : vector<2x24xf32>
    %723 = vector.extract_strided_slice %705 {offsets = [0, 48], sizes = [2, 24], strides = [1, 1]} : vector<2x72xf32> to vector<2x24xf32>
    %724 = vector.extract_strided_slice %706 {offsets = [0, 48], sizes = [2, 24], strides = [1, 1]} : vector<2x72xf32> to vector<2x24xf32>
    %725 = vector.broadcast %580 : vector<1x24xf32> to vector<2x24xf32>
    %726 = arith.addf %724, %725 : vector<2x24xf32>
    %727 = arith.mulf %714, %726 : vector<2x24xf32>
    %728 = arith.addf %723, %727 : vector<2x24xf32>
    %729 = math.tanh %728 : vector<2x24xf32>
    %cst_142 = arith.constant 1.000000e+00 : f32
    %730 = vector.broadcast %cst_142 : f32 to vector<2x24xf32>
    %731 = arith.subf %730, %722 : vector<2x24xf32>
    %732 = arith.mulf %731, %729 : vector<2x24xf32>
    %733 = arith.mulf %722, %674 : vector<2x24xf32>
    %734 = arith.addf %732, %733 : vector<2x24xf32>
    %735 = vector.extract_strided_slice %574 {offsets = [10, 0], sizes = [2, 72], strides = [1, 1]} : vector<16x72xf32> to vector<2x72xf32>
    %cst_143 = arith.constant dense<0.000000e+00> : vector<2x72xf32>
    %736 = tpu.matmul %704, %578, %cst_143 {dimension_numbers = #tpu.dot_dimension_numbers<[1], [0], [0], [1], [0, 0, 1, 1], [], []>} : vector<2x24xf32>, vector<24x72xf32>, vector<2x72xf32> -> vector<2x72xf32>
    %737 = vector.extract_strided_slice %735 {offsets = [0, 0], sizes = [2, 24], strides = [1, 1]} : vector<2x72xf32> to vector<2x24xf32>
    %738 = vector.extract_strided_slice %736 {offsets = [0, 0], sizes = [2, 24], strides = [1, 1]} : vector<2x72xf32> to vector<2x24xf32>
    %739 = arith.addf %737, %738 : vector<2x24xf32>
    %740 = arith.negf %739 : vector<2x24xf32>
    %741 = math.exp %740 : vector<2x24xf32>
    %cst_144 = arith.constant 1.000000e+00 : f32
    %742 = vector.broadcast %cst_144 : f32 to vector<2x24xf32>
    %743 = arith.addf %742, %741 : vector<2x24xf32>
    %744 = arith.divf %742, %743 : vector<2x24xf32>
    %745 = vector.extract_strided_slice %735 {offsets = [0, 24], sizes = [2, 24], strides = [1, 1]} : vector<2x72xf32> to vector<2x24xf32>
    %746 = vector.extract_strided_slice %736 {offsets = [0, 24], sizes = [2, 24], strides = [1, 1]} : vector<2x72xf32> to vector<2x24xf32>
    %747 = arith.addf %745, %746 : vector<2x24xf32>
    %748 = arith.negf %747 : vector<2x24xf32>
    %749 = math.exp %748 : vector<2x24xf32>
    %cst_145 = arith.constant 1.000000e+00 : f32
    %750 = vector.broadcast %cst_145 : f32 to vector<2x24xf32>
    %751 = arith.addf %750, %749 : vector<2x24xf32>
    %752 = arith.divf %750, %751 : vector<2x24xf32>
    %753 = vector.extract_strided_slice %735 {offsets = [0, 48], sizes = [2, 24], strides = [1, 1]} : vector<2x72xf32> to vector<2x24xf32>
    %754 = vector.extract_strided_slice %736 {offsets = [0, 48], sizes = [2, 24], strides = [1, 1]} : vector<2x72xf32> to vector<2x24xf32>
    %755 = vector.broadcast %582 : vector<1x24xf32> to vector<2x24xf32>
    %756 = arith.addf %754, %755 : vector<2x24xf32>
    %757 = arith.mulf %744, %756 : vector<2x24xf32>
    %758 = arith.addf %753, %757 : vector<2x24xf32>
    %759 = math.tanh %758 : vector<2x24xf32>
    %cst_146 = arith.constant 1.000000e+00 : f32
    %760 = vector.broadcast %cst_146 : f32 to vector<2x24xf32>
    %761 = arith.subf %760, %752 : vector<2x24xf32>
    %762 = arith.mulf %761, %759 : vector<2x24xf32>
    %763 = arith.mulf %752, %704 : vector<2x24xf32>
    %764 = arith.addf %762, %763 : vector<2x24xf32>
    %765 = vector.extract_strided_slice %567 {offsets = [6, 0], sizes = [2, 72], strides = [1, 1]} : vector<16x72xf32> to vector<2x72xf32>
    %cst_147 = arith.constant dense<0.000000e+00> : vector<2x72xf32>
    %766 = tpu.matmul %734, %576, %cst_147 {dimension_numbers = #tpu.dot_dimension_numbers<[1], [0], [0], [1], [0, 0, 1, 1], [], []>} : vector<2x24xf32>, vector<24x72xf32>, vector<2x72xf32> -> vector<2x72xf32>
    %767 = vector.extract_strided_slice %765 {offsets = [0, 0], sizes = [2, 24], strides = [1, 1]} : vector<2x72xf32> to vector<2x24xf32>
    %768 = vector.extract_strided_slice %766 {offsets = [0, 0], sizes = [2, 24], strides = [1, 1]} : vector<2x72xf32> to vector<2x24xf32>
    %769 = arith.addf %767, %768 : vector<2x24xf32>
    %770 = arith.negf %769 : vector<2x24xf32>
    %771 = math.exp %770 : vector<2x24xf32>
    %cst_148 = arith.constant 1.000000e+00 : f32
    %772 = vector.broadcast %cst_148 : f32 to vector<2x24xf32>
    %773 = arith.addf %772, %771 : vector<2x24xf32>
    %774 = arith.divf %772, %773 : vector<2x24xf32>
    %775 = vector.extract_strided_slice %765 {offsets = [0, 24], sizes = [2, 24], strides = [1, 1]} : vector<2x72xf32> to vector<2x24xf32>
    %776 = vector.extract_strided_slice %766 {offsets = [0, 24], sizes = [2, 24], strides = [1, 1]} : vector<2x72xf32> to vector<2x24xf32>
    %777 = arith.addf %775, %776 : vector<2x24xf32>
    %778 = arith.negf %777 : vector<2x24xf32>
    %779 = math.exp %778 : vector<2x24xf32>
    %cst_149 = arith.constant 1.000000e+00 : f32
    %780 = vector.broadcast %cst_149 : f32 to vector<2x24xf32>
    %781 = arith.addf %780, %779 : vector<2x24xf32>
    %782 = arith.divf %780, %781 : vector<2x24xf32>
    %783 = vector.extract_strided_slice %765 {offsets = [0, 48], sizes = [2, 24], strides = [1, 1]} : vector<2x72xf32> to vector<2x24xf32>
    %784 = vector.extract_strided_slice %766 {offsets = [0, 48], sizes = [2, 24], strides = [1, 1]} : vector<2x72xf32> to vector<2x24xf32>
    %785 = vector.broadcast %580 : vector<1x24xf32> to vector<2x24xf32>
    %786 = arith.addf %784, %785 : vector<2x24xf32>
    %787 = arith.mulf %774, %786 : vector<2x24xf32>
    %788 = arith.addf %783, %787 : vector<2x24xf32>
    %789 = math.tanh %788 : vector<2x24xf32>
    %cst_150 = arith.constant 1.000000e+00 : f32
    %790 = vector.broadcast %cst_150 : f32 to vector<2x24xf32>
    %791 = arith.subf %790, %782 : vector<2x24xf32>
    %792 = arith.mulf %791, %789 : vector<2x24xf32>
    %793 = arith.mulf %782, %734 : vector<2x24xf32>
    %794 = arith.addf %792, %793 : vector<2x24xf32>
    %795 = vector.extract_strided_slice %574 {offsets = [8, 0], sizes = [2, 72], strides = [1, 1]} : vector<16x72xf32> to vector<2x72xf32>
    %cst_151 = arith.constant dense<0.000000e+00> : vector<2x72xf32>
    %796 = tpu.matmul %764, %578, %cst_151 {dimension_numbers = #tpu.dot_dimension_numbers<[1], [0], [0], [1], [0, 0, 1, 1], [], []>} : vector<2x24xf32>, vector<24x72xf32>, vector<2x72xf32> -> vector<2x72xf32>
    %797 = vector.extract_strided_slice %795 {offsets = [0, 0], sizes = [2, 24], strides = [1, 1]} : vector<2x72xf32> to vector<2x24xf32>
    %798 = vector.extract_strided_slice %796 {offsets = [0, 0], sizes = [2, 24], strides = [1, 1]} : vector<2x72xf32> to vector<2x24xf32>
    %799 = arith.addf %797, %798 : vector<2x24xf32>
    %800 = arith.negf %799 : vector<2x24xf32>
    %801 = math.exp %800 : vector<2x24xf32>
    %cst_152 = arith.constant 1.000000e+00 : f32
    %802 = vector.broadcast %cst_152 : f32 to vector<2x24xf32>
    %803 = arith.addf %802, %801 : vector<2x24xf32>
    %804 = arith.divf %802, %803 : vector<2x24xf32>
    %805 = vector.extract_strided_slice %795 {offsets = [0, 24], sizes = [2, 24], strides = [1, 1]} : vector<2x72xf32> to vector<2x24xf32>
    %806 = vector.extract_strided_slice %796 {offsets = [0, 24], sizes = [2, 24], strides = [1, 1]} : vector<2x72xf32> to vector<2x24xf32>
    %807 = arith.addf %805, %806 : vector<2x24xf32>
    %808 = arith.negf %807 : vector<2x24xf32>
    %809 = math.exp %808 : vector<2x24xf32>
    %cst_153 = arith.constant 1.000000e+00 : f32
    %810 = vector.broadcast %cst_153 : f32 to vector<2x24xf32>
    %811 = arith.addf %810, %809 : vector<2x24xf32>
    %812 = arith.divf %810, %811 : vector<2x24xf32>
    %813 = vector.extract_strided_slice %795 {offsets = [0, 48], sizes = [2, 24], strides = [1, 1]} : vector<2x72xf32> to vector<2x24xf32>
    %814 = vector.extract_strided_slice %796 {offsets = [0, 48], sizes = [2, 24], strides = [1, 1]} : vector<2x72xf32> to vector<2x24xf32>
    %815 = vector.broadcast %582 : vector<1x24xf32> to vector<2x24xf32>
    %816 = arith.addf %814, %815 : vector<2x24xf32>
    %817 = arith.mulf %804, %816 : vector<2x24xf32>
    %818 = arith.addf %813, %817 : vector<2x24xf32>
    %819 = math.tanh %818 : vector<2x24xf32>
    %cst_154 = arith.constant 1.000000e+00 : f32
    %820 = vector.broadcast %cst_154 : f32 to vector<2x24xf32>
    %821 = arith.subf %820, %812 : vector<2x24xf32>
    %822 = arith.mulf %821, %819 : vector<2x24xf32>
    %823 = arith.mulf %812, %764 : vector<2x24xf32>
    %824 = arith.addf %822, %823 : vector<2x24xf32>
    %825 = vector.extract_strided_slice %567 {offsets = [8, 0], sizes = [2, 72], strides = [1, 1]} : vector<16x72xf32> to vector<2x72xf32>
    %cst_155 = arith.constant dense<0.000000e+00> : vector<2x72xf32>
    %826 = tpu.matmul %794, %576, %cst_155 {dimension_numbers = #tpu.dot_dimension_numbers<[1], [0], [0], [1], [0, 0, 1, 1], [], []>} : vector<2x24xf32>, vector<24x72xf32>, vector<2x72xf32> -> vector<2x72xf32>
    %827 = vector.extract_strided_slice %825 {offsets = [0, 0], sizes = [2, 24], strides = [1, 1]} : vector<2x72xf32> to vector<2x24xf32>
    %828 = vector.extract_strided_slice %826 {offsets = [0, 0], sizes = [2, 24], strides = [1, 1]} : vector<2x72xf32> to vector<2x24xf32>
    %829 = arith.addf %827, %828 : vector<2x24xf32>
    %830 = arith.negf %829 : vector<2x24xf32>
    %831 = math.exp %830 : vector<2x24xf32>
    %cst_156 = arith.constant 1.000000e+00 : f32
    %832 = vector.broadcast %cst_156 : f32 to vector<2x24xf32>
    %833 = arith.addf %832, %831 : vector<2x24xf32>
    %834 = arith.divf %832, %833 : vector<2x24xf32>
    %835 = vector.extract_strided_slice %825 {offsets = [0, 24], sizes = [2, 24], strides = [1, 1]} : vector<2x72xf32> to vector<2x24xf32>
    %836 = vector.extract_strided_slice %826 {offsets = [0, 24], sizes = [2, 24], strides = [1, 1]} : vector<2x72xf32> to vector<2x24xf32>
    %837 = arith.addf %835, %836 : vector<2x24xf32>
    %838 = arith.negf %837 : vector<2x24xf32>
    %839 = math.exp %838 : vector<2x24xf32>
    %cst_157 = arith.constant 1.000000e+00 : f32
    %840 = vector.broadcast %cst_157 : f32 to vector<2x24xf32>
    %841 = arith.addf %840, %839 : vector<2x24xf32>
    %842 = arith.divf %840, %841 : vector<2x24xf32>
    %843 = vector.extract_strided_slice %825 {offsets = [0, 48], sizes = [2, 24], strides = [1, 1]} : vector<2x72xf32> to vector<2x24xf32>
    %844 = vector.extract_strided_slice %826 {offsets = [0, 48], sizes = [2, 24], strides = [1, 1]} : vector<2x72xf32> to vector<2x24xf32>
    %845 = vector.broadcast %580 : vector<1x24xf32> to vector<2x24xf32>
    %846 = arith.addf %844, %845 : vector<2x24xf32>
    %847 = arith.mulf %834, %846 : vector<2x24xf32>
    %848 = arith.addf %843, %847 : vector<2x24xf32>
    %849 = math.tanh %848 : vector<2x24xf32>
    %cst_158 = arith.constant 1.000000e+00 : f32
    %850 = vector.broadcast %cst_158 : f32 to vector<2x24xf32>
    %851 = arith.subf %850, %842 : vector<2x24xf32>
    %852 = arith.mulf %851, %849 : vector<2x24xf32>
    %853 = arith.mulf %842, %794 : vector<2x24xf32>
    %854 = arith.addf %852, %853 : vector<2x24xf32>
    %855 = vector.extract_strided_slice %574 {offsets = [6, 0], sizes = [2, 72], strides = [1, 1]} : vector<16x72xf32> to vector<2x72xf32>
    %cst_159 = arith.constant dense<0.000000e+00> : vector<2x72xf32>
    %856 = tpu.matmul %824, %578, %cst_159 {dimension_numbers = #tpu.dot_dimension_numbers<[1], [0], [0], [1], [0, 0, 1, 1], [], []>} : vector<2x24xf32>, vector<24x72xf32>, vector<2x72xf32> -> vector<2x72xf32>
    %857 = vector.extract_strided_slice %855 {offsets = [0, 0], sizes = [2, 24], strides = [1, 1]} : vector<2x72xf32> to vector<2x24xf32>
    %858 = vector.extract_strided_slice %856 {offsets = [0, 0], sizes = [2, 24], strides = [1, 1]} : vector<2x72xf32> to vector<2x24xf32>
    %859 = arith.addf %857, %858 : vector<2x24xf32>
    %860 = arith.negf %859 : vector<2x24xf32>
    %861 = math.exp %860 : vector<2x24xf32>
    %cst_160 = arith.constant 1.000000e+00 : f32
    %862 = vector.broadcast %cst_160 : f32 to vector<2x24xf32>
    %863 = arith.addf %862, %861 : vector<2x24xf32>
    %864 = arith.divf %862, %863 : vector<2x24xf32>
    %865 = vector.extract_strided_slice %855 {offsets = [0, 24], sizes = [2, 24], strides = [1, 1]} : vector<2x72xf32> to vector<2x24xf32>
    %866 = vector.extract_strided_slice %856 {offsets = [0, 24], sizes = [2, 24], strides = [1, 1]} : vector<2x72xf32> to vector<2x24xf32>
    %867 = arith.addf %865, %866 : vector<2x24xf32>
    %868 = arith.negf %867 : vector<2x24xf32>
    %869 = math.exp %868 : vector<2x24xf32>
    %cst_161 = arith.constant 1.000000e+00 : f32
    %870 = vector.broadcast %cst_161 : f32 to vector<2x24xf32>
    %871 = arith.addf %870, %869 : vector<2x24xf32>
    %872 = arith.divf %870, %871 : vector<2x24xf32>
    %873 = vector.extract_strided_slice %855 {offsets = [0, 48], sizes = [2, 24], strides = [1, 1]} : vector<2x72xf32> to vector<2x24xf32>
    %874 = vector.extract_strided_slice %856 {offsets = [0, 48], sizes = [2, 24], strides = [1, 1]} : vector<2x72xf32> to vector<2x24xf32>
    %875 = vector.broadcast %582 : vector<1x24xf32> to vector<2x24xf32>
    %876 = arith.addf %874, %875 : vector<2x24xf32>
    %877 = arith.mulf %864, %876 : vector<2x24xf32>
    %878 = arith.addf %873, %877 : vector<2x24xf32>
    %879 = math.tanh %878 : vector<2x24xf32>
    %cst_162 = arith.constant 1.000000e+00 : f32
    %880 = vector.broadcast %cst_162 : f32 to vector<2x24xf32>
    %881 = arith.subf %880, %872 : vector<2x24xf32>
    %882 = arith.mulf %881, %879 : vector<2x24xf32>
    %883 = arith.mulf %872, %824 : vector<2x24xf32>
    %884 = arith.addf %882, %883 : vector<2x24xf32>
    %885 = vector.extract_strided_slice %567 {offsets = [10, 0], sizes = [2, 72], strides = [1, 1]} : vector<16x72xf32> to vector<2x72xf32>
    %cst_163 = arith.constant dense<0.000000e+00> : vector<2x72xf32>
    %886 = tpu.matmul %854, %576, %cst_163 {dimension_numbers = #tpu.dot_dimension_numbers<[1], [0], [0], [1], [0, 0, 1, 1], [], []>} : vector<2x24xf32>, vector<24x72xf32>, vector<2x72xf32> -> vector<2x72xf32>
    %887 = vector.extract_strided_slice %885 {offsets = [0, 0], sizes = [2, 24], strides = [1, 1]} : vector<2x72xf32> to vector<2x24xf32>
    %888 = vector.extract_strided_slice %886 {offsets = [0, 0], sizes = [2, 24], strides = [1, 1]} : vector<2x72xf32> to vector<2x24xf32>
    %889 = arith.addf %887, %888 : vector<2x24xf32>
    %890 = arith.negf %889 : vector<2x24xf32>
    %891 = math.exp %890 : vector<2x24xf32>
    %cst_164 = arith.constant 1.000000e+00 : f32
    %892 = vector.broadcast %cst_164 : f32 to vector<2x24xf32>
    %893 = arith.addf %892, %891 : vector<2x24xf32>
    %894 = arith.divf %892, %893 : vector<2x24xf32>
    %895 = vector.extract_strided_slice %885 {offsets = [0, 24], sizes = [2, 24], strides = [1, 1]} : vector<2x72xf32> to vector<2x24xf32>
    %896 = vector.extract_strided_slice %886 {offsets = [0, 24], sizes = [2, 24], strides = [1, 1]} : vector<2x72xf32> to vector<2x24xf32>
    %897 = arith.addf %895, %896 : vector<2x24xf32>
    %898 = arith.negf %897 : vector<2x24xf32>
    %899 = math.exp %898 : vector<2x24xf32>
    %cst_165 = arith.constant 1.000000e+00 : f32
    %900 = vector.broadcast %cst_165 : f32 to vector<2x24xf32>
    %901 = arith.addf %900, %899 : vector<2x24xf32>
    %902 = arith.divf %900, %901 : vector<2x24xf32>
    %903 = vector.extract_strided_slice %885 {offsets = [0, 48], sizes = [2, 24], strides = [1, 1]} : vector<2x72xf32> to vector<2x24xf32>
    %904 = vector.extract_strided_slice %886 {offsets = [0, 48], sizes = [2, 24], strides = [1, 1]} : vector<2x72xf32> to vector<2x24xf32>
    %905 = vector.broadcast %580 : vector<1x24xf32> to vector<2x24xf32>
    %906 = arith.addf %904, %905 : vector<2x24xf32>
    %907 = arith.mulf %894, %906 : vector<2x24xf32>
    %908 = arith.addf %903, %907 : vector<2x24xf32>
    %909 = math.tanh %908 : vector<2x24xf32>
    %cst_166 = arith.constant 1.000000e+00 : f32
    %910 = vector.broadcast %cst_166 : f32 to vector<2x24xf32>
    %911 = arith.subf %910, %902 : vector<2x24xf32>
    %912 = arith.mulf %911, %909 : vector<2x24xf32>
    %913 = arith.mulf %902, %854 : vector<2x24xf32>
    %914 = arith.addf %912, %913 : vector<2x24xf32>
    %915 = vector.extract_strided_slice %574 {offsets = [4, 0], sizes = [2, 72], strides = [1, 1]} : vector<16x72xf32> to vector<2x72xf32>
    %cst_167 = arith.constant dense<0.000000e+00> : vector<2x72xf32>
    %916 = tpu.matmul %884, %578, %cst_167 {dimension_numbers = #tpu.dot_dimension_numbers<[1], [0], [0], [1], [0, 0, 1, 1], [], []>} : vector<2x24xf32>, vector<24x72xf32>, vector<2x72xf32> -> vector<2x72xf32>
    %917 = vector.extract_strided_slice %915 {offsets = [0, 0], sizes = [2, 24], strides = [1, 1]} : vector<2x72xf32> to vector<2x24xf32>
    %918 = vector.extract_strided_slice %916 {offsets = [0, 0], sizes = [2, 24], strides = [1, 1]} : vector<2x72xf32> to vector<2x24xf32>
    %919 = arith.addf %917, %918 : vector<2x24xf32>
    %920 = arith.negf %919 : vector<2x24xf32>
    %921 = math.exp %920 : vector<2x24xf32>
    %cst_168 = arith.constant 1.000000e+00 : f32
    %922 = vector.broadcast %cst_168 : f32 to vector<2x24xf32>
    %923 = arith.addf %922, %921 : vector<2x24xf32>
    %924 = arith.divf %922, %923 : vector<2x24xf32>
    %925 = vector.extract_strided_slice %915 {offsets = [0, 24], sizes = [2, 24], strides = [1, 1]} : vector<2x72xf32> to vector<2x24xf32>
    %926 = vector.extract_strided_slice %916 {offsets = [0, 24], sizes = [2, 24], strides = [1, 1]} : vector<2x72xf32> to vector<2x24xf32>
    %927 = arith.addf %925, %926 : vector<2x24xf32>
    %928 = arith.negf %927 : vector<2x24xf32>
    %929 = math.exp %928 : vector<2x24xf32>
    %cst_169 = arith.constant 1.000000e+00 : f32
    %930 = vector.broadcast %cst_169 : f32 to vector<2x24xf32>
    %931 = arith.addf %930, %929 : vector<2x24xf32>
    %932 = arith.divf %930, %931 : vector<2x24xf32>
    %933 = vector.extract_strided_slice %915 {offsets = [0, 48], sizes = [2, 24], strides = [1, 1]} : vector<2x72xf32> to vector<2x24xf32>
    %934 = vector.extract_strided_slice %916 {offsets = [0, 48], sizes = [2, 24], strides = [1, 1]} : vector<2x72xf32> to vector<2x24xf32>
    %935 = vector.broadcast %582 : vector<1x24xf32> to vector<2x24xf32>
    %936 = arith.addf %934, %935 : vector<2x24xf32>
    %937 = arith.mulf %924, %936 : vector<2x24xf32>
    %938 = arith.addf %933, %937 : vector<2x24xf32>
    %939 = math.tanh %938 : vector<2x24xf32>
    %cst_170 = arith.constant 1.000000e+00 : f32
    %940 = vector.broadcast %cst_170 : f32 to vector<2x24xf32>
    %941 = arith.subf %940, %932 : vector<2x24xf32>
    %942 = arith.mulf %941, %939 : vector<2x24xf32>
    %943 = arith.mulf %932, %884 : vector<2x24xf32>
    %944 = arith.addf %942, %943 : vector<2x24xf32>
    %945 = vector.extract_strided_slice %567 {offsets = [12, 0], sizes = [2, 72], strides = [1, 1]} : vector<16x72xf32> to vector<2x72xf32>
    %cst_171 = arith.constant dense<0.000000e+00> : vector<2x72xf32>
    %946 = tpu.matmul %914, %576, %cst_171 {dimension_numbers = #tpu.dot_dimension_numbers<[1], [0], [0], [1], [0, 0, 1, 1], [], []>} : vector<2x24xf32>, vector<24x72xf32>, vector<2x72xf32> -> vector<2x72xf32>
    %947 = vector.extract_strided_slice %945 {offsets = [0, 0], sizes = [2, 24], strides = [1, 1]} : vector<2x72xf32> to vector<2x24xf32>
    %948 = vector.extract_strided_slice %946 {offsets = [0, 0], sizes = [2, 24], strides = [1, 1]} : vector<2x72xf32> to vector<2x24xf32>
    %949 = arith.addf %947, %948 : vector<2x24xf32>
    %950 = arith.negf %949 : vector<2x24xf32>
    %951 = math.exp %950 : vector<2x24xf32>
    %cst_172 = arith.constant 1.000000e+00 : f32
    %952 = vector.broadcast %cst_172 : f32 to vector<2x24xf32>
    %953 = arith.addf %952, %951 : vector<2x24xf32>
    %954 = arith.divf %952, %953 : vector<2x24xf32>
    %955 = vector.extract_strided_slice %945 {offsets = [0, 24], sizes = [2, 24], strides = [1, 1]} : vector<2x72xf32> to vector<2x24xf32>
    %956 = vector.extract_strided_slice %946 {offsets = [0, 24], sizes = [2, 24], strides = [1, 1]} : vector<2x72xf32> to vector<2x24xf32>
    %957 = arith.addf %955, %956 : vector<2x24xf32>
    %958 = arith.negf %957 : vector<2x24xf32>
    %959 = math.exp %958 : vector<2x24xf32>
    %cst_173 = arith.constant 1.000000e+00 : f32
    %960 = vector.broadcast %cst_173 : f32 to vector<2x24xf32>
    %961 = arith.addf %960, %959 : vector<2x24xf32>
    %962 = arith.divf %960, %961 : vector<2x24xf32>
    %963 = vector.extract_strided_slice %945 {offsets = [0, 48], sizes = [2, 24], strides = [1, 1]} : vector<2x72xf32> to vector<2x24xf32>
    %964 = vector.extract_strided_slice %946 {offsets = [0, 48], sizes = [2, 24], strides = [1, 1]} : vector<2x72xf32> to vector<2x24xf32>
    %965 = vector.broadcast %580 : vector<1x24xf32> to vector<2x24xf32>
    %966 = arith.addf %964, %965 : vector<2x24xf32>
    %967 = arith.mulf %954, %966 : vector<2x24xf32>
    %968 = arith.addf %963, %967 : vector<2x24xf32>
    %969 = math.tanh %968 : vector<2x24xf32>
    %cst_174 = arith.constant 1.000000e+00 : f32
    %970 = vector.broadcast %cst_174 : f32 to vector<2x24xf32>
    %971 = arith.subf %970, %962 : vector<2x24xf32>
    %972 = arith.mulf %971, %969 : vector<2x24xf32>
    %973 = arith.mulf %962, %914 : vector<2x24xf32>
    %974 = arith.addf %972, %973 : vector<2x24xf32>
    %975 = vector.extract_strided_slice %574 {offsets = [2, 0], sizes = [2, 72], strides = [1, 1]} : vector<16x72xf32> to vector<2x72xf32>
    %cst_175 = arith.constant dense<0.000000e+00> : vector<2x72xf32>
    %976 = tpu.matmul %944, %578, %cst_175 {dimension_numbers = #tpu.dot_dimension_numbers<[1], [0], [0], [1], [0, 0, 1, 1], [], []>} : vector<2x24xf32>, vector<24x72xf32>, vector<2x72xf32> -> vector<2x72xf32>
    %977 = vector.extract_strided_slice %975 {offsets = [0, 0], sizes = [2, 24], strides = [1, 1]} : vector<2x72xf32> to vector<2x24xf32>
    %978 = vector.extract_strided_slice %976 {offsets = [0, 0], sizes = [2, 24], strides = [1, 1]} : vector<2x72xf32> to vector<2x24xf32>
    %979 = arith.addf %977, %978 : vector<2x24xf32>
    %980 = arith.negf %979 : vector<2x24xf32>
    %981 = math.exp %980 : vector<2x24xf32>
    %cst_176 = arith.constant 1.000000e+00 : f32
    %982 = vector.broadcast %cst_176 : f32 to vector<2x24xf32>
    %983 = arith.addf %982, %981 : vector<2x24xf32>
    %984 = arith.divf %982, %983 : vector<2x24xf32>
    %985 = vector.extract_strided_slice %975 {offsets = [0, 24], sizes = [2, 24], strides = [1, 1]} : vector<2x72xf32> to vector<2x24xf32>
    %986 = vector.extract_strided_slice %976 {offsets = [0, 24], sizes = [2, 24], strides = [1, 1]} : vector<2x72xf32> to vector<2x24xf32>
    %987 = arith.addf %985, %986 : vector<2x24xf32>
    %988 = arith.negf %987 : vector<2x24xf32>
    %989 = math.exp %988 : vector<2x24xf32>
    %cst_177 = arith.constant 1.000000e+00 : f32
    %990 = vector.broadcast %cst_177 : f32 to vector<2x24xf32>
    %991 = arith.addf %990, %989 : vector<2x24xf32>
    %992 = arith.divf %990, %991 : vector<2x24xf32>
    %993 = vector.extract_strided_slice %975 {offsets = [0, 48], sizes = [2, 24], strides = [1, 1]} : vector<2x72xf32> to vector<2x24xf32>
    %994 = vector.extract_strided_slice %976 {offsets = [0, 48], sizes = [2, 24], strides = [1, 1]} : vector<2x72xf32> to vector<2x24xf32>
    %995 = vector.broadcast %582 : vector<1x24xf32> to vector<2x24xf32>
    %996 = arith.addf %994, %995 : vector<2x24xf32>
    %997 = arith.mulf %984, %996 : vector<2x24xf32>
    %998 = arith.addf %993, %997 : vector<2x24xf32>
    %999 = math.tanh %998 : vector<2x24xf32>
    %cst_178 = arith.constant 1.000000e+00 : f32
    %1000 = vector.broadcast %cst_178 : f32 to vector<2x24xf32>
    %1001 = arith.subf %1000, %992 : vector<2x24xf32>
    %1002 = arith.mulf %1001, %999 : vector<2x24xf32>
    %1003 = arith.mulf %992, %944 : vector<2x24xf32>
    %1004 = arith.addf %1002, %1003 : vector<2x24xf32>
    %1005 = vector.extract_strided_slice %567 {offsets = [14, 0], sizes = [2, 72], strides = [1, 1]} : vector<16x72xf32> to vector<2x72xf32>
    %cst_179 = arith.constant dense<0.000000e+00> : vector<2x72xf32>
    %1006 = tpu.matmul %974, %576, %cst_179 {dimension_numbers = #tpu.dot_dimension_numbers<[1], [0], [0], [1], [0, 0, 1, 1], [], []>} : vector<2x24xf32>, vector<24x72xf32>, vector<2x72xf32> -> vector<2x72xf32>
    %1007 = vector.extract_strided_slice %1005 {offsets = [0, 0], sizes = [2, 24], strides = [1, 1]} : vector<2x72xf32> to vector<2x24xf32>
    %1008 = vector.extract_strided_slice %1006 {offsets = [0, 0], sizes = [2, 24], strides = [1, 1]} : vector<2x72xf32> to vector<2x24xf32>
    %1009 = arith.addf %1007, %1008 : vector<2x24xf32>
    %1010 = arith.negf %1009 : vector<2x24xf32>
    %1011 = math.exp %1010 : vector<2x24xf32>
    %cst_180 = arith.constant 1.000000e+00 : f32
    %1012 = vector.broadcast %cst_180 : f32 to vector<2x24xf32>
    %1013 = arith.addf %1012, %1011 : vector<2x24xf32>
    %1014 = arith.divf %1012, %1013 : vector<2x24xf32>
    %1015 = vector.extract_strided_slice %1005 {offsets = [0, 24], sizes = [2, 24], strides = [1, 1]} : vector<2x72xf32> to vector<2x24xf32>
    %1016 = vector.extract_strided_slice %1006 {offsets = [0, 24], sizes = [2, 24], strides = [1, 1]} : vector<2x72xf32> to vector<2x24xf32>
    %1017 = arith.addf %1015, %1016 : vector<2x24xf32>
    %1018 = arith.negf %1017 : vector<2x24xf32>
    %1019 = math.exp %1018 : vector<2x24xf32>
    %cst_181 = arith.constant 1.000000e+00 : f32
    %1020 = vector.broadcast %cst_181 : f32 to vector<2x24xf32>
    %1021 = arith.addf %1020, %1019 : vector<2x24xf32>
    %1022 = arith.divf %1020, %1021 : vector<2x24xf32>
    %1023 = vector.extract_strided_slice %1005 {offsets = [0, 48], sizes = [2, 24], strides = [1, 1]} : vector<2x72xf32> to vector<2x24xf32>
    %1024 = vector.extract_strided_slice %1006 {offsets = [0, 48], sizes = [2, 24], strides = [1, 1]} : vector<2x72xf32> to vector<2x24xf32>
    %1025 = vector.broadcast %580 : vector<1x24xf32> to vector<2x24xf32>
    %1026 = arith.addf %1024, %1025 : vector<2x24xf32>
    %1027 = arith.mulf %1014, %1026 : vector<2x24xf32>
    %1028 = arith.addf %1023, %1027 : vector<2x24xf32>
    %1029 = math.tanh %1028 : vector<2x24xf32>
    %cst_182 = arith.constant 1.000000e+00 : f32
    %1030 = vector.broadcast %cst_182 : f32 to vector<2x24xf32>
    %1031 = arith.subf %1030, %1022 : vector<2x24xf32>
    %1032 = arith.mulf %1031, %1029 : vector<2x24xf32>
    %1033 = arith.mulf %1022, %974 : vector<2x24xf32>
    %1034 = arith.addf %1032, %1033 : vector<2x24xf32>
    %1035 = vector.extract_strided_slice %574 {offsets = [0, 0], sizes = [2, 72], strides = [1, 1]} : vector<16x72xf32> to vector<2x72xf32>
    %cst_183 = arith.constant dense<0.000000e+00> : vector<2x72xf32>
    %1036 = tpu.matmul %1004, %578, %cst_183 {dimension_numbers = #tpu.dot_dimension_numbers<[1], [0], [0], [1], [0, 0, 1, 1], [], []>} : vector<2x24xf32>, vector<24x72xf32>, vector<2x72xf32> -> vector<2x72xf32>
    %1037 = vector.extract_strided_slice %1035 {offsets = [0, 0], sizes = [2, 24], strides = [1, 1]} : vector<2x72xf32> to vector<2x24xf32>
    %1038 = vector.extract_strided_slice %1036 {offsets = [0, 0], sizes = [2, 24], strides = [1, 1]} : vector<2x72xf32> to vector<2x24xf32>
    %1039 = arith.addf %1037, %1038 : vector<2x24xf32>
    %1040 = arith.negf %1039 : vector<2x24xf32>
    %1041 = math.exp %1040 : vector<2x24xf32>
    %cst_184 = arith.constant 1.000000e+00 : f32
    %1042 = vector.broadcast %cst_184 : f32 to vector<2x24xf32>
    %1043 = arith.addf %1042, %1041 : vector<2x24xf32>
    %1044 = arith.divf %1042, %1043 : vector<2x24xf32>
    %1045 = vector.extract_strided_slice %1035 {offsets = [0, 24], sizes = [2, 24], strides = [1, 1]} : vector<2x72xf32> to vector<2x24xf32>
    %1046 = vector.extract_strided_slice %1036 {offsets = [0, 24], sizes = [2, 24], strides = [1, 1]} : vector<2x72xf32> to vector<2x24xf32>
    %1047 = arith.addf %1045, %1046 : vector<2x24xf32>
    %1048 = arith.negf %1047 : vector<2x24xf32>
    %1049 = math.exp %1048 : vector<2x24xf32>
    %cst_185 = arith.constant 1.000000e+00 : f32
    %1050 = vector.broadcast %cst_185 : f32 to vector<2x24xf32>
    %1051 = arith.addf %1050, %1049 : vector<2x24xf32>
    %1052 = arith.divf %1050, %1051 : vector<2x24xf32>
    %1053 = vector.extract_strided_slice %1035 {offsets = [0, 48], sizes = [2, 24], strides = [1, 1]} : vector<2x72xf32> to vector<2x24xf32>
    %1054 = vector.extract_strided_slice %1036 {offsets = [0, 48], sizes = [2, 24], strides = [1, 1]} : vector<2x72xf32> to vector<2x24xf32>
    %1055 = vector.broadcast %582 : vector<1x24xf32> to vector<2x24xf32>
    %1056 = arith.addf %1054, %1055 : vector<2x24xf32>
    %1057 = arith.mulf %1044, %1056 : vector<2x24xf32>
    %1058 = arith.addf %1053, %1057 : vector<2x24xf32>
    %1059 = math.tanh %1058 : vector<2x24xf32>
    %cst_186 = arith.constant 1.000000e+00 : f32
    %1060 = vector.broadcast %cst_186 : f32 to vector<2x24xf32>
    %1061 = arith.subf %1060, %1052 : vector<2x24xf32>
    %1062 = arith.mulf %1061, %1059 : vector<2x24xf32>
    %1063 = arith.mulf %1052, %1004 : vector<2x24xf32>
    %1064 = arith.addf %1062, %1063 : vector<2x24xf32>
    %1065 = tpu.concatenate %614, %674, %734, %794, %854, %914, %974, %1034 in 0 : vector<2x24xf32>, vector<2x24xf32>, vector<2x24xf32>, vector<2x24xf32>, vector<2x24xf32>, vector<2x24xf32>, vector<2x24xf32>, vector<2x24xf32> -> vector<16x24xf32>
    %1066 = tpu.concatenate %1064, %1004, %944, %884, %824, %764, %704, %644 in 0 : vector<2x24xf32>, vector<2x24xf32>, vector<2x24xf32>, vector<2x24xf32>, vector<2x24xf32>, vector<2x24xf32>, vector<2x24xf32>, vector<2x24xf32> -> vector<16x24xf32>
    %1067 = tpu.concatenate %1065, %1066 in 1 : vector<16x24xf32>, vector<16x24xf32> -> vector<16x48xf32>
    %c0_187 = arith.constant 0 : index
    %c0_188 = arith.constant 0 : index
    %c0_189 = arith.constant 0 : index
    %1068 = vector.load %arg17[%c0_187, %c0_188, %c0_189] : memref<2x48x72xf32, #tpu.memory_space<vmem>>, vector<2x48x72xf32>
    %c0_190 = arith.constant 0 : index
    %c0_191 = arith.constant 0 : index
    %c0_192 = arith.constant 0 : index
    %1069 = vector.load %arg18[%c0_190, %c0_191, %c0_192] : memref<2x24x72xf32, #tpu.memory_space<vmem>>, vector<2x24x72xf32>
    %c0_193 = arith.constant 0 : index
    %c0_194 = arith.constant 0 : index
    %c0_195 = arith.constant 0 : index
    %1070 = vector.load %arg19[%c0_193, %c0_194, %c0_195] : memref<2x1x72xf32, #tpu.memory_space<vmem>>, vector<2x1x72xf32>
    %c0_196 = arith.constant 0 : index
    %c0_197 = arith.constant 0 : index
    %c0_198 = arith.constant 0 : index
    %1071 = vector.load %arg20[%c0_196, %c0_197, %c0_198] : memref<2x1x24xf32, #tpu.memory_space<vmem>>, vector<2x1x24xf32>
    %1072 = vector.extract_strided_slice %1068 {offsets = [0, 0, 0], sizes = [1, 48, 72], strides = [1, 1, 1]} : vector<2x48x72xf32> to vector<1x48x72xf32>
    %1073 = vector.shape_cast %1072 : vector<1x48x72xf32> to vector<48x72xf32>
    %cst_199 = arith.constant dense<0.000000e+00> : vector<16x72xf32>
    %1074 = tpu.matmul %1067, %1073, %cst_199 {dimension_numbers = #tpu.dot_dimension_numbers<[1], [0], [0], [1], [0, 0, 1, 1], [], []>} : vector<16x48xf32>, vector<48x72xf32>, vector<16x72xf32> -> vector<16x72xf32>
    %1075 = vector.extract_strided_slice %1070 {offsets = [0, 0, 0], sizes = [1, 1, 72], strides = [1, 1, 1]} : vector<2x1x72xf32> to vector<1x1x72xf32>
    %1076 = vector.shape_cast %1075 : vector<1x1x72xf32> to vector<1x72xf32>
    %1077 = vector.broadcast %1076 : vector<1x72xf32> to vector<16x72xf32>
    %1078 = arith.addf %1074, %1077 : vector<16x72xf32>
    %1079 = vector.extract_strided_slice %1068 {offsets = [1, 0, 0], sizes = [1, 48, 72], strides = [1, 1, 1]} : vector<2x48x72xf32> to vector<1x48x72xf32>
    %1080 = vector.shape_cast %1079 : vector<1x48x72xf32> to vector<48x72xf32>
    %cst_200 = arith.constant dense<0.000000e+00> : vector<16x72xf32>
    %1081 = tpu.matmul %1067, %1080, %cst_200 {dimension_numbers = #tpu.dot_dimension_numbers<[1], [0], [0], [1], [0, 0, 1, 1], [], []>} : vector<16x48xf32>, vector<48x72xf32>, vector<16x72xf32> -> vector<16x72xf32>
    %1082 = vector.extract_strided_slice %1070 {offsets = [1, 0, 0], sizes = [1, 1, 72], strides = [1, 1, 1]} : vector<2x1x72xf32> to vector<1x1x72xf32>
    %1083 = vector.shape_cast %1082 : vector<1x1x72xf32> to vector<1x72xf32>
    %1084 = vector.broadcast %1083 : vector<1x72xf32> to vector<16x72xf32>
    %1085 = arith.addf %1081, %1084 : vector<16x72xf32>
    %1086 = vector.extract_strided_slice %1069 {offsets = [0, 0, 0], sizes = [1, 24, 72], strides = [1, 1, 1]} : vector<2x24x72xf32> to vector<1x24x72xf32>
    %1087 = vector.shape_cast %1086 : vector<1x24x72xf32> to vector<24x72xf32>
    %1088 = vector.extract_strided_slice %1069 {offsets = [1, 0, 0], sizes = [1, 24, 72], strides = [1, 1, 1]} : vector<2x24x72xf32> to vector<1x24x72xf32>
    %1089 = vector.shape_cast %1088 : vector<1x24x72xf32> to vector<24x72xf32>
    %1090 = vector.extract_strided_slice %1071 {offsets = [0, 0, 0], sizes = [1, 1, 24], strides = [1, 1, 1]} : vector<2x1x24xf32> to vector<1x1x24xf32>
    %1091 = vector.shape_cast %1090 : vector<1x1x24xf32> to vector<1x24xf32>
    %1092 = vector.extract_strided_slice %1071 {offsets = [1, 0, 0], sizes = [1, 1, 24], strides = [1, 1, 1]} : vector<2x1x24xf32> to vector<1x1x24xf32>
    %1093 = vector.shape_cast %1092 : vector<1x1x24xf32> to vector<1x24xf32>
    %cst_201 = arith.constant 0.000000e+00 : f32
    %1094 = vector.broadcast %cst_201 : f32 to vector<2x24xf32>
    %cst_202 = arith.constant 0.000000e+00 : f32
    %1095 = vector.broadcast %cst_202 : f32 to vector<2x24xf32>
    %1096 = vector.extract_strided_slice %1078 {offsets = [0, 0], sizes = [2, 72], strides = [1, 1]} : vector<16x72xf32> to vector<2x72xf32>
    %cst_203 = arith.constant dense<0.000000e+00> : vector<2x72xf32>
    %1097 = tpu.matmul %1094, %1087, %cst_203 {dimension_numbers = #tpu.dot_dimension_numbers<[1], [0], [0], [1], [0, 0, 1, 1], [], []>} : vector<2x24xf32>, vector<24x72xf32>, vector<2x72xf32> -> vector<2x72xf32>
    %1098 = vector.extract_strided_slice %1096 {offsets = [0, 0], sizes = [2, 24], strides = [1, 1]} : vector<2x72xf32> to vector<2x24xf32>
    %1099 = vector.extract_strided_slice %1097 {offsets = [0, 0], sizes = [2, 24], strides = [1, 1]} : vector<2x72xf32> to vector<2x24xf32>
    %1100 = arith.addf %1098, %1099 : vector<2x24xf32>
    %1101 = arith.negf %1100 : vector<2x24xf32>
    %1102 = math.exp %1101 : vector<2x24xf32>
    %cst_204 = arith.constant 1.000000e+00 : f32
    %1103 = vector.broadcast %cst_204 : f32 to vector<2x24xf32>
    %1104 = arith.addf %1103, %1102 : vector<2x24xf32>
    %1105 = arith.divf %1103, %1104 : vector<2x24xf32>
    %1106 = vector.extract_strided_slice %1096 {offsets = [0, 24], sizes = [2, 24], strides = [1, 1]} : vector<2x72xf32> to vector<2x24xf32>
    %1107 = vector.extract_strided_slice %1097 {offsets = [0, 24], sizes = [2, 24], strides = [1, 1]} : vector<2x72xf32> to vector<2x24xf32>
    %1108 = arith.addf %1106, %1107 : vector<2x24xf32>
    %1109 = arith.negf %1108 : vector<2x24xf32>
    %1110 = math.exp %1109 : vector<2x24xf32>
    %cst_205 = arith.constant 1.000000e+00 : f32
    %1111 = vector.broadcast %cst_205 : f32 to vector<2x24xf32>
    %1112 = arith.addf %1111, %1110 : vector<2x24xf32>
    %1113 = arith.divf %1111, %1112 : vector<2x24xf32>
    %1114 = vector.extract_strided_slice %1096 {offsets = [0, 48], sizes = [2, 24], strides = [1, 1]} : vector<2x72xf32> to vector<2x24xf32>
    %1115 = vector.extract_strided_slice %1097 {offsets = [0, 48], sizes = [2, 24], strides = [1, 1]} : vector<2x72xf32> to vector<2x24xf32>
    %1116 = vector.broadcast %1091 : vector<1x24xf32> to vector<2x24xf32>
    %1117 = arith.addf %1115, %1116 : vector<2x24xf32>
    %1118 = arith.mulf %1105, %1117 : vector<2x24xf32>
    %1119 = arith.addf %1114, %1118 : vector<2x24xf32>
    %1120 = math.tanh %1119 : vector<2x24xf32>
    %cst_206 = arith.constant 1.000000e+00 : f32
    %1121 = vector.broadcast %cst_206 : f32 to vector<2x24xf32>
    %1122 = arith.subf %1121, %1113 : vector<2x24xf32>
    %1123 = arith.mulf %1122, %1120 : vector<2x24xf32>
    %1124 = arith.mulf %1113, %1094 : vector<2x24xf32>
    %1125 = arith.addf %1123, %1124 : vector<2x24xf32>
    %1126 = vector.extract_strided_slice %1085 {offsets = [14, 0], sizes = [2, 72], strides = [1, 1]} : vector<16x72xf32> to vector<2x72xf32>
    %cst_207 = arith.constant dense<0.000000e+00> : vector<2x72xf32>
    %1127 = tpu.matmul %1095, %1089, %cst_207 {dimension_numbers = #tpu.dot_dimension_numbers<[1], [0], [0], [1], [0, 0, 1, 1], [], []>} : vector<2x24xf32>, vector<24x72xf32>, vector<2x72xf32> -> vector<2x72xf32>
    %1128 = vector.extract_strided_slice %1126 {offsets = [0, 0], sizes = [2, 24], strides = [1, 1]} : vector<2x72xf32> to vector<2x24xf32>
    %1129 = vector.extract_strided_slice %1127 {offsets = [0, 0], sizes = [2, 24], strides = [1, 1]} : vector<2x72xf32> to vector<2x24xf32>
    %1130 = arith.addf %1128, %1129 : vector<2x24xf32>
    %1131 = arith.negf %1130 : vector<2x24xf32>
    %1132 = math.exp %1131 : vector<2x24xf32>
    %cst_208 = arith.constant 1.000000e+00 : f32
    %1133 = vector.broadcast %cst_208 : f32 to vector<2x24xf32>
    %1134 = arith.addf %1133, %1132 : vector<2x24xf32>
    %1135 = arith.divf %1133, %1134 : vector<2x24xf32>
    %1136 = vector.extract_strided_slice %1126 {offsets = [0, 24], sizes = [2, 24], strides = [1, 1]} : vector<2x72xf32> to vector<2x24xf32>
    %1137 = vector.extract_strided_slice %1127 {offsets = [0, 24], sizes = [2, 24], strides = [1, 1]} : vector<2x72xf32> to vector<2x24xf32>
    %1138 = arith.addf %1136, %1137 : vector<2x24xf32>
    %1139 = arith.negf %1138 : vector<2x24xf32>
    %1140 = math.exp %1139 : vector<2x24xf32>
    %cst_209 = arith.constant 1.000000e+00 : f32
    %1141 = vector.broadcast %cst_209 : f32 to vector<2x24xf32>
    %1142 = arith.addf %1141, %1140 : vector<2x24xf32>
    %1143 = arith.divf %1141, %1142 : vector<2x24xf32>
    %1144 = vector.extract_strided_slice %1126 {offsets = [0, 48], sizes = [2, 24], strides = [1, 1]} : vector<2x72xf32> to vector<2x24xf32>
    %1145 = vector.extract_strided_slice %1127 {offsets = [0, 48], sizes = [2, 24], strides = [1, 1]} : vector<2x72xf32> to vector<2x24xf32>
    %1146 = vector.broadcast %1093 : vector<1x24xf32> to vector<2x24xf32>
    %1147 = arith.addf %1145, %1146 : vector<2x24xf32>
    %1148 = arith.mulf %1135, %1147 : vector<2x24xf32>
    %1149 = arith.addf %1144, %1148 : vector<2x24xf32>
    %1150 = math.tanh %1149 : vector<2x24xf32>
    %cst_210 = arith.constant 1.000000e+00 : f32
    %1151 = vector.broadcast %cst_210 : f32 to vector<2x24xf32>
    %1152 = arith.subf %1151, %1143 : vector<2x24xf32>
    %1153 = arith.mulf %1152, %1150 : vector<2x24xf32>
    %1154 = arith.mulf %1143, %1095 : vector<2x24xf32>
    %1155 = arith.addf %1153, %1154 : vector<2x24xf32>
    %1156 = vector.extract_strided_slice %1078 {offsets = [2, 0], sizes = [2, 72], strides = [1, 1]} : vector<16x72xf32> to vector<2x72xf32>
    %cst_211 = arith.constant dense<0.000000e+00> : vector<2x72xf32>
    %1157 = tpu.matmul %1125, %1087, %cst_211 {dimension_numbers = #tpu.dot_dimension_numbers<[1], [0], [0], [1], [0, 0, 1, 1], [], []>} : vector<2x24xf32>, vector<24x72xf32>, vector<2x72xf32> -> vector<2x72xf32>
    %1158 = vector.extract_strided_slice %1156 {offsets = [0, 0], sizes = [2, 24], strides = [1, 1]} : vector<2x72xf32> to vector<2x24xf32>
    %1159 = vector.extract_strided_slice %1157 {offsets = [0, 0], sizes = [2, 24], strides = [1, 1]} : vector<2x72xf32> to vector<2x24xf32>
    %1160 = arith.addf %1158, %1159 : vector<2x24xf32>
    %1161 = arith.negf %1160 : vector<2x24xf32>
    %1162 = math.exp %1161 : vector<2x24xf32>
    %cst_212 = arith.constant 1.000000e+00 : f32
    %1163 = vector.broadcast %cst_212 : f32 to vector<2x24xf32>
    %1164 = arith.addf %1163, %1162 : vector<2x24xf32>
    %1165 = arith.divf %1163, %1164 : vector<2x24xf32>
    %1166 = vector.extract_strided_slice %1156 {offsets = [0, 24], sizes = [2, 24], strides = [1, 1]} : vector<2x72xf32> to vector<2x24xf32>
    %1167 = vector.extract_strided_slice %1157 {offsets = [0, 24], sizes = [2, 24], strides = [1, 1]} : vector<2x72xf32> to vector<2x24xf32>
    %1168 = arith.addf %1166, %1167 : vector<2x24xf32>
    %1169 = arith.negf %1168 : vector<2x24xf32>
    %1170 = math.exp %1169 : vector<2x24xf32>
    %cst_213 = arith.constant 1.000000e+00 : f32
    %1171 = vector.broadcast %cst_213 : f32 to vector<2x24xf32>
    %1172 = arith.addf %1171, %1170 : vector<2x24xf32>
    %1173 = arith.divf %1171, %1172 : vector<2x24xf32>
    %1174 = vector.extract_strided_slice %1156 {offsets = [0, 48], sizes = [2, 24], strides = [1, 1]} : vector<2x72xf32> to vector<2x24xf32>
    %1175 = vector.extract_strided_slice %1157 {offsets = [0, 48], sizes = [2, 24], strides = [1, 1]} : vector<2x72xf32> to vector<2x24xf32>
    %1176 = vector.broadcast %1091 : vector<1x24xf32> to vector<2x24xf32>
    %1177 = arith.addf %1175, %1176 : vector<2x24xf32>
    %1178 = arith.mulf %1165, %1177 : vector<2x24xf32>
    %1179 = arith.addf %1174, %1178 : vector<2x24xf32>
    %1180 = math.tanh %1179 : vector<2x24xf32>
    %cst_214 = arith.constant 1.000000e+00 : f32
    %1181 = vector.broadcast %cst_214 : f32 to vector<2x24xf32>
    %1182 = arith.subf %1181, %1173 : vector<2x24xf32>
    %1183 = arith.mulf %1182, %1180 : vector<2x24xf32>
    %1184 = arith.mulf %1173, %1125 : vector<2x24xf32>
    %1185 = arith.addf %1183, %1184 : vector<2x24xf32>
    %1186 = vector.extract_strided_slice %1085 {offsets = [12, 0], sizes = [2, 72], strides = [1, 1]} : vector<16x72xf32> to vector<2x72xf32>
    %cst_215 = arith.constant dense<0.000000e+00> : vector<2x72xf32>
    %1187 = tpu.matmul %1155, %1089, %cst_215 {dimension_numbers = #tpu.dot_dimension_numbers<[1], [0], [0], [1], [0, 0, 1, 1], [], []>} : vector<2x24xf32>, vector<24x72xf32>, vector<2x72xf32> -> vector<2x72xf32>
    %1188 = vector.extract_strided_slice %1186 {offsets = [0, 0], sizes = [2, 24], strides = [1, 1]} : vector<2x72xf32> to vector<2x24xf32>
    %1189 = vector.extract_strided_slice %1187 {offsets = [0, 0], sizes = [2, 24], strides = [1, 1]} : vector<2x72xf32> to vector<2x24xf32>
    %1190 = arith.addf %1188, %1189 : vector<2x24xf32>
    %1191 = arith.negf %1190 : vector<2x24xf32>
    %1192 = math.exp %1191 : vector<2x24xf32>
    %cst_216 = arith.constant 1.000000e+00 : f32
    %1193 = vector.broadcast %cst_216 : f32 to vector<2x24xf32>
    %1194 = arith.addf %1193, %1192 : vector<2x24xf32>
    %1195 = arith.divf %1193, %1194 : vector<2x24xf32>
    %1196 = vector.extract_strided_slice %1186 {offsets = [0, 24], sizes = [2, 24], strides = [1, 1]} : vector<2x72xf32> to vector<2x24xf32>
    %1197 = vector.extract_strided_slice %1187 {offsets = [0, 24], sizes = [2, 24], strides = [1, 1]} : vector<2x72xf32> to vector<2x24xf32>
    %1198 = arith.addf %1196, %1197 : vector<2x24xf32>
    %1199 = arith.negf %1198 : vector<2x24xf32>
    %1200 = math.exp %1199 : vector<2x24xf32>
    %cst_217 = arith.constant 1.000000e+00 : f32
    %1201 = vector.broadcast %cst_217 : f32 to vector<2x24xf32>
    %1202 = arith.addf %1201, %1200 : vector<2x24xf32>
    %1203 = arith.divf %1201, %1202 : vector<2x24xf32>
    %1204 = vector.extract_strided_slice %1186 {offsets = [0, 48], sizes = [2, 24], strides = [1, 1]} : vector<2x72xf32> to vector<2x24xf32>
    %1205 = vector.extract_strided_slice %1187 {offsets = [0, 48], sizes = [2, 24], strides = [1, 1]} : vector<2x72xf32> to vector<2x24xf32>
    %1206 = vector.broadcast %1093 : vector<1x24xf32> to vector<2x24xf32>
    %1207 = arith.addf %1205, %1206 : vector<2x24xf32>
    %1208 = arith.mulf %1195, %1207 : vector<2x24xf32>
    %1209 = arith.addf %1204, %1208 : vector<2x24xf32>
    %1210 = math.tanh %1209 : vector<2x24xf32>
    %cst_218 = arith.constant 1.000000e+00 : f32
    %1211 = vector.broadcast %cst_218 : f32 to vector<2x24xf32>
    %1212 = arith.subf %1211, %1203 : vector<2x24xf32>
    %1213 = arith.mulf %1212, %1210 : vector<2x24xf32>
    %1214 = arith.mulf %1203, %1155 : vector<2x24xf32>
    %1215 = arith.addf %1213, %1214 : vector<2x24xf32>
    %1216 = vector.extract_strided_slice %1078 {offsets = [4, 0], sizes = [2, 72], strides = [1, 1]} : vector<16x72xf32> to vector<2x72xf32>
    %cst_219 = arith.constant dense<0.000000e+00> : vector<2x72xf32>
    %1217 = tpu.matmul %1185, %1087, %cst_219 {dimension_numbers = #tpu.dot_dimension_numbers<[1], [0], [0], [1], [0, 0, 1, 1], [], []>} : vector<2x24xf32>, vector<24x72xf32>, vector<2x72xf32> -> vector<2x72xf32>
    %1218 = vector.extract_strided_slice %1216 {offsets = [0, 0], sizes = [2, 24], strides = [1, 1]} : vector<2x72xf32> to vector<2x24xf32>
    %1219 = vector.extract_strided_slice %1217 {offsets = [0, 0], sizes = [2, 24], strides = [1, 1]} : vector<2x72xf32> to vector<2x24xf32>
    %1220 = arith.addf %1218, %1219 : vector<2x24xf32>
    %1221 = arith.negf %1220 : vector<2x24xf32>
    %1222 = math.exp %1221 : vector<2x24xf32>
    %cst_220 = arith.constant 1.000000e+00 : f32
    %1223 = vector.broadcast %cst_220 : f32 to vector<2x24xf32>
    %1224 = arith.addf %1223, %1222 : vector<2x24xf32>
    %1225 = arith.divf %1223, %1224 : vector<2x24xf32>
    %1226 = vector.extract_strided_slice %1216 {offsets = [0, 24], sizes = [2, 24], strides = [1, 1]} : vector<2x72xf32> to vector<2x24xf32>
    %1227 = vector.extract_strided_slice %1217 {offsets = [0, 24], sizes = [2, 24], strides = [1, 1]} : vector<2x72xf32> to vector<2x24xf32>
    %1228 = arith.addf %1226, %1227 : vector<2x24xf32>
    %1229 = arith.negf %1228 : vector<2x24xf32>
    %1230 = math.exp %1229 : vector<2x24xf32>
    %cst_221 = arith.constant 1.000000e+00 : f32
    %1231 = vector.broadcast %cst_221 : f32 to vector<2x24xf32>
    %1232 = arith.addf %1231, %1230 : vector<2x24xf32>
    %1233 = arith.divf %1231, %1232 : vector<2x24xf32>
    %1234 = vector.extract_strided_slice %1216 {offsets = [0, 48], sizes = [2, 24], strides = [1, 1]} : vector<2x72xf32> to vector<2x24xf32>
    %1235 = vector.extract_strided_slice %1217 {offsets = [0, 48], sizes = [2, 24], strides = [1, 1]} : vector<2x72xf32> to vector<2x24xf32>
    %1236 = vector.broadcast %1091 : vector<1x24xf32> to vector<2x24xf32>
    %1237 = arith.addf %1235, %1236 : vector<2x24xf32>
    %1238 = arith.mulf %1225, %1237 : vector<2x24xf32>
    %1239 = arith.addf %1234, %1238 : vector<2x24xf32>
    %1240 = math.tanh %1239 : vector<2x24xf32>
    %cst_222 = arith.constant 1.000000e+00 : f32
    %1241 = vector.broadcast %cst_222 : f32 to vector<2x24xf32>
    %1242 = arith.subf %1241, %1233 : vector<2x24xf32>
    %1243 = arith.mulf %1242, %1240 : vector<2x24xf32>
    %1244 = arith.mulf %1233, %1185 : vector<2x24xf32>
    %1245 = arith.addf %1243, %1244 : vector<2x24xf32>
    %1246 = vector.extract_strided_slice %1085 {offsets = [10, 0], sizes = [2, 72], strides = [1, 1]} : vector<16x72xf32> to vector<2x72xf32>
    %cst_223 = arith.constant dense<0.000000e+00> : vector<2x72xf32>
    %1247 = tpu.matmul %1215, %1089, %cst_223 {dimension_numbers = #tpu.dot_dimension_numbers<[1], [0], [0], [1], [0, 0, 1, 1], [], []>} : vector<2x24xf32>, vector<24x72xf32>, vector<2x72xf32> -> vector<2x72xf32>
    %1248 = vector.extract_strided_slice %1246 {offsets = [0, 0], sizes = [2, 24], strides = [1, 1]} : vector<2x72xf32> to vector<2x24xf32>
    %1249 = vector.extract_strided_slice %1247 {offsets = [0, 0], sizes = [2, 24], strides = [1, 1]} : vector<2x72xf32> to vector<2x24xf32>
    %1250 = arith.addf %1248, %1249 : vector<2x24xf32>
    %1251 = arith.negf %1250 : vector<2x24xf32>
    %1252 = math.exp %1251 : vector<2x24xf32>
    %cst_224 = arith.constant 1.000000e+00 : f32
    %1253 = vector.broadcast %cst_224 : f32 to vector<2x24xf32>
    %1254 = arith.addf %1253, %1252 : vector<2x24xf32>
    %1255 = arith.divf %1253, %1254 : vector<2x24xf32>
    %1256 = vector.extract_strided_slice %1246 {offsets = [0, 24], sizes = [2, 24], strides = [1, 1]} : vector<2x72xf32> to vector<2x24xf32>
    %1257 = vector.extract_strided_slice %1247 {offsets = [0, 24], sizes = [2, 24], strides = [1, 1]} : vector<2x72xf32> to vector<2x24xf32>
    %1258 = arith.addf %1256, %1257 : vector<2x24xf32>
    %1259 = arith.negf %1258 : vector<2x24xf32>
    %1260 = math.exp %1259 : vector<2x24xf32>
    %cst_225 = arith.constant 1.000000e+00 : f32
    %1261 = vector.broadcast %cst_225 : f32 to vector<2x24xf32>
    %1262 = arith.addf %1261, %1260 : vector<2x24xf32>
    %1263 = arith.divf %1261, %1262 : vector<2x24xf32>
    %1264 = vector.extract_strided_slice %1246 {offsets = [0, 48], sizes = [2, 24], strides = [1, 1]} : vector<2x72xf32> to vector<2x24xf32>
    %1265 = vector.extract_strided_slice %1247 {offsets = [0, 48], sizes = [2, 24], strides = [1, 1]} : vector<2x72xf32> to vector<2x24xf32>
    %1266 = vector.broadcast %1093 : vector<1x24xf32> to vector<2x24xf32>
    %1267 = arith.addf %1265, %1266 : vector<2x24xf32>
    %1268 = arith.mulf %1255, %1267 : vector<2x24xf32>
    %1269 = arith.addf %1264, %1268 : vector<2x24xf32>
    %1270 = math.tanh %1269 : vector<2x24xf32>
    %cst_226 = arith.constant 1.000000e+00 : f32
    %1271 = vector.broadcast %cst_226 : f32 to vector<2x24xf32>
    %1272 = arith.subf %1271, %1263 : vector<2x24xf32>
    %1273 = arith.mulf %1272, %1270 : vector<2x24xf32>
    %1274 = arith.mulf %1263, %1215 : vector<2x24xf32>
    %1275 = arith.addf %1273, %1274 : vector<2x24xf32>
    %1276 = vector.extract_strided_slice %1078 {offsets = [6, 0], sizes = [2, 72], strides = [1, 1]} : vector<16x72xf32> to vector<2x72xf32>
    %cst_227 = arith.constant dense<0.000000e+00> : vector<2x72xf32>
    %1277 = tpu.matmul %1245, %1087, %cst_227 {dimension_numbers = #tpu.dot_dimension_numbers<[1], [0], [0], [1], [0, 0, 1, 1], [], []>} : vector<2x24xf32>, vector<24x72xf32>, vector<2x72xf32> -> vector<2x72xf32>
    %1278 = vector.extract_strided_slice %1276 {offsets = [0, 0], sizes = [2, 24], strides = [1, 1]} : vector<2x72xf32> to vector<2x24xf32>
    %1279 = vector.extract_strided_slice %1277 {offsets = [0, 0], sizes = [2, 24], strides = [1, 1]} : vector<2x72xf32> to vector<2x24xf32>
    %1280 = arith.addf %1278, %1279 : vector<2x24xf32>
    %1281 = arith.negf %1280 : vector<2x24xf32>
    %1282 = math.exp %1281 : vector<2x24xf32>
    %cst_228 = arith.constant 1.000000e+00 : f32
    %1283 = vector.broadcast %cst_228 : f32 to vector<2x24xf32>
    %1284 = arith.addf %1283, %1282 : vector<2x24xf32>
    %1285 = arith.divf %1283, %1284 : vector<2x24xf32>
    %1286 = vector.extract_strided_slice %1276 {offsets = [0, 24], sizes = [2, 24], strides = [1, 1]} : vector<2x72xf32> to vector<2x24xf32>
    %1287 = vector.extract_strided_slice %1277 {offsets = [0, 24], sizes = [2, 24], strides = [1, 1]} : vector<2x72xf32> to vector<2x24xf32>
    %1288 = arith.addf %1286, %1287 : vector<2x24xf32>
    %1289 = arith.negf %1288 : vector<2x24xf32>
    %1290 = math.exp %1289 : vector<2x24xf32>
    %cst_229 = arith.constant 1.000000e+00 : f32
    %1291 = vector.broadcast %cst_229 : f32 to vector<2x24xf32>
    %1292 = arith.addf %1291, %1290 : vector<2x24xf32>
    %1293 = arith.divf %1291, %1292 : vector<2x24xf32>
    %1294 = vector.extract_strided_slice %1276 {offsets = [0, 48], sizes = [2, 24], strides = [1, 1]} : vector<2x72xf32> to vector<2x24xf32>
    %1295 = vector.extract_strided_slice %1277 {offsets = [0, 48], sizes = [2, 24], strides = [1, 1]} : vector<2x72xf32> to vector<2x24xf32>
    %1296 = vector.broadcast %1091 : vector<1x24xf32> to vector<2x24xf32>
    %1297 = arith.addf %1295, %1296 : vector<2x24xf32>
    %1298 = arith.mulf %1285, %1297 : vector<2x24xf32>
    %1299 = arith.addf %1294, %1298 : vector<2x24xf32>
    %1300 = math.tanh %1299 : vector<2x24xf32>
    %cst_230 = arith.constant 1.000000e+00 : f32
    %1301 = vector.broadcast %cst_230 : f32 to vector<2x24xf32>
    %1302 = arith.subf %1301, %1293 : vector<2x24xf32>
    %1303 = arith.mulf %1302, %1300 : vector<2x24xf32>
    %1304 = arith.mulf %1293, %1245 : vector<2x24xf32>
    %1305 = arith.addf %1303, %1304 : vector<2x24xf32>
    %1306 = vector.extract_strided_slice %1085 {offsets = [8, 0], sizes = [2, 72], strides = [1, 1]} : vector<16x72xf32> to vector<2x72xf32>
    %cst_231 = arith.constant dense<0.000000e+00> : vector<2x72xf32>
    %1307 = tpu.matmul %1275, %1089, %cst_231 {dimension_numbers = #tpu.dot_dimension_numbers<[1], [0], [0], [1], [0, 0, 1, 1], [], []>} : vector<2x24xf32>, vector<24x72xf32>, vector<2x72xf32> -> vector<2x72xf32>
    %1308 = vector.extract_strided_slice %1306 {offsets = [0, 0], sizes = [2, 24], strides = [1, 1]} : vector<2x72xf32> to vector<2x24xf32>
    %1309 = vector.extract_strided_slice %1307 {offsets = [0, 0], sizes = [2, 24], strides = [1, 1]} : vector<2x72xf32> to vector<2x24xf32>
    %1310 = arith.addf %1308, %1309 : vector<2x24xf32>
    %1311 = arith.negf %1310 : vector<2x24xf32>
    %1312 = math.exp %1311 : vector<2x24xf32>
    %cst_232 = arith.constant 1.000000e+00 : f32
    %1313 = vector.broadcast %cst_232 : f32 to vector<2x24xf32>
    %1314 = arith.addf %1313, %1312 : vector<2x24xf32>
    %1315 = arith.divf %1313, %1314 : vector<2x24xf32>
    %1316 = vector.extract_strided_slice %1306 {offsets = [0, 24], sizes = [2, 24], strides = [1, 1]} : vector<2x72xf32> to vector<2x24xf32>
    %1317 = vector.extract_strided_slice %1307 {offsets = [0, 24], sizes = [2, 24], strides = [1, 1]} : vector<2x72xf32> to vector<2x24xf32>
    %1318 = arith.addf %1316, %1317 : vector<2x24xf32>
    %1319 = arith.negf %1318 : vector<2x24xf32>
    %1320 = math.exp %1319 : vector<2x24xf32>
    %cst_233 = arith.constant 1.000000e+00 : f32
    %1321 = vector.broadcast %cst_233 : f32 to vector<2x24xf32>
    %1322 = arith.addf %1321, %1320 : vector<2x24xf32>
    %1323 = arith.divf %1321, %1322 : vector<2x24xf32>
    %1324 = vector.extract_strided_slice %1306 {offsets = [0, 48], sizes = [2, 24], strides = [1, 1]} : vector<2x72xf32> to vector<2x24xf32>
    %1325 = vector.extract_strided_slice %1307 {offsets = [0, 48], sizes = [2, 24], strides = [1, 1]} : vector<2x72xf32> to vector<2x24xf32>
    %1326 = vector.broadcast %1093 : vector<1x24xf32> to vector<2x24xf32>
    %1327 = arith.addf %1325, %1326 : vector<2x24xf32>
    %1328 = arith.mulf %1315, %1327 : vector<2x24xf32>
    %1329 = arith.addf %1324, %1328 : vector<2x24xf32>
    %1330 = math.tanh %1329 : vector<2x24xf32>
    %cst_234 = arith.constant 1.000000e+00 : f32
    %1331 = vector.broadcast %cst_234 : f32 to vector<2x24xf32>
    %1332 = arith.subf %1331, %1323 : vector<2x24xf32>
    %1333 = arith.mulf %1332, %1330 : vector<2x24xf32>
    %1334 = arith.mulf %1323, %1275 : vector<2x24xf32>
    %1335 = arith.addf %1333, %1334 : vector<2x24xf32>
    %1336 = vector.extract_strided_slice %1078 {offsets = [8, 0], sizes = [2, 72], strides = [1, 1]} : vector<16x72xf32> to vector<2x72xf32>
    %cst_235 = arith.constant dense<0.000000e+00> : vector<2x72xf32>
    %1337 = tpu.matmul %1305, %1087, %cst_235 {dimension_numbers = #tpu.dot_dimension_numbers<[1], [0], [0], [1], [0, 0, 1, 1], [], []>} : vector<2x24xf32>, vector<24x72xf32>, vector<2x72xf32> -> vector<2x72xf32>
    %1338 = vector.extract_strided_slice %1336 {offsets = [0, 0], sizes = [2, 24], strides = [1, 1]} : vector<2x72xf32> to vector<2x24xf32>
    %1339 = vector.extract_strided_slice %1337 {offsets = [0, 0], sizes = [2, 24], strides = [1, 1]} : vector<2x72xf32> to vector<2x24xf32>
    %1340 = arith.addf %1338, %1339 : vector<2x24xf32>
    %1341 = arith.negf %1340 : vector<2x24xf32>
    %1342 = math.exp %1341 : vector<2x24xf32>
    %cst_236 = arith.constant 1.000000e+00 : f32
    %1343 = vector.broadcast %cst_236 : f32 to vector<2x24xf32>
    %1344 = arith.addf %1343, %1342 : vector<2x24xf32>
    %1345 = arith.divf %1343, %1344 : vector<2x24xf32>
    %1346 = vector.extract_strided_slice %1336 {offsets = [0, 24], sizes = [2, 24], strides = [1, 1]} : vector<2x72xf32> to vector<2x24xf32>
    %1347 = vector.extract_strided_slice %1337 {offsets = [0, 24], sizes = [2, 24], strides = [1, 1]} : vector<2x72xf32> to vector<2x24xf32>
    %1348 = arith.addf %1346, %1347 : vector<2x24xf32>
    %1349 = arith.negf %1348 : vector<2x24xf32>
    %1350 = math.exp %1349 : vector<2x24xf32>
    %cst_237 = arith.constant 1.000000e+00 : f32
    %1351 = vector.broadcast %cst_237 : f32 to vector<2x24xf32>
    %1352 = arith.addf %1351, %1350 : vector<2x24xf32>
    %1353 = arith.divf %1351, %1352 : vector<2x24xf32>
    %1354 = vector.extract_strided_slice %1336 {offsets = [0, 48], sizes = [2, 24], strides = [1, 1]} : vector<2x72xf32> to vector<2x24xf32>
    %1355 = vector.extract_strided_slice %1337 {offsets = [0, 48], sizes = [2, 24], strides = [1, 1]} : vector<2x72xf32> to vector<2x24xf32>
    %1356 = vector.broadcast %1091 : vector<1x24xf32> to vector<2x24xf32>
    %1357 = arith.addf %1355, %1356 : vector<2x24xf32>
    %1358 = arith.mulf %1345, %1357 : vector<2x24xf32>
    %1359 = arith.addf %1354, %1358 : vector<2x24xf32>
    %1360 = math.tanh %1359 : vector<2x24xf32>
    %cst_238 = arith.constant 1.000000e+00 : f32
    %1361 = vector.broadcast %cst_238 : f32 to vector<2x24xf32>
    %1362 = arith.subf %1361, %1353 : vector<2x24xf32>
    %1363 = arith.mulf %1362, %1360 : vector<2x24xf32>
    %1364 = arith.mulf %1353, %1305 : vector<2x24xf32>
    %1365 = arith.addf %1363, %1364 : vector<2x24xf32>
    %1366 = vector.extract_strided_slice %1085 {offsets = [6, 0], sizes = [2, 72], strides = [1, 1]} : vector<16x72xf32> to vector<2x72xf32>
    %cst_239 = arith.constant dense<0.000000e+00> : vector<2x72xf32>
    %1367 = tpu.matmul %1335, %1089, %cst_239 {dimension_numbers = #tpu.dot_dimension_numbers<[1], [0], [0], [1], [0, 0, 1, 1], [], []>} : vector<2x24xf32>, vector<24x72xf32>, vector<2x72xf32> -> vector<2x72xf32>
    %1368 = vector.extract_strided_slice %1366 {offsets = [0, 0], sizes = [2, 24], strides = [1, 1]} : vector<2x72xf32> to vector<2x24xf32>
    %1369 = vector.extract_strided_slice %1367 {offsets = [0, 0], sizes = [2, 24], strides = [1, 1]} : vector<2x72xf32> to vector<2x24xf32>
    %1370 = arith.addf %1368, %1369 : vector<2x24xf32>
    %1371 = arith.negf %1370 : vector<2x24xf32>
    %1372 = math.exp %1371 : vector<2x24xf32>
    %cst_240 = arith.constant 1.000000e+00 : f32
    %1373 = vector.broadcast %cst_240 : f32 to vector<2x24xf32>
    %1374 = arith.addf %1373, %1372 : vector<2x24xf32>
    %1375 = arith.divf %1373, %1374 : vector<2x24xf32>
    %1376 = vector.extract_strided_slice %1366 {offsets = [0, 24], sizes = [2, 24], strides = [1, 1]} : vector<2x72xf32> to vector<2x24xf32>
    %1377 = vector.extract_strided_slice %1367 {offsets = [0, 24], sizes = [2, 24], strides = [1, 1]} : vector<2x72xf32> to vector<2x24xf32>
    %1378 = arith.addf %1376, %1377 : vector<2x24xf32>
    %1379 = arith.negf %1378 : vector<2x24xf32>
    %1380 = math.exp %1379 : vector<2x24xf32>
    %cst_241 = arith.constant 1.000000e+00 : f32
    %1381 = vector.broadcast %cst_241 : f32 to vector<2x24xf32>
    %1382 = arith.addf %1381, %1380 : vector<2x24xf32>
    %1383 = arith.divf %1381, %1382 : vector<2x24xf32>
    %1384 = vector.extract_strided_slice %1366 {offsets = [0, 48], sizes = [2, 24], strides = [1, 1]} : vector<2x72xf32> to vector<2x24xf32>
    %1385 = vector.extract_strided_slice %1367 {offsets = [0, 48], sizes = [2, 24], strides = [1, 1]} : vector<2x72xf32> to vector<2x24xf32>
    %1386 = vector.broadcast %1093 : vector<1x24xf32> to vector<2x24xf32>
    %1387 = arith.addf %1385, %1386 : vector<2x24xf32>
    %1388 = arith.mulf %1375, %1387 : vector<2x24xf32>
    %1389 = arith.addf %1384, %1388 : vector<2x24xf32>
    %1390 = math.tanh %1389 : vector<2x24xf32>
    %cst_242 = arith.constant 1.000000e+00 : f32
    %1391 = vector.broadcast %cst_242 : f32 to vector<2x24xf32>
    %1392 = arith.subf %1391, %1383 : vector<2x24xf32>
    %1393 = arith.mulf %1392, %1390 : vector<2x24xf32>
    %1394 = arith.mulf %1383, %1335 : vector<2x24xf32>
    %1395 = arith.addf %1393, %1394 : vector<2x24xf32>
    %1396 = vector.extract_strided_slice %1078 {offsets = [10, 0], sizes = [2, 72], strides = [1, 1]} : vector<16x72xf32> to vector<2x72xf32>
    %cst_243 = arith.constant dense<0.000000e+00> : vector<2x72xf32>
    %1397 = tpu.matmul %1365, %1087, %cst_243 {dimension_numbers = #tpu.dot_dimension_numbers<[1], [0], [0], [1], [0, 0, 1, 1], [], []>} : vector<2x24xf32>, vector<24x72xf32>, vector<2x72xf32> -> vector<2x72xf32>
    %1398 = vector.extract_strided_slice %1396 {offsets = [0, 0], sizes = [2, 24], strides = [1, 1]} : vector<2x72xf32> to vector<2x24xf32>
    %1399 = vector.extract_strided_slice %1397 {offsets = [0, 0], sizes = [2, 24], strides = [1, 1]} : vector<2x72xf32> to vector<2x24xf32>
    %1400 = arith.addf %1398, %1399 : vector<2x24xf32>
    %1401 = arith.negf %1400 : vector<2x24xf32>
    %1402 = math.exp %1401 : vector<2x24xf32>
    %cst_244 = arith.constant 1.000000e+00 : f32
    %1403 = vector.broadcast %cst_244 : f32 to vector<2x24xf32>
    %1404 = arith.addf %1403, %1402 : vector<2x24xf32>
    %1405 = arith.divf %1403, %1404 : vector<2x24xf32>
    %1406 = vector.extract_strided_slice %1396 {offsets = [0, 24], sizes = [2, 24], strides = [1, 1]} : vector<2x72xf32> to vector<2x24xf32>
    %1407 = vector.extract_strided_slice %1397 {offsets = [0, 24], sizes = [2, 24], strides = [1, 1]} : vector<2x72xf32> to vector<2x24xf32>
    %1408 = arith.addf %1406, %1407 : vector<2x24xf32>
    %1409 = arith.negf %1408 : vector<2x24xf32>
    %1410 = math.exp %1409 : vector<2x24xf32>
    %cst_245 = arith.constant 1.000000e+00 : f32
    %1411 = vector.broadcast %cst_245 : f32 to vector<2x24xf32>
    %1412 = arith.addf %1411, %1410 : vector<2x24xf32>
    %1413 = arith.divf %1411, %1412 : vector<2x24xf32>
    %1414 = vector.extract_strided_slice %1396 {offsets = [0, 48], sizes = [2, 24], strides = [1, 1]} : vector<2x72xf32> to vector<2x24xf32>
    %1415 = vector.extract_strided_slice %1397 {offsets = [0, 48], sizes = [2, 24], strides = [1, 1]} : vector<2x72xf32> to vector<2x24xf32>
    %1416 = vector.broadcast %1091 : vector<1x24xf32> to vector<2x24xf32>
    %1417 = arith.addf %1415, %1416 : vector<2x24xf32>
    %1418 = arith.mulf %1405, %1417 : vector<2x24xf32>
    %1419 = arith.addf %1414, %1418 : vector<2x24xf32>
    %1420 = math.tanh %1419 : vector<2x24xf32>
    %cst_246 = arith.constant 1.000000e+00 : f32
    %1421 = vector.broadcast %cst_246 : f32 to vector<2x24xf32>
    %1422 = arith.subf %1421, %1413 : vector<2x24xf32>
    %1423 = arith.mulf %1422, %1420 : vector<2x24xf32>
    %1424 = arith.mulf %1413, %1365 : vector<2x24xf32>
    %1425 = arith.addf %1423, %1424 : vector<2x24xf32>
    %1426 = vector.extract_strided_slice %1085 {offsets = [4, 0], sizes = [2, 72], strides = [1, 1]} : vector<16x72xf32> to vector<2x72xf32>
    %cst_247 = arith.constant dense<0.000000e+00> : vector<2x72xf32>
    %1427 = tpu.matmul %1395, %1089, %cst_247 {dimension_numbers = #tpu.dot_dimension_numbers<[1], [0], [0], [1], [0, 0, 1, 1], [], []>} : vector<2x24xf32>, vector<24x72xf32>, vector<2x72xf32> -> vector<2x72xf32>
    %1428 = vector.extract_strided_slice %1426 {offsets = [0, 0], sizes = [2, 24], strides = [1, 1]} : vector<2x72xf32> to vector<2x24xf32>
    %1429 = vector.extract_strided_slice %1427 {offsets = [0, 0], sizes = [2, 24], strides = [1, 1]} : vector<2x72xf32> to vector<2x24xf32>
    %1430 = arith.addf %1428, %1429 : vector<2x24xf32>
    %1431 = arith.negf %1430 : vector<2x24xf32>
    %1432 = math.exp %1431 : vector<2x24xf32>
    %cst_248 = arith.constant 1.000000e+00 : f32
    %1433 = vector.broadcast %cst_248 : f32 to vector<2x24xf32>
    %1434 = arith.addf %1433, %1432 : vector<2x24xf32>
    %1435 = arith.divf %1433, %1434 : vector<2x24xf32>
    %1436 = vector.extract_strided_slice %1426 {offsets = [0, 24], sizes = [2, 24], strides = [1, 1]} : vector<2x72xf32> to vector<2x24xf32>
    %1437 = vector.extract_strided_slice %1427 {offsets = [0, 24], sizes = [2, 24], strides = [1, 1]} : vector<2x72xf32> to vector<2x24xf32>
    %1438 = arith.addf %1436, %1437 : vector<2x24xf32>
    %1439 = arith.negf %1438 : vector<2x24xf32>
    %1440 = math.exp %1439 : vector<2x24xf32>
    %cst_249 = arith.constant 1.000000e+00 : f32
    %1441 = vector.broadcast %cst_249 : f32 to vector<2x24xf32>
    %1442 = arith.addf %1441, %1440 : vector<2x24xf32>
    %1443 = arith.divf %1441, %1442 : vector<2x24xf32>
    %1444 = vector.extract_strided_slice %1426 {offsets = [0, 48], sizes = [2, 24], strides = [1, 1]} : vector<2x72xf32> to vector<2x24xf32>
    %1445 = vector.extract_strided_slice %1427 {offsets = [0, 48], sizes = [2, 24], strides = [1, 1]} : vector<2x72xf32> to vector<2x24xf32>
    %1446 = vector.broadcast %1093 : vector<1x24xf32> to vector<2x24xf32>
    %1447 = arith.addf %1445, %1446 : vector<2x24xf32>
    %1448 = arith.mulf %1435, %1447 : vector<2x24xf32>
    %1449 = arith.addf %1444, %1448 : vector<2x24xf32>
    %1450 = math.tanh %1449 : vector<2x24xf32>
    %cst_250 = arith.constant 1.000000e+00 : f32
    %1451 = vector.broadcast %cst_250 : f32 to vector<2x24xf32>
    %1452 = arith.subf %1451, %1443 : vector<2x24xf32>
    %1453 = arith.mulf %1452, %1450 : vector<2x24xf32>
    %1454 = arith.mulf %1443, %1395 : vector<2x24xf32>
    %1455 = arith.addf %1453, %1454 : vector<2x24xf32>
    %1456 = vector.extract_strided_slice %1078 {offsets = [12, 0], sizes = [2, 72], strides = [1, 1]} : vector<16x72xf32> to vector<2x72xf32>
    %cst_251 = arith.constant dense<0.000000e+00> : vector<2x72xf32>
    %1457 = tpu.matmul %1425, %1087, %cst_251 {dimension_numbers = #tpu.dot_dimension_numbers<[1], [0], [0], [1], [0, 0, 1, 1], [], []>} : vector<2x24xf32>, vector<24x72xf32>, vector<2x72xf32> -> vector<2x72xf32>
    %1458 = vector.extract_strided_slice %1456 {offsets = [0, 0], sizes = [2, 24], strides = [1, 1]} : vector<2x72xf32> to vector<2x24xf32>
    %1459 = vector.extract_strided_slice %1457 {offsets = [0, 0], sizes = [2, 24], strides = [1, 1]} : vector<2x72xf32> to vector<2x24xf32>
    %1460 = arith.addf %1458, %1459 : vector<2x24xf32>
    %1461 = arith.negf %1460 : vector<2x24xf32>
    %1462 = math.exp %1461 : vector<2x24xf32>
    %cst_252 = arith.constant 1.000000e+00 : f32
    %1463 = vector.broadcast %cst_252 : f32 to vector<2x24xf32>
    %1464 = arith.addf %1463, %1462 : vector<2x24xf32>
    %1465 = arith.divf %1463, %1464 : vector<2x24xf32>
    %1466 = vector.extract_strided_slice %1456 {offsets = [0, 24], sizes = [2, 24], strides = [1, 1]} : vector<2x72xf32> to vector<2x24xf32>
    %1467 = vector.extract_strided_slice %1457 {offsets = [0, 24], sizes = [2, 24], strides = [1, 1]} : vector<2x72xf32> to vector<2x24xf32>
    %1468 = arith.addf %1466, %1467 : vector<2x24xf32>
    %1469 = arith.negf %1468 : vector<2x24xf32>
    %1470 = math.exp %1469 : vector<2x24xf32>
    %cst_253 = arith.constant 1.000000e+00 : f32
    %1471 = vector.broadcast %cst_253 : f32 to vector<2x24xf32>
    %1472 = arith.addf %1471, %1470 : vector<2x24xf32>
    %1473 = arith.divf %1471, %1472 : vector<2x24xf32>
    %1474 = vector.extract_strided_slice %1456 {offsets = [0, 48], sizes = [2, 24], strides = [1, 1]} : vector<2x72xf32> to vector<2x24xf32>
    %1475 = vector.extract_strided_slice %1457 {offsets = [0, 48], sizes = [2, 24], strides = [1, 1]} : vector<2x72xf32> to vector<2x24xf32>
    %1476 = vector.broadcast %1091 : vector<1x24xf32> to vector<2x24xf32>
    %1477 = arith.addf %1475, %1476 : vector<2x24xf32>
    %1478 = arith.mulf %1465, %1477 : vector<2x24xf32>
    %1479 = arith.addf %1474, %1478 : vector<2x24xf32>
    %1480 = math.tanh %1479 : vector<2x24xf32>
    %cst_254 = arith.constant 1.000000e+00 : f32
    %1481 = vector.broadcast %cst_254 : f32 to vector<2x24xf32>
    %1482 = arith.subf %1481, %1473 : vector<2x24xf32>
    %1483 = arith.mulf %1482, %1480 : vector<2x24xf32>
    %1484 = arith.mulf %1473, %1425 : vector<2x24xf32>
    %1485 = arith.addf %1483, %1484 : vector<2x24xf32>
    %1486 = vector.extract_strided_slice %1085 {offsets = [2, 0], sizes = [2, 72], strides = [1, 1]} : vector<16x72xf32> to vector<2x72xf32>
    %cst_255 = arith.constant dense<0.000000e+00> : vector<2x72xf32>
    %1487 = tpu.matmul %1455, %1089, %cst_255 {dimension_numbers = #tpu.dot_dimension_numbers<[1], [0], [0], [1], [0, 0, 1, 1], [], []>} : vector<2x24xf32>, vector<24x72xf32>, vector<2x72xf32> -> vector<2x72xf32>
    %1488 = vector.extract_strided_slice %1486 {offsets = [0, 0], sizes = [2, 24], strides = [1, 1]} : vector<2x72xf32> to vector<2x24xf32>
    %1489 = vector.extract_strided_slice %1487 {offsets = [0, 0], sizes = [2, 24], strides = [1, 1]} : vector<2x72xf32> to vector<2x24xf32>
    %1490 = arith.addf %1488, %1489 : vector<2x24xf32>
    %1491 = arith.negf %1490 : vector<2x24xf32>
    %1492 = math.exp %1491 : vector<2x24xf32>
    %cst_256 = arith.constant 1.000000e+00 : f32
    %1493 = vector.broadcast %cst_256 : f32 to vector<2x24xf32>
    %1494 = arith.addf %1493, %1492 : vector<2x24xf32>
    %1495 = arith.divf %1493, %1494 : vector<2x24xf32>
    %1496 = vector.extract_strided_slice %1486 {offsets = [0, 24], sizes = [2, 24], strides = [1, 1]} : vector<2x72xf32> to vector<2x24xf32>
    %1497 = vector.extract_strided_slice %1487 {offsets = [0, 24], sizes = [2, 24], strides = [1, 1]} : vector<2x72xf32> to vector<2x24xf32>
    %1498 = arith.addf %1496, %1497 : vector<2x24xf32>
    %1499 = arith.negf %1498 : vector<2x24xf32>
    %1500 = math.exp %1499 : vector<2x24xf32>
    %cst_257 = arith.constant 1.000000e+00 : f32
    %1501 = vector.broadcast %cst_257 : f32 to vector<2x24xf32>
    %1502 = arith.addf %1501, %1500 : vector<2x24xf32>
    %1503 = arith.divf %1501, %1502 : vector<2x24xf32>
    %1504 = vector.extract_strided_slice %1486 {offsets = [0, 48], sizes = [2, 24], strides = [1, 1]} : vector<2x72xf32> to vector<2x24xf32>
    %1505 = vector.extract_strided_slice %1487 {offsets = [0, 48], sizes = [2, 24], strides = [1, 1]} : vector<2x72xf32> to vector<2x24xf32>
    %1506 = vector.broadcast %1093 : vector<1x24xf32> to vector<2x24xf32>
    %1507 = arith.addf %1505, %1506 : vector<2x24xf32>
    %1508 = arith.mulf %1495, %1507 : vector<2x24xf32>
    %1509 = arith.addf %1504, %1508 : vector<2x24xf32>
    %1510 = math.tanh %1509 : vector<2x24xf32>
    %cst_258 = arith.constant 1.000000e+00 : f32
    %1511 = vector.broadcast %cst_258 : f32 to vector<2x24xf32>
    %1512 = arith.subf %1511, %1503 : vector<2x24xf32>
    %1513 = arith.mulf %1512, %1510 : vector<2x24xf32>
    %1514 = arith.mulf %1503, %1455 : vector<2x24xf32>
    %1515 = arith.addf %1513, %1514 : vector<2x24xf32>
    %1516 = vector.extract_strided_slice %1078 {offsets = [14, 0], sizes = [2, 72], strides = [1, 1]} : vector<16x72xf32> to vector<2x72xf32>
    %cst_259 = arith.constant dense<0.000000e+00> : vector<2x72xf32>
    %1517 = tpu.matmul %1485, %1087, %cst_259 {dimension_numbers = #tpu.dot_dimension_numbers<[1], [0], [0], [1], [0, 0, 1, 1], [], []>} : vector<2x24xf32>, vector<24x72xf32>, vector<2x72xf32> -> vector<2x72xf32>
    %1518 = vector.extract_strided_slice %1516 {offsets = [0, 0], sizes = [2, 24], strides = [1, 1]} : vector<2x72xf32> to vector<2x24xf32>
    %1519 = vector.extract_strided_slice %1517 {offsets = [0, 0], sizes = [2, 24], strides = [1, 1]} : vector<2x72xf32> to vector<2x24xf32>
    %1520 = arith.addf %1518, %1519 : vector<2x24xf32>
    %1521 = arith.negf %1520 : vector<2x24xf32>
    %1522 = math.exp %1521 : vector<2x24xf32>
    %cst_260 = arith.constant 1.000000e+00 : f32
    %1523 = vector.broadcast %cst_260 : f32 to vector<2x24xf32>
    %1524 = arith.addf %1523, %1522 : vector<2x24xf32>
    %1525 = arith.divf %1523, %1524 : vector<2x24xf32>
    %1526 = vector.extract_strided_slice %1516 {offsets = [0, 24], sizes = [2, 24], strides = [1, 1]} : vector<2x72xf32> to vector<2x24xf32>
    %1527 = vector.extract_strided_slice %1517 {offsets = [0, 24], sizes = [2, 24], strides = [1, 1]} : vector<2x72xf32> to vector<2x24xf32>
    %1528 = arith.addf %1526, %1527 : vector<2x24xf32>
    %1529 = arith.negf %1528 : vector<2x24xf32>
    %1530 = math.exp %1529 : vector<2x24xf32>
    %cst_261 = arith.constant 1.000000e+00 : f32
    %1531 = vector.broadcast %cst_261 : f32 to vector<2x24xf32>
    %1532 = arith.addf %1531, %1530 : vector<2x24xf32>
    %1533 = arith.divf %1531, %1532 : vector<2x24xf32>
    %1534 = vector.extract_strided_slice %1516 {offsets = [0, 48], sizes = [2, 24], strides = [1, 1]} : vector<2x72xf32> to vector<2x24xf32>
    %1535 = vector.extract_strided_slice %1517 {offsets = [0, 48], sizes = [2, 24], strides = [1, 1]} : vector<2x72xf32> to vector<2x24xf32>
    %1536 = vector.broadcast %1091 : vector<1x24xf32> to vector<2x24xf32>
    %1537 = arith.addf %1535, %1536 : vector<2x24xf32>
    %1538 = arith.mulf %1525, %1537 : vector<2x24xf32>
    %1539 = arith.addf %1534, %1538 : vector<2x24xf32>
    %1540 = math.tanh %1539 : vector<2x24xf32>
    %cst_262 = arith.constant 1.000000e+00 : f32
    %1541 = vector.broadcast %cst_262 : f32 to vector<2x24xf32>
    %1542 = arith.subf %1541, %1533 : vector<2x24xf32>
    %1543 = arith.mulf %1542, %1540 : vector<2x24xf32>
    %1544 = arith.mulf %1533, %1485 : vector<2x24xf32>
    %1545 = arith.addf %1543, %1544 : vector<2x24xf32>
    %1546 = vector.extract_strided_slice %1085 {offsets = [0, 0], sizes = [2, 72], strides = [1, 1]} : vector<16x72xf32> to vector<2x72xf32>
    %cst_263 = arith.constant dense<0.000000e+00> : vector<2x72xf32>
    %1547 = tpu.matmul %1515, %1089, %cst_263 {dimension_numbers = #tpu.dot_dimension_numbers<[1], [0], [0], [1], [0, 0, 1, 1], [], []>} : vector<2x24xf32>, vector<24x72xf32>, vector<2x72xf32> -> vector<2x72xf32>
    %1548 = vector.extract_strided_slice %1546 {offsets = [0, 0], sizes = [2, 24], strides = [1, 1]} : vector<2x72xf32> to vector<2x24xf32>
    %1549 = vector.extract_strided_slice %1547 {offsets = [0, 0], sizes = [2, 24], strides = [1, 1]} : vector<2x72xf32> to vector<2x24xf32>
    %1550 = arith.addf %1548, %1549 : vector<2x24xf32>
    %1551 = arith.negf %1550 : vector<2x24xf32>
    %1552 = math.exp %1551 : vector<2x24xf32>
    %cst_264 = arith.constant 1.000000e+00 : f32
    %1553 = vector.broadcast %cst_264 : f32 to vector<2x24xf32>
    %1554 = arith.addf %1553, %1552 : vector<2x24xf32>
    %1555 = arith.divf %1553, %1554 : vector<2x24xf32>
    %1556 = vector.extract_strided_slice %1546 {offsets = [0, 24], sizes = [2, 24], strides = [1, 1]} : vector<2x72xf32> to vector<2x24xf32>
    %1557 = vector.extract_strided_slice %1547 {offsets = [0, 24], sizes = [2, 24], strides = [1, 1]} : vector<2x72xf32> to vector<2x24xf32>
    %1558 = arith.addf %1556, %1557 : vector<2x24xf32>
    %1559 = arith.negf %1558 : vector<2x24xf32>
    %1560 = math.exp %1559 : vector<2x24xf32>
    %cst_265 = arith.constant 1.000000e+00 : f32
    %1561 = vector.broadcast %cst_265 : f32 to vector<2x24xf32>
    %1562 = arith.addf %1561, %1560 : vector<2x24xf32>
    %1563 = arith.divf %1561, %1562 : vector<2x24xf32>
    %1564 = vector.extract_strided_slice %1546 {offsets = [0, 48], sizes = [2, 24], strides = [1, 1]} : vector<2x72xf32> to vector<2x24xf32>
    %1565 = vector.extract_strided_slice %1547 {offsets = [0, 48], sizes = [2, 24], strides = [1, 1]} : vector<2x72xf32> to vector<2x24xf32>
    %1566 = vector.broadcast %1093 : vector<1x24xf32> to vector<2x24xf32>
    %1567 = arith.addf %1565, %1566 : vector<2x24xf32>
    %1568 = arith.mulf %1555, %1567 : vector<2x24xf32>
    %1569 = arith.addf %1564, %1568 : vector<2x24xf32>
    %1570 = math.tanh %1569 : vector<2x24xf32>
    %cst_266 = arith.constant 1.000000e+00 : f32
    %1571 = vector.broadcast %cst_266 : f32 to vector<2x24xf32>
    %1572 = arith.subf %1571, %1563 : vector<2x24xf32>
    %1573 = arith.mulf %1572, %1570 : vector<2x24xf32>
    %1574 = arith.mulf %1563, %1515 : vector<2x24xf32>
    %1575 = arith.addf %1573, %1574 : vector<2x24xf32>
    %1576 = tpu.concatenate %1125, %1185, %1245, %1305, %1365, %1425, %1485, %1545 in 0 : vector<2x24xf32>, vector<2x24xf32>, vector<2x24xf32>, vector<2x24xf32>, vector<2x24xf32>, vector<2x24xf32>, vector<2x24xf32>, vector<2x24xf32> -> vector<16x24xf32>
    %1577 = tpu.concatenate %1575, %1515, %1455, %1395, %1335, %1275, %1215, %1155 in 0 : vector<2x24xf32>, vector<2x24xf32>, vector<2x24xf32>, vector<2x24xf32>, vector<2x24xf32>, vector<2x24xf32>, vector<2x24xf32>, vector<2x24xf32> -> vector<16x24xf32>
    %1578 = tpu.concatenate %1576, %1577 in 1 : vector<16x24xf32>, vector<16x24xf32> -> vector<16x48xf32>
    %c0_267 = arith.constant 0 : index
    %c0_268 = arith.constant 0 : index
    %1579 = vector.load %arg21[%c0_267, %c0_268] : memref<48x3xf32, #tpu.memory_space<vmem>>, vector<48x3xf32>
    %cst_269 = arith.constant dense<0.000000e+00> : vector<16x3xf32>
    %1580 = tpu.matmul %1578, %1579, %cst_269 {dimension_numbers = #tpu.dot_dimension_numbers<[1], [0], [0], [1], [0, 0, 1, 1], [], []>} : vector<16x48xf32>, vector<48x3xf32>, vector<16x3xf32> -> vector<16x3xf32>
    %c0_270 = arith.constant 0 : index
    %c0_271 = arith.constant 0 : index
    %1581 = vector.load %arg22[%c0_270, %c0_271] : memref<1x3xf32, #tpu.memory_space<vmem>>, vector<1x3xf32>
    %1582 = vector.broadcast %1581 : vector<1x3xf32> to vector<16x3xf32>
    %1583 = arith.addf %1580, %1582 : vector<16x3xf32>
    %cst_272 = arith.constant 9.99999974E-6 : f32
    %1584 = vector.broadcast %cst_272 : f32 to vector<16x3xf32>
    %1585 = arith.addf %1583, %1584 : vector<16x3xf32>
    %c0_273 = arith.constant 0 : index
    %c0_274 = arith.constant 0 : index
    %1586 = vector.load %arg23[%c0_273, %c0_274] : memref<16x3xf32, #tpu.memory_space<vmem>>, vector<16x3xf32>
    tpu.vector_store %arg23[%c0_273, %c0_274], %1585 {strides = array<i32>} : memref<16x3xf32, #tpu.memory_space<vmem>>, vector<16x3xf32>,
    %c0_275 = arith.constant 0 : index
    %c0_276 = arith.constant 0 : index
    %1587 = vector.load %arg1[%c0_275, %c0_276] : memref<16x1xi32, #tpu.memory_space<vmem>>, vector<16x1xi32>
    %c0_277 = arith.constant 0 : index
    %c0_278 = arith.constant 0 : index
    %1588 = vector.load %arg2[%c0_277, %c0_278] : memref<1x3xf32, #tpu.memory_space<vmem>>, vector<1x3xf32>
    %1589 = tpu.iota {dimensions = array<i32: 1>} : vector<16x3xi32>
    %1590 = vector.broadcast %1587 : vector<16x1xi32> to vector<16x3xi32>
    %1591 = arith.cmpi eq, %1589, %1590 : vector<16x3xi32>
    %1592 = arith.extui %1591 : vector<16x3xi1> to vector<16x3xi32>
    %1593 = arith.sitofp %1592 : vector<16x3xi32> to vector<16x3xf32>
    %c-1_i32 = arith.constant -1 : i32
    %1594 = vector.broadcast %c-1_i32 : i32 to vector<16x1xi32>
    %1595 = arith.cmpi ne, %1587, %1594 : vector<16x1xi32>
    %1596 = arith.extui %1595 : vector<16x1xi1> to vector<16x1xi32>
    %1597 = arith.sitofp %1596 : vector<16x1xi32> to vector<16x1xf32>
    %cst_279 = arith.constant dense<0xFF800000> : vector<16xf32>
    %1598 = vector.multi_reduction <maximumf>, %1585, %cst_279 [1] : vector<16x3xf32> to vector<16xf32>
    %1599 = vector.shape_cast %1598 : vector<16xf32> to vector<16x1xf32>
    %1600 = vector.broadcast %1599 : vector<16x1xf32> to vector<16x3xf32>
    %1601 = arith.subf %1585, %1600 : vector<16x3xf32>
    %1602 = math.exp %1601 : vector<16x3xf32>
    %cst_280 = arith.constant dense<0.000000e+00> : vector<16xf32>
    %1603 = vector.multi_reduction <add>, %1602, %cst_280 [1] : vector<16x3xf32> to vector<16xf32>
    %1604 = vector.shape_cast %1603 : vector<16xf32> to vector<16x1xf32>
    %1605 = vector.broadcast %1599 : vector<16x1xf32> to vector<16x3xf32>
    %1606 = arith.subf %1585, %1605 : vector<16x3xf32>
    %1607 = math.log %1604 : vector<16x1xf32>
    %1608 = vector.broadcast %1607 : vector<16x1xf32> to vector<16x3xf32>
    %1609 = arith.subf %1606, %1608 : vector<16x3xf32>
    %1610 = vector.broadcast %1604 : vector<16x1xf32> to vector<16x3xf32>
    %1611 = arith.divf %1602, %1610 : vector<16x3xf32>
    %1612 = vector.broadcast %1588 : vector<1x3xf32> to vector<16x3xf32>
    %1613 = arith.mulf %1593, %1612 : vector<16x3xf32>
    %cst_281 = arith.constant dense<0.000000e+00> : vector<16xf32>
    %1614 = vector.multi_reduction <add>, %1613, %cst_281 [1] : vector<16x3xf32> to vector<16xf32>
    %1615 = vector.shape_cast %1614 : vector<16xf32> to vector<16x1xf32>
    %1616 = arith.mulf %1615, %1597 : vector<16x1xf32>
    %1617 = arith.mulf %1593, %1609 : vector<16x3xf32>
    %cst_282 = arith.constant dense<0.000000e+00> : vector<16xf32>
    %1618 = vector.multi_reduction <add>, %1617, %cst_282 [1] : vector<16x3xf32> to vector<16xf32>
    %1619 = vector.shape_cast %1618 : vector<16xf32> to vector<16x1xf32>
    %cst_283 = arith.constant 0.000000e+00 : f32
    %1620 = vector.broadcast %cst_283 : f32 to vector<16x1xf32>
    %1621 = arith.subf %1620, %1619 : vector<16x1xf32>
    %1622 = arith.mulf %1616, %1621 : vector<16x1xf32>
    %1623 = vector.shape_cast %1622 : vector<16x1xf32> to vector<1x16x1xf32>
    %cst_284 = arith.constant dense<0.000000e+00> : vector<1xf32>
    %1624 = vector.multi_reduction <add>, %1623, %cst_284 [1, 2] : vector<1x16x1xf32> to vector<1xf32>
    %1625 = vector.shape_cast %1624 : vector<1xf32> to vector<1x1x1xf32>
    %1626 = vector.extract %1625[0, 0, 0] : f32 from vector<1x1x1xf32>
    %1627 = vector.broadcast %1626 : f32 to vector<1x1xf32>
    %1628 = vector.shape_cast %1616 : vector<16x1xf32> to vector<1x16x1xf32>
    %cst_285 = arith.constant dense<0.000000e+00> : vector<1xf32>
    %1629 = vector.multi_reduction <add>, %1628, %cst_285 [1, 2] : vector<1x16x1xf32> to vector<1xf32>
    %1630 = vector.shape_cast %1629 : vector<1xf32> to vector<1x1x1xf32>
    %1631 = vector.extract %1630[0, 0, 0] : f32 from vector<1x1x1xf32>
    %1632 = vector.broadcast %1631 : f32 to vector<1x1xf32>
    %cst_286 = arith.constant 9.99999996E-13 : f32
    %1633 = vector.broadcast %cst_286 : f32 to vector<1x1xf32>
    %1634 = arith.maximumf %1632, %1633 : vector<1x1xf32>
    %1635 = arith.divf %1627, %1634 : vector<1x1xf32>
    %1636 = arith.mulf %1611, %1593 : vector<16x3xf32>
    %1637 = vector.broadcast %1597 : vector<16x1xf32> to vector<16x3xf32>
    %1638 = arith.mulf %1636, %1637 : vector<16x3xf32>
    %cst_287 = arith.constant dense<0.000000e+00> : vector<3xf32>
    %1639 = vector.multi_reduction <add>, %1638, %cst_287 [0] : vector<16x3xf32> to vector<3xf32>
    %1640 = vector.shape_cast %1639 : vector<3xf32> to vector<1x3xf32>
    %1641 = vector.broadcast %1597 : vector<16x1xf32> to vector<16x3xf32>
    %1642 = arith.mulf %1611, %1641 : vector<16x3xf32>
    %cst_288 = arith.constant dense<0.000000e+00> : vector<3xf32>
    %1643 = vector.multi_reduction <add>, %1642, %cst_288 [0] : vector<16x3xf32> to vector<3xf32>
    %1644 = vector.shape_cast %1643 : vector<3xf32> to vector<1x3xf32>
    %1645 = vector.broadcast %1597 : vector<16x1xf32> to vector<16x3xf32>
    %1646 = arith.mulf %1593, %1645 : vector<16x3xf32>
    %cst_289 = arith.constant dense<0.000000e+00> : vector<3xf32>
    %1647 = vector.multi_reduction <add>, %1646, %cst_289 [0] : vector<16x3xf32> to vector<3xf32>
    %1648 = vector.shape_cast %1647 : vector<3xf32> to vector<1x3xf32>
    %1649 = arith.addf %1644, %1648 : vector<1x3xf32>
    %cst_290 = arith.constant 2.000000e+00 : f32
    %1650 = vector.broadcast %cst_290 : f32 to vector<1x3xf32>
    %1651 = arith.mulf %1650, %1640 : vector<1x3xf32>
    %cst_291 = arith.constant 9.99999997E-7 : f32
    %1652 = vector.broadcast %cst_291 : f32 to vector<1x3xf32>
    %1653 = arith.addf %1651, %1652 : vector<1x3xf32>
    %cst_292 = arith.constant 9.99999997E-7 : f32
    %1654 = vector.broadcast %cst_292 : f32 to vector<1x3xf32>
    %1655 = arith.addf %1649, %1654 : vector<1x3xf32>
    %1656 = arith.divf %1653, %1655 : vector<1x3xf32>
    %1657 = vector.shape_cast %1656 : vector<1x3xf32> to vector<1x1x3xf32>
    %cst_293 = arith.constant dense<0.000000e+00> : vector<1xf32>
    %1658 = vector.multi_reduction <add>, %1657, %cst_293 [1, 2] : vector<1x1x3xf32> to vector<1xf32>
    %1659 = vector.shape_cast %1658 : vector<1xf32> to vector<1x1x1xf32>
    %1660 = vector.extract %1659[0, 0, 0] : f32 from vector<1x1x1xf32>
    %1661 = vector.broadcast %1660 : f32 to vector<1x1xf32>
    %cst_294 = arith.constant 3.000000e+00 : f32
    %1662 = vector.broadcast %cst_294 : f32 to vector<1x1xf32>
    %1663 = arith.divf %1661, %1662 : vector<1x1xf32>
    %cst_295 = arith.constant 1.000000e+00 : f32
    %1664 = vector.broadcast %cst_295 : f32 to vector<1x1xf32>
    %1665 = arith.subf %1664, %1663 : vector<1x1xf32>
    %c0_296 = arith.constant 0 : index
    %c0_297 = arith.constant 0 : index
    %1666 = vector.load %arg25[%c0_296, %c0_297] : memref<1x1xf32, #tpu.memory_space<vmem>>, vector<1x1xf32>
    tpu.vector_store %arg25[%c0_296, %c0_297], %1635 {strides = array<i32>} : memref<1x1xf32, #tpu.memory_space<vmem>>, vector<1x1xf32>,
    %c0_298 = arith.constant 0 : index
    %c0_299 = arith.constant 0 : index
    %1667 = vector.load %arg26[%c0_298, %c0_299] : memref<1x1xf32, #tpu.memory_space<vmem>>, vector<1x1xf32>
    tpu.vector_store %arg26[%c0_298, %c0_299], %1665 {strides = array<i32>} : memref<1x1xf32, #tpu.memory_space<vmem>>, vector<1x1xf32>,
    %1668 = arith.addf %1635, %1665 : vector<1x1xf32>
    %c0_300 = arith.constant 0 : index
    %c0_301 = arith.constant 0 : index
    %1669 = vector.load %arg24[%c0_300, %c0_301] : memref<1x1xf32, #tpu.memory_space<vmem>>, vector<1x1xf32>
    tpu.vector_store %arg24[%c0_300, %c0_301], %1668 {strides = array<i32>} : memref<1x1xf32, #tpu.memory_space<vmem>>, vector<1x1xf32>,
    return
  }
}

</mosaic_0001>

<llo_original>
// kernel: forward.1
$region0: #{forward.1}
  #allocation0 [shape = 'u32[]', space=smem, size = 0x4, offset = 0x4, fixed_abs, tag = 'smem constant byte address 0x4 - core index']
  #allocation1 [shape = 'u32[144,128]{1,0:T(1,128)}', space=vmem, size = 0x12000, scoped, tag = 'internal scratch']
  %s0 = inlined_call_operand.vmem [shape: f32[16,3], index: 0, kind: input, shape index: {}]
  %s1 = inlined_call_operand.vmem [shape: s32[16,1], index: 1, kind: input, shape index: {}]
  %s2 = inlined_call_operand.vmem [shape: f32[1,3], index: 2, kind: input, shape index: {}]
  %s3 = inlined_call_operand.hbm [shape: f32[3,36], index: 3, kind: input, shape index: {}]
  %s4 = inlined_call_operand.hbm [shape: f32[1,36], index: 4, kind: input, shape index: {}]
  %s5 = inlined_call_operand.hbm [shape: f32[36,36], index: 5, kind: input, shape index: {}]
  %s6 = inlined_call_operand.vmem [shape: f32[1,36], index: 6, kind: input, shape index: {}]
  %s7 = inlined_call_operand.vmem [shape: f32[36,8], index: 7, kind: input, shape index: {}]
  %s8 = inlined_call_operand.vmem [shape: f32[1,8], index: 8, kind: input, shape index: {}]
  %s9 = inlined_call_operand.hbm [shape: f32[2,8,72], index: 9, kind: input, shape index: {}]
  %s10 = inlined_call_operand.hbm [shape: f32[2,24,72], index: 10, kind: input, shape index: {}]
  %s11 = inlined_call_operand.vmem [shape: f32[2,1,72], index: 11, kind: input, shape index: {}]
  %s12 = inlined_call_operand.hbm [shape: f32[2,1,24], index: 12, kind: input, shape index: {}]
  %s13 = inlined_call_operand.vmem [shape: f32[2,48,72], index: 13, kind: input, shape index: {}]
  %s14 = inlined_call_operand.hbm [shape: f32[2,24,72], index: 14, kind: input, shape index: {}]
  %s15 = inlined_call_operand.hbm [shape: f32[2,1,72], index: 15, kind: input, shape index: {}]
  %s16 = inlined_call_operand.hbm [shape: f32[2,1,24], index: 16, kind: input, shape index: {}]
  %s17 = inlined_call_operand.vmem [shape: f32[2,48,72], index: 17, kind: input, shape index: {}]
  %s18 = inlined_call_operand.vmem [shape: f32[2,24,72], index: 18, kind: input, shape index: {}]
  %s19 = inlined_call_operand.hbm [shape: f32[2,1,72], index: 19, kind: input, shape index: {}]
  %s20 = inlined_call_operand.hbm [shape: f32[2,1,24], index: 20, kind: input, shape index: {}]
  %s21 = inlined_call_operand.vmem [shape: f32[48,3], index: 21, kind: input, shape index: {}]
  %s22 = inlined_call_operand.hbm [shape: f32[1,3], index: 22, kind: input, shape index: {}]
  %s23 = inlined_call_operand.vmem [shape: f32[16,3], index: 23, kind: output, shape index: {0}]
  %s24 = inlined_call_operand.hbm [shape: f32[1,1], index: 24, kind: output, shape index: {1}]
  %s25 = inlined_call_operand.hbm [shape: f32[1,1], index: 25, kind: output, shape index: {2}]
  %s26 = inlined_call_operand.hbm [shape: f32[1,1], index: 26, kind: output, shape index: {3}]
  %27 = xla_tuple %s23, %s24, %s25, %s26
  %s28 = sld [smem:[#allocation0]]
  $region174: #{forward.1} parent=0
    _
  %s30 = ssub.s32 1, %s28
  %s31 = scalar_select 0, %s30, %s28
  $region1: #{forward.1} parent=0
    #allocation2 [shape = 'u8[2048]{0}', space=vmem, size = 0x800, scoped, tag = 'input window, operand 3, single buffered']
    #allocation3 [shape = 's32[1]{0}', space=sflag, size = 0x4, scoped, tag = 'scoped memory for forward.1']
    #allocation4 [shape = 's32[1]{0}', space=sflag, size = 0x4, scoped, tag = 'scoped memory for forward.1']
    #allocation5 [shape = 'u8[512]{0}', space=vmem, size = 0x400, scoped, tag = 'input window, operand 4, single buffered']
    #allocation6 [shape = 's32[1]{0}', space=sflag, size = 0x4, scoped, tag = 'scoped memory for forward.1']
    #allocation7 [shape = 'u8[20480]{0}', space=vmem, size = 0x5000, scoped, tag = 'input window, operand 5, single buffered']
    #allocation8 [shape = 'u8[8192]{0}', space=vmem, size = 0x2000, scoped, tag = 'input window, operand 9, single buffered']
    #allocation9 [shape = 's32[1]{0}', space=sflag, size = 0x4, scoped, tag = 'scoped memory for forward.1']
    #allocation10 [shape = 'u8[24576]{0}', space=vmem, size = 0x6000, scoped, tag = 'input window, operand 10, single buffered']
    #allocation11 [shape = 'u8[1024]{0}', space=vmem, size = 0x400, scoped, tag = 'input window, operand 12, single buffered']
    #allocation12 [shape = 's32[1]{0}', space=sflag, size = 0x4, scoped, tag = 'scoped memory for forward.1']
    #allocation13 [shape = 'u8[24576]{0}', space=vmem, size = 0x6000, scoped, tag = 'input window, operand 14, single buffered']
    #allocation14 [shape = 'u8[1024]{0}', space=vmem, size = 0x400, scoped, tag = 'input window, operand 15, single buffered']
    #allocation15 [shape = 's32[1]{0}', space=sflag, size = 0x4, scoped, tag = 'scoped memory for forward.1']
    #allocation16 [shape = 'u8[1024]{0}', space=vmem, size = 0x400, scoped, tag = 'input window, operand 16, single buffered']
    #allocation17 [shape = 'u8[1024]{0}', space=vmem, size = 0x400, scoped, tag = 'input window, operand 19, single buffered']
    #allocation18 [shape = 's32[1]{0}', space=sflag, size = 0x4, scoped, tag = 'scoped memory for forward.1']
    #allocation19 [shape = 'u8[1024]{0}', space=vmem, size = 0x400, scoped, tag = 'input window, operand 20, single buffered']
    #allocation20 [shape = 'u8[512]{0}', space=vmem, size = 0x400, scoped, tag = 'input window, operand 22, single buffered']
    #allocation21 [shape = 's32[1]{0}', space=sflag, size = 0x4, scoped, tag = 'scoped memory for forward.1']
    #allocation22 [shape = 'u8[512]{0}', space=vmem, size = 0x400, scoped, tag = 'output window, operand 1, single buffered']
    #allocation23 [shape = 'u8[512]{0}', space=vmem, size = 0x400, scoped, tag = 'output window, operand 2, single buffered']
    #allocation24 [shape = 's32[1]{0}', space=sflag, size = 0x4, scoped, tag = 'scoped memory for forward.1']
    #allocation25 [shape = 'u8[512]{0}', space=vmem, size = 0x400, scoped, tag = 'output window, operand 3, single buffered']
    %32 = vsyncpa [#allocation3], 0
    %33 = vsyncpa [#allocation6], 0
    %34 = vsyncpa [#allocation9], 0
    %35 = vsyncpa [#allocation12], 0
    %36 = vsyncpa [#allocation15], 0
    %37 = vsyncpa [#allocation18], 0
    %38 = vsyncpa [#allocation21], 0
    %39 = vsyncpa [#allocation4], 0
    %40 = vsyncpa [#allocation24], 0
    // Predicated region
    $region2: #{forward.1} parent=1 // pred_check
      _
    $region3: #{forward.1} parent=1 // pred_check_branch
      %42 = sbr.rel (0) target = $region5
    $region4: #{forward.1} parent=1 // pred_region
      _
    $region5: #{forward.1} parent=1 // pred_fallthru
      _
    // Predicated region
    $region6: #{forward.1} parent=1 // pred_check
      _
    $region7: #{forward.1} parent=1 // pred_check_branch
      %44 = sbr.rel (0) target = $region9
    $region8: #{forward.1} parent=1 // pred_region
      _
    $region9: #{forward.1} parent=1 // pred_fallthru
      _
    // Predicated region
    $region10: #{forward.1} parent=1 // pred_check
      _
    $region11: #{forward.1} parent=1 // pred_check_branch
      %46 = sbr.rel (0) target = $region13
    $region12: #{forward.1} parent=1 // pred_region
      _
    $region13: #{forward.1} parent=1 // pred_fallthru
      _
    // Predicated region
    $region14: #{forward.1} parent=1 // pred_check
      _
    $region15: #{forward.1} parent=1 // pred_check_branch
      %48 = sbr.rel (0) target = $region17
    $region16: #{forward.1} parent=1 // pred_region
      %s50 = ssub.s32 64, 64
      %51 = vsyncadd [#allocation3], %s50
      %s53 = sshll.u32 [#allocation2], 4
      %s54 = int_to_ptr.vmem [resolvable:$true] %s53
      %56 = dma.hbm_to_vmem [thread:$0]  %s3, 64, %s54, [#allocation3]
    $region17: #{forward.1} parent=1 // pred_fallthru
      _
    // Predicated region
    $region18: #{forward.1} parent=1 // pred_check
      _
    $region19: #{forward.1} parent=1 // pred_check_branch
      %58 = sbr.rel (0) target = $region21
    $region20: #{forward.1} parent=1 // pred_region
      %s60 = ssub.s32 16, 16
      %61 = vsyncadd [#allocation6], %s60
      %s63 = sshll.u32 [#allocation5], 4
      %s64 = int_to_ptr.vmem [resolvable:$true] %s63
      %66 = dma.hbm_to_vmem [thread:$0]  %s4, 16, %s64, [#allocation6]
    $region21: #{forward.1} parent=1 // pred_fallthru
      _
    // Predicated region
    $region22: #{forward.1} parent=1 // pred_check
      _
    $region23: #{forward.1} parent=1 // pred_check_branch
      %68 = sbr.rel (0) target = $region25
    $region24: #{forward.1} parent=1 // pred_region
      %s70 = ssub.s32 640, 640
      %71 = vsyncadd [#allocation6], %s70
      %s72 = sshll.u32 [#allocation7], 4
      %s73 = int_to_ptr.vmem [resolvable:$true] %s72
      %78 = dma.hbm_to_vmem [thread:$0]  %s5, 640, %s73, [#allocation6], 128, 128, 8
    $region25: #{forward.1} parent=1 // pred_fallthru
      _
    // Predicated region
    $region26: #{forward.1} parent=1 // pred_check
      _
    $region27: #{forward.1} parent=1 // pred_check_branch
      %80 = sbr.rel (0) target = $region29
    $region28: #{forward.1} parent=1 // pred_region
      _
    $region29: #{forward.1} parent=1 // pred_fallthru
      _
    // Predicated region
    $region30: #{forward.1} parent=1 // pred_check
      _
    $region31: #{forward.1} parent=1 // pred_check_branch
      %82 = sbr.rel (0) target = $region33
    $region32: #{forward.1} parent=1 // pred_region
      _
    $region33: #{forward.1} parent=1 // pred_fallthru
      _
    // Predicated region
    $region34: #{forward.1} parent=1 // pred_check
      _
    $region35: #{forward.1} parent=1 // pred_check_branch
      %84 = sbr.rel (0) target = $region37
    $region36: #{forward.1} parent=1 // pred_region
      _
    $region37: #{forward.1} parent=1 // pred_fallthru
      _
    // Predicated region
    $region38: #{forward.1} parent=1 // pred_check
      _
    $region39: #{forward.1} parent=1 // pred_check_branch
      %86 = sbr.rel (0) target = $region41
    $region40: #{forward.1} parent=1 // pred_region
      %s88 = ssub.s32 256, 256
      %89 = vsyncadd [#allocation9], %s88
      %s90 = sshll.u32 [#allocation8], 4
      %s91 = int_to_ptr.vmem [resolvable:$true] %s90
      %96 = dma.hbm_to_vmem [thread:$0]  %s9, 256, %s91, [#allocation9], 128, 128, 8
    $region41: #{forward.1} parent=1 // pred_fallthru
      _
    // Predicated region
    $region42: #{forward.1} parent=1 // pred_check
      _
    $region43: #{forward.1} parent=1 // pred_check_branch
      %98 = sbr.rel (0) target = $region45
    $region44: #{forward.1} parent=1 // pred_region
      %s100 = ssub.s32 768, 768
      %101 = vsyncadd [#allocation9], %s100
      %s102 = sshll.u32 [#allocation10], 4
      %s103 = int_to_ptr.vmem [resolvable:$true] %s102
      %108 = dma.hbm_to_vmem [thread:$0]  %s10, 768, %s103, [#allocation9], 128, 128, 8
    $region45: #{forward.1} parent=1 // pred_fallthru
      _
    // Predicated region
    $region46: #{forward.1} parent=1 // pred_check
      _
    $region47: #{forward.1} parent=1 // pred_check_branch
      %110 = sbr.rel (0) target = $region49
    $region48: #{forward.1} parent=1 // pred_region
      _
    $region49: #{forward.1} parent=1 // pred_fallthru
      _
    // Predicated region
    $region50: #{forward.1} parent=1 // pred_check
      _
    $region51: #{forward.1} parent=1 // pred_check_branch
      %112 = sbr.rel (0) target = $region53
    $region52: #{forward.1} parent=1 // pred_region
      %s114 = ssub.s32 32, 32
      %115 = vsyncadd [#allocation12], %s114
      %s116 = sshll.u32 [#allocation11], 4
      %s117 = int_to_ptr.vmem [resolvable:$true] %s116
      %122 = dma.hbm_to_vmem [thread:$0]  %s12, 32, %s117, [#allocation12], 16, 16, 1
    $region53: #{forward.1} parent=1 // pred_fallthru
      _
    // Predicated region
    $region54: #{forward.1} parent=1 // pred_check
      _
    $region55: #{forward.1} parent=1 // pred_check_branch
      %124 = sbr.rel (0) target = $region57
    $region56: #{forward.1} parent=1 // pred_region
      _
    $region57: #{forward.1} parent=1 // pred_fallthru
      _
    // Predicated region
    $region58: #{forward.1} parent=1 // pred_check
      _
    $region59: #{forward.1} parent=1 // pred_check_branch
      %126 = sbr.rel (0) target = $region61
    $region60: #{forward.1} parent=1 // pred_region
      %s128 = ssub.s32 768, 768
      %129 = vsyncadd [#allocation12], %s128
      %s130 = sshll.u32 [#allocation13], 4
      %s131 = int_to_ptr.vmem [resolvable:$true] %s130
      %136 = dma.hbm_to_vmem [thread:$0]  %s14, 768, %s131, [#allocation12], 128, 128, 8
    $region61: #{forward.1} parent=1 // pred_fallthru
      _
    // Predicated region
    $region62: #{forward.1} parent=1 // pred_check
      _
    $region63: #{forward.1} parent=1 // pred_check_branch
      %138 = sbr.rel (0) target = $region65
    $region64: #{forward.1} parent=1 // pred_region
      %s140 = ssub.s32 32, 32
      %141 = vsyncadd [#allocation15], %s140
      %s142 = sshll.u32 [#allocation14], 4
      %s143 = int_to_ptr.vmem [resolvable:$true] %s142
      %148 = dma.hbm_to_vmem [thread:$0]  %s15, 32, %s143, [#allocation15], 16, 16, 1
    $region65: #{forward.1} parent=1 // pred_fallthru
      _
    // Predicated region
    $region66: #{forward.1} parent=1 // pred_check
      _
    $region67: #{forward.1} parent=1 // pred_check_branch
      %150 = sbr.rel (0) target = $region69
    $region68: #{forward.1} parent=1 // pred_region
      %s152 = ssub.s32 32, 32
      %153 = vsyncadd [#allocation15], %s152
      %s154 = sshll.u32 [#allocation16], 4
      %s155 = int_to_ptr.vmem [resolvable:$true] %s154
      %160 = dma.hbm_to_vmem [thread:$0]  %s16, 32, %s155, [#allocation15], 16, 16, 1
    $region69: #{forward.1} parent=1 // pred_fallthru
      _
    // Predicated region
    $region70: #{forward.1} parent=1 // pred_check
      _
    $region71: #{forward.1} parent=1 // pred_check_branch
      %162 = sbr.rel (0) target = $region73
    $region72: #{forward.1} parent=1 // pred_region
      _
    $region73: #{forward.1} parent=1 // pred_fallthru
      _
    // Predicated region
    $region74: #{forward.1} parent=1 // pred_check
      _
    $region75: #{forward.1} parent=1 // pred_check_branch
      %164 = sbr.rel (0) target = $region77
    $region76: #{forward.1} parent=1 // pred_region
      _
    $region77: #{forward.1} parent=1 // pred_fallthru
      _
    // Predicated region
    $region78: #{forward.1} parent=1 // pred_check
      _
    $region79: #{forward.1} parent=1 // pred_check_branch
      %166 = sbr.rel (0) target = $region81
    $region80: #{forward.1} parent=1 // pred_region
      %s168 = ssub.s32 32, 32
      %169 = vsyncadd [#allocation18], %s168
      %s170 = sshll.u32 [#allocation17], 4
      %s171 = int_to_ptr.vmem [resolvable:$true] %s170
      %176 = dma.hbm_to_vmem [thread:$0]  %s19, 32, %s171, [#allocation18], 16, 16, 1
    $region81: #{forward.1} parent=1 // pred_fallthru
      _
    // Predicated region
    $region82: #{forward.1} parent=1 // pred_check
      _
    $region83: #{forward.1} parent=1 // pred_check_branch
      %178 = sbr.rel (0) target = $region85
    $region84: #{forward.1} parent=1 // pred_region
      %s180 = ssub.s32 32, 32
      %181 = vsyncadd [#allocation18], %s180
      %s182 = sshll.u32 [#allocation19], 4
      %s183 = int_to_ptr.vmem [resolvable:$true] %s182
      %188 = dma.hbm_to_vmem [thread:$0]  %s20, 32, %s183, [#allocation18], 16, 16, 1
    $region85: #{forward.1} parent=1 // pred_fallthru
      _
    // Predicated region
    $region86: #{forward.1} parent=1 // pred_check
      _
    $region87: #{forward.1} parent=1 // pred_check_branch
      %190 = sbr.rel (0) target = $region89
    $region88: #{forward.1} parent=1 // pred_region
      _
    $region89: #{forward.1} parent=1 // pred_fallthru
      _
    // Predicated region
    $region90: #{forward.1} parent=1 // pred_check
      _
    $region91: #{forward.1} parent=1 // pred_check_branch
      %192 = sbr.rel (0) target = $region93
    $region92: #{forward.1} parent=1 // pred_region
      %s194 = ssub.s32 16, 16
      %195 = vsyncadd [#allocation21], %s194
      %s197 = sshll.u32 [#allocation20], 4
      %s198 = int_to_ptr.vmem [resolvable:$true] %s197
      %200 = dma.hbm_to_vmem [thread:$0]  %s22, 16, %s198, [#allocation21]
    $region93: #{forward.1} parent=1 // pred_fallthru
      _
    // Predicated region
    $region94: #{forward.1} parent=1 // pred_check
      _
    $region95: #{forward.1} parent=1 // pred_check_branch
      %202 = sbr.rel (0) target = $region97
    $region96: #{forward.1} parent=1 // pred_region
      %203 = dma.done [#allocation3], 64
    $region97: #{forward.1} parent=1 // pred_fallthru
      _
    // Predicated region
    $region98: #{forward.1} parent=1 // pred_check
      _
    $region99: #{forward.1} parent=1 // pred_check_branch
      %205 = sbr.rel (0) target = $region101
    $region100: #{forward.1} parent=1 // pred_region
      %206 = dma.done [#allocation6], 16
    $region101: #{forward.1} parent=1 // pred_fallthru
      _
    // Predicated region
    $region102: #{forward.1} parent=1 // pred_check
      _
    $region103: #{forward.1} parent=1 // pred_check_branch
      %208 = sbr.rel (0) target = $region105
    $region104: #{forward.1} parent=1 // pred_region
      %209 = dma.done [#allocation6], 640
    $region105: #{forward.1} parent=1 // pred_fallthru
      _
    // Predicated region
    $region106: #{forward.1} parent=1 // pred_check
      _
    $region107: #{forward.1} parent=1 // pred_check_branch
      %211 = sbr.rel (0) target = $region109
    $region108: #{forward.1} parent=1 // pred_region
      %212 = dma.done [#allocation9], 256
    $region109: #{forward.1} parent=1 // pred_fallthru
      _
    // Predicated region
    $region110: #{forward.1} parent=1 // pred_check
      _
    $region111: #{forward.1} parent=1 // pred_check_branch
      %214 = sbr.rel (0) target = $region113
    $region112: #{forward.1} parent=1 // pred_region
      %215 = dma.done [#allocation9], 768
    $region113: #{forward.1} parent=1 // pred_fallthru
      _
    // Predicated region
    $region114: #{forward.1} parent=1 // pred_check
      _
    $region115: #{forward.1} parent=1 // pred_check_branch
      %217 = sbr.rel (0) target = $region117
    $region116: #{forward.1} parent=1 // pred_region
      %218 = dma.done [#allocation12], 32
    $region117: #{forward.1} parent=1 // pred_fallthru
      _
    // Predicated region
    $region118: #{forward.1} parent=1 // pred_check
      _
    $region119: #{forward.1} parent=1 // pred_check_branch
      %220 = sbr.rel (0) target = $region121
    $region120: #{forward.1} parent=1 // pred_region
      %221 = dma.done [#allocation12], 768
    $region121: #{forward.1} parent=1 // pred_fallthru
      _
    // Predicated region
    $region122: #{forward.1} parent=1 // pred_check
      _
    $region123: #{forward.1} parent=1 // pred_check_branch
      %223 = sbr.rel (0) target = $region125
    $region124: #{forward.1} parent=1 // pred_region
      %224 = dma.done [#allocation15], 32
    $region125: #{forward.1} parent=1 // pred_fallthru
      _
    // Predicated region
    $region126: #{forward.1} parent=1 // pred_check
      _
    $region127: #{forward.1} parent=1 // pred_check_branch
      %226 = sbr.rel (0) target = $region129
    $region128: #{forward.1} parent=1 // pred_region
      %227 = dma.done [#allocation15], 32
    $region129: #{forward.1} parent=1 // pred_fallthru
      _
    // Predicated region
    $region130: #{forward.1} parent=1 // pred_check
      _
    $region131: #{forward.1} parent=1 // pred_check_branch
      %229 = sbr.rel (0) target = $region133
    $region132: #{forward.1} parent=1 // pred_region
      %230 = dma.done [#allocation18], 32
    $region133: #{forward.1} parent=1 // pred_fallthru
      _
    // Predicated region
    $region134: #{forward.1} parent=1 // pred_check
      _
    $region135: #{forward.1} parent=1 // pred_check_branch
      %232 = sbr.rel (0) target = $region137
    $region136: #{forward.1} parent=1 // pred_region
      %233 = dma.done [#allocation18], 32
    $region137: #{forward.1} parent=1 // pred_fallthru
      _
    // Predicated region
    $region138: #{forward.1} parent=1 // pred_check
      _
    $region139: #{forward.1} parent=1 // pred_check_branch
      %235 = sbr.rel (0) target = $region141
    $region140: #{forward.1} parent=1 // pred_region
      %236 = dma.done [#allocation21], 16
    $region141: #{forward.1} parent=1 // pred_fallthru
      _
    %v237 = vld [vmem:[%s0] sm:$0xff]
    %v238 = vld [vmem:[%s0 + $0x8] sm:$0xff]
    %v239 = vld [vmem:[#allocation2] sm:$0x7]
    %v240 = vld [vmem:[#allocation5] sm:$0x1]
    %v242 = vlaneseq
    %v243 = vshrl.u32 %v242, 7
    %v244 = vsub.s32 0, %v243
    %v245 = vrot.slane %v240, %v244
    %vm247 = vcmask 23552
    %v249 = vsel %vm247, %v237, 0
    %v252 = vsel %vm247, %v238, 0
    %vm254 = vcmask 1042432
    %v256 = vsel %vm254, %v239, 0
    %258 = vmatprep.subr.mxu0 0.0
    %259 = vmatpush1.msra.mxu0 %v256
    %260 = vmatprep.subr.mxu0 0.0
    %261 = vmatpush1.msra.mxu0 0.0
    %262 = vmatprep.subr.mxu0 0.0
    %263 = vmatpush1.msra.mxu0 0.0
    %264 = vmatprep.subr.mxu0 0.0
    %265 = vmatpush1.msra.mxu0 0.0
    %266 = vmatprep.subr.mxu0 0.0
    %267 = vmatpush1.msra.mxu0 0.0
    %268 = vmatprep.subr.mxu0 0.0
    %269 = vmatpush1.msra.mxu0 0.0
    %270 = vmatprep.subr.mxu0 0.0
    %271 = vmatpush1.msra.mxu0 0.0
    %272 = vmatprep.subr.mxu0 0.0
    %273 = vmatpush1.msra.mxu0 0.0
    %274 = vmatprep.subr.mxu0 0.0
    %275 = vmatpush1.msra.mxu0 0.0
    %276 = vmatprep.subr.mxu0 0.0
    %277 = vmatpush1.msra.mxu0 0.0
    %278 = vmatprep.subr.mxu0 0.0
    %279 = vmatpush1.msra.mxu0 0.0
    %280 = vmatprep.subr.mxu0 0.0
    %281 = vmatpush1.msra.mxu0 0.0
    %282 = vmatprep.subr.mxu0 0.0
    %283 = vmatpush1.msra.mxu0 0.0
    %284 = vmatprep.subr.mxu0 0.0
    %285 = vmatpush1.msra.mxu0 0.0
    %286 = vmatprep.subr.mxu0 0.0
    %287 = vmatpush1.msra.mxu0 0.0
    %288 = vmatprep.subr.mxu0 0.0
    %289 = vmatpush1.msra.mxu0 0.0
    %290 = vmatprep.subr.mxu0 0.0
    %291 = vmatpush1.msra.mxu0 0.0
    %292 = vmatprep.subr.mxu0 0.0
    %293 = vmatpush1.msra.mxu0 0.0
    %294 = vmatprep.subr.mxu0 0.0
    %295 = vmatpush1.msra.mxu0 0.0
    %296 = vmatprep.subr.mxu0 0.0
    %297 = vmatpush1.msra.mxu0 0.0
    %298 = vmatprep.subr.mxu0 0.0
    %299 = vmatpush1.msra.mxu0 0.0
    %300 = vmatprep.subr.mxu0 0.0
    %301 = vmatpush1.msra.mxu0 0.0
    %302 = vmatprep.subr.mxu0 0.0
    %303 = vmatpush1.msra.mxu0 0.0
    %304 = vmatprep.subr.mxu0 0.0
    %305 = vmatpush1.msra.mxu0 0.0
    %306 = vmatprep.subr.mxu0 0.0
    %307 = vmatpush1.msra.mxu0 0.0
    %308 = vmatprep.subr.mxu0 0.0
    %309 = vmatpush1.msra.mxu0 0.0
    %310 = vmatprep.subr.mxu0 0.0
    %311 = vmatpush1.msra.mxu0 0.0
    %312 = vmatprep.subr.mxu0 0.0
    %313 = vmatpush1.msra.mxu0 0.0
    %314 = vmatprep.subr.mxu0 0.0
    %315 = vmatpush1.msra.mxu0 0.0
    %316 = vmatprep.subr.mxu0 0.0
    %317 = vmatpush1.msra.mxu0 0.0
    %318 = vmatprep.subr.mxu0 0.0
    %319 = vmatpush1.msra.mxu0 0.0
    %320 = vmatprep.subr.mxu0 0.0
    %321 = vmatpush1.msra.mxu0 0.0
    %322 = vmatprep.mubr.f32.mxu0 0.0
    %323 = vmatmul.mubr.f32.gmra.mrb[0].mxu0 %v249
    %v324 = vpop.f32.mrb[0].mxu0
    %v325 = vadd.f32 %v245, %v324
    %v326 = vpop.f32.mrb[0].mxu0
    %327 = vmatprep.mubr.f32.mxu0 0.0
    %328 = vmatmul.mubr.f32.gmra.mrb[0].mxu0 %v252
    %v329 = vpop.f32.mrb[0].mxu0
    %v330 = vadd.f32 %v245, %v329
    %v331 = vpop.f32.mrb[0].mxu0
    %332 = vdwg.mxu0
    %vm333 = vcmp.gt.f32.partialorder %v325, 0.0
    %vm334 = vcmp.gt.f32.partialorder %v330, 0.0
    %v335 = vmul.f32 %v325, 1.442695
    %v336 = vpow.pop %v335
    %v337 = vmul.f32 %v330, 1.442695
    %v338 = vpow.pop %v337
    %v339 = vsub.f32 %v336, 1.0
    %v340 = vsub.f32 %v338, 1.0
    %v341 = vmul.f32 %v339, 1.6732632
    %v342 = vmul.f32 %v340, 1.6732632
    %v343 = vsel %vm333, %v325, %v341
    %v344 = vsel %vm334, %v330, %v342
    %v345 = vmul.f32 %v343, 1.050701
    %v346 = vmul.f32 %v344, 1.050701
    %v347 = vld [vmem:[#allocation7] sm:$0xff]
    %v348 = vld [vmem:[#allocation7 + $0x8] sm:$0xff]
    %v349 = vld [vmem:[#allocation7 + $0x10] sm:$0xff]
    %v350 = vld [vmem:[#allocation7 + $0x18] sm:$0xff]
    %v351 = vld [vmem:[#allocation7 + $0x20] sm:$0xf]
    %v352 = vld [vmem:[%s6] sm:$0x1]
    %v354 = vlaneseq
    %v355 = vshrl.u32 %v354, 7
    %v356 = vsub.s32 0, %v355
    %v357 = vrot.slane %v352, %v356
    %vm359 = vcmask 293888
    %v361 = vsel %vm359, %v345, 0
    %v364 = vsel %vm359, %v346, 0
    %vm366 = vcmask 1043456
    %v368 = vsel %vm366, %v351, 0
    %370 = vmatprep.subr.mxu0 0.0
    %371 = vmatpush1.msra.mxu0 %v347
    %372 = vmatprep.subr.mxu0 0.0
    %373 = vmatpush1.msra.mxu0 %v348
    %374 = vmatprep.subr.mxu0 0.0
    %375 = vmatpush1.msra.mxu0 %v349
    %376 = vmatprep.subr.mxu0 0.0
    %377 = vmatpush1.msra.mxu0 %v350
    %378 = vmatprep.subr.mxu0 0.0
    %379 = vmatpush1.msra.mxu0 %v368
    %380 = vmatprep.subr.mxu0 0.0
    %381 = vmatpush1.msra.mxu0 0.0
    %382 = vmatprep.subr.mxu0 0.0
    %383 = vmatpush1.msra.mxu0 0.0
    %384 = vmatprep.subr.mxu0 0.0
    %385 = vmatpush1.msra.mxu0 0.0
    %386 = vmatprep.subr.mxu0 0.0
    %387 = vmatpush1.msra.mxu0 0.0
    %388 = vmatprep.subr.mxu0 0.0
    %389 = vmatpush1.msra.mxu0 0.0
    %390 = vmatprep.subr.mxu0 0.0
    %391 = vmatpush1.msra.mxu0 0.0
    %392 = vmatprep.subr.mxu0 0.0
    %393 = vmatpush1.msra.mxu0 0.0
    %394 = vmatprep.subr.mxu0 0.0
    %395 = vmatpush1.msra.mxu0 0.0
    %396 = vmatprep.subr.mxu0 0.0
    %397 = vmatpush1.msra.mxu0 0.0
    %398 = vmatprep.subr.mxu0 0.0
    %399 = vmatpush1.msra.mxu0 0.0
    %400 = vmatprep.subr.mxu0 0.0
    %401 = vmatpush1.msra.mxu0 0.0
    %402 = vmatprep.subr.mxu0 0.0
    %403 = vmatpush1.msra.mxu0 0.0
    %404 = vmatprep.subr.mxu0 0.0
    %405 = vmatpush1.msra.mxu0 0.0
    %406 = vmatprep.subr.mxu0 0.0
    %407 = vmatpush1.msra.mxu0 0.0
    %408 = vmatprep.subr.mxu0 0.0
    %409 = vmatpush1.msra.mxu0 0.0
    %410 = vmatprep.subr.mxu0 0.0
    %411 = vmatpush1.msra.mxu0 0.0
    %412 = vmatprep.subr.mxu0 0.0
    %413 = vmatpush1.msra.mxu0 0.0
    %414 = vmatprep.subr.mxu0 0.0
    %415 = vmatpush1.msra.mxu0 0.0
    %416 = vmatprep.subr.mxu0 0.0
    %417 = vmatpush1.msra.mxu0 0.0
    %418 = vmatprep.subr.mxu0 0.0
    %419 = vmatpush1.msra.mxu0 0.0
    %420 = vmatprep.subr.mxu0 0.0
    %421 = vmatpush1.msra.mxu0 0.0
    %422 = vmatprep.subr.mxu0 0.0
    %423 = vmatpush1.msra.mxu0 0.0
    %424 = vmatprep.subr.mxu0 0.0
    %425 = vmatpush1.msra.mxu0 0.0
    %426 = vmatprep.subr.mxu0 0.0
    %427 = vmatpush1.msra.mxu0 0.0
    %428 = vmatprep.subr.mxu0 0.0
    %429 = vmatpush1.msra.mxu0 0.0
    %430 = vmatprep.subr.mxu0 0.0
    %431 = vmatpush1.msra.mxu0 0.0
    %432 = vmatprep.subr.mxu0 0.0
    %433 = vmatpush1.msra.mxu0 0.0
    %434 = vmatprep.mubr.f32.mxu0 0.0
    %435 = vmatmul.mubr.f32.gmra.mrb[0].mxu0 %v361
    %v436 = vpop.f32.mrb[0].mxu0
    %v437 = vadd.f32 %v357, %v436
    %v438 = vpop.f32.mrb[0].mxu0
    %439 = vmatprep.mubr.f32.mxu0 0.0
    %440 = vmatmul.mubr.f32.gmra.mrb[0].mxu0 %v364
    %v441 = vpop.f32.mrb[0].mxu0
    %v442 = vadd.f32 %v357, %v441
    %v443 = vpop.f32.mrb[0].mxu0
    %444 = vdwg.mxu0
    %vm445 = vcmp.gt.f32.partialorder %v437, 0.0
    %vm446 = vcmp.gt.f32.partialorder %v442, 0.0
    %v447 = vmul.f32 %v437, 1.442695
    %v448 = vpow.pop %v447
    %v449 = vmul.f32 %v442, 1.442695
    %v450 = vpow.pop %v449
    %v451 = vsub.f32 %v448, 1.0
    %v452 = vsub.f32 %v450, 1.0
    %v453 = vmul.f32 %v451, 1.6732632
    %v454 = vmul.f32 %v452, 1.6732632
    %v455 = vsel %vm445, %v437, %v453
    %v456 = vsel %vm446, %v442, %v454
    %v457 = vmul.f32 %v455, 1.050701
    %v458 = vmul.f32 %v456, 1.050701
    %v459 = vld [vmem:[%s7] sm:$0xff]
    %v460 = vld [vmem:[%s7 + $0x8] sm:$0xff]
    %v461 = vld [vmem:[%s7 + $0x10] sm:$0xff]
    %v462 = vld [vmem:[%s7 + $0x18] sm:$0xff]
    %v463 = vld [vmem:[%s7 + $0x20] sm:$0xf]
    %v464 = vld [vmem:[%s8] sm:$0x1]
    %v466 = vlaneseq
    %v467 = vshrl.u32 %v466, 7
    %v468 = vsub.s32 0, %v467
    %v469 = vrot.slane %v464, %v468
    %v472 = vsel %vm359, %v457, 0
    %v475 = vsel %vm359, %v458, 0
    %v478 = vsel %vm366, %v463, 0
    %480 = vmatprep.subr.mxu0 0.0
    %481 = vmatpush1.msra.mxu0 %v459
    %482 = vmatprep.subr.mxu0 0.0
    %483 = vmatpush1.msra.mxu0 %v460
    %484 = vmatprep.subr.mxu0 0.0
    %485 = vmatpush1.msra.mxu0 %v461
    %486 = vmatprep.subr.mxu0 0.0
    %487 = vmatpush1.msra.mxu0 %v462
    %488 = vmatprep.subr.mxu0 0.0
    %489 = vmatpush1.msra.mxu0 %v478
    %490 = vmatprep.subr.mxu0 0.0
    %491 = vmatpush1.msra.mxu0 0.0
    %492 = vmatprep.subr.mxu0 0.0
    %493 = vmatpush1.msra.mxu0 0.0
    %494 = vmatprep.subr.mxu0 0.0
    %495 = vmatpush1.msra.mxu0 0.0
    %496 = vmatprep.subr.mxu0 0.0
    %497 = vmatpush1.msra.mxu0 0.0
    %498 = vmatprep.subr.mxu0 0.0
    %499 = vmatpush1.msra.mxu0 0.0
    %500 = vmatprep.subr.mxu0 0.0
    %501 = vmatpush1.msra.mxu0 0.0
    %502 = vmatprep.subr.mxu0 0.0
    %503 = vmatpush1.msra.mxu0 0.0
    %504 = vmatprep.subr.mxu0 0.0
    %505 = vmatpush1.msra.mxu0 0.0
    %506 = vmatprep.subr.mxu0 0.0
    %507 = vmatpush1.msra.mxu0 0.0
    %508 = vmatprep.subr.mxu0 0.0
    %509 = vmatpush1.msra.mxu0 0.0
    %510 = vmatprep.subr.mxu0 0.0
    %511 = vmatpush1.msra.mxu0 0.0
    %512 = vmatprep.subr.mxu0 0.0
    %513 = vmatpush1.msra.mxu0 0.0
    %514 = vmatprep.subr.mxu0 0.0
    %515 = vmatpush1.msra.mxu0 0.0
    %516 = vmatprep.subr.mxu0 0.0
    %517 = vmatpush1.msra.mxu0 0.0
    %518 = vmatprep.subr.mxu0 0.0
    %519 = vmatpush1.msra.mxu0 0.0
    %520 = vmatprep.subr.mxu0 0.0
    %521 = vmatpush1.msra.mxu0 0.0
    %522 = vmatprep.subr.mxu0 0.0
    %523 = vmatpush1.msra.mxu0 0.0
    %524 = vmatprep.subr.mxu0 0.0
    %525 = vmatpush1.msra.mxu0 0.0
    %526 = vmatprep.subr.mxu0 0.0
    %527 = vmatpush1.msra.mxu0 0.0
    %528 = vmatprep.subr.mxu0 0.0
    %529 = vmatpush1.msra.mxu0 0.0
    %530 = vmatprep.subr.mxu0 0.0
    %531 = vmatpush1.msra.mxu0 0.0
    %532 = vmatprep.subr.mxu0 0.0
    %533 = vmatpush1.msra.mxu0 0.0
    %534 = vmatprep.subr.mxu0 0.0
    %535 = vmatpush1.msra.mxu0 0.0
    %536 = vmatprep.subr.mxu0 0.0
    %537 = vmatpush1.msra.mxu0 0.0
    %538 = vmatprep.subr.mxu0 0.0
    %539 = vmatpush1.msra.mxu0 0.0
    %540 = vmatprep.subr.mxu0 0.0
    %541 = vmatpush1.msra.mxu0 0.0
    %542 = vmatprep.subr.mxu0 0.0
    %543 = vmatpush1.msra.mxu0 0.0
    %544 = vmatprep.mubr.f32.mxu0 0.0
    %545 = vmatmul.mubr.f32.gmra.mrb[0].mxu0 %v472
    %v546 = vpop.f32.mrb[0].mxu0
    %v547 = vadd.f32 %v469, %v546
    %v548 = vpop.f32.mrb[0].mxu0
    %549 = vmatprep.mubr.f32.mxu0 0.0
    %550 = vmatmul.mubr.f32.gmra.mrb[0].mxu0 %v475
    %v551 = vpop.f32.mrb[0].mxu0
    %v552 = vadd.f32 %v469, %v551
    %v553 = vpop.f32.mrb[0].mxu0
    %554 = vdwg.mxu0
    %vm555 = vcmp.gt.f32.partialorder %v547, 0.0
    %vm556 = vcmp.gt.f32.partialorder %v552, 0.0
    %v557 = vmul.f32 %v547, 1.442695
    %v558 = vpow.pop %v557
    %v559 = vmul.f32 %v552, 1.442695
    %v560 = vpow.pop %v559
    %v561 = vsub.f32 %v558, 1.0
    %v562 = vsub.f32 %v560, 1.0
    %v563 = vmul.f32 %v561, 1.6732632
    %v564 = vmul.f32 %v562, 1.6732632
    %v565 = vsel %vm555, %v547, %v563
    %v566 = vsel %vm556, %v552, %v564
    %v567 = vmul.f32 %v565, 1.050701
    %v568 = vmul.f32 %v566, 1.050701
    %v569 = vld [vmem:[#allocation8] sm:$0xff]
    %v570 = vld [vmem:[#allocation8 + $0x8] sm:$0xff]
    %v571 = vld [vmem:[#allocation10] sm:$0xff]
    %v572 = vld [vmem:[#allocation10 + $0x8] sm:$0xff]
    %v573 = vld [vmem:[#allocation10 + $0x10] sm:$0xff]
    %v574 = vld [vmem:[#allocation10 + $0x18] sm:$0xff]
    %v575 = vld [vmem:[#allocation10 + $0x20] sm:$0xff]
    %v576 = vld [vmem:[#allocation10 + $0x28] sm:$0xff]
    %v577 = vld [vmem:[%s11] sm:$0x1]
    %v578 = vld [vmem:[%s11 + $0x1] sm:$0x1]
    %v579 = vld [vmem:[#allocation11] sm:$0x1]
    %v580 = vld [vmem:[#allocation11 + $0x1] sm:$0x1]
    %v582 = vlaneseq
    %v583 = vshrl.u32 %v582, 7
    %v584 = vsub.s32 0, %v583
    %v585 = vrot.slane %v577, %v584
    %vm587 = vcmask 64512
    %v589 = vsel %vm587, %v567, 0
    %v592 = vsel %vm587, %v568, 0
    %594 = vmatprep.subr.mxu0 0.0
    %595 = vmatpush1.msra.mxu0 %v569
    %596 = vmatprep.subr.mxu0 0.0
    %597 = vmatpush1.msra.mxu0 0.0
    %598 = vmatprep.subr.mxu0 0.0
    %599 = vmatpush1.msra.mxu0 0.0
    %600 = vmatprep.subr.mxu0 0.0
    %601 = vmatpush1.msra.mxu0 0.0
    %602 = vmatprep.subr.mxu0 0.0
    %603 = vmatpush1.msra.mxu0 0.0
    %604 = vmatprep.subr.mxu0 0.0
    %605 = vmatpush1.msra.mxu0 0.0
    %606 = vmatprep.subr.mxu0 0.0
    %607 = vmatpush1.msra.mxu0 0.0
    %608 = vmatprep.subr.mxu0 0.0
    %609 = vmatpush1.msra.mxu0 0.0
    %610 = vmatprep.subr.mxu0 0.0
    %611 = vmatpush1.msra.mxu0 0.0
    %612 = vmatprep.subr.mxu0 0.0
    %613 = vmatpush1.msra.mxu0 0.0
    %614 = vmatprep.subr.mxu0 0.0
    %615 = vmatpush1.msra.mxu0 0.0
    %616 = vmatprep.subr.mxu0 0.0
    %617 = vmatpush1.msra.mxu0 0.0
    %618 = vmatprep.subr.mxu0 0.0
    %619 = vmatpush1.msra.mxu0 0.0
    %620 = vmatprep.subr.mxu0 0.0
    %621 = vmatpush1.msra.mxu0 0.0
    %622 = vmatprep.subr.mxu0 0.0
    %623 = vmatpush1.msra.mxu0 0.0
    %624 = vmatprep.subr.mxu0 0.0
    %625 = vmatpush1.msra.mxu0 0.0
    %626 = vmatprep.subr.mxu0 0.0
    %627 = vmatpush1.msra.mxu0 0.0
    %628 = vmatprep.subr.mxu0 0.0
    %629 = vmatpush1.msra.mxu0 0.0
    %630 = vmatprep.subr.mxu0 0.0
    %631 = vmatpush1.msra.mxu0 0.0
    %632 = vmatprep.subr.mxu0 0.0
    %633 = vmatpush1.msra.mxu0 0.0
    %634 = vmatprep.subr.mxu0 0.0
    %635 = vmatpush1.msra.mxu0 0.0
    %636 = vmatprep.subr.mxu0 0.0
    %637 = vmatpush1.msra.mxu0 0.0
    %638 = vmatprep.subr.mxu0 0.0
    %639 = vmatpush1.msra.mxu0 0.0
    %640 = vmatprep.subr.mxu0 0.0
    %641 = vmatpush1.msra.mxu0 0.0
    %642 = vmatprep.subr.mxu0 0.0
    %643 = vmatpush1.msra.mxu0 0.0
    %644 = vmatprep.subr.mxu0 0.0
    %645 = vmatpush1.msra.mxu0 0.0
    %646 = vmatprep.subr.mxu0 0.0
    %647 = vmatpush1.msra.mxu0 0.0
    %648 = vmatprep.subr.mxu0 0.0
    %649 = vmatpush1.msra.mxu0 0.0
    %650 = vmatprep.subr.mxu0 0.0
    %651 = vmatpush1.msra.mxu0 0.0
    %652 = vmatprep.subr.mxu0 0.0
    %653 = vmatpush1.msra.mxu0 0.0
    %654 = vmatprep.subr.mxu0 0.0
    %655 = vmatpush1.msra.mxu0 0.0
    %656 = vmatprep.subr.mxu0 0.0
    %657 = vmatpush1.msra.mxu0 0.0
    %658 = vmatprep.mubr.f32.mxu0 0.0
    %659 = vmatmul.mubr.f32.gmra.mrb[0].mxu0 %v589
    %v660 = vpop.f32.mrb[0].mxu0
    %v661 = vadd.f32 %v585, %v660
    %v662 = vpop.f32.mrb[0].mxu0
    %663 = vmatprep.mubr.f32.mxu0 0.0
    %664 = vmatmul.mubr.f32.gmra.mrb[0].mxu0 %v592
    %v665 = vpop.f32.mrb[0].mxu0
    %v666 = vadd.f32 %v585, %v665
    %v667 = vpop.f32.mrb[0].mxu0
    %668 = vdwg.mxu0
    %v670 = vlaneseq
    %v671 = vshrl.u32 %v670, 7
    %v672 = vsub.s32 0, %v671
    %v673 = vrot.slane %v578, %v672
    %675 = vmatprep.subr.mxu0 0.0
    %676 = vmatpush1.msra.mxu0 %v570
    %677 = vmatprep.subr.mxu0 0.0
    %678 = vmatpush1.msra.mxu0 0.0
    %679 = vmatprep.subr.mxu0 0.0
    %680 = vmatpush1.msra.mxu0 0.0
    %681 = vmatprep.subr.mxu0 0.0
    %682 = vmatpush1.msra.mxu0 0.0
    %683 = vmatprep.subr.mxu0 0.0
    %684 = vmatpush1.msra.mxu0 0.0
    %685 = vmatprep.subr.mxu0 0.0
    %686 = vmatpush1.msra.mxu0 0.0
    %687 = vmatprep.subr.mxu0 0.0
    %688 = vmatpush1.msra.mxu0 0.0
    %689 = vmatprep.subr.mxu0 0.0
    %690 = vmatpush1.msra.mxu0 0.0
    %691 = vmatprep.subr.mxu0 0.0
    %692 = vmatpush1.msra.mxu0 0.0
    %693 = vmatprep.subr.mxu0 0.0
    %694 = vmatpush1.msra.mxu0 0.0
    %695 = vmatprep.subr.mxu0 0.0
    %696 = vmatpush1.msra.mxu0 0.0
    %697 = vmatprep.subr.mxu0 0.0
    %698 = vmatpush1.msra.mxu0 0.0
    %699 = vmatprep.subr.mxu0 0.0
    %700 = vmatpush1.msra.mxu0 0.0
    %701 = vmatprep.subr.mxu0 0.0
    %702 = vmatpush1.msra.mxu0 0.0
    %703 = vmatprep.subr.mxu0 0.0
    %704 = vmatpush1.msra.mxu0 0.0
    %705 = vmatprep.subr.mxu0 0.0
    %706 = vmatpush1.msra.mxu0 0.0
    %707 = vmatprep.subr.mxu0 0.0
    %708 = vmatpush1.msra.mxu0 0.0
    %709 = vmatprep.subr.mxu0 0.0
    %710 = vmatpush1.msra.mxu0 0.0
    %711 = vmatprep.subr.mxu0 0.0
    %712 = vmatpush1.msra.mxu0 0.0
    %713 = vmatprep.subr.mxu0 0.0
    %714 = vmatpush1.msra.mxu0 0.0
    %715 = vmatprep.subr.mxu0 0.0
    %716 = vmatpush1.msra.mxu0 0.0
    %717 = vmatprep.subr.mxu0 0.0
    %718 = vmatpush1.msra.mxu0 0.0
    %719 = vmatprep.subr.mxu0 0.0
    %720 = vmatpush1.msra.mxu0 0.0
    %721 = vmatprep.subr.mxu0 0.0
    %722 = vmatpush1.msra.mxu0 0.0
    %723 = vmatprep.subr.mxu0 0.0
    %724 = vmatpush1.msra.mxu0 0.0
    %725 = vmatprep.subr.mxu0 0.0
    %726 = vmatpush1.msra.mxu0 0.0
    %727 = vmatprep.subr.mxu0 0.0
    %728 = vmatpush1.msra.mxu0 0.0
    %729 = vmatprep.subr.mxu0 0.0
    %730 = vmatpush1.msra.mxu0 0.0
    %731 = vmatprep.subr.mxu0 0.0
    %732 = vmatpush1.msra.mxu0 0.0
    %733 = vmatprep.subr.mxu0 0.0
    %734 = vmatpush1.msra.mxu0 0.0
    %735 = vmatprep.subr.mxu0 0.0
    %736 = vmatpush1.msra.mxu0 0.0
    %737 = vmatprep.subr.mxu0 0.0
    %738 = vmatpush1.msra.mxu0 0.0
    %739 = vmatprep.mubr.f32.mxu0 0.0
    %740 = vmatmul.mubr.f32.gmra.mrb[0].mxu0 %v589
    %v741 = vpop.f32.mrb[0].mxu0
    %v742 = vadd.f32 %v673, %v741
    %v743 = vpop.f32.mrb[0].mxu0
    %744 = vmatprep.mubr.f32.mxu0 0.0
    %745 = vmatmul.mubr.f32.gmra.mrb[0].mxu0 %v592
    %v746 = vpop.f32.mrb[0].mxu0
    %v747 = vadd.f32 %v673, %v746
    %v748 = vpop.f32.mrb[0].mxu0
    %749 = vdwg.mxu0
    %vm750 = vcmask 195584
    %v752 = vsel %vm750, 0.0, 0
    %754 = vmatprep.subr.mxu0 0.0
    %755 = vmatpush1.msra.mxu0 %v571
    %756 = vmatprep.subr.mxu0 0.0
    %757 = vmatpush1.msra.mxu0 %v572
    %758 = vmatprep.subr.mxu0 0.0
    %759 = vmatpush1.msra.mxu0 %v573
    %760 = vmatprep.subr.mxu0 0.0
    %761 = vmatpush1.msra.mxu0 0.0
    %762 = vmatprep.subr.mxu0 0.0
    %763 = vmatpush1.msra.mxu0 0.0
    %764 = vmatprep.subr.mxu0 0.0
    %765 = vmatpush1.msra.mxu0 0.0
    %766 = vmatprep.subr.mxu0 0.0
    %767 = vmatpush1.msra.mxu0 0.0
    %768 = vmatprep.subr.mxu0 0.0
    %769 = vmatpush1.msra.mxu0 0.0
    %770 = vmatprep.subr.mxu0 0.0
    %771 = vmatpush1.msra.mxu0 0.0
    %772 = vmatprep.subr.mxu0 0.0
    %773 = vmatpush1.msra.mxu0 0.0
    %774 = vmatprep.subr.mxu0 0.0
    %775 = vmatpush1.msra.mxu0 0.0
    %776 = vmatprep.subr.mxu0 0.0
    %777 = vmatpush1.msra.mxu0 0.0
    %778 = vmatprep.subr.mxu0 0.0
    %779 = vmatpush1.msra.mxu0 0.0
    %780 = vmatprep.subr.mxu0 0.0
    %781 = vmatpush1.msra.mxu0 0.0
    %782 = vmatprep.subr.mxu0 0.0
    %783 = vmatpush1.msra.mxu0 0.0
    %784 = vmatprep.subr.mxu0 0.0
    %785 = vmatpush1.msra.mxu0 0.0
    %786 = vmatprep.subr.mxu0 0.0
    %787 = vmatpush1.msra.mxu0 0.0
    %788 = vmatprep.subr.mxu0 0.0
    %789 = vmatpush1.msra.mxu0 0.0
    %790 = vmatprep.subr.mxu0 0.0
    %791 = vmatpush1.msra.mxu0 0.0
    %792 = vmatprep.subr.mxu0 0.0
    %793 = vmatpush1.msra.mxu0 0.0
    %794 = vmatprep.subr.mxu0 0.0
    %795 = vmatpush1.msra.mxu0 0.0
    %796 = vmatprep.subr.mxu0 0.0
    %797 = vmatpush1.msra.mxu0 0.0
    %798 = vmatprep.subr.mxu0 0.0
    %799 = vmatpush1.msra.mxu0 0.0
    %800 = vmatprep.subr.mxu0 0.0
    %801 = vmatpush1.msra.mxu0 0.0
    %802 = vmatprep.subr.mxu0 0.0
    %803 = vmatpush1.msra.mxu0 0.0
    %804 = vmatprep.subr.mxu0 0.0
    %805 = vmatpush1.msra.mxu0 0.0
    %806 = vmatprep.subr.mxu0 0.0
    %807 = vmatpush1.msra.mxu0 0.0
    %808 = vmatprep.subr.mxu0 0.0
    %809 = vmatpush1.msra.mxu0 0.0
    %810 = vmatprep.subr.mxu0 0.0
    %811 = vmatpush1.msra.mxu0 0.0
    %812 = vmatprep.subr.mxu0 0.0
    %813 = vmatpush1.msra.mxu0 0.0
    %814 = vmatprep.subr.mxu0 0.0
    %815 = vmatpush1.msra.mxu0 0.0
    %816 = vmatprep.subr.mxu0 0.0
    %817 = vmatpush1.msra.mxu0 0.0
    %818 = vmatprep.mubr.f32.mxu0 0.0
    %819 = vmatmul.mubr.f32.gmra.mrb[0].mxu0 %v752
    %v820 = vpop.f32.mrb[0].mxu0
    %v821 = vadd.f32 0.0, %v820
    %v822 = vpop.f32.mrb[0].mxu0
    %823 = vdwg.mxu0
    %v824 = vadd.f32 %v661, %v821
    %v825 = vxor.u32 %v824, 2147483648
    %v826 = vmul.f32 %v825, 1.442695
    %v827 = vpow.pop %v826
    %v828 = vadd.f32 %v827, 1.0
    %v829 = vrcp.pop %v828
    %v830 = vmul.f32 1.0, %v829
    %v832 = vlaneseq
    %v833 = vshrl.u32 %v832, 7
    %v834 = vsub.s32 0, %v833
    %v835 = vrot.slane %v579, %v834
    %836 = vrot.lane.b32.xlu0 %v835, 48
    %v837 = vpop.permute.xlu0 %836
    %v839 = vadd.f32 %v821, %v837
    %841 = vrot.lane.b32.xlu0 %v839, 80
    %v842 = vpop.permute.xlu0 %841
    %v844 = vmul.f32 %v830, %v842
    %846 = vrot.lane.b32.xlu0 %v844, 48
    %v847 = vpop.permute.xlu0 %846
    %v849 = vadd.f32 %v661, %v847
    %v850 = vtanh.pop %v849
    %v851 = vsub.f32 1.0, %v830
    %853 = vrot.lane.b32.xlu0 %v850, 104
    %v854 = vpop.permute.xlu0 %853
    %v856 = vmul.f32 %v851, %v854
    %v857 = vmul.f32 %v830, 0.0
    %v858 = vadd.f32 %v856, %v857
    %859 = vmatprep.subr.mxu0 0.0
    %860 = vmatpush1.msra.mxu0 %v574
    %861 = vmatprep.subr.mxu0 0.0
    %862 = vmatpush1.msra.mxu0 %v575
    %863 = vmatprep.subr.mxu0 0.0
    %864 = vmatpush1.msra.mxu0 %v576
    %865 = vmatprep.subr.mxu0 0.0
    %866 = vmatpush1.msra.mxu0 0.0
    %867 = vmatprep.subr.mxu0 0.0
    %868 = vmatpush1.msra.mxu0 0.0
    %869 = vmatprep.subr.mxu0 0.0
    %870 = vmatpush1.msra.mxu0 0.0
    %871 = vmatprep.subr.mxu0 0.0
    %872 = vmatpush1.msra.mxu0 0.0
    %873 = vmatprep.subr.mxu0 0.0
    %874 = vmatpush1.msra.mxu0 0.0
    %875 = vmatprep.subr.mxu0 0.0
    %876 = vmatpush1.msra.mxu0 0.0
    %877 = vmatprep.subr.mxu0 0.0
    %878 = vmatpush1.msra.mxu0 0.0
    %879 = vmatprep.subr.mxu0 0.0
    %880 = vmatpush1.msra.mxu0 0.0
    %881 = vmatprep.subr.mxu0 0.0
    %882 = vmatpush1.msra.mxu0 0.0
    %883 = vmatprep.subr.mxu0 0.0
    %884 = vmatpush1.msra.mxu0 0.0
    %885 = vmatprep.subr.mxu0 0.0
    %886 = vmatpush1.msra.mxu0 0.0
    %887 = vmatprep.subr.mxu0 0.0
    %888 = vmatpush1.msra.mxu0 0.0
    %889 = vmatprep.subr.mxu0 0.0
    %890 = vmatpush1.msra.mxu0 0.0
    %891 = vmatprep.subr.mxu0 0.0
    %892 = vmatpush1.msra.mxu0 0.0
    %893 = vmatprep.subr.mxu0 0.0
    %894 = vmatpush1.msra.mxu0 0.0
    %895 = vmatprep.subr.mxu0 0.0
    %896 = vmatpush1.msra.mxu0 0.0
    %897 = vmatprep.subr.mxu0 0.0
    %898 = vmatpush1.msra.mxu0 0.0
    %899 = vmatprep.subr.mxu0 0.0
    %900 = vmatpush1.msra.mxu0 0.0
    %901 = vmatprep.subr.mxu0 0.0
    %902 = vmatpush1.msra.mxu0 0.0
    %903 = vmatprep.subr.mxu0 0.0
    %904 = vmatpush1.msra.mxu0 0.0
    %905 = vmatprep.subr.mxu0 0.0
    %906 = vmatpush1.msra.mxu0 0.0
    %907 = vmatprep.subr.mxu0 0.0
    %908 = vmatpush1.msra.mxu0 0.0
    %909 = vmatprep.subr.mxu0 0.0
    %910 = vmatpush1.msra.mxu0 0.0
    %911 = vmatprep.subr.mxu0 0.0
    %912 = vmatpush1.msra.mxu0 0.0
    %913 = vmatprep.subr.mxu0 0.0
    %914 = vmatpush1.msra.mxu0 0.0
    %915 = vmatprep.subr.mxu0 0.0
    %916 = vmatpush1.msra.mxu0 0.0
    %917 = vmatprep.subr.mxu0 0.0
    %918 = vmatpush1.msra.mxu0 0.0
    %919 = vmatprep.subr.mxu0 0.0
    %920 = vmatpush1.msra.mxu0 0.0
    %921 = vmatprep.subr.mxu0 0.0
    %922 = vmatpush1.msra.mxu0 0.0
    %923 = vmatprep.mubr.f32.mxu0 0.0
    %924 = vmatmul.mubr.f32.gmra.mrb[0].mxu0 %v752
    %v925 = vpop.f32.mrb[0].mxu0
    %v926 = vadd.f32 0.0, %v925
    %v927 = vpop.f32.mrb[0].mxu0
    %928 = vdwg.mxu0
    %v930 = vrot.slane %v926, 2
    %v932 = vadd.f32 %v747, %v930
    %v933 = vxor.u32 %v932, 2147483648
    %v934 = vmul.f32 %v933, 1.442695
    %v935 = vpow.pop %v934
    %v936 = vadd.f32 %v935, 1.0
    %v937 = vrcp.pop %v936
    %v938 = vmul.f32 1.0, %v937
    %v940 = vlaneseq
    %v941 = vshrl.u32 %v940, 7
    %v942 = vsub.s32 0, %v941
    %v943 = vrot.slane %v580, %v942
    %944 = vrot.lane.b32.xlu0 %v943, 48
    %v945 = vpop.permute.xlu0 %944
    %v947 = vadd.f32 %v926, %v945
    %v949 = vrot.slane %v947, 2
    %950 = vrot.lane.b32.xlu0 %v949, 80
    %v951 = vpop.permute.xlu0 %950
    %v953 = vmul.f32 %v938, %v951
    %955 = vrot.lane.b32.xlu0 %v953, 48
    %v956 = vpop.permute.xlu0 %955
    %v958 = vadd.f32 %v747, %v956
    %v959 = vtanh.pop %v958
    %v960 = vsub.f32 1.0, %v938
    %962 = vrot.lane.b32.xlu0 %v959, 104
    %v963 = vpop.permute.xlu0 %962
    %v965 = vmul.f32 %v960, %v963
    %v966 = vmul.f32 %v938, 0.0
    %v967 = vadd.f32 %v965, %v966
    %969 = vrot.lane.b32.xlu0 %v858, 104
    %v970 = vpop.permute.xlu0 %969
    %v971 = vsel %vm750, %v970, 0
    %973 = vmatprep.subr.mxu0 0.0
    %974 = vmatpush1.msra.mxu0 %v571
    %975 = vmatprep.subr.mxu0 0.0
    %976 = vmatpush1.msra.mxu0 %v572
    %977 = vmatprep.subr.mxu0 0.0
    %978 = vmatpush1.msra.mxu0 %v573
    %979 = vmatprep.subr.mxu0 0.0
    %980 = vmatpush1.msra.mxu0 0.0
    %981 = vmatprep.subr.mxu0 0.0
    %982 = vmatpush1.msra.mxu0 0.0
    %983 = vmatprep.subr.mxu0 0.0
    %984 = vmatpush1.msra.mxu0 0.0
    %985 = vmatprep.subr.mxu0 0.0
    %986 = vmatpush1.msra.mxu0 0.0
    %987 = vmatprep.subr.mxu0 0.0
    %988 = vmatpush1.msra.mxu0 0.0
    %989 = vmatprep.subr.mxu0 0.0
    %990 = vmatpush1.msra.mxu0 0.0
    %991 = vmatprep.subr.mxu0 0.0
    %992 = vmatpush1.msra.mxu0 0.0
    %993 = vmatprep.subr.mxu0 0.0
    %994 = vmatpush1.msra.mxu0 0.0
    %995 = vmatprep.subr.mxu0 0.0
    %996 = vmatpush1.msra.mxu0 0.0
    %997 = vmatprep.subr.mxu0 0.0
    %998 = vmatpush1.msra.mxu0 0.0
    %999 = vmatprep.subr.mxu0 0.0
    %1000 = vmatpush1.msra.mxu0 0.0
    %1001 = vmatprep.subr.mxu0 0.0
    %1002 = vmatpush1.msra.mxu0 0.0
    %1003 = vmatprep.subr.mxu0 0.0
    %1004 = vmatpush1.msra.mxu0 0.0
    %1005 = vmatprep.subr.mxu0 0.0
    %1006 = vmatpush1.msra.mxu0 0.0
    %1007 = vmatprep.subr.mxu0 0.0
    %1008 = vmatpush1.msra.mxu0 0.0
    %1009 = vmatprep.subr.mxu0 0.0
    %1010 = vmatpush1.msra.mxu0 0.0
    %1011 = vmatprep.subr.mxu0 0.0
    %1012 = vmatpush1.msra.mxu0 0.0
    %1013 = vmatprep.subr.mxu0 0.0
    %1014 = vmatpush1.msra.mxu0 0.0
    %1015 = vmatprep.subr.mxu0 0.0
    %1016 = vmatpush1.msra.mxu0 0.0
    %1017 = vmatprep.subr.mxu0 0.0
    %1018 = vmatpush1.msra.mxu0 0.0
    %1019 = vmatprep.subr.mxu0 0.0
    %1020 = vmatpush1.msra.mxu0 0.0
    %1021 = vmatprep.subr.mxu0 0.0
    %1022 = vmatpush1.msra.mxu0 0.0
    %1023 = vmatprep.subr.mxu0 0.0
    %1024 = vmatpush1.msra.mxu0 0.0
    %1025 = vmatprep.subr.mxu0 0.0
    %1026 = vmatpush1.msra.mxu0 0.0
    %1027 = vmatprep.subr.mxu0 0.0
    %1028 = vmatpush1.msra.mxu0 0.0
    %1029 = vmatprep.subr.mxu0 0.0
    %1030 = vmatpush1.msra.mxu0 0.0
    %1031 = vmatprep.subr.mxu0 0.0
    %1032 = vmatpush1.msra.mxu0 0.0
    %1033 = vmatprep.subr.mxu0 0.0
    %1034 = vmatpush1.msra.mxu0 0.0
    %1035 = vmatprep.subr.mxu0 0.0
    %1036 = vmatpush1.msra.mxu0 0.0
    %1037 = vmatprep.mubr.f32.mxu0 0.0
    %1038 = vmatmul.mubr.f32.gmra.mrb[0].mxu0 %v971
    %v1039 = vpop.f32.mrb[0].mxu0
    %v1040 = vadd.f32 0.0, %v1039
    %v1041 = vpop.f32.mrb[0].mxu0
    %1042 = vdwg.mxu0
    %v1044 = vrot.slane %v1040, 6
    %v1046 = vadd.f32 %v661, %v1044
    %v1047 = vxor.u32 %v1046, 2147483648
    %v1048 = vmul.f32 %v1047, 1.442695
    %v1049 = vpow.pop %v1048
    %v1050 = vadd.f32 %v1049, 1.0
    %v1051 = vrcp.pop %v1050
    %v1052 = vmul.f32 1.0, %v1051
    %v1053 = vadd.f32 %v1040, %v837
    %v1055 = vrot.slane %v1053, 6
    %1056 = vrot.lane.b32.xlu0 %v1055, 80
    %v1057 = vpop.permute.xlu0 %1056
    %v1059 = vmul.f32 %v1052, %v1057
    %1061 = vrot.lane.b32.xlu0 %v1059, 48
    %v1062 = vpop.permute.xlu0 %1061
    %v1064 = vadd.f32 %v661, %v1062
    %v1065 = vtanh.pop %v1064
    %v1066 = vsub.f32 1.0, %v1052
    %1068 = vrot.lane.b32.xlu0 %v1065, 104
    %v1069 = vpop.permute.xlu0 %1068
    %v1071 = vmul.f32 %v1066, %v1069
    %v1072 = vrot.slane %v858, 6
    %v1074 = vmul.f32 %v1052, %v1072
    %v1075 = vadd.f32 %v1071, %v1074
    %v1077 = vrot.slane %v967, 6
    %1078 = vrot.lane.b32.xlu0 %v1077, 104
    %v1079 = vpop.permute.xlu0 %1078
    %v1080 = vsel %vm750, %v1079, 0
    %1082 = vmatprep.subr.mxu0 0.0
    %1083 = vmatpush1.msra.mxu0 %v574
    %1084 = vmatprep.subr.mxu0 0.0
    %1085 = vmatpush1.msra.mxu0 %v575
    %1086 = vmatprep.subr.mxu0 0.0
    %1087 = vmatpush1.msra.mxu0 %v576
    %1088 = vmatprep.subr.mxu0 0.0
    %1089 = vmatpush1.msra.mxu0 0.0
    %1090 = vmatprep.subr.mxu0 0.0
    %1091 = vmatpush1.msra.mxu0 0.0
    %1092 = vmatprep.subr.mxu0 0.0
    %1093 = vmatpush1.msra.mxu0 0.0
    %1094 = vmatprep.subr.mxu0 0.0
    %1095 = vmatpush1.msra.mxu0 0.0
    %1096 = vmatprep.subr.mxu0 0.0
    %1097 = vmatpush1.msra.mxu0 0.0
    %1098 = vmatprep.subr.mxu0 0.0
    %1099 = vmatpush1.msra.mxu0 0.0
    %1100 = vmatprep.subr.mxu0 0.0
    %1101 = vmatpush1.msra.mxu0 0.0
    %1102 = vmatprep.subr.mxu0 0.0
    %1103 = vmatpush1.msra.mxu0 0.0
    %1104 = vmatprep.subr.mxu0 0.0
    %1105 = vmatpush1.msra.mxu0 0.0
    %1106 = vmatprep.subr.mxu0 0.0
    %1107 = vmatpush1.msra.mxu0 0.0
    %1108 = vmatprep.subr.mxu0 0.0
    %1109 = vmatpush1.msra.mxu0 0.0
    %1110 = vmatprep.subr.mxu0 0.0
    %1111 = vmatpush1.msra.mxu0 0.0
    %1112 = vmatprep.subr.mxu0 0.0
    %1113 = vmatpush1.msra.mxu0 0.0
    %1114 = vmatprep.subr.mxu0 0.0
    %1115 = vmatpush1.msra.mxu0 0.0
    %1116 = vmatprep.subr.mxu0 0.0
    %1117 = vmatpush1.msra.mxu0 0.0
    %1118 = vmatprep.subr.mxu0 0.0
    %1119 = vmatpush1.msra.mxu0 0.0
    %1120 = vmatprep.subr.mxu0 0.0
    %1121 = vmatpush1.msra.mxu0 0.0
    %1122 = vmatprep.subr.mxu0 0.0
    %1123 = vmatpush1.msra.mxu0 0.0
    %1124 = vmatprep.subr.mxu0 0.0
    %1125 = vmatpush1.msra.mxu0 0.0
    %1126 = vmatprep.subr.mxu0 0.0
    %1127 = vmatpush1.msra.mxu0 0.0
    %1128 = vmatprep.subr.mxu0 0.0
    %1129 = vmatpush1.msra.mxu0 0.0
    %1130 = vmatprep.subr.mxu0 0.0
    %1131 = vmatpush1.msra.mxu0 0.0
    %1132 = vmatprep.subr.mxu0 0.0
    %1133 = vmatpush1.msra.mxu0 0.0
    %1134 = vmatprep.subr.mxu0 0.0
    %1135 = vmatpush1.msra.mxu0 0.0
    %1136 = vmatprep.subr.mxu0 0.0
    %1137 = vmatpush1.msra.mxu0 0.0
    %1138 = vmatprep.subr.mxu0 0.0
    %1139 = vmatpush1.msra.mxu0 0.0
    %1140 = vmatprep.subr.mxu0 0.0
    %1141 = vmatpush1.msra.mxu0 0.0
    %1142 = vmatprep.subr.mxu0 0.0
    %1143 = vmatpush1.msra.mxu0 0.0
    %1144 = vmatprep.subr.mxu0 0.0
    %1145 = vmatpush1.msra.mxu0 0.0
    %1146 = vmatprep.mubr.f32.mxu0 0.0
    %1147 = vmatmul.mubr.f32.gmra.mrb[0].mxu0 %v1080
    %v1148 = vpop.f32.mrb[0].mxu0
    %v1149 = vadd.f32 0.0, %v1148
    %v1150 = vpop.f32.mrb[0].mxu0
    %1151 = vdwg.mxu0
    %v1153 = vrot.slane %v1149, 4
    %v1155 = vadd.f32 %v747, %v1153
    %v1156 = vxor.u32 %v1155, 2147483648
    %v1157 = vmul.f32 %v1156, 1.442695
    %v1158 = vpow.pop %v1157
    %v1159 = vadd.f32 %v1158, 1.0
    %v1160 = vrcp.pop %v1159
    %v1161 = vmul.f32 1.0, %v1160
    %v1162 = vadd.f32 %v1149, %v945
    %v1164 = vrot.slane %v1162, 4
    %1165 = vrot.lane.b32.xlu0 %v1164, 80
    %v1166 = vpop.permute.xlu0 %1165
    %v1168 = vmul.f32 %v1161, %v1166
    %1170 = vrot.lane.b32.xlu0 %v1168, 48
    %v1171 = vpop.permute.xlu0 %1170
    %v1173 = vadd.f32 %v747, %v1171
    %v1174 = vtanh.pop %v1173
    %v1175 = vsub.f32 1.0, %v1161
    %1177 = vrot.lane.b32.xlu0 %v1174, 104
    %v1178 = vpop.permute.xlu0 %1177
    %v1180 = vmul.f32 %v1175, %v1178
    %v1181 = vrot.slane %v967, 2
    %v1183 = vmul.f32 %v1161, %v1181
    %v1184 = vadd.f32 %v1180, %v1183
    %v1186 = vrot.slane %v1075, 2
    %1187 = vrot.lane.b32.xlu0 %v1186, 104
    %v1188 = vpop.permute.xlu0 %1187
    %v1189 = vsel %vm750, %v1188, 0
    %1191 = vmatprep.subr.mxu0 0.0
    %1192 = vmatpush1.msra.mxu0 %v571
    %1193 = vmatprep.subr.mxu0 0.0
    %1194 = vmatpush1.msra.mxu0 %v572
    %1195 = vmatprep.subr.mxu0 0.0
    %1196 = vmatpush1.msra.mxu0 %v573
    %1197 = vmatprep.subr.mxu0 0.0
    %1198 = vmatpush1.msra.mxu0 0.0
    %1199 = vmatprep.subr.mxu0 0.0
    %1200 = vmatpush1.msra.mxu0 0.0
    %1201 = vmatprep.subr.mxu0 0.0
    %1202 = vmatpush1.msra.mxu0 0.0
    %1203 = vmatprep.subr.mxu0 0.0
    %1204 = vmatpush1.msra.mxu0 0.0
    %1205 = vmatprep.subr.mxu0 0.0
    %1206 = vmatpush1.msra.mxu0 0.0
    %1207 = vmatprep.subr.mxu0 0.0
    %1208 = vmatpush1.msra.mxu0 0.0
    %1209 = vmatprep.subr.mxu0 0.0
    %1210 = vmatpush1.msra.mxu0 0.0
    %1211 = vmatprep.subr.mxu0 0.0
    %1212 = vmatpush1.msra.mxu0 0.0
    %1213 = vmatprep.subr.mxu0 0.0
    %1214 = vmatpush1.msra.mxu0 0.0
    %1215 = vmatprep.subr.mxu0 0.0
    %1216 = vmatpush1.msra.mxu0 0.0
    %1217 = vmatprep.subr.mxu0 0.0
    %1218 = vmatpush1.msra.mxu0 0.0
    %1219 = vmatprep.subr.mxu0 0.0
    %1220 = vmatpush1.msra.mxu0 0.0
    %1221 = vmatprep.subr.mxu0 0.0
    %1222 = vmatpush1.msra.mxu0 0.0
    %1223 = vmatprep.subr.mxu0 0.0
    %1224 = vmatpush1.msra.mxu0 0.0
    %1225 = vmatprep.subr.mxu0 0.0
    %1226 = vmatpush1.msra.mxu0 0.0
    %1227 = vmatprep.subr.mxu0 0.0
    %1228 = vmatpush1.msra.mxu0 0.0
    %1229 = vmatprep.subr.mxu0 0.0
    %1230 = vmatpush1.msra.mxu0 0.0
    %1231 = vmatprep.subr.mxu0 0.0
    %1232 = vmatpush1.msra.mxu0 0.0
    %1233 = vmatprep.subr.mxu0 0.0
    %1234 = vmatpush1.msra.mxu0 0.0
    %1235 = vmatprep.subr.mxu0 0.0
    %1236 = vmatpush1.msra.mxu0 0.0
    %1237 = vmatprep.subr.mxu0 0.0
    %1238 = vmatpush1.msra.mxu0 0.0
    %1239 = vmatprep.subr.mxu0 0.0
    %1240 = vmatpush1.msra.mxu0 0.0
    %1241 = vmatprep.subr.mxu0 0.0
    %1242 = vmatpush1.msra.mxu0 0.0
    %1243 = vmatprep.subr.mxu0 0.0
    %1244 = vmatpush1.msra.mxu0 0.0
    %1245 = vmatprep.subr.mxu0 0.0
    %1246 = vmatpush1.msra.mxu0 0.0
    %1247 = vmatprep.subr.mxu0 0.0
    %1248 = vmatpush1.msra.mxu0 0.0
    %1249 = vmatprep.subr.mxu0 0.0
    %1250 = vmatpush1.msra.mxu0 0.0
    %1251 = vmatprep.subr.mxu0 0.0
    %1252 = vmatpush1.msra.mxu0 0.0
    %1253 = vmatprep.subr.mxu0 0.0
    %1254 = vmatpush1.msra.mxu0 0.0
    %1255 = vmatprep.mubr.f32.mxu0 0.0
    %1256 = vmatmul.mubr.f32.gmra.mrb[0].mxu0 %v1189
    %v1257 = vpop.f32.mrb[0].mxu0
    %v1258 = vadd.f32 0.0, %v1257
    %v1259 = vpop.f32.mrb[0].mxu0
    %1260 = vdwg.mxu0
    %v1262 = vrot.slane %v1258, 4
    %v1264 = vadd.f32 %v661, %v1262
    %v1265 = vxor.u32 %v1264, 2147483648
    %v1266 = vmul.f32 %v1265, 1.442695
    %v1267 = vpow.pop %v1266
    %v1268 = vadd.f32 %v1267, 1.0
    %v1269 = vrcp.pop %v1268
    %v1270 = vmul.f32 1.0, %v1269
    %v1271 = vadd.f32 %v1258, %v837
    %v1273 = vrot.slane %v1271, 4
    %1274 = vrot.lane.b32.xlu0 %v1273, 80
    %v1275 = vpop.permute.xlu0 %1274
    %v1277 = vmul.f32 %v1270, %v1275
    %1279 = vrot.lane.b32.xlu0 %v1277, 48
    %v1280 = vpop.permute.xlu0 %1279
    %v1282 = vadd.f32 %v661, %v1280
    %v1283 = vtanh.pop %v1282
    %v1284 = vsub.f32 1.0, %v1270
    %1286 = vrot.lane.b32.xlu0 %v1283, 104
    %v1287 = vpop.permute.xlu0 %1286
    %v1289 = vmul.f32 %v1284, %v1287
    %v1290 = vrot.slane %v1075, 6
    %v1292 = vmul.f32 %v1270, %v1290
    %v1293 = vadd.f32 %v1289, %v1292
    %v1295 = vrot.slane %v1184, 4
    %1296 = vrot.lane.b32.xlu0 %v1295, 104
    %v1297 = vpop.permute.xlu0 %1296
    %v1298 = vsel %vm750, %v1297, 0
    %1300 = vmatprep.subr.mxu0 0.0
    %1301 = vmatpush1.msra.mxu0 %v574
    %1302 = vmatprep.subr.mxu0 0.0
    %1303 = vmatpush1.msra.mxu0 %v575
    %1304 = vmatprep.subr.mxu0 0.0
    %1305 = vmatpush1.msra.mxu0 %v576
    %1306 = vmatprep.subr.mxu0 0.0
    %1307 = vmatpush1.msra.mxu0 0.0
    %1308 = vmatprep.subr.mxu0 0.0
    %1309 = vmatpush1.msra.mxu0 0.0
    %1310 = vmatprep.subr.mxu0 0.0
    %1311 = vmatpush1.msra.mxu0 0.0
    %1312 = vmatprep.subr.mxu0 0.0
    %1313 = vmatpush1.msra.mxu0 0.0
    %1314 = vmatprep.subr.mxu0 0.0
    %1315 = vmatpush1.msra.mxu0 0.0
    %1316 = vmatprep.subr.mxu0 0.0
    %1317 = vmatpush1.msra.mxu0 0.0
    %1318 = vmatprep.subr.mxu0 0.0
    %1319 = vmatpush1.msra.mxu0 0.0
    %1320 = vmatprep.subr.mxu0 0.0
    %1321 = vmatpush1.msra.mxu0 0.0
    %1322 = vmatprep.subr.mxu0 0.0
    %1323 = vmatpush1.msra.mxu0 0.0
    %1324 = vmatprep.subr.mxu0 0.0
    %1325 = vmatpush1.msra.mxu0 0.0
    %1326 = vmatprep.subr.mxu0 0.0
    %1327 = vmatpush1.msra.mxu0 0.0
    %1328 = vmatprep.subr.mxu0 0.0
    %1329 = vmatpush1.msra.mxu0 0.0
    %1330 = vmatprep.subr.mxu0 0.0
    %1331 = vmatpush1.msra.mxu0 0.0
    %1332 = vmatprep.subr.mxu0 0.0
    %1333 = vmatpush1.msra.mxu0 0.0
    %1334 = vmatprep.subr.mxu0 0.0
    %1335 = vmatpush1.msra.mxu0 0.0
    %1336 = vmatprep.subr.mxu0 0.0
    %1337 = vmatpush1.msra.mxu0 0.0
    %1338 = vmatprep.subr.mxu0 0.0
    %1339 = vmatpush1.msra.mxu0 0.0
    %1340 = vmatprep.subr.mxu0 0.0
    %1341 = vmatpush1.msra.mxu0 0.0
    %1342 = vmatprep.subr.mxu0 0.0
    %1343 = vmatpush1.msra.mxu0 0.0
    %1344 = vmatprep.subr.mxu0 0.0
    %1345 = vmatpush1.msra.mxu0 0.0
    %1346 = vmatprep.subr.mxu0 0.0
    %1347 = vmatpush1.msra.mxu0 0.0
    %1348 = vmatprep.subr.mxu0 0.0
    %1349 = vmatpush1.msra.mxu0 0.0
    %1350 = vmatprep.subr.mxu0 0.0
    %1351 = vmatpush1.msra.mxu0 0.0
    %1352 = vmatprep.subr.mxu0 0.0
    %1353 = vmatpush1.msra.mxu0 0.0
    %1354 = vmatprep.subr.mxu0 0.0
    %1355 = vmatpush1.msra.mxu0 0.0
    %1356 = vmatprep.subr.mxu0 0.0
    %1357 = vmatpush1.msra.mxu0 0.0
    %1358 = vmatprep.subr.mxu0 0.0
    %1359 = vmatpush1.msra.mxu0 0.0
    %1360 = vmatprep.subr.mxu0 0.0
    %1361 = vmatpush1.msra.mxu0 0.0
    %1362 = vmatprep.subr.mxu0 0.0
    %1363 = vmatpush1.msra.mxu0 0.0
    %1364 = vmatprep.mubr.f32.mxu0 0.0
    %1365 = vmatmul.mubr.f32.gmra.mrb[0].mxu0 %v1298
    %v1366 = vpop.f32.mrb[0].mxu0
    %v1367 = vadd.f32 0.0, %v1366
    %v1368 = vpop.f32.mrb[0].mxu0
    %1369 = vdwg.mxu0
    %v1371 = vrot.slane %v1367, 6
    %v1373 = vadd.f32 %v747, %v1371
    %v1374 = vxor.u32 %v1373, 2147483648
    %v1375 = vmul.f32 %v1374, 1.442695
    %v1376 = vpow.pop %v1375
    %v1377 = vadd.f32 %v1376, 1.0
    %v1378 = vrcp.pop %v1377
    %v1379 = vmul.f32 1.0, %v1378
    %v1380 = vadd.f32 %v1367, %v945
    %v1382 = vrot.slane %v1380, 6
    %1383 = vrot.lane.b32.xlu0 %v1382, 80
    %v1384 = vpop.permute.xlu0 %1383
    %v1386 = vmul.f32 %v1379, %v1384
    %1388 = vrot.lane.b32.xlu0 %v1386, 48
    %v1389 = vpop.permute.xlu0 %1388
    %v1391 = vadd.f32 %v747, %v1389
    %v1392 = vtanh.pop %v1391
    %v1393 = vsub.f32 1.0, %v1379
    %1395 = vrot.lane.b32.xlu0 %v1392, 104
    %v1396 = vpop.permute.xlu0 %1395
    %v1398 = vmul.f32 %v1393, %v1396
    %v1399 = vrot.slane %v1184, 2
    %v1401 = vmul.f32 %v1379, %v1399
    %v1402 = vadd.f32 %v1398, %v1401
    %v1404 = vrot.slane %v1293, 4
    %1405 = vrot.lane.b32.xlu0 %v1404, 104
    %v1406 = vpop.permute.xlu0 %1405
    %v1407 = vsel %vm750, %v1406, 0
    %1409 = vmatprep.subr.mxu0 0.0
    %1410 = vmatpush1.msra.mxu0 %v571
    %1411 = vmatprep.subr.mxu0 0.0
    %1412 = vmatpush1.msra.mxu0 %v572
    %1413 = vmatprep.subr.mxu0 0.0
    %1414 = vmatpush1.msra.mxu0 %v573
    %1415 = vmatprep.subr.mxu0 0.0
    %1416 = vmatpush1.msra.mxu0 0.0
    %1417 = vmatprep.subr.mxu0 0.0
    %1418 = vmatpush1.msra.mxu0 0.0
    %1419 = vmatprep.subr.mxu0 0.0
    %1420 = vmatpush1.msra.mxu0 0.0
    %1421 = vmatprep.subr.mxu0 0.0
    %1422 = vmatpush1.msra.mxu0 0.0
    %1423 = vmatprep.subr.mxu0 0.0
    %1424 = vmatpush1.msra.mxu0 0.0
    %1425 = vmatprep.subr.mxu0 0.0
    %1426 = vmatpush1.msra.mxu0 0.0
    %1427 = vmatprep.subr.mxu0 0.0
    %1428 = vmatpush1.msra.mxu0 0.0
    %1429 = vmatprep.subr.mxu0 0.0
    %1430 = vmatpush1.msra.mxu0 0.0
    %1431 = vmatprep.subr.mxu0 0.0
    %1432 = vmatpush1.msra.mxu0 0.0
    %1433 = vmatprep.subr.mxu0 0.0
    %1434 = vmatpush1.msra.mxu0 0.0
    %1435 = vmatprep.subr.mxu0 0.0
    %1436 = vmatpush1.msra.mxu0 0.0
    %1437 = vmatprep.subr.mxu0 0.0
    %1438 = vmatpush1.msra.mxu0 0.0
    %1439 = vmatprep.subr.mxu0 0.0
    %1440 = vmatpush1.msra.mxu0 0.0
    %1441 = vmatprep.subr.mxu0 0.0
    %1442 = vmatpush1.msra.mxu0 0.0
    %1443 = vmatprep.subr.mxu0 0.0
    %1444 = vmatpush1.msra.mxu0 0.0
    %1445 = vmatprep.subr.mxu0 0.0
    %1446 = vmatpush1.msra.mxu0 0.0
    %1447 = vmatprep.subr.mxu0 0.0
    %1448 = vmatpush1.msra.mxu0 0.0
    %1449 = vmatprep.subr.mxu0 0.0
    %1450 = vmatpush1.msra.mxu0 0.0
    %1451 = vmatprep.subr.mxu0 0.0
    %1452 = vmatpush1.msra.mxu0 0.0
    %1453 = vmatprep.subr.mxu0 0.0
    %1454 = vmatpush1.msra.mxu0 0.0
    %1455 = vmatprep.subr.mxu0 0.0
    %1456 = vmatpush1.msra.mxu0 0.0
    %1457 = vmatprep.subr.mxu0 0.0
    %1458 = vmatpush1.msra.mxu0 0.0
    %1459 = vmatprep.subr.mxu0 0.0
    %1460 = vmatpush1.msra.mxu0 0.0
    %1461 = vmatprep.subr.mxu0 0.0
    %1462 = vmatpush1.msra.mxu0 0.0
    %1463 = vmatprep.subr.mxu0 0.0
    %1464 = vmatpush1.msra.mxu0 0.0
    %1465 = vmatprep.subr.mxu0 0.0
    %1466 = vmatpush1.msra.mxu0 0.0
    %1467 = vmatprep.subr.mxu0 0.0
    %1468 = vmatpush1.msra.mxu0 0.0
    %1469 = vmatprep.subr.mxu0 0.0
    %1470 = vmatpush1.msra.mxu0 0.0
    %1471 = vmatprep.subr.mxu0 0.0
    %1472 = vmatpush1.msra.mxu0 0.0
    %1473 = vmatprep.mubr.f32.mxu0 0.0
    %1474 = vmatmul.mubr.f32.gmra.mrb[0].mxu0 %v1407
    %v1475 = vpop.f32.mrb[0].mxu0
    %v1476 = vadd.f32 0.0, %v1475
    %v1477 = vpop.f32.mrb[0].mxu0
    %1478 = vdwg.mxu0
    %v1480 = vrot.slane %v1476, 2
    %v1482 = vadd.f32 %v661, %v1480
    %v1483 = vxor.u32 %v1482, 2147483648
    %v1484 = vmul.f32 %v1483, 1.442695
    %v1485 = vpow.pop %v1484
    %v1486 = vadd.f32 %v1485, 1.0
    %v1487 = vrcp.pop %v1486
    %v1488 = vmul.f32 1.0, %v1487
    %v1489 = vadd.f32 %v1476, %v837
    %v1491 = vrot.slane %v1489, 2
    %1492 = vrot.lane.b32.xlu0 %v1491, 80
    %v1493 = vpop.permute.xlu0 %1492
    %v1495 = vmul.f32 %v1488, %v1493
    %1497 = vrot.lane.b32.xlu0 %v1495, 48
    %v1498 = vpop.permute.xlu0 %1497
    %v1500 = vadd.f32 %v661, %v1498
    %v1501 = vtanh.pop %v1500
    %v1502 = vsub.f32 1.0, %v1488
    %1504 = vrot.lane.b32.xlu0 %v1501, 104
    %v1505 = vpop.permute.xlu0 %1504
    %v1507 = vmul.f32 %v1502, %v1505
    %v1508 = vrot.slane %v1293, 6
    %v1510 = vmul.f32 %v1488, %v1508
    %v1511 = vadd.f32 %v1507, %v1510
    %v1513 = vrot.slane %v1402, 2
    %1514 = vrot.lane.b32.xlu0 %v1513, 104
    %v1515 = vpop.permute.xlu0 %1514
    %v1516 = vsel %vm750, %v1515, 0
    %1518 = vmatprep.subr.mxu0 0.0
    %1519 = vmatpush1.msra.mxu0 %v574
    %1520 = vmatprep.subr.mxu0 0.0
    %1521 = vmatpush1.msra.mxu0 %v575
    %1522 = vmatprep.subr.mxu0 0.0
    %1523 = vmatpush1.msra.mxu0 %v576
    %1524 = vmatprep.subr.mxu0 0.0
    %1525 = vmatpush1.msra.mxu0 0.0
    %1526 = vmatprep.subr.mxu0 0.0
    %1527 = vmatpush1.msra.mxu0 0.0
    %1528 = vmatprep.subr.mxu0 0.0
    %1529 = vmatpush1.msra.mxu0 0.0
    %1530 = vmatprep.subr.mxu0 0.0
    %1531 = vmatpush1.msra.mxu0 0.0
    %1532 = vmatprep.subr.mxu0 0.0
    %1533 = vmatpush1.msra.mxu0 0.0
    %1534 = vmatprep.subr.mxu0 0.0
    %1535 = vmatpush1.msra.mxu0 0.0
    %1536 = vmatprep.subr.mxu0 0.0
    %1537 = vmatpush1.msra.mxu0 0.0
    %1538 = vmatprep.subr.mxu0 0.0
    %1539 = vmatpush1.msra.mxu0 0.0
    %1540 = vmatprep.subr.mxu0 0.0
    %1541 = vmatpush1.msra.mxu0 0.0
    %1542 = vmatprep.subr.mxu0 0.0
    %1543 = vmatpush1.msra.mxu0 0.0
    %1544 = vmatprep.subr.mxu0 0.0
    %1545 = vmatpush1.msra.mxu0 0.0
    %1546 = vmatprep.subr.mxu0 0.0
    %1547 = vmatpush1.msra.mxu0 0.0
    %1548 = vmatprep.subr.mxu0 0.0
    %1549 = vmatpush1.msra.mxu0 0.0
    %1550 = vmatprep.subr.mxu0 0.0
    %1551 = vmatpush1.msra.mxu0 0.0
    %1552 = vmatprep.subr.mxu0 0.0
    %1553 = vmatpush1.msra.mxu0 0.0
    %1554 = vmatprep.subr.mxu0 0.0
    %1555 = vmatpush1.msra.mxu0 0.0
    %1556 = vmatprep.subr.mxu0 0.0
    %1557 = vmatpush1.msra.mxu0 0.0
    %1558 = vmatprep.subr.mxu0 0.0
    %1559 = vmatpush1.msra.mxu0 0.0
    %1560 = vmatprep.subr.mxu0 0.0
    %1561 = vmatpush1.msra.mxu0 0.0
    %1562 = vmatprep.subr.mxu0 0.0
    %1563 = vmatpush1.msra.mxu0 0.0
    %1564 = vmatprep.subr.mxu0 0.0
    %1565 = vmatpush1.msra.mxu0 0.0
    %1566 = vmatprep.subr.mxu0 0.0
    %1567 = vmatpush1.msra.mxu0 0.0
    %1568 = vmatprep.subr.mxu0 0.0
    %1569 = vmatpush1.msra.mxu0 0.0
    %1570 = vmatprep.subr.mxu0 0.0
    %1571 = vmatpush1.msra.mxu0 0.0
    %1572 = vmatprep.subr.mxu0 0.0
    %1573 = vmatpush1.msra.mxu0 0.0
    %1574 = vmatprep.subr.mxu0 0.0
    %1575 = vmatpush1.msra.mxu0 0.0
    %1576 = vmatprep.subr.mxu0 0.0
    %1577 = vmatpush1.msra.mxu0 0.0
    %1578 = vmatprep.subr.mxu0 0.0
    %1579 = vmatpush1.msra.mxu0 0.0
    %1580 = vmatprep.subr.mxu0 0.0
    %1581 = vmatpush1.msra.mxu0 0.0
    %1582 = vmatprep.mubr.f32.mxu0 0.0
    %1583 = vmatmul.mubr.f32.gmra.mrb[0].mxu0 %v1516
    %v1584 = vpop.f32.mrb[0].mxu0
    %v1585 = vadd.f32 0.0, %v1584
    %v1586 = vpop.f32.mrb[0].mxu0
    %1587 = vdwg.mxu0
    %v1588 = vadd.f32 %v747, %v1585
    %v1589 = vxor.u32 %v1588, 2147483648
    %v1590 = vmul.f32 %v1589, 1.442695
    %v1591 = vpow.pop %v1590
    %v1592 = vadd.f32 %v1591, 1.0
    %v1593 = vrcp.pop %v1592
    %v1594 = vmul.f32 1.0, %v1593
    %v1595 = vadd.f32 %v1585, %v945
    %1597 = vrot.lane.b32.xlu0 %v1595, 80
    %v1598 = vpop.permute.xlu0 %1597
    %v1600 = vmul.f32 %v1594, %v1598
    %1602 = vrot.lane.b32.xlu0 %v1600, 48
    %v1603 = vpop.permute.xlu0 %1602
    %v1605 = vadd.f32 %v747, %v1603
    %v1606 = vtanh.pop %v1605
    %v1607 = vsub.f32 1.0, %v1594
    %1609 = vrot.lane.b32.xlu0 %v1606, 104
    %v1610 = vpop.permute.xlu0 %1609
    %v1612 = vmul.f32 %v1607, %v1610
    %v1614 = vmul.f32 %v1594, %v1513
    %v1615 = vadd.f32 %v1612, %v1614
    %v1617 = vrot.slane %v1511, 6
    %1618 = vrot.lane.b32.xlu0 %v1617, 104
    %v1619 = vpop.permute.xlu0 %1618
    %v1620 = vsel %vm750, %v1619, 0
    %1622 = vmatprep.subr.mxu0 0.0
    %1623 = vmatpush1.msra.mxu0 %v571
    %1624 = vmatprep.subr.mxu0 0.0
    %1625 = vmatpush1.msra.mxu0 %v572
    %1626 = vmatprep.subr.mxu0 0.0
    %1627 = vmatpush1.msra.mxu0 %v573
    %1628 = vmatprep.subr.mxu0 0.0
    %1629 = vmatpush1.msra.mxu0 0.0
    %1630 = vmatprep.subr.mxu0 0.0
    %1631 = vmatpush1.msra.mxu0 0.0
    %1632 = vmatprep.subr.mxu0 0.0
    %1633 = vmatpush1.msra.mxu0 0.0
    %1634 = vmatprep.subr.mxu0 0.0
    %1635 = vmatpush1.msra.mxu0 0.0
    %1636 = vmatprep.subr.mxu0 0.0
    %1637 = vmatpush1.msra.mxu0 0.0
    %1638 = vmatprep.subr.mxu0 0.0
    %1639 = vmatpush1.msra.mxu0 0.0
    %1640 = vmatprep.subr.mxu0 0.0
    %1641 = vmatpush1.msra.mxu0 0.0
    %1642 = vmatprep.subr.mxu0 0.0
    %1643 = vmatpush1.msra.mxu0 0.0
    %1644 = vmatprep.subr.mxu0 0.0
    %1645 = vmatpush1.msra.mxu0 0.0
    %1646 = vmatprep.subr.mxu0 0.0
    %1647 = vmatpush1.msra.mxu0 0.0
    %1648 = vmatprep.subr.mxu0 0.0
    %1649 = vmatpush1.msra.mxu0 0.0
    %1650 = vmatprep.subr.mxu0 0.0
    %1651 = vmatpush1.msra.mxu0 0.0
    %1652 = vmatprep.subr.mxu0 0.0
    %1653 = vmatpush1.msra.mxu0 0.0
    %1654 = vmatprep.subr.mxu0 0.0
    %1655 = vmatpush1.msra.mxu0 0.0
    %1656 = vmatprep.subr.mxu0 0.0
    %1657 = vmatpush1.msra.mxu0 0.0
    %1658 = vmatprep.subr.mxu0 0.0
    %1659 = vmatpush1.msra.mxu0 0.0
    %1660 = vmatprep.subr.mxu0 0.0
    %1661 = vmatpush1.msra.mxu0 0.0
    %1662 = vmatprep.subr.mxu0 0.0
    %1663 = vmatpush1.msra.mxu0 0.0
    %1664 = vmatprep.subr.mxu0 0.0
    %1665 = vmatpush1.msra.mxu0 0.0
    %1666 = vmatprep.subr.mxu0 0.0
    %1667 = vmatpush1.msra.mxu0 0.0
    %1668 = vmatprep.subr.mxu0 0.0
    %1669 = vmatpush1.msra.mxu0 0.0
    %1670 = vmatprep.subr.mxu0 0.0
    %1671 = vmatpush1.msra.mxu0 0.0
    %1672 = vmatprep.subr.mxu0 0.0
    %1673 = vmatpush1.msra.mxu0 0.0
    %1674 = vmatprep.subr.mxu0 0.0
    %1675 = vmatpush1.msra.mxu0 0.0
    %1676 = vmatprep.subr.mxu0 0.0
    %1677 = vmatpush1.msra.mxu0 0.0
    %1678 = vmatprep.subr.mxu0 0.0
    %1679 = vmatpush1.msra.mxu0 0.0
    %1680 = vmatprep.subr.mxu0 0.0
    %1681 = vmatpush1.msra.mxu0 0.0
    %1682 = vmatprep.subr.mxu0 0.0
    %1683 = vmatpush1.msra.mxu0 0.0
    %1684 = vmatprep.subr.mxu0 0.0
    %1685 = vmatpush1.msra.mxu0 0.0
    %1686 = vmatprep.mubr.f32.mxu0 0.0
    %1687 = vmatmul.mubr.f32.gmra.mrb[0].mxu0 %v1620
    %v1688 = vpop.f32.mrb[0].mxu0
    %v1689 = vadd.f32 0.0, %v1688
    %v1690 = vpop.f32.mrb[0].mxu0
    %1691 = vdwg.mxu0
    %v1692 = vadd.f32 %v666, %v1689
    %v1693 = vxor.u32 %v1692, 2147483648
    %v1694 = vmul.f32 %v1693, 1.442695
    %v1695 = vpow.pop %v1694
    %v1696 = vadd.f32 %v1695, 1.0
    %v1697 = vrcp.pop %v1696
    %v1698 = vmul.f32 1.0, %v1697
    %v1699 = vadd.f32 %v1689, %v837
    %1701 = vrot.lane.b32.xlu0 %v1699, 80
    %v1702 = vpop.permute.xlu0 %1701
    %v1704 = vmul.f32 %v1698, %v1702
    %1706 = vrot.lane.b32.xlu0 %v1704, 48
    %v1707 = vpop.permute.xlu0 %1706
    %v1709 = vadd.f32 %v666, %v1707
    %v1710 = vtanh.pop %v1709
    %v1711 = vsub.f32 1.0, %v1698
    %1713 = vrot.lane.b32.xlu0 %v1710, 104
    %v1714 = vpop.permute.xlu0 %1713
    %v1716 = vmul.f32 %v1711, %v1714
    %v1718 = vmul.f32 %v1698, %v1617
    %v1719 = vadd.f32 %v1716, %v1718
    %1721 = vrot.lane.b32.xlu0 %v1615, 104
    %v1722 = vpop.permute.xlu0 %1721
    %v1723 = vsel %vm750, %v1722, 0
    %1725 = vmatprep.subr.mxu0 0.0
    %1726 = vmatpush1.msra.mxu0 %v574
    %1727 = vmatprep.subr.mxu0 0.0
    %1728 = vmatpush1.msra.mxu0 %v575
    %1729 = vmatprep.subr.mxu0 0.0
    %1730 = vmatpush1.msra.mxu0 %v576
    %1731 = vmatprep.subr.mxu0 0.0
    %1732 = vmatpush1.msra.mxu0 0.0
    %1733 = vmatprep.subr.mxu0 0.0
    %1734 = vmatpush1.msra.mxu0 0.0
    %1735 = vmatprep.subr.mxu0 0.0
    %1736 = vmatpush1.msra.mxu0 0.0
    %1737 = vmatprep.subr.mxu0 0.0
    %1738 = vmatpush1.msra.mxu0 0.0
    %1739 = vmatprep.subr.mxu0 0.0
    %1740 = vmatpush1.msra.mxu0 0.0
    %1741 = vmatprep.subr.mxu0 0.0
    %1742 = vmatpush1.msra.mxu0 0.0
    %1743 = vmatprep.subr.mxu0 0.0
    %1744 = vmatpush1.msra.mxu0 0.0
    %1745 = vmatprep.subr.mxu0 0.0
    %1746 = vmatpush1.msra.mxu0 0.0
    %1747 = vmatprep.subr.mxu0 0.0
    %1748 = vmatpush1.msra.mxu0 0.0
    %1749 = vmatprep.subr.mxu0 0.0
    %1750 = vmatpush1.msra.mxu0 0.0
    %1751 = vmatprep.subr.mxu0 0.0
    %1752 = vmatpush1.msra.mxu0 0.0
    %1753 = vmatprep.subr.mxu0 0.0
    %1754 = vmatpush1.msra.mxu0 0.0
    %1755 = vmatprep.subr.mxu0 0.0
    %1756 = vmatpush1.msra.mxu0 0.0
    %1757 = vmatprep.subr.mxu0 0.0
    %1758 = vmatpush1.msra.mxu0 0.0
    %1759 = vmatprep.subr.mxu0 0.0
    %1760 = vmatpush1.msra.mxu0 0.0
    %1761 = vmatprep.subr.mxu0 0.0
    %1762 = vmatpush1.msra.mxu0 0.0
    %1763 = vmatprep.subr.mxu0 0.0
    %1764 = vmatpush1.msra.mxu0 0.0
    %1765 = vmatprep.subr.mxu0 0.0
    %1766 = vmatpush1.msra.mxu0 0.0
    %1767 = vmatprep.subr.mxu0 0.0
    %1768 = vmatpush1.msra.mxu0 0.0
    %1769 = vmatprep.subr.mxu0 0.0
    %1770 = vmatpush1.msra.mxu0 0.0
    %1771 = vmatprep.subr.mxu0 0.0
    %1772 = vmatpush1.msra.mxu0 0.0
    %1773 = vmatprep.subr.mxu0 0.0
    %1774 = vmatpush1.msra.mxu0 0.0
    %1775 = vmatprep.subr.mxu0 0.0
    %1776 = vmatpush1.msra.mxu0 0.0
    %1777 = vmatprep.subr.mxu0 0.0
    %1778 = vmatpush1.msra.mxu0 0.0
    %1779 = vmatprep.subr.mxu0 0.0
    %1780 = vmatpush1.msra.mxu0 0.0
    %1781 = vmatprep.subr.mxu0 0.0
    %1782 = vmatpush1.msra.mxu0 0.0
    %1783 = vmatprep.subr.mxu0 0.0
    %1784 = vmatpush1.msra.mxu0 0.0
    %1785 = vmatprep.subr.mxu0 0.0
    %1786 = vmatpush1.msra.mxu0 0.0
    %1787 = vmatprep.subr.mxu0 0.0
    %1788 = vmatpush1.msra.mxu0 0.0
    %1789 = vmatprep.mubr.f32.mxu0 0.0
    %1790 = vmatmul.mubr.f32.gmra.mrb[0].mxu0 %v1723
    %v1791 = vpop.f32.mrb[0].mxu0
    %v1792 = vadd.f32 0.0, %v1791
    %v1793 = vpop.f32.mrb[0].mxu0
    %1794 = vdwg.mxu0
    %v1796 = vrot.slane %v1792, 2
    %v1798 = vadd.f32 %v742, %v1796
    %v1799 = vxor.u32 %v1798, 2147483648
    %v1800 = vmul.f32 %v1799, 1.442695
    %v1801 = vpow.pop %v1800
    %v1802 = vadd.f32 %v1801, 1.0
    %v1803 = vrcp.pop %v1802
    %v1804 = vmul.f32 1.0, %v1803
    %v1805 = vadd.f32 %v1792, %v945
    %v1807 = vrot.slane %v1805, 2
    %1808 = vrot.lane.b32.xlu0 %v1807, 80
    %v1809 = vpop.permute.xlu0 %1808
    %v1811 = vmul.f32 %v1804, %v1809
    %1813 = vrot.lane.b32.xlu0 %v1811, 48
    %v1814 = vpop.permute.xlu0 %1813
    %v1816 = vadd.f32 %v742, %v1814
    %v1817 = vtanh.pop %v1816
    %v1818 = vsub.f32 1.0, %v1804
    %1820 = vrot.lane.b32.xlu0 %v1817, 104
    %v1821 = vpop.permute.xlu0 %1820
    %v1823 = vmul.f32 %v1818, %v1821
    %v1824 = vrot.slane %v1615, 2
    %v1826 = vmul.f32 %v1804, %v1824
    %v1827 = vadd.f32 %v1823, %v1826
    %1829 = vrot.lane.b32.xlu0 %v1719, 104
    %v1830 = vpop.permute.xlu0 %1829
    %v1831 = vsel %vm750, %v1830, 0
    %1833 = vmatprep.subr.mxu0 0.0
    %1834 = vmatpush1.msra.mxu0 %v571
    %1835 = vmatprep.subr.mxu0 0.0
    %1836 = vmatpush1.msra.mxu0 %v572
    %1837 = vmatprep.subr.mxu0 0.0
    %1838 = vmatpush1.msra.mxu0 %v573
    %1839 = vmatprep.subr.mxu0 0.0
    %1840 = vmatpush1.msra.mxu0 0.0
    %1841 = vmatprep.subr.mxu0 0.0
    %1842 = vmatpush1.msra.mxu0 0.0
    %1843 = vmatprep.subr.mxu0 0.0
    %1844 = vmatpush1.msra.mxu0 0.0
    %1845 = vmatprep.subr.mxu0 0.0
    %1846 = vmatpush1.msra.mxu0 0.0
    %1847 = vmatprep.subr.mxu0 0.0
    %1848 = vmatpush1.msra.mxu0 0.0
    %1849 = vmatprep.subr.mxu0 0.0
    %1850 = vmatpush1.msra.mxu0 0.0
    %1851 = vmatprep.subr.mxu0 0.0
    %1852 = vmatpush1.msra.mxu0 0.0
    %1853 = vmatprep.subr.mxu0 0.0
    %1854 = vmatpush1.msra.mxu0 0.0
    %1855 = vmatprep.subr.mxu0 0.0
    %1856 = vmatpush1.msra.mxu0 0.0
    %1857 = vmatprep.subr.mxu0 0.0
    %1858 = vmatpush1.msra.mxu0 0.0
    %1859 = vmatprep.subr.mxu0 0.0
    %1860 = vmatpush1.msra.mxu0 0.0
    %1861 = vmatprep.subr.mxu0 0.0
    %1862 = vmatpush1.msra.mxu0 0.0
    %1863 = vmatprep.subr.mxu0 0.0
    %1864 = vmatpush1.msra.mxu0 0.0
    %1865 = vmatprep.subr.mxu0 0.0
    %1866 = vmatpush1.msra.mxu0 0.0
    %1867 = vmatprep.subr.mxu0 0.0
    %1868 = vmatpush1.msra.mxu0 0.0
    %1869 = vmatprep.subr.mxu0 0.0
    %1870 = vmatpush1.msra.mxu0 0.0
    %1871 = vmatprep.subr.mxu0 0.0
    %1872 = vmatpush1.msra.mxu0 0.0
    %1873 = vmatprep.subr.mxu0 0.0
    %1874 = vmatpush1.msra.mxu0 0.0
    %1875 = vmatprep.subr.mxu0 0.0
    %1876 = vmatpush1.msra.mxu0 0.0
    %1877 = vmatprep.subr.mxu0 0.0
    %1878 = vmatpush1.msra.mxu0 0.0
    %1879 = vmatprep.subr.mxu0 0.0
    %1880 = vmatpush1.msra.mxu0 0.0
    %1881 = vmatprep.subr.mxu0 0.0
    %1882 = vmatpush1.msra.mxu0 0.0
    %1883 = vmatprep.subr.mxu0 0.0
    %1884 = vmatpush1.msra.mxu0 0.0
    %1885 = vmatprep.subr.mxu0 0.0
    %1886 = vmatpush1.msra.mxu0 0.0
    %1887 = vmatprep.subr.mxu0 0.0
    %1888 = vmatpush1.msra.mxu0 0.0
    %1889 = vmatprep.subr.mxu0 0.0
    %1890 = vmatpush1.msra.mxu0 0.0
    %1891 = vmatprep.subr.mxu0 0.0
    %1892 = vmatpush1.msra.mxu0 0.0
    %1893 = vmatprep.subr.mxu0 0.0
    %1894 = vmatpush1.msra.mxu0 0.0
    %1895 = vmatprep.subr.mxu0 0.0
    %1896 = vmatpush1.msra.mxu0 0.0
    %1897 = vmatprep.mubr.f32.mxu0 0.0
    %1898 = vmatmul.mubr.f32.gmra.mrb[0].mxu0 %v1831
    %v1899 = vpop.f32.mrb[0].mxu0
    %v1900 = vadd.f32 0.0, %v1899
    %v1901 = vpop.f32.mrb[0].mxu0
    %1902 = vdwg.mxu0
    %v1904 = vrot.slane %v1900, 6
    %v1906 = vadd.f32 %v666, %v1904
    %v1907 = vxor.u32 %v1906, 2147483648
    %v1908 = vmul.f32 %v1907, 1.442695
    %v1909 = vpow.pop %v1908
    %v1910 = vadd.f32 %v1909, 1.0
    %v1911 = vrcp.pop %v1910
    %v1912 = vmul.f32 1.0, %v1911
    %v1913 = vadd.f32 %v1900, %v837
    %v1915 = vrot.slane %v1913, 6
    %1916 = vrot.lane.b32.xlu0 %v1915, 80
    %v1917 = vpop.permute.xlu0 %1916
    %v1919 = vmul.f32 %v1912, %v1917
    %1921 = vrot.lane.b32.xlu0 %v1919, 48
    %v1922 = vpop.permute.xlu0 %1921
    %v1924 = vadd.f32 %v666, %v1922
    %v1925 = vtanh.pop %v1924
    %v1926 = vsub.f32 1.0, %v1912
    %1928 = vrot.lane.b32.xlu0 %v1925, 104
    %v1929 = vpop.permute.xlu0 %1928
    %v1931 = vmul.f32 %v1926, %v1929
    %v1932 = vrot.slane %v1719, 6
    %v1934 = vmul.f32 %v1912, %v1932
    %v1935 = vadd.f32 %v1931, %v1934
    %v1937 = vrot.slane %v1827, 6
    %1938 = vrot.lane.b32.xlu0 %v1937, 104
    %v1939 = vpop.permute.xlu0 %1938
    %v1940 = vsel %vm750, %v1939, 0
    %1942 = vmatprep.subr.mxu0 0.0
    %1943 = vmatpush1.msra.mxu0 %v574
    %1944 = vmatprep.subr.mxu0 0.0
    %1945 = vmatpush1.msra.mxu0 %v575
    %1946 = vmatprep.subr.mxu0 0.0
    %1947 = vmatpush1.msra.mxu0 %v576
    %1948 = vmatprep.subr.mxu0 0.0
    %1949 = vmatpush1.msra.mxu0 0.0
    %1950 = vmatprep.subr.mxu0 0.0
    %1951 = vmatpush1.msra.mxu0 0.0
    %1952 = vmatprep.subr.mxu0 0.0
    %1953 = vmatpush1.msra.mxu0 0.0
    %1954 = vmatprep.subr.mxu0 0.0
    %1955 = vmatpush1.msra.mxu0 0.0
    %1956 = vmatprep.subr.mxu0 0.0
    %1957 = vmatpush1.msra.mxu0 0.0
    %1958 = vmatprep.subr.mxu0 0.0
    %1959 = vmatpush1.msra.mxu0 0.0
    %1960 = vmatprep.subr.mxu0 0.0
    %1961 = vmatpush1.msra.mxu0 0.0
    %1962 = vmatprep.subr.mxu0 0.0
    %1963 = vmatpush1.msra.mxu0 0.0
    %1964 = vmatprep.subr.mxu0 0.0
    %1965 = vmatpush1.msra.mxu0 0.0
    %1966 = vmatprep.subr.mxu0 0.0
    %1967 = vmatpush1.msra.mxu0 0.0
    %1968 = vmatprep.subr.mxu0 0.0
    %1969 = vmatpush1.msra.mxu0 0.0
    %1970 = vmatprep.subr.mxu0 0.0
    %1971 = vmatpush1.msra.mxu0 0.0
    %1972 = vmatprep.subr.mxu0 0.0
    %1973 = vmatpush1.msra.mxu0 0.0
    %1974 = vmatprep.subr.mxu0 0.0
    %1975 = vmatpush1.msra.mxu0 0.0
    %1976 = vmatprep.subr.mxu0 0.0
    %1977 = vmatpush1.msra.mxu0 0.0
    %1978 = vmatprep.subr.mxu0 0.0
    %1979 = vmatpush1.msra.mxu0 0.0
    %1980 = vmatprep.subr.mxu0 0.0
    %1981 = vmatpush1.msra.mxu0 0.0
    %1982 = vmatprep.subr.mxu0 0.0
    %1983 = vmatpush1.msra.mxu0 0.0
    %1984 = vmatprep.subr.mxu0 0.0
    %1985 = vmatpush1.msra.mxu0 0.0
    %1986 = vmatprep.subr.mxu0 0.0
    %1987 = vmatpush1.msra.mxu0 0.0
    %1988 = vmatprep.subr.mxu0 0.0
    %1989 = vmatpush1.msra.mxu0 0.0
    %1990 = vmatprep.subr.mxu0 0.0
    %1991 = vmatpush1.msra.mxu0 0.0
    %1992 = vmatprep.subr.mxu0 0.0
    %1993 = vmatpush1.msra.mxu0 0.0
    %1994 = vmatprep.subr.mxu0 0.0
    %1995 = vmatpush1.msra.mxu0 0.0
    %1996 = vmatprep.subr.mxu0 0.0
    %1997 = vmatpush1.msra.mxu0 0.0
    %1998 = vmatprep.subr.mxu0 0.0
    %1999 = vmatpush1.msra.mxu0 0.0
    %2000 = vmatprep.subr.mxu0 0.0
    %2001 = vmatpush1.msra.mxu0 0.0
    %2002 = vmatprep.subr.mxu0 0.0
    %2003 = vmatpush1.msra.mxu0 0.0
    %2004 = vmatprep.subr.mxu0 0.0
    %2005 = vmatpush1.msra.mxu0 0.0
    %2006 = vmatprep.mubr.f32.mxu0 0.0
    %2007 = vmatmul.mubr.f32.gmra.mrb[0].mxu0 %v1940
    %v2008 = vpop.f32.mrb[0].mxu0
    %v2009 = vadd.f32 0.0, %v2008
    %v2010 = vpop.f32.mrb[0].mxu0
    %2011 = vdwg.mxu0
    %v2013 = vrot.slane %v2009, 4
    %v2015 = vadd.f32 %v742, %v2013
    %v2016 = vxor.u32 %v2015, 2147483648
    %v2017 = vmul.f32 %v2016, 1.442695
    %v2018 = vpow.pop %v2017
    %v2019 = vadd.f32 %v2018, 1.0
    %v2020 = vrcp.pop %v2019
    %v2021 = vmul.f32 1.0, %v2020
    %v2022 = vadd.f32 %v2009, %v945
    %v2024 = vrot.slane %v2022, 4
    %2025 = vrot.lane.b32.xlu0 %v2024, 80
    %v2026 = vpop.permute.xlu0 %2025
    %v2028 = vmul.f32 %v2021, %v2026
    %2030 = vrot.lane.b32.xlu0 %v2028, 48
    %v2031 = vpop.permute.xlu0 %2030
    %v2033 = vadd.f32 %v742, %v2031
    %v2034 = vtanh.pop %v2033
    %v2035 = vsub.f32 1.0, %v2021
    %2037 = vrot.lane.b32.xlu0 %v2034, 104
    %v2038 = vpop.permute.xlu0 %2037
    %v2040 = vmul.f32 %v2035, %v2038
    %v2041 = vrot.slane %v1827, 2
    %v2043 = vmul.f32 %v2021, %v2041
    %v2044 = vadd.f32 %v2040, %v2043
    %v2046 = vrot.slane %v1935, 2
    %2047 = vrot.lane.b32.xlu0 %v2046, 104
    %v2048 = vpop.permute.xlu0 %2047
    %v2049 = vsel %vm750, %v2048, 0
    %2051 = vmatprep.subr.mxu0 0.0
    %2052 = vmatpush1.msra.mxu0 %v571
    %2053 = vmatprep.subr.mxu0 0.0
    %2054 = vmatpush1.msra.mxu0 %v572
    %2055 = vmatprep.subr.mxu0 0.0
    %2056 = vmatpush1.msra.mxu0 %v573
    %2057 = vmatprep.subr.mxu0 0.0
    %2058 = vmatpush1.msra.mxu0 0.0
    %2059 = vmatprep.subr.mxu0 0.0
    %2060 = vmatpush1.msra.mxu0 0.0
    %2061 = vmatprep.subr.mxu0 0.0
    %2062 = vmatpush1.msra.mxu0 0.0
    %2063 = vmatprep.subr.mxu0 0.0
    %2064 = vmatpush1.msra.mxu0 0.0
    %2065 = vmatprep.subr.mxu0 0.0
    %2066 = vmatpush1.msra.mxu0 0.0
    %2067 = vmatprep.subr.mxu0 0.0
    %2068 = vmatpush1.msra.mxu0 0.0
    %2069 = vmatprep.subr.mxu0 0.0
    %2070 = vmatpush1.msra.mxu0 0.0
    %2071 = vmatprep.subr.mxu0 0.0
    %2072 = vmatpush1.msra.mxu0 0.0
    %2073 = vmatprep.subr.mxu0 0.0
    %2074 = vmatpush1.msra.mxu0 0.0
    %2075 = vmatprep.subr.mxu0 0.0
    %2076 = vmatpush1.msra.mxu0 0.0
    %2077 = vmatprep.subr.mxu0 0.0
    %2078 = vmatpush1.msra.mxu0 0.0
    %2079 = vmatprep.subr.mxu0 0.0
    %2080 = vmatpush1.msra.mxu0 0.0
    %2081 = vmatprep.subr.mxu0 0.0
    %2082 = vmatpush1.msra.mxu0 0.0
    %2083 = vmatprep.subr.mxu0 0.0
    %2084 = vmatpush1.msra.mxu0 0.0
    %2085 = vmatprep.subr.mxu0 0.0
    %2086 = vmatpush1.msra.mxu0 0.0
    %2087 = vmatprep.subr.mxu0 0.0
    %2088 = vmatpush1.msra.mxu0 0.0
    %2089 = vmatprep.subr.mxu0 0.0
    %2090 = vmatpush1.msra.mxu0 0.0
    %2091 = vmatprep.subr.mxu0 0.0
    %2092 = vmatpush1.msra.mxu0 0.0
    %2093 = vmatprep.subr.mxu0 0.0
    %2094 = vmatpush1.msra.mxu0 0.0
    %2095 = vmatprep.subr.mxu0 0.0
    %2096 = vmatpush1.msra.mxu0 0.0
    %2097 = vmatprep.subr.mxu0 0.0
    %2098 = vmatpush1.msra.mxu0 0.0
    %2099 = vmatprep.subr.mxu0 0.0
    %2100 = vmatpush1.msra.mxu0 0.0
    %2101 = vmatprep.subr.mxu0 0.0
    %2102 = vmatpush1.msra.mxu0 0.0
    %2103 = vmatprep.subr.mxu0 0.0
    %2104 = vmatpush1.msra.mxu0 0.0
    %2105 = vmatprep.subr.mxu0 0.0
    %2106 = vmatpush1.msra.mxu0 0.0
    %2107 = vmatprep.subr.mxu0 0.0
    %2108 = vmatpush1.msra.mxu0 0.0
    %2109 = vmatprep.subr.mxu0 0.0
    %2110 = vmatpush1.msra.mxu0 0.0
    %2111 = vmatprep.subr.mxu0 0.0
    %2112 = vmatpush1.msra.mxu0 0.0
    %2113 = vmatprep.subr.mxu0 0.0
    %2114 = vmatpush1.msra.mxu0 0.0
    %2115 = vmatprep.mubr.f32.mxu0 0.0
    %2116 = vmatmul.mubr.f32.gmra.mrb[0].mxu0 %v2049
    %v2117 = vpop.f32.mrb[0].mxu0
    %v2118 = vadd.f32 0.0, %v2117
    %v2119 = vpop.f32.mrb[0].mxu0
    %2120 = vdwg.mxu0
    %v2122 = vrot.slane %v2118, 4
    %v2124 = vadd.f32 %v666, %v2122
    %v2125 = vxor.u32 %v2124, 2147483648
    %v2126 = vmul.f32 %v2125, 1.442695
    %v2127 = vpow.pop %v2126
    %v2128 = vadd.f32 %v2127, 1.0
    %v2129 = vrcp.pop %v2128
    %v2130 = vmul.f32 1.0, %v2129
    %v2131 = vadd.f32 %v2118, %v837
    %v2133 = vrot.slane %v2131, 4
    %2134 = vrot.lane.b32.xlu0 %v2133, 80
    %v2135 = vpop.permute.xlu0 %2134
    %v2137 = vmul.f32 %v2130, %v2135
    %2139 = vrot.lane.b32.xlu0 %v2137, 48
    %v2140 = vpop.permute.xlu0 %2139
    %v2142 = vadd.f32 %v666, %v2140
    %v2143 = vtanh.pop %v2142
    %v2144 = vsub.f32 1.0, %v2130
    %2146 = vrot.lane.b32.xlu0 %v2143, 104
    %v2147 = vpop.permute.xlu0 %2146
    %v2149 = vmul.f32 %v2144, %v2147
    %v2150 = vrot.slane %v1935, 6
    %v2152 = vmul.f32 %v2130, %v2150
    %v2153 = vadd.f32 %v2149, %v2152
    %v2155 = vrot.slane %v2044, 4
    %2156 = vrot.lane.b32.xlu0 %v2155, 104
    %v2157 = vpop.permute.xlu0 %2156
    %v2158 = vsel %vm750, %v2157, 0
    %2160 = vmatprep.subr.mxu0 0.0
    %2161 = vmatpush1.msra.mxu0 %v574
    %2162 = vmatprep.subr.mxu0 0.0
    %2163 = vmatpush1.msra.mxu0 %v575
    %2164 = vmatprep.subr.mxu0 0.0
    %2165 = vmatpush1.msra.mxu0 %v576
    %2166 = vmatprep.subr.mxu0 0.0
    %2167 = vmatpush1.msra.mxu0 0.0
    %2168 = vmatprep.subr.mxu0 0.0
    %2169 = vmatpush1.msra.mxu0 0.0
    %2170 = vmatprep.subr.mxu0 0.0
    %2171 = vmatpush1.msra.mxu0 0.0
    %2172 = vmatprep.subr.mxu0 0.0
    %2173 = vmatpush1.msra.mxu0 0.0
    %2174 = vmatprep.subr.mxu0 0.0
    %2175 = vmatpush1.msra.mxu0 0.0
    %2176 = vmatprep.subr.mxu0 0.0
    %2177 = vmatpush1.msra.mxu0 0.0
    %2178 = vmatprep.subr.mxu0 0.0
    %2179 = vmatpush1.msra.mxu0 0.0
    %2180 = vmatprep.subr.mxu0 0.0
    %2181 = vmatpush1.msra.mxu0 0.0
    %2182 = vmatprep.subr.mxu0 0.0
    %2183 = vmatpush1.msra.mxu0 0.0
    %2184 = vmatprep.subr.mxu0 0.0
    %2185 = vmatpush1.msra.mxu0 0.0
    %2186 = vmatprep.subr.mxu0 0.0
    %2187 = vmatpush1.msra.mxu0 0.0
    %2188 = vmatprep.subr.mxu0 0.0
    %2189 = vmatpush1.msra.mxu0 0.0
    %2190 = vmatprep.subr.mxu0 0.0
    %2191 = vmatpush1.msra.mxu0 0.0
    %2192 = vmatprep.subr.mxu0 0.0
    %2193 = vmatpush1.msra.mxu0 0.0
    %2194 = vmatprep.subr.mxu0 0.0
    %2195 = vmatpush1.msra.mxu0 0.0
    %2196 = vmatprep.subr.mxu0 0.0
    %2197 = vmatpush1.msra.mxu0 0.0
    %2198 = vmatprep.subr.mxu0 0.0
    %2199 = vmatpush1.msra.mxu0 0.0
    %2200 = vmatprep.subr.mxu0 0.0
    %2201 = vmatpush1.msra.mxu0 0.0
    %2202 = vmatprep.subr.mxu0 0.0
    %2203 = vmatpush1.msra.mxu0 0.0
    %2204 = vmatprep.subr.mxu0 0.0
    %2205 = vmatpush1.msra.mxu0 0.0
    %2206 = vmatprep.subr.mxu0 0.0
    %2207 = vmatpush1.msra.mxu0 0.0
    %2208 = vmatprep.subr.mxu0 0.0
    %2209 = vmatpush1.msra.mxu0 0.0
    %2210 = vmatprep.subr.mxu0 0.0
    %2211 = vmatpush1.msra.mxu0 0.0
    %2212 = vmatprep.subr.mxu0 0.0
    %2213 = vmatpush1.msra.mxu0 0.0
    %2214 = vmatprep.subr.mxu0 0.0
    %2215 = vmatpush1.msra.mxu0 0.0
    %2216 = vmatprep.subr.mxu0 0.0
    %2217 = vmatpush1.msra.mxu0 0.0
    %2218 = vmatprep.subr.mxu0 0.0
    %2219 = vmatpush1.msra.mxu0 0.0
    %2220 = vmatprep.subr.mxu0 0.0
    %2221 = vmatpush1.msra.mxu0 0.0
    %2222 = vmatprep.subr.mxu0 0.0
    %2223 = vmatpush1.msra.mxu0 0.0
    %2224 = vmatprep.mubr.f32.mxu0 0.0
    %2225 = vmatmul.mubr.f32.gmra.mrb[0].mxu0 %v2158
    %v2226 = vpop.f32.mrb[0].mxu0
    %v2227 = vadd.f32 0.0, %v2226
    %v2228 = vpop.f32.mrb[0].mxu0
    %2229 = vdwg.mxu0
    %v2231 = vrot.slane %v2227, 6
    %v2233 = vadd.f32 %v742, %v2231
    %v2234 = vxor.u32 %v2233, 2147483648
    %v2235 = vmul.f32 %v2234, 1.442695
    %v2236 = vpow.pop %v2235
    %v2237 = vadd.f32 %v2236, 1.0
    %v2238 = vrcp.pop %v2237
    %v2239 = vmul.f32 1.0, %v2238
    %v2240 = vadd.f32 %v2227, %v945
    %v2242 = vrot.slane %v2240, 6
    %2243 = vrot.lane.b32.xlu0 %v2242, 80
    %v2244 = vpop.permute.xlu0 %2243
    %v2246 = vmul.f32 %v2239, %v2244
    %2248 = vrot.lane.b32.xlu0 %v2246, 48
    %v2249 = vpop.permute.xlu0 %2248
    %v2251 = vadd.f32 %v742, %v2249
    %v2252 = vtanh.pop %v2251
    %v2253 = vsub.f32 1.0, %v2239
    %2255 = vrot.lane.b32.xlu0 %v2252, 104
    %v2256 = vpop.permute.xlu0 %2255
    %v2258 = vmul.f32 %v2253, %v2256
    %v2259 = vrot.slane %v2044, 2
    %v2261 = vmul.f32 %v2239, %v2259
    %v2262 = vadd.f32 %v2258, %v2261
    %v2264 = vrot.slane %v2153, 4
    %2265 = vrot.lane.b32.xlu0 %v2264, 104
    %v2266 = vpop.permute.xlu0 %2265
    %v2267 = vsel %vm750, %v2266, 0
    %2269 = vmatprep.subr.mxu0 0.0
    %2270 = vmatpush1.msra.mxu0 %v571
    %2271 = vmatprep.subr.mxu0 0.0
    %2272 = vmatpush1.msra.mxu0 %v572
    %2273 = vmatprep.subr.mxu0 0.0
    %2274 = vmatpush1.msra.mxu0 %v573
    %2275 = vmatprep.subr.mxu0 0.0
    %2276 = vmatpush1.msra.mxu0 0.0
    %2277 = vmatprep.subr.mxu0 0.0
    %2278 = vmatpush1.msra.mxu0 0.0
    %2279 = vmatprep.subr.mxu0 0.0
    %2280 = vmatpush1.msra.mxu0 0.0
    %2281 = vmatprep.subr.mxu0 0.0
    %2282 = vmatpush1.msra.mxu0 0.0
    %2283 = vmatprep.subr.mxu0 0.0
    %2284 = vmatpush1.msra.mxu0 0.0
    %2285 = vmatprep.subr.mxu0 0.0
    %2286 = vmatpush1.msra.mxu0 0.0
    %2287 = vmatprep.subr.mxu0 0.0
    %2288 = vmatpush1.msra.mxu0 0.0
    %2289 = vmatprep.subr.mxu0 0.0
    %2290 = vmatpush1.msra.mxu0 0.0
    %2291 = vmatprep.subr.mxu0 0.0
    %2292 = vmatpush1.msra.mxu0 0.0
    %2293 = vmatprep.subr.mxu0 0.0
    %2294 = vmatpush1.msra.mxu0 0.0
    %2295 = vmatprep.subr.mxu0 0.0
    %2296 = vmatpush1.msra.mxu0 0.0
    %2297 = vmatprep.subr.mxu0 0.0
    %2298 = vmatpush1.msra.mxu0 0.0
    %2299 = vmatprep.subr.mxu0 0.0
    %2300 = vmatpush1.msra.mxu0 0.0
    %2301 = vmatprep.subr.mxu0 0.0
    %2302 = vmatpush1.msra.mxu0 0.0
    %2303 = vmatprep.subr.mxu0 0.0
    %2304 = vmatpush1.msra.mxu0 0.0
    %2305 = vmatprep.subr.mxu0 0.0
    %2306 = vmatpush1.msra.mxu0 0.0
    %2307 = vmatprep.subr.mxu0 0.0
    %2308 = vmatpush1.msra.mxu0 0.0
    %2309 = vmatprep.subr.mxu0 0.0
    %2310 = vmatpush1.msra.mxu0 0.0
    %2311 = vmatprep.subr.mxu0 0.0
    %2312 = vmatpush1.msra.mxu0 0.0
    %2313 = vmatprep.subr.mxu0 0.0
    %2314 = vmatpush1.msra.mxu0 0.0
    %2315 = vmatprep.subr.mxu0 0.0
    %2316 = vmatpush1.msra.mxu0 0.0
    %2317 = vmatprep.subr.mxu0 0.0
    %2318 = vmatpush1.msra.mxu0 0.0
    %2319 = vmatprep.subr.mxu0 0.0
    %2320 = vmatpush1.msra.mxu0 0.0
    %2321 = vmatprep.subr.mxu0 0.0
    %2322 = vmatpush1.msra.mxu0 0.0
    %2323 = vmatprep.subr.mxu0 0.0
    %2324 = vmatpush1.msra.mxu0 0.0
    %2325 = vmatprep.subr.mxu0 0.0
    %2326 = vmatpush1.msra.mxu0 0.0
    %2327 = vmatprep.subr.mxu0 0.0
    %2328 = vmatpush1.msra.mxu0 0.0
    %2329 = vmatprep.subr.mxu0 0.0
    %2330 = vmatpush1.msra.mxu0 0.0
    %2331 = vmatprep.subr.mxu0 0.0
    %2332 = vmatpush1.msra.mxu0 0.0
    %2333 = vmatprep.mubr.f32.mxu0 0.0
    %2334 = vmatmul.mubr.f32.gmra.mrb[0].mxu0 %v2267
    %v2335 = vpop.f32.mrb[0].mxu0
    %v2336 = vadd.f32 0.0, %v2335
    %v2337 = vpop.f32.mrb[0].mxu0
    %2338 = vdwg.mxu0
    %v2340 = vrot.slane %v2336, 2
    %v2342 = vadd.f32 %v666, %v2340
    %v2343 = vxor.u32 %v2342, 2147483648
    %v2344 = vmul.f32 %v2343, 1.442695
    %v2345 = vpow.pop %v2344
    %v2346 = vadd.f32 %v2345, 1.0
    %v2347 = vrcp.pop %v2346
    %v2348 = vmul.f32 1.0, %v2347
    %v2349 = vadd.f32 %v2336, %v837
    %v2351 = vrot.slane %v2349, 2
    %2352 = vrot.lane.b32.xlu0 %v2351, 80
    %v2353 = vpop.permute.xlu0 %2352
    %v2355 = vmul.f32 %v2348, %v2353
    %2357 = vrot.lane.b32.xlu0 %v2355, 48
    %v2358 = vpop.permute.xlu0 %2357
    %v2360 = vadd.f32 %v666, %v2358
    %v2361 = vtanh.pop %v2360
    %v2362 = vsub.f32 1.0, %v2348
    %2364 = vrot.lane.b32.xlu0 %v2361, 104
    %v2365 = vpop.permute.xlu0 %2364
    %v2367 = vmul.f32 %v2362, %v2365
    %v2368 = vrot.slane %v2153, 6
    %v2370 = vmul.f32 %v2348, %v2368
    %v2371 = vadd.f32 %v2367, %v2370
    %v2373 = vrot.slane %v2262, 2
    %2374 = vrot.lane.b32.xlu0 %v2373, 104
    %v2375 = vpop.permute.xlu0 %2374
    %v2376 = vsel %vm750, %v2375, 0
    %2378 = vmatprep.subr.mxu0 0.0
    %2379 = vmatpush1.msra.mxu0 %v574
    %2380 = vmatprep.subr.mxu0 0.0
    %2381 = vmatpush1.msra.mxu0 %v575
    %2382 = vmatprep.subr.mxu0 0.0
    %2383 = vmatpush1.msra.mxu0 %v576
    %2384 = vmatprep.subr.mxu0 0.0
    %2385 = vmatpush1.msra.mxu0 0.0
    %2386 = vmatprep.subr.mxu0 0.0
    %2387 = vmatpush1.msra.mxu0 0.0
    %2388 = vmatprep.subr.mxu0 0.0
    %2389 = vmatpush1.msra.mxu0 0.0
    %2390 = vmatprep.subr.mxu0 0.0
    %2391 = vmatpush1.msra.mxu0 0.0
    %2392 = vmatprep.subr.mxu0 0.0
    %2393 = vmatpush1.msra.mxu0 0.0
    %2394 = vmatprep.subr.mxu0 0.0
    %2395 = vmatpush1.msra.mxu0 0.0
    %2396 = vmatprep.subr.mxu0 0.0
    %2397 = vmatpush1.msra.mxu0 0.0
    %2398 = vmatprep.subr.mxu0 0.0
    %2399 = vmatpush1.msra.mxu0 0.0
    %2400 = vmatprep.subr.mxu0 0.0
    %2401 = vmatpush1.msra.mxu0 0.0
    %2402 = vmatprep.subr.mxu0 0.0
    %2403 = vmatpush1.msra.mxu0 0.0
    %2404 = vmatprep.subr.mxu0 0.0
    %2405 = vmatpush1.msra.mxu0 0.0
    %2406 = vmatprep.subr.mxu0 0.0
    %2407 = vmatpush1.msra.mxu0 0.0
    %2408 = vmatprep.subr.mxu0 0.0
    %2409 = vmatpush1.msra.mxu0 0.0
    %2410 = vmatprep.subr.mxu0 0.0
    %2411 = vmatpush1.msra.mxu0 0.0
    %2412 = vmatprep.subr.mxu0 0.0
    %2413 = vmatpush1.msra.mxu0 0.0
    %2414 = vmatprep.subr.mxu0 0.0
    %2415 = vmatpush1.msra.mxu0 0.0
    %2416 = vmatprep.subr.mxu0 0.0
    %2417 = vmatpush1.msra.mxu0 0.0
    %2418 = vmatprep.subr.mxu0 0.0
    %2419 = vmatpush1.msra.mxu0 0.0
    %2420 = vmatprep.subr.mxu0 0.0
    %2421 = vmatpush1.msra.mxu0 0.0
    %2422 = vmatprep.subr.mxu0 0.0
    %2423 = vmatpush1.msra.mxu0 0.0
    %2424 = vmatprep.subr.mxu0 0.0
    %2425 = vmatpush1.msra.mxu0 0.0
    %2426 = vmatprep.subr.mxu0 0.0
    %2427 = vmatpush1.msra.mxu0 0.0
    %2428 = vmatprep.subr.mxu0 0.0
    %2429 = vmatpush1.msra.mxu0 0.0
    %2430 = vmatprep.subr.mxu0 0.0
    %2431 = vmatpush1.msra.mxu0 0.0
    %2432 = vmatprep.subr.mxu0 0.0
    %2433 = vmatpush1.msra.mxu0 0.0
    %2434 = vmatprep.subr.mxu0 0.0
    %2435 = vmatpush1.msra.mxu0 0.0
    %2436 = vmatprep.subr.mxu0 0.0
    %2437 = vmatpush1.msra.mxu0 0.0
    %2438 = vmatprep.subr.mxu0 0.0
    %2439 = vmatpush1.msra.mxu0 0.0
    %2440 = vmatprep.subr.mxu0 0.0
    %2441 = vmatpush1.msra.mxu0 0.0
    %2442 = vmatprep.mubr.f32.mxu0 0.0
    %2443 = vmatmul.mubr.f32.gmra.mrb[0].mxu0 %v2376
    %v2444 = vpop.f32.mrb[0].mxu0
    %v2445 = vadd.f32 0.0, %v2444
    %v2446 = vpop.f32.mrb[0].mxu0
    %2447 = vdwg.mxu0
    %v2448 = vadd.f32 %v742, %v2445
    %v2449 = vxor.u32 %v2448, 2147483648
    %v2450 = vmul.f32 %v2449, 1.442695
    %v2451 = vpow.pop %v2450
    %v2452 = vadd.f32 %v2451, 1.0
    %v2453 = vrcp.pop %v2452
    %v2454 = vmul.f32 1.0, %v2453
    %v2455 = vadd.f32 %v2445, %v945
    %2457 = vrot.lane.b32.xlu0 %v2455, 80
    %v2458 = vpop.permute.xlu0 %2457
    %v2460 = vmul.f32 %v2454, %v2458
    %2462 = vrot.lane.b32.xlu0 %v2460, 48
    %v2463 = vpop.permute.xlu0 %2462
    %v2465 = vadd.f32 %v742, %v2463
    %v2466 = vtanh.pop %v2465
    %v2467 = vsub.f32 1.0, %v2454
    %2469 = vrot.lane.b32.xlu0 %v2466, 104
    %v2470 = vpop.permute.xlu0 %2469
    %v2472 = vmul.f32 %v2467, %v2470
    %v2474 = vmul.f32 %v2454, %v2373
    %v2475 = vadd.f32 %v2472, %v2474
    %vm2476 = vcmask 1041408
    %v2477 = vsel %vm2476, %v858, %v1075
    %v2478 = vsel %vm366, %v2477, %v1293
    %vm2479 = vcmask 1045504
    %v2480 = vsel %vm2479, %v2478, %v1511
    %v2481 = vsel %vm2476, %v1719, %v1935
    %v2482 = vsel %vm366, %v2481, %v2153
    %v2483 = vsel %vm2479, %v2482, %v2371
    %v2484 = vsel %vm2476, %v2475, %v2262
    %v2485 = vsel %vm366, %v2484, %v2044
    %v2486 = vsel %vm2479, %v2485, %v1827
    %v2487 = vsel %vm2476, %v1615, %v1402
    %v2488 = vsel %vm366, %v2487, %v1184
    %v2489 = vsel %vm2479, %v2488, %v967
    %2492 = vrot.lane.b32.xlu0 %v2480, 104
    %v2493 = vpop.permute.xlu0 %2492
    %2494 = vrot.lane.b32.xlu0 %v2483, 104
    %v2495 = vpop.permute.xlu0 %2494
    %v2498 = vsel %vm750, %v2493, %v2486
    %v2499 = vsel %vm750, %v2495, %v2489
    %v2500 = vld [vmem:[%s13] sm:$0xff]
    %v2501 = vld [vmem:[%s13 + $0x8] sm:$0xff]
    %v2502 = vld [vmem:[%s13 + $0x10] sm:$0xff]
    %v2503 = vld [vmem:[%s13 + $0x18] sm:$0xff]
    %v2504 = vld [vmem:[%s13 + $0x20] sm:$0xff]
    %v2505 = vld [vmem:[%s13 + $0x28] sm:$0xff]
    %v2506 = vld [vmem:[%s13 + $0x30] sm:$0xff]
    %v2507 = vld [vmem:[%s13 + $0x38] sm:$0xff]
    %v2508 = vld [vmem:[%s13 + $0x40] sm:$0xff]
    %v2509 = vld [vmem:[%s13 + $0x48] sm:$0xff]
    %v2510 = vld [vmem:[%s13 + $0x50] sm:$0xff]
    %v2511 = vld [vmem:[%s13 + $0x58] sm:$0xff]
    %v2512 = vld [vmem:[#allocation13] sm:$0xff]
    %v2513 = vld [vmem:[#allocation13 + $0x8] sm:$0xff]
    %v2514 = vld [vmem:[#allocation13 + $0x10] sm:$0xff]
    %v2515 = vld [vmem:[#allocation13 + $0x18] sm:$0xff]
    %v2516 = vld [vmem:[#allocation13 + $0x20] sm:$0xff]
    %v2517 = vld [vmem:[#allocation13 + $0x28] sm:$0xff]
    %v2518 = vld [vmem:[#allocation14] sm:$0x1]
    %v2519 = vld [vmem:[#allocation14 + $0x1] sm:$0x1]
    %v2520 = vld [vmem:[#allocation16] sm:$0x1]
    %v2521 = vld [vmem:[#allocation16 + $0x1] sm:$0x1]
    %v2523 = vlaneseq
    %v2524 = vshrl.u32 %v2523, 7
    %v2525 = vsub.s32 0, %v2524
    %v2526 = vrot.slane %v2518, %v2525
    %vm2528 = vcmask 392192
    %v2530 = vsel %vm2528, %v2498, 0
    %v2533 = vsel %vm2528, %v2499, 0
    %2535 = vmatprep.subr.mxu0 0.0
    %2536 = vmatpush1.msra.mxu0 %v2500
    %2537 = vmatprep.subr.mxu0 0.0
    %2538 = vmatpush1.msra.mxu0 %v2501
    %2539 = vmatprep.subr.mxu0 0.0
    %2540 = vmatpush1.msra.mxu0 %v2502
    %2541 = vmatprep.subr.mxu0 0.0
    %2542 = vmatpush1.msra.mxu0 %v2503
    %2543 = vmatprep.subr.mxu0 0.0
    %2544 = vmatpush1.msra.mxu0 %v2504
    %2545 = vmatprep.subr.mxu0 0.0
    %2546 = vmatpush1.msra.mxu0 %v2505
    %2547 = vmatprep.subr.mxu0 0.0
    %2548 = vmatpush1.msra.mxu0 0.0
    %2549 = vmatprep.subr.mxu0 0.0
    %2550 = vmatpush1.msra.mxu0 0.0
    %2551 = vmatprep.subr.mxu0 0.0
    %2552 = vmatpush1.msra.mxu0 0.0
    %2553 = vmatprep.subr.mxu0 0.0
    %2554 = vmatpush1.msra.mxu0 0.0
    %2555 = vmatprep.subr.mxu0 0.0
    %2556 = vmatpush1.msra.mxu0 0.0
    %2557 = vmatprep.subr.mxu0 0.0
    %2558 = vmatpush1.msra.mxu0 0.0
    %2559 = vmatprep.subr.mxu0 0.0
    %2560 = vmatpush1.msra.mxu0 0.0
    %2561 = vmatprep.subr.mxu0 0.0
    %2562 = vmatpush1.msra.mxu0 0.0
    %2563 = vmatprep.subr.mxu0 0.0
    %2564 = vmatpush1.msra.mxu0 0.0
    %2565 = vmatprep.subr.mxu0 0.0
    %2566 = vmatpush1.msra.mxu0 0.0
    %2567 = vmatprep.subr.mxu0 0.0
    %2568 = vmatpush1.msra.mxu0 0.0
    %2569 = vmatprep.subr.mxu0 0.0
    %2570 = vmatpush1.msra.mxu0 0.0
    %2571 = vmatprep.subr.mxu0 0.0
    %2572 = vmatpush1.msra.mxu0 0.0
    %2573 = vmatprep.subr.mxu0 0.0
    %2574 = vmatpush1.msra.mxu0 0.0
    %2575 = vmatprep.subr.mxu0 0.0
    %2576 = vmatpush1.msra.mxu0 0.0
    %2577 = vmatprep.subr.mxu0 0.0
    %2578 = vmatpush1.msra.mxu0 0.0
    %2579 = vmatprep.subr.mxu0 0.0
    %2580 = vmatpush1.msra.mxu0 0.0
    %2581 = vmatprep.subr.mxu0 0.0
    %2582 = vmatpush1.msra.mxu0 0.0
    %2583 = vmatprep.subr.mxu0 0.0
    %2584 = vmatpush1.msra.mxu0 0.0
    %2585 = vmatprep.subr.mxu0 0.0
    %2586 = vmatpush1.msra.mxu0 0.0
    %2587 = vmatprep.subr.mxu0 0.0
    %2588 = vmatpush1.msra.mxu0 0.0
    %2589 = vmatprep.subr.mxu0 0.0
    %2590 = vmatpush1.msra.mxu0 0.0
    %2591 = vmatprep.subr.mxu0 0.0
    %2592 = vmatpush1.msra.mxu0 0.0
    %2593 = vmatprep.subr.mxu0 0.0
    %2594 = vmatpush1.msra.mxu0 0.0
    %2595 = vmatprep.subr.mxu0 0.0
    %2596 = vmatpush1.msra.mxu0 0.0
    %2597 = vmatprep.subr.mxu0 0.0
    %2598 = vmatpush1.msra.mxu0 0.0
    %2599 = vmatprep.mubr.f32.mxu0 0.0
    %2600 = vmatmul.mubr.f32.gmra.mrb[0].mxu0 %v2530
    %v2601 = vpop.f32.mrb[0].mxu0
    %v2602 = vadd.f32 %v2526, %v2601
    %v2603 = vpop.f32.mrb[0].mxu0
    %2604 = vmatprep.mubr.f32.mxu0 0.0
    %2605 = vmatmul.mubr.f32.gmra.mrb[0].mxu0 %v2533
    %v2606 = vpop.f32.mrb[0].mxu0
    %v2607 = vadd.f32 %v2526, %v2606
    %v2608 = vpop.f32.mrb[0].mxu0
    %2609 = vdwg.mxu0
    %v2611 = vlaneseq
    %v2612 = vshrl.u32 %v2611, 7
    %v2613 = vsub.s32 0, %v2612
    %v2614 = vrot.slane %v2519, %v2613
    %2616 = vmatprep.subr.mxu0 0.0
    %2617 = vmatpush1.msra.mxu0 %v2506
    %2618 = vmatprep.subr.mxu0 0.0
    %2619 = vmatpush1.msra.mxu0 %v2507
    %2620 = vmatprep.subr.mxu0 0.0
    %2621 = vmatpush1.msra.mxu0 %v2508
    %2622 = vmatprep.subr.mxu0 0.0
    %2623 = vmatpush1.msra.mxu0 %v2509
    %2624 = vmatprep.subr.mxu0 0.0
    %2625 = vmatpush1.msra.mxu0 %v2510
    %2626 = vmatprep.subr.mxu0 0.0
    %2627 = vmatpush1.msra.mxu0 %v2511
    %2628 = vmatprep.subr.mxu0 0.0
    %2629 = vmatpush1.msra.mxu0 0.0
    %2630 = vmatprep.subr.mxu0 0.0
    %2631 = vmatpush1.msra.mxu0 0.0
    %2632 = vmatprep.subr.mxu0 0.0
    %2633 = vmatpush1.msra.mxu0 0.0
    %2634 = vmatprep.subr.mxu0 0.0
    %2635 = vmatpush1.msra.mxu0 0.0
    %2636 = vmatprep.subr.mxu0 0.0
    %2637 = vmatpush1.msra.mxu0 0.0
    %2638 = vmatprep.subr.mxu0 0.0
    %2639 = vmatpush1.msra.mxu0 0.0
    %2640 = vmatprep.subr.mxu0 0.0
    %2641 = vmatpush1.msra.mxu0 0.0
    %2642 = vmatprep.subr.mxu0 0.0
    %2643 = vmatpush1.msra.mxu0 0.0
    %2644 = vmatprep.subr.mxu0 0.0
    %2645 = vmatpush1.msra.mxu0 0.0
    %2646 = vmatprep.subr.mxu0 0.0
    %2647 = vmatpush1.msra.mxu0 0.0
    %2648 = vmatprep.subr.mxu0 0.0
    %2649 = vmatpush1.msra.mxu0 0.0
    %2650 = vmatprep.subr.mxu0 0.0
    %2651 = vmatpush1.msra.mxu0 0.0
    %2652 = vmatprep.subr.mxu0 0.0
    %2653 = vmatpush1.msra.mxu0 0.0
    %2654 = vmatprep.subr.mxu0 0.0
    %2655 = vmatpush1.msra.mxu0 0.0
    %2656 = vmatprep.subr.mxu0 0.0
    %2657 = vmatpush1.msra.mxu0 0.0
    %2658 = vmatprep.subr.mxu0 0.0
    %2659 = vmatpush1.msra.mxu0 0.0
    %2660 = vmatprep.subr.mxu0 0.0
    %2661 = vmatpush1.msra.mxu0 0.0
    %2662 = vmatprep.subr.mxu0 0.0
    %2663 = vmatpush1.msra.mxu0 0.0
    %2664 = vmatprep.subr.mxu0 0.0
    %2665 = vmatpush1.msra.mxu0 0.0
    %2666 = vmatprep.subr.mxu0 0.0
    %2667 = vmatpush1.msra.mxu0 0.0
    %2668 = vmatprep.subr.mxu0 0.0
    %2669 = vmatpush1.msra.mxu0 0.0
    %2670 = vmatprep.subr.mxu0 0.0
    %2671 = vmatpush1.msra.mxu0 0.0
    %2672 = vmatprep.subr.mxu0 0.0
    %2673 = vmatpush1.msra.mxu0 0.0
    %2674 = vmatprep.subr.mxu0 0.0
    %2675 = vmatpush1.msra.mxu0 0.0
    %2676 = vmatprep.subr.mxu0 0.0
    %2677 = vmatpush1.msra.mxu0 0.0
    %2678 = vmatprep.subr.mxu0 0.0
    %2679 = vmatpush1.msra.mxu0 0.0
    %2680 = vmatprep.mubr.f32.mxu0 0.0
    %2681 = vmatmul.mubr.f32.gmra.mrb[0].mxu0 %v2530
    %v2682 = vpop.f32.mrb[0].mxu0
    %v2683 = vadd.f32 %v2614, %v2682
    %v2684 = vpop.f32.mrb[0].mxu0
    %2685 = vmatprep.mubr.f32.mxu0 0.0
    %2686 = vmatmul.mubr.f32.gmra.mrb[0].mxu0 %v2533
    %v2687 = vpop.f32.mrb[0].mxu0
    %v2688 = vadd.f32 %v2614, %v2687
    %v2689 = vpop.f32.mrb[0].mxu0
    %2690 = vdwg.mxu0
    %2691 = vmatprep.subr.mxu0 0.0
    %2692 = vmatpush1.msra.mxu0 %v2512
    %2693 = vmatprep.subr.mxu0 0.0
    %2694 = vmatpush1.msra.mxu0 %v2513
    %2695 = vmatprep.subr.mxu0 0.0
    %2696 = vmatpush1.msra.mxu0 %v2514
    %2697 = vmatprep.subr.mxu0 0.0
    %2698 = vmatpush1.msra.mxu0 0.0
    %2699 = vmatprep.subr.mxu0 0.0
    %2700 = vmatpush1.msra.mxu0 0.0
    %2701 = vmatprep.subr.mxu0 0.0
    %2702 = vmatpush1.msra.mxu0 0.0
    %2703 = vmatprep.subr.mxu0 0.0
    %2704 = vmatpush1.msra.mxu0 0.0
    %2705 = vmatprep.subr.mxu0 0.0
    %2706 = vmatpush1.msra.mxu0 0.0
    %2707 = vmatprep.subr.mxu0 0.0
    %2708 = vmatpush1.msra.mxu0 0.0
    %2709 = vmatprep.subr.mxu0 0.0
    %2710 = vmatpush1.msra.mxu0 0.0
    %2711 = vmatprep.subr.mxu0 0.0
    %2712 = vmatpush1.msra.mxu0 0.0
    %2713 = vmatprep.subr.mxu0 0.0
    %2714 = vmatpush1.msra.mxu0 0.0
    %2715 = vmatprep.subr.mxu0 0.0
    %2716 = vmatpush1.msra.mxu0 0.0
    %2717 = vmatprep.subr.mxu0 0.0
    %2718 = vmatpush1.msra.mxu0 0.0
    %2719 = vmatprep.subr.mxu0 0.0
    %2720 = vmatpush1.msra.mxu0 0.0
    %2721 = vmatprep.subr.mxu0 0.0
    %2722 = vmatpush1.msra.mxu0 0.0
    %2723 = vmatprep.subr.mxu0 0.0
    %2724 = vmatpush1.msra.mxu0 0.0
    %2725 = vmatprep.subr.mxu0 0.0
    %2726 = vmatpush1.msra.mxu0 0.0
    %2727 = vmatprep.subr.mxu0 0.0
    %2728 = vmatpush1.msra.mxu0 0.0
    %2729 = vmatprep.subr.mxu0 0.0
    %2730 = vmatpush1.msra.mxu0 0.0
    %2731 = vmatprep.subr.mxu0 0.0
    %2732 = vmatpush1.msra.mxu0 0.0
    %2733 = vmatprep.subr.mxu0 0.0
    %2734 = vmatpush1.msra.mxu0 0.0
    %2735 = vmatprep.subr.mxu0 0.0
    %2736 = vmatpush1.msra.mxu0 0.0
    %2737 = vmatprep.subr.mxu0 0.0
    %2738 = vmatpush1.msra.mxu0 0.0
    %2739 = vmatprep.subr.mxu0 0.0
    %2740 = vmatpush1.msra.mxu0 0.0
    %2741 = vmatprep.subr.mxu0 0.0
    %2742 = vmatpush1.msra.mxu0 0.0
    %2743 = vmatprep.subr.mxu0 0.0
    %2744 = vmatpush1.msra.mxu0 0.0
    %2745 = vmatprep.subr.mxu0 0.0
    %2746 = vmatpush1.msra.mxu0 0.0
    %2747 = vmatprep.subr.mxu0 0.0
    %2748 = vmatpush1.msra.mxu0 0.0
    %2749 = vmatprep.subr.mxu0 0.0
    %2750 = vmatpush1.msra.mxu0 0.0
    %2751 = vmatprep.subr.mxu0 0.0
    %2752 = vmatpush1.msra.mxu0 0.0
    %2753 = vmatprep.subr.mxu0 0.0
    %2754 = vmatpush1.msra.mxu0 0.0
    %2755 = vmatprep.mubr.f32.mxu0 0.0
    %2756 = vmatmul.mubr.f32.gmra.mrb[0].mxu0 %v752
    %v2757 = vpop.f32.mrb[0].mxu0
    %v2758 = vadd.f32 0.0, %v2757
    %v2759 = vpop.f32.mrb[0].mxu0
    %2760 = vdwg.mxu0
    %v2761 = vadd.f32 %v2602, %v2758
    %v2762 = vxor.u32 %v2761, 2147483648
    %v2763 = vmul.f32 %v2762, 1.442695
    %v2764 = vpow.pop %v2763
    %v2765 = vadd.f32 %v2764, 1.0
    %v2766 = vrcp.pop %v2765
    %v2767 = vmul.f32 1.0, %v2766
    %v2769 = vlaneseq
    %v2770 = vshrl.u32 %v2769, 7
    %v2771 = vsub.s32 0, %v2770
    %v2772 = vrot.slane %v2520, %v2771
    %2773 = vrot.lane.b32.xlu0 %v2772, 48
    %v2774 = vpop.permute.xlu0 %2773
    %v2776 = vadd.f32 %v2758, %v2774
    %2778 = vrot.lane.b32.xlu0 %v2776, 80
    %v2779 = vpop.permute.xlu0 %2778
    %v2781 = vmul.f32 %v2767, %v2779
    %2783 = vrot.lane.b32.xlu0 %v2781, 48
    %v2784 = vpop.permute.xlu0 %2783
    %v2786 = vadd.f32 %v2602, %v2784
    %v2787 = vtanh.pop %v2786
    %v2788 = vsub.f32 1.0, %v2767
    %2790 = vrot.lane.b32.xlu0 %v2787, 104
    %v2791 = vpop.permute.xlu0 %2790
    %v2793 = vmul.f32 %v2788, %v2791
    %v2794 = vmul.f32 %v2767, 0.0
    %v2795 = vadd.f32 %v2793, %v2794
    %2796 = vmatprep.subr.mxu0 0.0
    %2797 = vmatpush1.msra.mxu0 %v2515
    %2798 = vmatprep.subr.mxu0 0.0
    %2799 = vmatpush1.msra.mxu0 %v2516
    %2800 = vmatprep.subr.mxu0 0.0
    %2801 = vmatpush1.msra.mxu0 %v2517
    %2802 = vmatprep.subr.mxu0 0.0
    %2803 = vmatpush1.msra.mxu0 0.0
    %2804 = vmatprep.subr.mxu0 0.0
    %2805 = vmatpush1.msra.mxu0 0.0
    %2806 = vmatprep.subr.mxu0 0.0
    %2807 = vmatpush1.msra.mxu0 0.0
    %2808 = vmatprep.subr.mxu0 0.0
    %2809 = vmatpush1.msra.mxu0 0.0
    %2810 = vmatprep.subr.mxu0 0.0
    %2811 = vmatpush1.msra.mxu0 0.0
    %2812 = vmatprep.subr.mxu0 0.0
    %2813 = vmatpush1.msra.mxu0 0.0
    %2814 = vmatprep.subr.mxu0 0.0
    %2815 = vmatpush1.msra.mxu0 0.0
    %2816 = vmatprep.subr.mxu0 0.0
    %2817 = vmatpush1.msra.mxu0 0.0
    %2818 = vmatprep.subr.mxu0 0.0
    %2819 = vmatpush1.msra.mxu0 0.0
    %2820 = vmatprep.subr.mxu0 0.0
    %2821 = vmatpush1.msra.mxu0 0.0
    %2822 = vmatprep.subr.mxu0 0.0
    %2823 = vmatpush1.msra.mxu0 0.0
    %2824 = vmatprep.subr.mxu0 0.0
    %2825 = vmatpush1.msra.mxu0 0.0
    %2826 = vmatprep.subr.mxu0 0.0
    %2827 = vmatpush1.msra.mxu0 0.0
    %2828 = vmatprep.subr.mxu0 0.0
    %2829 = vmatpush1.msra.mxu0 0.0
    %2830 = vmatprep.subr.mxu0 0.0
    %2831 = vmatpush1.msra.mxu0 0.0
    %2832 = vmatprep.subr.mxu0 0.0
    %2833 = vmatpush1.msra.mxu0 0.0
    %2834 = vmatprep.subr.mxu0 0.0
    %2835 = vmatpush1.msra.mxu0 0.0
    %2836 = vmatprep.subr.mxu0 0.0
    %2837 = vmatpush1.msra.mxu0 0.0
    %2838 = vmatprep.subr.mxu0 0.0
    %2839 = vmatpush1.msra.mxu0 0.0
    %2840 = vmatprep.subr.mxu0 0.0
    %2841 = vmatpush1.msra.mxu0 0.0
    %2842 = vmatprep.subr.mxu0 0.0
    %2843 = vmatpush1.msra.mxu0 0.0
    %2844 = vmatprep.subr.mxu0 0.0
    %2845 = vmatpush1.msra.mxu0 0.0
    %2846 = vmatprep.subr.mxu0 0.0
    %2847 = vmatpush1.msra.mxu0 0.0
    %2848 = vmatprep.subr.mxu0 0.0
    %2849 = vmatpush1.msra.mxu0 0.0
    %2850 = vmatprep.subr.mxu0 0.0
    %2851 = vmatpush1.msra.mxu0 0.0
    %2852 = vmatprep.subr.mxu0 0.0
    %2853 = vmatpush1.msra.mxu0 0.0
    %2854 = vmatprep.subr.mxu0 0.0
    %2855 = vmatpush1.msra.mxu0 0.0
    %2856 = vmatprep.subr.mxu0 0.0
    %2857 = vmatpush1.msra.mxu0 0.0
    %2858 = vmatprep.subr.mxu0 0.0
    %2859 = vmatpush1.msra.mxu0 0.0
    %2860 = vmatprep.mubr.f32.mxu0 0.0
    %2861 = vmatmul.mubr.f32.gmra.mrb[0].mxu0 %v752
    %v2862 = vpop.f32.mrb[0].mxu0
    %v2863 = vadd.f32 0.0, %v2862
    %v2864 = vpop.f32.mrb[0].mxu0
    %2865 = vdwg.mxu0
    %v2867 = vrot.slane %v2863, 2
    %v2869 = vadd.f32 %v2688, %v2867
    %v2870 = vxor.u32 %v2869, 2147483648
    %v2871 = vmul.f32 %v2870, 1.442695
    %v2872 = vpow.pop %v2871
    %v2873 = vadd.f32 %v2872, 1.0
    %v2874 = vrcp.pop %v2873
    %v2875 = vmul.f32 1.0, %v2874
    %v2877 = vlaneseq
    %v2878 = vshrl.u32 %v2877, 7
    %v2879 = vsub.s32 0, %v2878
    %v2880 = vrot.slane %v2521, %v2879
    %2881 = vrot.lane.b32.xlu0 %v2880, 48
    %v2882 = vpop.permute.xlu0 %2881
    %v2884 = vadd.f32 %v2863, %v2882
    %v2886 = vrot.slane %v2884, 2
    %2887 = vrot.lane.b32.xlu0 %v2886, 80
    %v2888 = vpop.permute.xlu0 %2887
    %v2890 = vmul.f32 %v2875, %v2888
    %2892 = vrot.lane.b32.xlu0 %v2890, 48
    %v2893 = vpop.permute.xlu0 %2892
    %v2895 = vadd.f32 %v2688, %v2893
    %v2896 = vtanh.pop %v2895
    %v2897 = vsub.f32 1.0, %v2875
    %2899 = vrot.lane.b32.xlu0 %v2896, 104
    %v2900 = vpop.permute.xlu0 %2899
    %v2902 = vmul.f32 %v2897, %v2900
    %v2903 = vmul.f32 %v2875, 0.0
    %v2904 = vadd.f32 %v2902, %v2903
    %2906 = vrot.lane.b32.xlu0 %v2795, 104
    %v2907 = vpop.permute.xlu0 %2906
    %v2908 = vsel %vm750, %v2907, 0
    %2910 = vmatprep.subr.mxu0 0.0
    %2911 = vmatpush1.msra.mxu0 %v2512
    %2912 = vmatprep.subr.mxu0 0.0
    %2913 = vmatpush1.msra.mxu0 %v2513
    %2914 = vmatprep.subr.mxu0 0.0
    %2915 = vmatpush1.msra.mxu0 %v2514
    %2916 = vmatprep.subr.mxu0 0.0
    %2917 = vmatpush1.msra.mxu0 0.0
    %2918 = vmatprep.subr.mxu0 0.0
    %2919 = vmatpush1.msra.mxu0 0.0
    %2920 = vmatprep.subr.mxu0 0.0
    %2921 = vmatpush1.msra.mxu0 0.0
    %2922 = vmatprep.subr.mxu0 0.0
    %2923 = vmatpush1.msra.mxu0 0.0
    %2924 = vmatprep.subr.mxu0 0.0
    %2925 = vmatpush1.msra.mxu0 0.0
    %2926 = vmatprep.subr.mxu0 0.0
    %2927 = vmatpush1.msra.mxu0 0.0
    %2928 = vmatprep.subr.mxu0 0.0
    %2929 = vmatpush1.msra.mxu0 0.0
    %2930 = vmatprep.subr.mxu0 0.0
    %2931 = vmatpush1.msra.mxu0 0.0
    %2932 = vmatprep.subr.mxu0 0.0
    %2933 = vmatpush1.msra.mxu0 0.0
    %2934 = vmatprep.subr.mxu0 0.0
    %2935 = vmatpush1.msra.mxu0 0.0
    %2936 = vmatprep.subr.mxu0 0.0
    %2937 = vmatpush1.msra.mxu0 0.0
    %2938 = vmatprep.subr.mxu0 0.0
    %2939 = vmatpush1.msra.mxu0 0.0
    %2940 = vmatprep.subr.mxu0 0.0
    %2941 = vmatpush1.msra.mxu0 0.0
    %2942 = vmatprep.subr.mxu0 0.0
    %2943 = vmatpush1.msra.mxu0 0.0
    %2944 = vmatprep.subr.mxu0 0.0
    %2945 = vmatpush1.msra.mxu0 0.0
    %2946 = vmatprep.subr.mxu0 0.0
    %2947 = vmatpush1.msra.mxu0 0.0
    %2948 = vmatprep.subr.mxu0 0.0
    %2949 = vmatpush1.msra.mxu0 0.0
    %2950 = vmatprep.subr.mxu0 0.0
    %2951 = vmatpush1.msra.mxu0 0.0
    %2952 = vmatprep.subr.mxu0 0.0
    %2953 = vmatpush1.msra.mxu0 0.0
    %2954 = vmatprep.subr.mxu0 0.0
    %2955 = vmatpush1.msra.mxu0 0.0
    %2956 = vmatprep.subr.mxu0 0.0
    %2957 = vmatpush1.msra.mxu0 0.0
    %2958 = vmatprep.subr.mxu0 0.0
    %2959 = vmatpush1.msra.mxu0 0.0
    %2960 = vmatprep.subr.mxu0 0.0
    %2961 = vmatpush1.msra.mxu0 0.0
    %2962 = vmatprep.subr.mxu0 0.0
    %2963 = vmatpush1.msra.mxu0 0.0
    %2964 = vmatprep.subr.mxu0 0.0
    %2965 = vmatpush1.msra.mxu0 0.0
    %2966 = vmatprep.subr.mxu0 0.0
    %2967 = vmatpush1.msra.mxu0 0.0
    %2968 = vmatprep.subr.mxu0 0.0
    %2969 = vmatpush1.msra.mxu0 0.0
    %2970 = vmatprep.subr.mxu0 0.0
    %2971 = vmatpush1.msra.mxu0 0.0
    %2972 = vmatprep.subr.mxu0 0.0
    %2973 = vmatpush1.msra.mxu0 0.0
    %2974 = vmatprep.mubr.f32.mxu0 0.0
    %2975 = vmatmul.mubr.f32.gmra.mrb[0].mxu0 %v2908
    %v2976 = vpop.f32.mrb[0].mxu0
    %v2977 = vadd.f32 0.0, %v2976
    %v2978 = vpop.f32.mrb[0].mxu0
    %2979 = vdwg.mxu0
    %v2981 = vrot.slane %v2977, 6
    %v2983 = vadd.f32 %v2602, %v2981
    %v2984 = vxor.u32 %v2983, 2147483648
    %v2985 = vmul.f32 %v2984, 1.442695
    %v2986 = vpow.pop %v2985
    %v2987 = vadd.f32 %v2986, 1.0
    %v2988 = vrcp.pop %v2987
    %v2989 = vmul.f32 1.0, %v2988
    %v2990 = vadd.f32 %v2977, %v2774
    %v2992 = vrot.slane %v2990, 6
    %2993 = vrot.lane.b32.xlu0 %v2992, 80
    %v2994 = vpop.permute.xlu0 %2993
    %v2996 = vmul.f32 %v2989, %v2994
    %2998 = vrot.lane.b32.xlu0 %v2996, 48
    %v2999 = vpop.permute.xlu0 %2998
    %v3001 = vadd.f32 %v2602, %v2999
    %v3002 = vtanh.pop %v3001
    %v3003 = vsub.f32 1.0, %v2989
    %3005 = vrot.lane.b32.xlu0 %v3002, 104
    %v3006 = vpop.permute.xlu0 %3005
    %v3008 = vmul.f32 %v3003, %v3006
    %v3009 = vrot.slane %v2795, 6
    %v3011 = vmul.f32 %v2989, %v3009
    %v3012 = vadd.f32 %v3008, %v3011
    %v3014 = vrot.slane %v2904, 6
    %3015 = vrot.lane.b32.xlu0 %v3014, 104
    %v3016 = vpop.permute.xlu0 %3015
    %v3017 = vsel %vm750, %v3016, 0
    %3019 = vmatprep.subr.mxu0 0.0
    %3020 = vmatpush1.msra.mxu0 %v2515
    %3021 = vmatprep.subr.mxu0 0.0
    %3022 = vmatpush1.msra.mxu0 %v2516
    %3023 = vmatprep.subr.mxu0 0.0
    %3024 = vmatpush1.msra.mxu0 %v2517
    %3025 = vmatprep.subr.mxu0 0.0
    %3026 = vmatpush1.msra.mxu0 0.0
    %3027 = vmatprep.subr.mxu0 0.0
    %3028 = vmatpush1.msra.mxu0 0.0
    %3029 = vmatprep.subr.mxu0 0.0
    %3030 = vmatpush1.msra.mxu0 0.0
    %3031 = vmatprep.subr.mxu0 0.0
    %3032 = vmatpush1.msra.mxu0 0.0
    %3033 = vmatprep.subr.mxu0 0.0
    %3034 = vmatpush1.msra.mxu0 0.0
    %3035 = vmatprep.subr.mxu0 0.0
    %3036 = vmatpush1.msra.mxu0 0.0
    %3037 = vmatprep.subr.mxu0 0.0
    %3038 = vmatpush1.msra.mxu0 0.0
    %3039 = vmatprep.subr.mxu0 0.0
    %3040 = vmatpush1.msra.mxu0 0.0
    %3041 = vmatprep.subr.mxu0 0.0
    %3042 = vmatpush1.msra.mxu0 0.0
    %3043 = vmatprep.subr.mxu0 0.0
    %3044 = vmatpush1.msra.mxu0 0.0
    %3045 = vmatprep.subr.mxu0 0.0
    %3046 = vmatpush1.msra.mxu0 0.0
    %3047 = vmatprep.subr.mxu0 0.0
    %3048 = vmatpush1.msra.mxu0 0.0
    %3049 = vmatprep.subr.mxu0 0.0
    %3050 = vmatpush1.msra.mxu0 0.0
    %3051 = vmatprep.subr.mxu0 0.0
    %3052 = vmatpush1.msra.mxu0 0.0
    %3053 = vmatprep.subr.mxu0 0.0
    %3054 = vmatpush1.msra.mxu0 0.0
    %3055 = vmatprep.subr.mxu0 0.0
    %3056 = vmatpush1.msra.mxu0 0.0
    %3057 = vmatprep.subr.mxu0 0.0
    %3058 = vmatpush1.msra.mxu0 0.0
    %3059 = vmatprep.subr.mxu0 0.0
    %3060 = vmatpush1.msra.mxu0 0.0
    %3061 = vmatprep.subr.mxu0 0.0
    %3062 = vmatpush1.msra.mxu0 0.0
    %3063 = vmatprep.subr.mxu0 0.0
    %3064 = vmatpush1.msra.mxu0 0.0
    %3065 = vmatprep.subr.mxu0 0.0
    %3066 = vmatpush1.msra.mxu0 0.0
    %3067 = vmatprep.subr.mxu0 0.0
    %3068 = vmatpush1.msra.mxu0 0.0
    %3069 = vmatprep.subr.mxu0 0.0
    %3070 = vmatpush1.msra.mxu0 0.0
    %3071 = vmatprep.subr.mxu0 0.0
    %3072 = vmatpush1.msra.mxu0 0.0
    %3073 = vmatprep.subr.mxu0 0.0
    %3074 = vmatpush1.msra.mxu0 0.0
    %3075 = vmatprep.subr.mxu0 0.0
    %3076 = vmatpush1.msra.mxu0 0.0
    %3077 = vmatprep.subr.mxu0 0.0
    %3078 = vmatpush1.msra.mxu0 0.0
    %3079 = vmatprep.subr.mxu0 0.0
    %3080 = vmatpush1.msra.mxu0 0.0
    %3081 = vmatprep.subr.mxu0 0.0
    %3082 = vmatpush1.msra.mxu0 0.0
    %3083 = vmatprep.mubr.f32.mxu0 0.0
    %3084 = vmatmul.mubr.f32.gmra.mrb[0].mxu0 %v3017
    %v3085 = vpop.f32.mrb[0].mxu0
    %v3086 = vadd.f32 0.0, %v3085
    %v3087 = vpop.f32.mrb[0].mxu0
    %3088 = vdwg.mxu0
    %v3090 = vrot.slane %v3086, 4
    %v3092 = vadd.f32 %v2688, %v3090
    %v3093 = vxor.u32 %v3092, 2147483648
    %v3094 = vmul.f32 %v3093, 1.442695
    %v3095 = vpow.pop %v3094
    %v3096 = vadd.f32 %v3095, 1.0
    %v3097 = vrcp.pop %v3096
    %v3098 = vmul.f32 1.0, %v3097
    %v3099 = vadd.f32 %v3086, %v2882
    %v3101 = vrot.slane %v3099, 4
    %3102 = vrot.lane.b32.xlu0 %v3101, 80
    %v3103 = vpop.permute.xlu0 %3102
    %v3105 = vmul.f32 %v3098, %v3103
    %3107 = vrot.lane.b32.xlu0 %v3105, 48
    %v3108 = vpop.permute.xlu0 %3107
    %v3110 = vadd.f32 %v2688, %v3108
    %v3111 = vtanh.pop %v3110
    %v3112 = vsub.f32 1.0, %v3098
    %3114 = vrot.lane.b32.xlu0 %v3111, 104
    %v3115 = vpop.permute.xlu0 %3114
    %v3117 = vmul.f32 %v3112, %v3115
    %v3118 = vrot.slane %v2904, 2
    %v3120 = vmul.f32 %v3098, %v3118
    %v3121 = vadd.f32 %v3117, %v3120
    %v3123 = vrot.slane %v3012, 2
    %3124 = vrot.lane.b32.xlu0 %v3123, 104
    %v3125 = vpop.permute.xlu0 %3124
    %v3126 = vsel %vm750, %v3125, 0
    %3128 = vmatprep.subr.mxu0 0.0
    %3129 = vmatpush1.msra.mxu0 %v2512
    %3130 = vmatprep.subr.mxu0 0.0
    %3131 = vmatpush1.msra.mxu0 %v2513
    %3132 = vmatprep.subr.mxu0 0.0
    %3133 = vmatpush1.msra.mxu0 %v2514
    %3134 = vmatprep.subr.mxu0 0.0
    %3135 = vmatpush1.msra.mxu0 0.0
    %3136 = vmatprep.subr.mxu0 0.0
    %3137 = vmatpush1.msra.mxu0 0.0
    %3138 = vmatprep.subr.mxu0 0.0
    %3139 = vmatpush1.msra.mxu0 0.0
    %3140 = vmatprep.subr.mxu0 0.0
    %3141 = vmatpush1.msra.mxu0 0.0
    %3142 = vmatprep.subr.mxu0 0.0
    %3143 = vmatpush1.msra.mxu0 0.0
    %3144 = vmatprep.subr.mxu0 0.0
    %3145 = vmatpush1.msra.mxu0 0.0
    %3146 = vmatprep.subr.mxu0 0.0
    %3147 = vmatpush1.msra.mxu0 0.0
    %3148 = vmatprep.subr.mxu0 0.0
    %3149 = vmatpush1.msra.mxu0 0.0
    %3150 = vmatprep.subr.mxu0 0.0
    %3151 = vmatpush1.msra.mxu0 0.0
    %3152 = vmatprep.subr.mxu0 0.0
    %3153 = vmatpush1.msra.mxu0 0.0
    %3154 = vmatprep.subr.mxu0 0.0
    %3155 = vmatpush1.msra.mxu0 0.0
    %3156 = vmatprep.subr.mxu0 0.0
    %3157 = vmatpush1.msra.mxu0 0.0
    %3158 = vmatprep.subr.mxu0 0.0
    %3159 = vmatpush1.msra.mxu0 0.0
    %3160 = vmatprep.subr.mxu0 0.0
    %3161 = vmatpush1.msra.mxu0 0.0
    %3162 = vmatprep.subr.mxu0 0.0
    %3163 = vmatpush1.msra.mxu0 0.0
    %3164 = vmatprep.subr.mxu0 0.0
    %3165 = vmatpush1.msra.mxu0 0.0
    %3166 = vmatprep.subr.mxu0 0.0
    %3167 = vmatpush1.msra.mxu0 0.0
    %3168 = vmatprep.subr.mxu0 0.0
    %3169 = vmatpush1.msra.mxu0 0.0
    %3170 = vmatprep.subr.mxu0 0.0
    %3171 = vmatpush1.msra.mxu0 0.0
    %3172 = vmatprep.subr.mxu0 0.0
    %3173 = vmatpush1.msra.mxu0 0.0
    %3174 = vmatprep.subr.mxu0 0.0
    %3175 = vmatpush1.msra.mxu0 0.0
    %3176 = vmatprep.subr.mxu0 0.0
    %3177 = vmatpush1.msra.mxu0 0.0
    %3178 = vmatprep.subr.mxu0 0.0
    %3179 = vmatpush1.msra.mxu0 0.0
    %3180 = vmatprep.subr.mxu0 0.0
    %3181 = vmatpush1.msra.mxu0 0.0
    %3182 = vmatprep.subr.mxu0 0.0
    %3183 = vmatpush1.msra.mxu0 0.0
    %3184 = vmatprep.subr.mxu0 0.0
    %3185 = vmatpush1.msra.mxu0 0.0
    %3186 = vmatprep.subr.mxu0 0.0
    %3187 = vmatpush1.msra.mxu0 0.0
    %3188 = vmatprep.subr.mxu0 0.0
    %3189 = vmatpush1.msra.mxu0 0.0
    %3190 = vmatprep.subr.mxu0 0.0
    %3191 = vmatpush1.msra.mxu0 0.0
    %3192 = vmatprep.mubr.f32.mxu0 0.0
    %3193 = vmatmul.mubr.f32.gmra.mrb[0].mxu0 %v3126
    %v3194 = vpop.f32.mrb[0].mxu0
    %v3195 = vadd.f32 0.0, %v3194
    %v3196 = vpop.f32.mrb[0].mxu0
    %3197 = vdwg.mxu0
    %v3199 = vrot.slane %v3195, 4
    %v3201 = vadd.f32 %v2602, %v3199
    %v3202 = vxor.u32 %v3201, 2147483648
    %v3203 = vmul.f32 %v3202, 1.442695
    %v3204 = vpow.pop %v3203
    %v3205 = vadd.f32 %v3204, 1.0
    %v3206 = vrcp.pop %v3205
    %v3207 = vmul.f32 1.0, %v3206
    %v3208 = vadd.f32 %v3195, %v2774
    %v3210 = vrot.slane %v3208, 4
    %3211 = vrot.lane.b32.xlu0 %v3210, 80
    %v3212 = vpop.permute.xlu0 %3211
    %v3214 = vmul.f32 %v3207, %v3212
    %3216 = vrot.lane.b32.xlu0 %v3214, 48
    %v3217 = vpop.permute.xlu0 %3216
    %v3219 = vadd.f32 %v2602, %v3217
    %v3220 = vtanh.pop %v3219
    %v3221 = vsub.f32 1.0, %v3207
    %3223 = vrot.lane.b32.xlu0 %v3220, 104
    %v3224 = vpop.permute.xlu0 %3223
    %v3226 = vmul.f32 %v3221, %v3224
    %v3227 = vrot.slane %v3012, 6
    %v3229 = vmul.f32 %v3207, %v3227
    %v3230 = vadd.f32 %v3226, %v3229
    %v3232 = vrot.slane %v3121, 4
    %3233 = vrot.lane.b32.xlu0 %v3232, 104
    %v3234 = vpop.permute.xlu0 %3233
    %v3235 = vsel %vm750, %v3234, 0
    %3237 = vmatprep.subr.mxu0 0.0
    %3238 = vmatpush1.msra.mxu0 %v2515
    %3239 = vmatprep.subr.mxu0 0.0
    %3240 = vmatpush1.msra.mxu0 %v2516
    %3241 = vmatprep.subr.mxu0 0.0
    %3242 = vmatpush1.msra.mxu0 %v2517
    %3243 = vmatprep.subr.mxu0 0.0
    %3244 = vmatpush1.msra.mxu0 0.0
    %3245 = vmatprep.subr.mxu0 0.0
    %3246 = vmatpush1.msra.mxu0 0.0
    %3247 = vmatprep.subr.mxu0 0.0
    %3248 = vmatpush1.msra.mxu0 0.0
    %3249 = vmatprep.subr.mxu0 0.0
    %3250 = vmatpush1.msra.mxu0 0.0
    %3251 = vmatprep.subr.mxu0 0.0
    %3252 = vmatpush1.msra.mxu0 0.0
    %3253 = vmatprep.subr.mxu0 0.0
    %3254 = vmatpush1.msra.mxu0 0.0
    %3255 = vmatprep.subr.mxu0 0.0
    %3256 = vmatpush1.msra.mxu0 0.0
    %3257 = vmatprep.subr.mxu0 0.0
    %3258 = vmatpush1.msra.mxu0 0.0
    %3259 = vmatprep.subr.mxu0 0.0
    %3260 = vmatpush1.msra.mxu0 0.0
    %3261 = vmatprep.subr.mxu0 0.0
    %3262 = vmatpush1.msra.mxu0 0.0
    %3263 = vmatprep.subr.mxu0 0.0
    %3264 = vmatpush1.msra.mxu0 0.0
    %3265 = vmatprep.subr.mxu0 0.0
    %3266 = vmatpush1.msra.mxu0 0.0
    %3267 = vmatprep.subr.mxu0 0.0
    %3268 = vmatpush1.msra.mxu0 0.0
    %3269 = vmatprep.subr.mxu0 0.0
    %3270 = vmatpush1.msra.mxu0 0.0
    %3271 = vmatprep.subr.mxu0 0.0
    %3272 = vmatpush1.msra.mxu0 0.0
    %3273 = vmatprep.subr.mxu0 0.0
    %3274 = vmatpush1.msra.mxu0 0.0
    %3275 = vmatprep.subr.mxu0 0.0
    %3276 = vmatpush1.msra.mxu0 0.0
    %3277 = vmatprep.subr.mxu0 0.0
    %3278 = vmatpush1.msra.mxu0 0.0
    %3279 = vmatprep.subr.mxu0 0.0
    %3280 = vmatpush1.msra.mxu0 0.0
    %3281 = vmatprep.subr.mxu0 0.0
    %3282 = vmatpush1.msra.mxu0 0.0
    %3283 = vmatprep.subr.mxu0 0.0
    %3284 = vmatpush1.msra.mxu0 0.0
    %3285 = vmatprep.subr.mxu0 0.0
    %3286 = vmatpush1.msra.mxu0 0.0
    %3287 = vmatprep.subr.mxu0 0.0
    %3288 = vmatpush1.msra.mxu0 0.0
    %3289 = vmatprep.subr.mxu0 0.0
    %3290 = vmatpush1.msra.mxu0 0.0
    %3291 = vmatprep.subr.mxu0 0.0
    %3292 = vmatpush1.msra.mxu0 0.0
    %3293 = vmatprep.subr.mxu0 0.0
    %3294 = vmatpush1.msra.mxu0 0.0
    %3295 = vmatprep.subr.mxu0 0.0
    %3296 = vmatpush1.msra.mxu0 0.0
    %3297 = vmatprep.subr.mxu0 0.0
    %3298 = vmatpush1.msra.mxu0 0.0
    %3299 = vmatprep.subr.mxu0 0.0
    %3300 = vmatpush1.msra.mxu0 0.0
    %3301 = vmatprep.mubr.f32.mxu0 0.0
    %3302 = vmatmul.mubr.f32.gmra.mrb[0].mxu0 %v3235
    %v3303 = vpop.f32.mrb[0].mxu0
    %v3304 = vadd.f32 0.0, %v3303
    %v3305 = vpop.f32.mrb[0].mxu0
    %3306 = vdwg.mxu0
    %v3308 = vrot.slane %v3304, 6
    %v3310 = vadd.f32 %v2688, %v3308
    %v3311 = vxor.u32 %v3310, 2147483648
    %v3312 = vmul.f32 %v3311, 1.442695
    %v3313 = vpow.pop %v3312
    %v3314 = vadd.f32 %v3313, 1.0
    %v3315 = vrcp.pop %v3314
    %v3316 = vmul.f32 1.0, %v3315
    %v3317 = vadd.f32 %v3304, %v2882
    %v3319 = vrot.slane %v3317, 6
    %3320 = vrot.lane.b32.xlu0 %v3319, 80
    %v3321 = vpop.permute.xlu0 %3320
    %v3323 = vmul.f32 %v3316, %v3321
    %3325 = vrot.lane.b32.xlu0 %v3323, 48
    %v3326 = vpop.permute.xlu0 %3325
    %v3328 = vadd.f32 %v2688, %v3326
    %v3329 = vtanh.pop %v3328
    %v3330 = vsub.f32 1.0, %v3316
    %3332 = vrot.lane.b32.xlu0 %v3329, 104
    %v3333 = vpop.permute.xlu0 %3332
    %v3335 = vmul.f32 %v3330, %v3333
    %v3336 = vrot.slane %v3121, 2
    %v3338 = vmul.f32 %v3316, %v3336
    %v3339 = vadd.f32 %v3335, %v3338
    %v3341 = vrot.slane %v3230, 4
    %3342 = vrot.lane.b32.xlu0 %v3341, 104
    %v3343 = vpop.permute.xlu0 %3342
    %v3344 = vsel %vm750, %v3343, 0
    %3346 = vmatprep.subr.mxu0 0.0
    %3347 = vmatpush1.msra.mxu0 %v2512
    %3348 = vmatprep.subr.mxu0 0.0
    %3349 = vmatpush1.msra.mxu0 %v2513
    %3350 = vmatprep.subr.mxu0 0.0
    %3351 = vmatpush1.msra.mxu0 %v2514
    %3352 = vmatprep.subr.mxu0 0.0
    %3353 = vmatpush1.msra.mxu0 0.0
    %3354 = vmatprep.subr.mxu0 0.0
    %3355 = vmatpush1.msra.mxu0 0.0
    %3356 = vmatprep.subr.mxu0 0.0
    %3357 = vmatpush1.msra.mxu0 0.0
    %3358 = vmatprep.subr.mxu0 0.0
    %3359 = vmatpush1.msra.mxu0 0.0
    %3360 = vmatprep.subr.mxu0 0.0
    %3361 = vmatpush1.msra.mxu0 0.0
    %3362 = vmatprep.subr.mxu0 0.0
    %3363 = vmatpush1.msra.mxu0 0.0
    %3364 = vmatprep.subr.mxu0 0.0
    %3365 = vmatpush1.msra.mxu0 0.0
    %3366 = vmatprep.subr.mxu0 0.0
    %3367 = vmatpush1.msra.mxu0 0.0
    %3368 = vmatprep.subr.mxu0 0.0
    %3369 = vmatpush1.msra.mxu0 0.0
    %3370 = vmatprep.subr.mxu0 0.0
    %3371 = vmatpush1.msra.mxu0 0.0
    %3372 = vmatprep.subr.mxu0 0.0
    %3373 = vmatpush1.msra.mxu0 0.0
    %3374 = vmatprep.subr.mxu0 0.0
    %3375 = vmatpush1.msra.mxu0 0.0
    %3376 = vmatprep.subr.mxu0 0.0
    %3377 = vmatpush1.msra.mxu0 0.0
    %3378 = vmatprep.subr.mxu0 0.0
    %3379 = vmatpush1.msra.mxu0 0.0
    %3380 = vmatprep.subr.mxu0 0.0
    %3381 = vmatpush1.msra.mxu0 0.0
    %3382 = vmatprep.subr.mxu0 0.0
    %3383 = vmatpush1.msra.mxu0 0.0
    %3384 = vmatprep.subr.mxu0 0.0
    %3385 = vmatpush1.msra.mxu0 0.0
    %3386 = vmatprep.subr.mxu0 0.0
    %3387 = vmatpush1.msra.mxu0 0.0
    %3388 = vmatprep.subr.mxu0 0.0
    %3389 = vmatpush1.msra.mxu0 0.0
    %3390 = vmatprep.subr.mxu0 0.0
    %3391 = vmatpush1.msra.mxu0 0.0
    %3392 = vmatprep.subr.mxu0 0.0
    %3393 = vmatpush1.msra.mxu0 0.0
    %3394 = vmatprep.subr.mxu0 0.0
    %3395 = vmatpush1.msra.mxu0 0.0
    %3396 = vmatprep.subr.mxu0 0.0
    %3397 = vmatpush1.msra.mxu0 0.0
    %3398 = vmatprep.subr.mxu0 0.0
    %3399 = vmatpush1.msra.mxu0 0.0
    %3400 = vmatprep.subr.mxu0 0.0
    %3401 = vmatpush1.msra.mxu0 0.0
    %3402 = vmatprep.subr.mxu0 0.0
    %3403 = vmatpush1.msra.mxu0 0.0
    %3404 = vmatprep.subr.mxu0 0.0
    %3405 = vmatpush1.msra.mxu0 0.0
    %3406 = vmatprep.subr.mxu0 0.0
    %3407 = vmatpush1.msra.mxu0 0.0
    %3408 = vmatprep.subr.mxu0 0.0
    %3409 = vmatpush1.msra.mxu0 0.0
    %3410 = vmatprep.mubr.f32.mxu0 0.0
    %3411 = vmatmul.mubr.f32.gmra.mrb[0].mxu0 %v3344
    %v3412 = vpop.f32.mrb[0].mxu0
    %v3413 = vadd.f32 0.0, %v3412
    %v3414 = vpop.f32.mrb[0].mxu0
    %3415 = vdwg.mxu0
    %v3417 = vrot.slane %v3413, 2
    %v3419 = vadd.f32 %v2602, %v3417
    %v3420 = vxor.u32 %v3419, 2147483648
    %v3421 = vmul.f32 %v3420, 1.442695
    %v3422 = vpow.pop %v3421
    %v3423 = vadd.f32 %v3422, 1.0
    %v3424 = vrcp.pop %v3423
    %v3425 = vmul.f32 1.0, %v3424
    %v3426 = vadd.f32 %v3413, %v2774
    %v3428 = vrot.slane %v3426, 2
    %3429 = vrot.lane.b32.xlu0 %v3428, 80
    %v3430 = vpop.permute.xlu0 %3429
    %v3432 = vmul.f32 %v3425, %v3430
    %3434 = vrot.lane.b32.xlu0 %v3432, 48
    %v3435 = vpop.permute.xlu0 %3434
    %v3437 = vadd.f32 %v2602, %v3435
    %v3438 = vtanh.pop %v3437
    %v3439 = vsub.f32 1.0, %v3425
    %3441 = vrot.lane.b32.xlu0 %v3438, 104
    %v3442 = vpop.permute.xlu0 %3441
    %v3444 = vmul.f32 %v3439, %v3442
    %v3445 = vrot.slane %v3230, 6
    %v3447 = vmul.f32 %v3425, %v3445
    %v3448 = vadd.f32 %v3444, %v3447
    %v3450 = vrot.slane %v3339, 2
    %3451 = vrot.lane.b32.xlu0 %v3450, 104
    %v3452 = vpop.permute.xlu0 %3451
    %v3453 = vsel %vm750, %v3452, 0
    %3455 = vmatprep.subr.mxu0 0.0
    %3456 = vmatpush1.msra.mxu0 %v2515
    %3457 = vmatprep.subr.mxu0 0.0
    %3458 = vmatpush1.msra.mxu0 %v2516
    %3459 = vmatprep.subr.mxu0 0.0
    %3460 = vmatpush1.msra.mxu0 %v2517
    %3461 = vmatprep.subr.mxu0 0.0
    %3462 = vmatpush1.msra.mxu0 0.0
    %3463 = vmatprep.subr.mxu0 0.0
    %3464 = vmatpush1.msra.mxu0 0.0
    %3465 = vmatprep.subr.mxu0 0.0
    %3466 = vmatpush1.msra.mxu0 0.0
    %3467 = vmatprep.subr.mxu0 0.0
    %3468 = vmatpush1.msra.mxu0 0.0
    %3469 = vmatprep.subr.mxu0 0.0
    %3470 = vmatpush1.msra.mxu0 0.0
    %3471 = vmatprep.subr.mxu0 0.0
    %3472 = vmatpush1.msra.mxu0 0.0
    %3473 = vmatprep.subr.mxu0 0.0
    %3474 = vmatpush1.msra.mxu0 0.0
    %3475 = vmatprep.subr.mxu0 0.0
    %3476 = vmatpush1.msra.mxu0 0.0
    %3477 = vmatprep.subr.mxu0 0.0
    %3478 = vmatpush1.msra.mxu0 0.0
    %3479 = vmatprep.subr.mxu0 0.0
    %3480 = vmatpush1.msra.mxu0 0.0
    %3481 = vmatprep.subr.mxu0 0.0
    %3482 = vmatpush1.msra.mxu0 0.0
    %3483 = vmatprep.subr.mxu0 0.0
    %3484 = vmatpush1.msra.mxu0 0.0
    %3485 = vmatprep.subr.mxu0 0.0
    %3486 = vmatpush1.msra.mxu0 0.0
    %3487 = vmatprep.subr.mxu0 0.0
    %3488 = vmatpush1.msra.mxu0 0.0
    %3489 = vmatprep.subr.mxu0 0.0
    %3490 = vmatpush1.msra.mxu0 0.0
    %3491 = vmatprep.subr.mxu0 0.0
    %3492 = vmatpush1.msra.mxu0 0.0
    %3493 = vmatprep.subr.mxu0 0.0
    %3494 = vmatpush1.msra.mxu0 0.0
    %3495 = vmatprep.subr.mxu0 0.0
    %3496 = vmatpush1.msra.mxu0 0.0
    %3497 = vmatprep.subr.mxu0 0.0
    %3498 = vmatpush1.msra.mxu0 0.0
    %3499 = vmatprep.subr.mxu0 0.0
    %3500 = vmatpush1.msra.mxu0 0.0
    %3501 = vmatprep.subr.mxu0 0.0
    %3502 = vmatpush1.msra.mxu0 0.0
    %3503 = vmatprep.subr.mxu0 0.0
    %3504 = vmatpush1.msra.mxu0 0.0
    %3505 = vmatprep.subr.mxu0 0.0
    %3506 = vmatpush1.msra.mxu0 0.0
    %3507 = vmatprep.subr.mxu0 0.0
    %3508 = vmatpush1.msra.mxu0 0.0
    %3509 = vmatprep.subr.mxu0 0.0
    %3510 = vmatpush1.msra.mxu0 0.0
    %3511 = vmatprep.subr.mxu0 0.0
    %3512 = vmatpush1.msra.mxu0 0.0
    %3513 = vmatprep.subr.mxu0 0.0
    %3514 = vmatpush1.msra.mxu0 0.0
    %3515 = vmatprep.subr.mxu0 0.0
    %3516 = vmatpush1.msra.mxu0 0.0
    %3517 = vmatprep.subr.mxu0 0.0
    %3518 = vmatpush1.msra.mxu0 0.0
    %3519 = vmatprep.mubr.f32.mxu0 0.0
    %3520 = vmatmul.mubr.f32.gmra.mrb[0].mxu0 %v3453
    %v3521 = vpop.f32.mrb[0].mxu0
    %v3522 = vadd.f32 0.0, %v3521
    %v3523 = vpop.f32.mrb[0].mxu0
    %3524 = vdwg.mxu0
    %v3525 = vadd.f32 %v2688, %v3522
    %v3526 = vxor.u32 %v3525, 2147483648
    %v3527 = vmul.f32 %v3526, 1.442695
    %v3528 = vpow.pop %v3527
    %v3529 = vadd.f32 %v3528, 1.0
    %v3530 = vrcp.pop %v3529
    %v3531 = vmul.f32 1.0, %v3530
    %v3532 = vadd.f32 %v3522, %v2882
    %3534 = vrot.lane.b32.xlu0 %v3532, 80
    %v3535 = vpop.permute.xlu0 %3534
    %v3537 = vmul.f32 %v3531, %v3535
    %3539 = vrot.lane.b32.xlu0 %v3537, 48
    %v3540 = vpop.permute.xlu0 %3539
    %v3542 = vadd.f32 %v2688, %v3540
    %v3543 = vtanh.pop %v3542
    %v3544 = vsub.f32 1.0, %v3531
    %3546 = vrot.lane.b32.xlu0 %v3543, 104
    %v3547 = vpop.permute.xlu0 %3546
    %v3549 = vmul.f32 %v3544, %v3547
    %v3551 = vmul.f32 %v3531, %v3450
    %v3552 = vadd.f32 %v3549, %v3551
    %v3554 = vrot.slane %v3448, 6
    %3555 = vrot.lane.b32.xlu0 %v3554, 104
    %v3556 = vpop.permute.xlu0 %3555
    %v3557 = vsel %vm750, %v3556, 0
    %3559 = vmatprep.subr.mxu0 0.0
    %3560 = vmatpush1.msra.mxu0 %v2512
    %3561 = vmatprep.subr.mxu0 0.0
    %3562 = vmatpush1.msra.mxu0 %v2513
    %3563 = vmatprep.subr.mxu0 0.0
    %3564 = vmatpush1.msra.mxu0 %v2514
    %3565 = vmatprep.subr.mxu0 0.0
    %3566 = vmatpush1.msra.mxu0 0.0
    %3567 = vmatprep.subr.mxu0 0.0
    %3568 = vmatpush1.msra.mxu0 0.0
    %3569 = vmatprep.subr.mxu0 0.0
    %3570 = vmatpush1.msra.mxu0 0.0
    %3571 = vmatprep.subr.mxu0 0.0
    %3572 = vmatpush1.msra.mxu0 0.0
    %3573 = vmatprep.subr.mxu0 0.0
    %3574 = vmatpush1.msra.mxu0 0.0
    %3575 = vmatprep.subr.mxu0 0.0
    %3576 = vmatpush1.msra.mxu0 0.0
    %3577 = vmatprep.subr.mxu0 0.0
    %3578 = vmatpush1.msra.mxu0 0.0
    %3579 = vmatprep.subr.mxu0 0.0
    %3580 = vmatpush1.msra.mxu0 0.0
    %3581 = vmatprep.subr.mxu0 0.0
    %3582 = vmatpush1.msra.mxu0 0.0
    %3583 = vmatprep.subr.mxu0 0.0
    %3584 = vmatpush1.msra.mxu0 0.0
    %3585 = vmatprep.subr.mxu0 0.0
    %3586 = vmatpush1.msra.mxu0 0.0
    %3587 = vmatprep.subr.mxu0 0.0
    %3588 = vmatpush1.msra.mxu0 0.0
    %3589 = vmatprep.subr.mxu0 0.0
    %3590 = vmatpush1.msra.mxu0 0.0
    %3591 = vmatprep.subr.mxu0 0.0
    %3592 = vmatpush1.msra.mxu0 0.0
    %3593 = vmatprep.subr.mxu0 0.0
    %3594 = vmatpush1.msra.mxu0 0.0
    %3595 = vmatprep.subr.mxu0 0.0
    %3596 = vmatpush1.msra.mxu0 0.0
    %3597 = vmatprep.subr.mxu0 0.0
    %3598 = vmatpush1.msra.mxu0 0.0
    %3599 = vmatprep.subr.mxu0 0.0
    %3600 = vmatpush1.msra.mxu0 0.0
    %3601 = vmatprep.subr.mxu0 0.0
    %3602 = vmatpush1.msra.mxu0 0.0
    %3603 = vmatprep.subr.mxu0 0.0
    %3604 = vmatpush1.msra.mxu0 0.0
    %3605 = vmatprep.subr.mxu0 0.0
    %3606 = vmatpush1.msra.mxu0 0.0
    %3607 = vmatprep.subr.mxu0 0.0
    %3608 = vmatpush1.msra.mxu0 0.0
    %3609 = vmatprep.subr.mxu0 0.0
    %3610 = vmatpush1.msra.mxu0 0.0
    %3611 = vmatprep.subr.mxu0 0.0
    %3612 = vmatpush1.msra.mxu0 0.0
    %3613 = vmatprep.subr.mxu0 0.0
    %3614 = vmatpush1.msra.mxu0 0.0
    %3615 = vmatprep.subr.mxu0 0.0
    %3616 = vmatpush1.msra.mxu0 0.0
    %3617 = vmatprep.subr.mxu0 0.0
    %3618 = vmatpush1.msra.mxu0 0.0
    %3619 = vmatprep.subr.mxu0 0.0
    %3620 = vmatpush1.msra.mxu0 0.0
    %3621 = vmatprep.subr.mxu0 0.0
    %3622 = vmatpush1.msra.mxu0 0.0
    %3623 = vmatprep.mubr.f32.mxu0 0.0
    %3624 = vmatmul.mubr.f32.gmra.mrb[0].mxu0 %v3557
    %v3625 = vpop.f32.mrb[0].mxu0
    %v3626 = vadd.f32 0.0, %v3625
    %v3627 = vpop.f32.mrb[0].mxu0
    %3628 = vdwg.mxu0
    %v3629 = vadd.f32 %v2607, %v3626
    %v3630 = vxor.u32 %v3629, 2147483648
    %v3631 = vmul.f32 %v3630, 1.442695
    %v3632 = vpow.pop %v3631
    %v3633 = vadd.f32 %v3632, 1.0
    %v3634 = vrcp.pop %v3633
    %v3635 = vmul.f32 1.0, %v3634
    %v3636 = vadd.f32 %v3626, %v2774
    %3638 = vrot.lane.b32.xlu0 %v3636, 80
    %v3639 = vpop.permute.xlu0 %3638
    %v3641 = vmul.f32 %v3635, %v3639
    %3643 = vrot.lane.b32.xlu0 %v3641, 48
    %v3644 = vpop.permute.xlu0 %3643
    %v3646 = vadd.f32 %v2607, %v3644
    %v3647 = vtanh.pop %v3646
    %v3648 = vsub.f32 1.0, %v3635
    %3650 = vrot.lane.b32.xlu0 %v3647, 104
    %v3651 = vpop.permute.xlu0 %3650
    %v3653 = vmul.f32 %v3648, %v3651
    %v3655 = vmul.f32 %v3635, %v3554
    %v3656 = vadd.f32 %v3653, %v3655
    %3658 = vrot.lane.b32.xlu0 %v3552, 104
    %v3659 = vpop.permute.xlu0 %3658
    %v3660 = vsel %vm750, %v3659, 0
    %3662 = vmatprep.subr.mxu0 0.0
    %3663 = vmatpush1.msra.mxu0 %v2515
    %3664 = vmatprep.subr.mxu0 0.0
    %3665 = vmatpush1.msra.mxu0 %v2516
    %3666 = vmatprep.subr.mxu0 0.0
    %3667 = vmatpush1.msra.mxu0 %v2517
    %3668 = vmatprep.subr.mxu0 0.0
    %3669 = vmatpush1.msra.mxu0 0.0
    %3670 = vmatprep.subr.mxu0 0.0
    %3671 = vmatpush1.msra.mxu0 0.0
    %3672 = vmatprep.subr.mxu0 0.0
    %3673 = vmatpush1.msra.mxu0 0.0
    %3674 = vmatprep.subr.mxu0 0.0
    %3675 = vmatpush1.msra.mxu0 0.0
    %3676 = vmatprep.subr.mxu0 0.0
    %3677 = vmatpush1.msra.mxu0 0.0
    %3678 = vmatprep.subr.mxu0 0.0
    %3679 = vmatpush1.msra.mxu0 0.0
    %3680 = vmatprep.subr.mxu0 0.0
    %3681 = vmatpush1.msra.mxu0 0.0
    %3682 = vmatprep.subr.mxu0 0.0
    %3683 = vmatpush1.msra.mxu0 0.0
    %3684 = vmatprep.subr.mxu0 0.0
    %3685 = vmatpush1.msra.mxu0 0.0
    %3686 = vmatprep.subr.mxu0 0.0
    %3687 = vmatpush1.msra.mxu0 0.0
    %3688 = vmatprep.subr.mxu0 0.0
    %3689 = vmatpush1.msra.mxu0 0.0
    %3690 = vmatprep.subr.mxu0 0.0
    %3691 = vmatpush1.msra.mxu0 0.0
    %3692 = vmatprep.subr.mxu0 0.0
    %3693 = vmatpush1.msra.mxu0 0.0
    %3694 = vmatprep.subr.mxu0 0.0
    %3695 = vmatpush1.msra.mxu0 0.0
    %3696 = vmatprep.subr.mxu0 0.0
    %3697 = vmatpush1.msra.mxu0 0.0
    %3698 = vmatprep.subr.mxu0 0.0
    %3699 = vmatpush1.msra.mxu0 0.0
    %3700 = vmatprep.subr.mxu0 0.0
    %3701 = vmatpush1.msra.mxu0 0.0
    %3702 = vmatprep.subr.mxu0 0.0
    %3703 = vmatpush1.msra.mxu0 0.0
    %3704 = vmatprep.subr.mxu0 0.0
    %3705 = vmatpush1.msra.mxu0 0.0
    %3706 = vmatprep.subr.mxu0 0.0
    %3707 = vmatpush1.msra.mxu0 0.0
    %3708 = vmatprep.subr.mxu0 0.0
    %3709 = vmatpush1.msra.mxu0 0.0
    %3710 = vmatprep.subr.mxu0 0.0
    %3711 = vmatpush1.msra.mxu0 0.0
    %3712 = vmatprep.subr.mxu0 0.0
    %3713 = vmatpush1.msra.mxu0 0.0
    %3714 = vmatprep.subr.mxu0 0.0
    %3715 = vmatpush1.msra.mxu0 0.0
    %3716 = vmatprep.subr.mxu0 0.0
    %3717 = vmatpush1.msra.mxu0 0.0
    %3718 = vmatprep.subr.mxu0 0.0
    %3719 = vmatpush1.msra.mxu0 0.0
    %3720 = vmatprep.subr.mxu0 0.0
    %3721 = vmatpush1.msra.mxu0 0.0
    %3722 = vmatprep.subr.mxu0 0.0
    %3723 = vmatpush1.msra.mxu0 0.0
    %3724 = vmatprep.subr.mxu0 0.0
    %3725 = vmatpush1.msra.mxu0 0.0
    %3726 = vmatprep.mubr.f32.mxu0 0.0
    %3727 = vmatmul.mubr.f32.gmra.mrb[0].mxu0 %v3660
    %v3728 = vpop.f32.mrb[0].mxu0
    %v3729 = vadd.f32 0.0, %v3728
    %v3730 = vpop.f32.mrb[0].mxu0
    %3731 = vdwg.mxu0
    %v3733 = vrot.slane %v3729, 2
    %v3735 = vadd.f32 %v2683, %v3733
    %v3736 = vxor.u32 %v3735, 2147483648
    %v3737 = vmul.f32 %v3736, 1.442695
    %v3738 = vpow.pop %v3737
    %v3739 = vadd.f32 %v3738, 1.0
    %v3740 = vrcp.pop %v3739
    %v3741 = vmul.f32 1.0, %v3740
    %v3742 = vadd.f32 %v3729, %v2882
    %v3744 = vrot.slane %v3742, 2
    %3745 = vrot.lane.b32.xlu0 %v3744, 80
    %v3746 = vpop.permute.xlu0 %3745
    %v3748 = vmul.f32 %v3741, %v3746
    %3750 = vrot.lane.b32.xlu0 %v3748, 48
    %v3751 = vpop.permute.xlu0 %3750
    %v3753 = vadd.f32 %v2683, %v3751
    %v3754 = vtanh.pop %v3753
    %v3755 = vsub.f32 1.0, %v3741
    %3757 = vrot.lane.b32.xlu0 %v3754, 104
    %v3758 = vpop.permute.xlu0 %3757
    %v3760 = vmul.f32 %v3755, %v3758
    %v3761 = vrot.slane %v3552, 2
    %v3763 = vmul.f32 %v3741, %v3761
    %v3764 = vadd.f32 %v3760, %v3763
    %3766 = vrot.lane.b32.xlu0 %v3656, 104
    %v3767 = vpop.permute.xlu0 %3766
    %v3768 = vsel %vm750, %v3767, 0
    %3770 = vmatprep.subr.mxu0 0.0
    %3771 = vmatpush1.msra.mxu0 %v2512
    %3772 = vmatprep.subr.mxu0 0.0
    %3773 = vmatpush1.msra.mxu0 %v2513
    %3774 = vmatprep.subr.mxu0 0.0
    %3775 = vmatpush1.msra.mxu0 %v2514
    %3776 = vmatprep.subr.mxu0 0.0
    %3777 = vmatpush1.msra.mxu0 0.0
    %3778 = vmatprep.subr.mxu0 0.0
    %3779 = vmatpush1.msra.mxu0 0.0
    %3780 = vmatprep.subr.mxu0 0.0
    %3781 = vmatpush1.msra.mxu0 0.0
    %3782 = vmatprep.subr.mxu0 0.0
    %3783 = vmatpush1.msra.mxu0 0.0
    %3784 = vmatprep.subr.mxu0 0.0
    %3785 = vmatpush1.msra.mxu0 0.0
    %3786 = vmatprep.subr.mxu0 0.0
    %3787 = vmatpush1.msra.mxu0 0.0
    %3788 = vmatprep.subr.mxu0 0.0
    %3789 = vmatpush1.msra.mxu0 0.0
    %3790 = vmatprep.subr.mxu0 0.0
    %3791 = vmatpush1.msra.mxu0 0.0
    %3792 = vmatprep.subr.mxu0 0.0
    %3793 = vmatpush1.msra.mxu0 0.0
    %3794 = vmatprep.subr.mxu0 0.0
    %3795 = vmatpush1.msra.mxu0 0.0
    %3796 = vmatprep.subr.mxu0 0.0
    %3797 = vmatpush1.msra.mxu0 0.0
    %3798 = vmatprep.subr.mxu0 0.0
    %3799 = vmatpush1.msra.mxu0 0.0
    %3800 = vmatprep.subr.mxu0 0.0
    %3801 = vmatpush1.msra.mxu0 0.0
    %3802 = vmatprep.subr.mxu0 0.0
    %3803 = vmatpush1.msra.mxu0 0.0
    %3804 = vmatprep.subr.mxu0 0.0
    %3805 = vmatpush1.msra.mxu0 0.0
    %3806 = vmatprep.subr.mxu0 0.0
    %3807 = vmatpush1.msra.mxu0 0.0
    %3808 = vmatprep.subr.mxu0 0.0
    %3809 = vmatpush1.msra.mxu0 0.0
    %3810 = vmatprep.subr.mxu0 0.0
    %3811 = vmatpush1.msra.mxu0 0.0
    %3812 = vmatprep.subr.mxu0 0.0
    %3813 = vmatpush1.msra.mxu0 0.0
    %3814 = vmatprep.subr.mxu0 0.0
    %3815 = vmatpush1.msra.mxu0 0.0
    %3816 = vmatprep.subr.mxu0 0.0
    %3817 = vmatpush1.msra.mxu0 0.0
    %3818 = vmatprep.subr.mxu0 0.0
    %3819 = vmatpush1.msra.mxu0 0.0
    %3820 = vmatprep.subr.mxu0 0.0
    %3821 = vmatpush1.msra.mxu0 0.0
    %3822 = vmatprep.subr.mxu0 0.0
    %3823 = vmatpush1.msra.mxu0 0.0
    %3824 = vmatprep.subr.mxu0 0.0
    %3825 = vmatpush1.msra.mxu0 0.0
    %3826 = vmatprep.subr.mxu0 0.0
    %3827 = vmatpush1.msra.mxu0 0.0
    %3828 = vmatprep.subr.mxu0 0.0
    %3829 = vmatpush1.msra.mxu0 0.0
    %3830 = vmatprep.subr.mxu0 0.0
    %3831 = vmatpush1.msra.mxu0 0.0
    %3832 = vmatprep.subr.mxu0 0.0
    %3833 = vmatpush1.msra.mxu0 0.0
    %3834 = vmatprep.mubr.f32.mxu0 0.0
    %3835 = vmatmul.mubr.f32.gmra.mrb[0].mxu0 %v3768
    %v3836 = vpop.f32.mrb[0].mxu0
    %v3837 = vadd.f32 0.0, %v3836
    %v3838 = vpop.f32.mrb[0].mxu0
    %3839 = vdwg.mxu0
    %v3841 = vrot.slane %v3837, 6
    %v3843 = vadd.f32 %v2607, %v3841
    %v3844 = vxor.u32 %v3843, 2147483648
    %v3845 = vmul.f32 %v3844, 1.442695
    %v3846 = vpow.pop %v3845
    %v3847 = vadd.f32 %v3846, 1.0
    %v3848 = vrcp.pop %v3847
    %v3849 = vmul.f32 1.0, %v3848
    %v3850 = vadd.f32 %v3837, %v2774
    %v3852 = vrot.slane %v3850, 6
    %3853 = vrot.lane.b32.xlu0 %v3852, 80
    %v3854 = vpop.permute.xlu0 %3853
    %v3856 = vmul.f32 %v3849, %v3854
    %3858 = vrot.lane.b32.xlu0 %v3856, 48
    %v3859 = vpop.permute.xlu0 %3858
    %v3861 = vadd.f32 %v2607, %v3859
    %v3862 = vtanh.pop %v3861
    %v3863 = vsub.f32 1.0, %v3849
    %3865 = vrot.lane.b32.xlu0 %v3862, 104
    %v3866 = vpop.permute.xlu0 %3865
    %v3868 = vmul.f32 %v3863, %v3866
    %v3869 = vrot.slane %v3656, 6
    %v3871 = vmul.f32 %v3849, %v3869
    %v3872 = vadd.f32 %v3868, %v3871
    %v3874 = vrot.slane %v3764, 6
    %3875 = vrot.lane.b32.xlu0 %v3874, 104
    %v3876 = vpop.permute.xlu0 %3875
    %v3877 = vsel %vm750, %v3876, 0
    %3879 = vmatprep.subr.mxu0 0.0
    %3880 = vmatpush1.msra.mxu0 %v2515
    %3881 = vmatprep.subr.mxu0 0.0
    %3882 = vmatpush1.msra.mxu0 %v2516
    %3883 = vmatprep.subr.mxu0 0.0
    %3884 = vmatpush1.msra.mxu0 %v2517
    %3885 = vmatprep.subr.mxu0 0.0
    %3886 = vmatpush1.msra.mxu0 0.0
    %3887 = vmatprep.subr.mxu0 0.0
    %3888 = vmatpush1.msra.mxu0 0.0
    %3889 = vmatprep.subr.mxu0 0.0
    %3890 = vmatpush1.msra.mxu0 0.0
    %3891 = vmatprep.subr.mxu0 0.0
    %3892 = vmatpush1.msra.mxu0 0.0
    %3893 = vmatprep.subr.mxu0 0.0
    %3894 = vmatpush1.msra.mxu0 0.0
    %3895 = vmatprep.subr.mxu0 0.0
    %3896 = vmatpush1.msra.mxu0 0.0
    %3897 = vmatprep.subr.mxu0 0.0
    %3898 = vmatpush1.msra.mxu0 0.0
    %3899 = vmatprep.subr.mxu0 0.0
    %3900 = vmatpush1.msra.mxu0 0.0
    %3901 = vmatprep.subr.mxu0 0.0
    %3902 = vmatpush1.msra.mxu0 0.0
    %3903 = vmatprep.subr.mxu0 0.0
    %3904 = vmatpush1.msra.mxu0 0.0
    %3905 = vmatprep.subr.mxu0 0.0
    %3906 = vmatpush1.msra.mxu0 0.0
    %3907 = vmatprep.subr.mxu0 0.0
    %3908 = vmatpush1.msra.mxu0 0.0
    %3909 = vmatprep.subr.mxu0 0.0
    %3910 = vmatpush1.msra.mxu0 0.0
    %3911 = vmatprep.subr.mxu0 0.0
    %3912 = vmatpush1.msra.mxu0 0.0
    %3913 = vmatprep.subr.mxu0 0.0
    %3914 = vmatpush1.msra.mxu0 0.0
    %3915 = vmatprep.subr.mxu0 0.0
    %3916 = vmatpush1.msra.mxu0 0.0
    %3917 = vmatprep.subr.mxu0 0.0
    %3918 = vmatpush1.msra.mxu0 0.0
    %3919 = vmatprep.subr.mxu0 0.0
    %3920 = vmatpush1.msra.mxu0 0.0
    %3921 = vmatprep.subr.mxu0 0.0
    %3922 = vmatpush1.msra.mxu0 0.0
    %3923 = vmatprep.subr.mxu0 0.0
    %3924 = vmatpush1.msra.mxu0 0.0
    %3925 = vmatprep.subr.mxu0 0.0
    %3926 = vmatpush1.msra.mxu0 0.0
    %3927 = vmatprep.subr.mxu0 0.0
    %3928 = vmatpush1.msra.mxu0 0.0
    %3929 = vmatprep.subr.mxu0 0.0
    %3930 = vmatpush1.msra.mxu0 0.0
    %3931 = vmatprep.subr.mxu0 0.0
    %3932 = vmatpush1.msra.mxu0 0.0
    %3933 = vmatprep.subr.mxu0 0.0
    %3934 = vmatpush1.msra.mxu0 0.0
    %3935 = vmatprep.subr.mxu0 0.0
    %3936 = vmatpush1.msra.mxu0 0.0
    %3937 = vmatprep.subr.mxu0 0.0
    %3938 = vmatpush1.msra.mxu0 0.0
    %3939 = vmatprep.subr.mxu0 0.0
    %3940 = vmatpush1.msra.mxu0 0.0
    %3941 = vmatprep.subr.mxu0 0.0
    %3942 = vmatpush1.msra.mxu0 0.0
    %3943 = vmatprep.mubr.f32.mxu0 0.0
    %3944 = vmatmul.mubr.f32.gmra.mrb[0].mxu0 %v3877
    %v3945 = vpop.f32.mrb[0].mxu0
    %v3946 = vadd.f32 0.0, %v3945
    %v3947 = vpop.f32.mrb[0].mxu0
    %3948 = vdwg.mxu0
    %v3950 = vrot.slane %v3946, 4
    %v3952 = vadd.f32 %v2683, %v3950
    %v3953 = vxor.u32 %v3952, 2147483648
    %v3954 = vmul.f32 %v3953, 1.442695
    %v3955 = vpow.pop %v3954
    %v3956 = vadd.f32 %v3955, 1.0
    %v3957 = vrcp.pop %v3956
    %v3958 = vmul.f32 1.0, %v3957
    %v3959 = vadd.f32 %v3946, %v2882
    %v3961 = vrot.slane %v3959, 4
    %3962 = vrot.lane.b32.xlu0 %v3961, 80
    %v3963 = vpop.permute.xlu0 %3962
    %v3965 = vmul.f32 %v3958, %v3963
    %3967 = vrot.lane.b32.xlu0 %v3965, 48
    %v3968 = vpop.permute.xlu0 %3967
    %v3970 = vadd.f32 %v2683, %v3968
    %v3971 = vtanh.pop %v3970
    %v3972 = vsub.f32 1.0, %v3958
    %3974 = vrot.lane.b32.xlu0 %v3971, 104
    %v3975 = vpop.permute.xlu0 %3974
    %v3977 = vmul.f32 %v3972, %v3975
    %v3978 = vrot.slane %v3764, 2
    %v3980 = vmul.f32 %v3958, %v3978
    %v3981 = vadd.f32 %v3977, %v3980
    %v3983 = vrot.slane %v3872, 2
    %3984 = vrot.lane.b32.xlu0 %v3983, 104
    %v3985 = vpop.permute.xlu0 %3984
    %v3986 = vsel %vm750, %v3985, 0
    %3988 = vmatprep.subr.mxu0 0.0
    %3989 = vmatpush1.msra.mxu0 %v2512
    %3990 = vmatprep.subr.mxu0 0.0
    %3991 = vmatpush1.msra.mxu0 %v2513
    %3992 = vmatprep.subr.mxu0 0.0
    %3993 = vmatpush1.msra.mxu0 %v2514
    %3994 = vmatprep.subr.mxu0 0.0
    %3995 = vmatpush1.msra.mxu0 0.0
    %3996 = vmatprep.subr.mxu0 0.0
    %3997 = vmatpush1.msra.mxu0 0.0
    %3998 = vmatprep.subr.mxu0 0.0
    %3999 = vmatpush1.msra.mxu0 0.0
    %4000 = vmatprep.subr.mxu0 0.0
    %4001 = vmatpush1.msra.mxu0 0.0
    %4002 = vmatprep.subr.mxu0 0.0
    %4003 = vmatpush1.msra.mxu0 0.0
    %4004 = vmatprep.subr.mxu0 0.0
    %4005 = vmatpush1.msra.mxu0 0.0
    %4006 = vmatprep.subr.mxu0 0.0
    %4007 = vmatpush1.msra.mxu0 0.0
    %4008 = vmatprep.subr.mxu0 0.0
    %4009 = vmatpush1.msra.mxu0 0.0
    %4010 = vmatprep.subr.mxu0 0.0
    %4011 = vmatpush1.msra.mxu0 0.0
    %4012 = vmatprep.subr.mxu0 0.0
    %4013 = vmatpush1.msra.mxu0 0.0
    %4014 = vmatprep.subr.mxu0 0.0
    %4015 = vmatpush1.msra.mxu0 0.0
    %4016 = vmatprep.subr.mxu0 0.0
    %4017 = vmatpush1.msra.mxu0 0.0
    %4018 = vmatprep.subr.mxu0 0.0
    %4019 = vmatpush1.msra.mxu0 0.0
    %4020 = vmatprep.subr.mxu0 0.0
    %4021 = vmatpush1.msra.mxu0 0.0
    %4022 = vmatprep.subr.mxu0 0.0
    %4023 = vmatpush1.msra.mxu0 0.0
    %4024 = vmatprep.subr.mxu0 0.0
    %4025 = vmatpush1.msra.mxu0 0.0
    %4026 = vmatprep.subr.mxu0 0.0
    %4027 = vmatpush1.msra.mxu0 0.0
    %4028 = vmatprep.subr.mxu0 0.0
    %4029 = vmatpush1.msra.mxu0 0.0
    %4030 = vmatprep.subr.mxu0 0.0
    %4031 = vmatpush1.msra.mxu0 0.0
    %4032 = vmatprep.subr.mxu0 0.0
    %4033 = vmatpush1.msra.mxu0 0.0
    %4034 = vmatprep.subr.mxu0 0.0
    %4035 = vmatpush1.msra.mxu0 0.0
    %4036 = vmatprep.subr.mxu0 0.0
    %4037 = vmatpush1.msra.mxu0 0.0
    %4038 = vmatprep.subr.mxu0 0.0
    %4039 = vmatpush1.msra.mxu0 0.0
    %4040 = vmatprep.subr.mxu0 0.0
    %4041 = vmatpush1.msra.mxu0 0.0
    %4042 = vmatprep.subr.mxu0 0.0
    %4043 = vmatpush1.msra.mxu0 0.0
    %4044 = vmatprep.subr.mxu0 0.0
    %4045 = vmatpush1.msra.mxu0 0.0
    %4046 = vmatprep.subr.mxu0 0.0
    %4047 = vmatpush1.msra.mxu0 0.0
    %4048 = vmatprep.subr.mxu0 0.0
    %4049 = vmatpush1.msra.mxu0 0.0
    %4050 = vmatprep.subr.mxu0 0.0
    %4051 = vmatpush1.msra.mxu0 0.0
    %4052 = vmatprep.mubr.f32.mxu0 0.0
    %4053 = vmatmul.mubr.f32.gmra.mrb[0].mxu0 %v3986
    %v4054 = vpop.f32.mrb[0].mxu0
    %v4055 = vadd.f32 0.0, %v4054
    %v4056 = vpop.f32.mrb[0].mxu0
    %4057 = vdwg.mxu0
    %v4059 = vrot.slane %v4055, 4
    %v4061 = vadd.f32 %v2607, %v4059
    %v4062 = vxor.u32 %v4061, 2147483648
    %v4063 = vmul.f32 %v4062, 1.442695
    %v4064 = vpow.pop %v4063
    %v4065 = vadd.f32 %v4064, 1.0
    %v4066 = vrcp.pop %v4065
    %v4067 = vmul.f32 1.0, %v4066
    %v4068 = vadd.f32 %v4055, %v2774
    %v4070 = vrot.slane %v4068, 4
    %4071 = vrot.lane.b32.xlu0 %v4070, 80
    %v4072 = vpop.permute.xlu0 %4071
    %v4074 = vmul.f32 %v4067, %v4072
    %4076 = vrot.lane.b32.xlu0 %v4074, 48
    %v4077 = vpop.permute.xlu0 %4076
    %v4079 = vadd.f32 %v2607, %v4077
    %v4080 = vtanh.pop %v4079
    %v4081 = vsub.f32 1.0, %v4067
    %4083 = vrot.lane.b32.xlu0 %v4080, 104
    %v4084 = vpop.permute.xlu0 %4083
    %v4086 = vmul.f32 %v4081, %v4084
    %v4087 = vrot.slane %v3872, 6
    %v4089 = vmul.f32 %v4067, %v4087
    %v4090 = vadd.f32 %v4086, %v4089
    %v4092 = vrot.slane %v3981, 4
    %4093 = vrot.lane.b32.xlu0 %v4092, 104
    %v4094 = vpop.permute.xlu0 %4093
    %v4095 = vsel %vm750, %v4094, 0
    %4097 = vmatprep.subr.mxu0 0.0
    %4098 = vmatpush1.msra.mxu0 %v2515
    %4099 = vmatprep.subr.mxu0 0.0
    %4100 = vmatpush1.msra.mxu0 %v2516
    %4101 = vmatprep.subr.mxu0 0.0
    %4102 = vmatpush1.msra.mxu0 %v2517
    %4103 = vmatprep.subr.mxu0 0.0
    %4104 = vmatpush1.msra.mxu0 0.0
    %4105 = vmatprep.subr.mxu0 0.0
    %4106 = vmatpush1.msra.mxu0 0.0
    %4107 = vmatprep.subr.mxu0 0.0
    %4108 = vmatpush1.msra.mxu0 0.0
    %4109 = vmatprep.subr.mxu0 0.0
    %4110 = vmatpush1.msra.mxu0 0.0
    %4111 = vmatprep.subr.mxu0 0.0
    %4112 = vmatpush1.msra.mxu0 0.0
    %4113 = vmatprep.subr.mxu0 0.0
    %4114 = vmatpush1.msra.mxu0 0.0
    %4115 = vmatprep.subr.mxu0 0.0
    %4116 = vmatpush1.msra.mxu0 0.0
    %4117 = vmatprep.subr.mxu0 0.0
    %4118 = vmatpush1.msra.mxu0 0.0
    %4119 = vmatprep.subr.mxu0 0.0
    %4120 = vmatpush1.msra.mxu0 0.0
    %4121 = vmatprep.subr.mxu0 0.0
    %4122 = vmatpush1.msra.mxu0 0.0
    %4123 = vmatprep.subr.mxu0 0.0
    %4124 = vmatpush1.msra.mxu0 0.0
    %4125 = vmatprep.subr.mxu0 0.0
    %4126 = vmatpush1.msra.mxu0 0.0
    %4127 = vmatprep.subr.mxu0 0.0
    %4128 = vmatpush1.msra.mxu0 0.0
    %4129 = vmatprep.subr.mxu0 0.0
    %4130 = vmatpush1.msra.mxu0 0.0
    %4131 = vmatprep.subr.mxu0 0.0
    %4132 = vmatpush1.msra.mxu0 0.0
    %4133 = vmatprep.subr.mxu0 0.0
    %4134 = vmatpush1.msra.mxu0 0.0
    %4135 = vmatprep.subr.mxu0 0.0
    %4136 = vmatpush1.msra.mxu0 0.0
    %4137 = vmatprep.subr.mxu0 0.0
    %4138 = vmatpush1.msra.mxu0 0.0
    %4139 = vmatprep.subr.mxu0 0.0
    %4140 = vmatpush1.msra.mxu0 0.0
    %4141 = vmatprep.subr.mxu0 0.0
    %4142 = vmatpush1.msra.mxu0 0.0
    %4143 = vmatprep.subr.mxu0 0.0
    %4144 = vmatpush1.msra.mxu0 0.0
    %4145 = vmatprep.subr.mxu0 0.0
    %4146 = vmatpush1.msra.mxu0 0.0
    %4147 = vmatprep.subr.mxu0 0.0
    %4148 = vmatpush1.msra.mxu0 0.0
    %4149 = vmatprep.subr.mxu0 0.0
    %4150 = vmatpush1.msra.mxu0 0.0
    %4151 = vmatprep.subr.mxu0 0.0
    %4152 = vmatpush1.msra.mxu0 0.0
    %4153 = vmatprep.subr.mxu0 0.0
    %4154 = vmatpush1.msra.mxu0 0.0
    %4155 = vmatprep.subr.mxu0 0.0
    %4156 = vmatpush1.msra.mxu0 0.0
    %4157 = vmatprep.subr.mxu0 0.0
    %4158 = vmatpush1.msra.mxu0 0.0
    %4159 = vmatprep.subr.mxu0 0.0
    %4160 = vmatpush1.msra.mxu0 0.0
    %4161 = vmatprep.mubr.f32.mxu0 0.0
    %4162 = vmatmul.mubr.f32.gmra.mrb[0].mxu0 %v4095
    %v4163 = vpop.f32.mrb[0].mxu0
    %v4164 = vadd.f32 0.0, %v4163
    %v4165 = vpop.f32.mrb[0].mxu0
    %4166 = vdwg.mxu0
    %v4168 = vrot.slane %v4164, 6
    %v4170 = vadd.f32 %v2683, %v4168
    %v4171 = vxor.u32 %v4170, 2147483648
    %v4172 = vmul.f32 %v4171, 1.442695
    %v4173 = vpow.pop %v4172
    %v4174 = vadd.f32 %v4173, 1.0
    %v4175 = vrcp.pop %v4174
    %v4176 = vmul.f32 1.0, %v4175
    %v4177 = vadd.f32 %v4164, %v2882
    %v4179 = vrot.slane %v4177, 6
    %4180 = vrot.lane.b32.xlu0 %v4179, 80
    %v4181 = vpop.permute.xlu0 %4180
    %v4183 = vmul.f32 %v4176, %v4181
    %4185 = vrot.lane.b32.xlu0 %v4183, 48
    %v4186 = vpop.permute.xlu0 %4185
    %v4188 = vadd.f32 %v2683, %v4186
    %v4189 = vtanh.pop %v4188
    %v4190 = vsub.f32 1.0, %v4176
    %4192 = vrot.lane.b32.xlu0 %v4189, 104
    %v4193 = vpop.permute.xlu0 %4192
    %v4195 = vmul.f32 %v4190, %v4193
    %v4196 = vrot.slane %v3981, 2
    %v4198 = vmul.f32 %v4176, %v4196
    %v4199 = vadd.f32 %v4195, %v4198
    %v4201 = vrot.slane %v4090, 4
    %4202 = vrot.lane.b32.xlu0 %v4201, 104
    %v4203 = vpop.permute.xlu0 %4202
    %v4204 = vsel %vm750, %v4203, 0
    %4206 = vmatprep.subr.mxu0 0.0
    %4207 = vmatpush1.msra.mxu0 %v2512
    %4208 = vmatprep.subr.mxu0 0.0
    %4209 = vmatpush1.msra.mxu0 %v2513
    %4210 = vmatprep.subr.mxu0 0.0
    %4211 = vmatpush1.msra.mxu0 %v2514
    %4212 = vmatprep.subr.mxu0 0.0
    %4213 = vmatpush1.msra.mxu0 0.0
    %4214 = vmatprep.subr.mxu0 0.0
    %4215 = vmatpush1.msra.mxu0 0.0
    %4216 = vmatprep.subr.mxu0 0.0
    %4217 = vmatpush1.msra.mxu0 0.0
    %4218 = vmatprep.subr.mxu0 0.0
    %4219 = vmatpush1.msra.mxu0 0.0
    %4220 = vmatprep.subr.mxu0 0.0
    %4221 = vmatpush1.msra.mxu0 0.0
    %4222 = vmatprep.subr.mxu0 0.0
    %4223 = vmatpush1.msra.mxu0 0.0
    %4224 = vmatprep.subr.mxu0 0.0
    %4225 = vmatpush1.msra.mxu0 0.0
    %4226 = vmatprep.subr.mxu0 0.0
    %4227 = vmatpush1.msra.mxu0 0.0
    %4228 = vmatprep.subr.mxu0 0.0
    %4229 = vmatpush1.msra.mxu0 0.0
    %4230 = vmatprep.subr.mxu0 0.0
    %4231 = vmatpush1.msra.mxu0 0.0
    %4232 = vmatprep.subr.mxu0 0.0
    %4233 = vmatpush1.msra.mxu0 0.0
    %4234 = vmatprep.subr.mxu0 0.0
    %4235 = vmatpush1.msra.mxu0 0.0
    %4236 = vmatprep.subr.mxu0 0.0
    %4237 = vmatpush1.msra.mxu0 0.0
    %4238 = vmatprep.subr.mxu0 0.0
    %4239 = vmatpush1.msra.mxu0 0.0
    %4240 = vmatprep.subr.mxu0 0.0
    %4241 = vmatpush1.msra.mxu0 0.0
    %4242 = vmatprep.subr.mxu0 0.0
    %4243 = vmatpush1.msra.mxu0 0.0
    %4244 = vmatprep.subr.mxu0 0.0
    %4245 = vmatpush1.msra.mxu0 0.0
    %4246 = vmatprep.subr.mxu0 0.0
    %4247 = vmatpush1.msra.mxu0 0.0
    %4248 = vmatprep.subr.mxu0 0.0
    %4249 = vmatpush1.msra.mxu0 0.0
    %4250 = vmatprep.subr.mxu0 0.0
    %4251 = vmatpush1.msra.mxu0 0.0
    %4252 = vmatprep.subr.mxu0 0.0
    %4253 = vmatpush1.msra.mxu0 0.0
    %4254 = vmatprep.subr.mxu0 0.0
    %4255 = vmatpush1.msra.mxu0 0.0
    %4256 = vmatprep.subr.mxu0 0.0
    %4257 = vmatpush1.msra.mxu0 0.0
    %4258 = vmatprep.subr.mxu0 0.0
    %4259 = vmatpush1.msra.mxu0 0.0
    %4260 = vmatprep.subr.mxu0 0.0
    %4261 = vmatpush1.msra.mxu0 0.0
    %4262 = vmatprep.subr.mxu0 0.0
    %4263 = vmatpush1.msra.mxu0 0.0
    %4264 = vmatprep.subr.mxu0 0.0
    %4265 = vmatpush1.msra.mxu0 0.0
    %4266 = vmatprep.subr.mxu0 0.0
    %4267 = vmatpush1.msra.mxu0 0.0
    %4268 = vmatprep.subr.mxu0 0.0
    %4269 = vmatpush1.msra.mxu0 0.0
    %4270 = vmatprep.mubr.f32.mxu0 0.0
    %4271 = vmatmul.mubr.f32.gmra.mrb[0].mxu0 %v4204
    %v4272 = vpop.f32.mrb[0].mxu0
    %v4273 = vadd.f32 0.0, %v4272
    %v4274 = vpop.f32.mrb[0].mxu0
    %4275 = vdwg.mxu0
    %v4277 = vrot.slane %v4273, 2
    %v4279 = vadd.f32 %v2607, %v4277
    %v4280 = vxor.u32 %v4279, 2147483648
    %v4281 = vmul.f32 %v4280, 1.442695
    %v4282 = vpow.pop %v4281
    %v4283 = vadd.f32 %v4282, 1.0
    %v4284 = vrcp.pop %v4283
    %v4285 = vmul.f32 1.0, %v4284
    %v4286 = vadd.f32 %v4273, %v2774
    %v4288 = vrot.slane %v4286, 2
    %4289 = vrot.lane.b32.xlu0 %v4288, 80
    %v4290 = vpop.permute.xlu0 %4289
    %v4292 = vmul.f32 %v4285, %v4290
    %4294 = vrot.lane.b32.xlu0 %v4292, 48
    %v4295 = vpop.permute.xlu0 %4294
    %v4297 = vadd.f32 %v2607, %v4295
    %v4298 = vtanh.pop %v4297
    %v4299 = vsub.f32 1.0, %v4285
    %4301 = vrot.lane.b32.xlu0 %v4298, 104
    %v4302 = vpop.permute.xlu0 %4301
    %v4304 = vmul.f32 %v4299, %v4302
    %v4305 = vrot.slane %v4090, 6
    %v4307 = vmul.f32 %v4285, %v4305
    %v4308 = vadd.f32 %v4304, %v4307
    %v4310 = vrot.slane %v4199, 2
    %4311 = vrot.lane.b32.xlu0 %v4310, 104
    %v4312 = vpop.permute.xlu0 %4311
    %v4313 = vsel %vm750, %v4312, 0
    %4315 = vmatprep.subr.mxu0 0.0
    %4316 = vmatpush1.msra.mxu0 %v2515
    %4317 = vmatprep.subr.mxu0 0.0
    %4318 = vmatpush1.msra.mxu0 %v2516
    %4319 = vmatprep.subr.mxu0 0.0
    %4320 = vmatpush1.msra.mxu0 %v2517
    %4321 = vmatprep.subr.mxu0 0.0
    %4322 = vmatpush1.msra.mxu0 0.0
    %4323 = vmatprep.subr.mxu0 0.0
    %4324 = vmatpush1.msra.mxu0 0.0
    %4325 = vmatprep.subr.mxu0 0.0
    %4326 = vmatpush1.msra.mxu0 0.0
    %4327 = vmatprep.subr.mxu0 0.0
    %4328 = vmatpush1.msra.mxu0 0.0
    %4329 = vmatprep.subr.mxu0 0.0
    %4330 = vmatpush1.msra.mxu0 0.0
    %4331 = vmatprep.subr.mxu0 0.0
    %4332 = vmatpush1.msra.mxu0 0.0
    %4333 = vmatprep.subr.mxu0 0.0
    %4334 = vmatpush1.msra.mxu0 0.0
    %4335 = vmatprep.subr.mxu0 0.0
    %4336 = vmatpush1.msra.mxu0 0.0
    %4337 = vmatprep.subr.mxu0 0.0
    %4338 = vmatpush1.msra.mxu0 0.0
    %4339 = vmatprep.subr.mxu0 0.0
    %4340 = vmatpush1.msra.mxu0 0.0
    %4341 = vmatprep.subr.mxu0 0.0
    %4342 = vmatpush1.msra.mxu0 0.0
    %4343 = vmatprep.subr.mxu0 0.0
    %4344 = vmatpush1.msra.mxu0 0.0
    %4345 = vmatprep.subr.mxu0 0.0
    %4346 = vmatpush1.msra.mxu0 0.0
    %4347 = vmatprep.subr.mxu0 0.0
    %4348 = vmatpush1.msra.mxu0 0.0
    %4349 = vmatprep.subr.mxu0 0.0
    %4350 = vmatpush1.msra.mxu0 0.0
    %4351 = vmatprep.subr.mxu0 0.0
    %4352 = vmatpush1.msra.mxu0 0.0
    %4353 = vmatprep.subr.mxu0 0.0
    %4354 = vmatpush1.msra.mxu0 0.0
    %4355 = vmatprep.subr.mxu0 0.0
    %4356 = vmatpush1.msra.mxu0 0.0
    %4357 = vmatprep.subr.mxu0 0.0
    %4358 = vmatpush1.msra.mxu0 0.0
    %4359 = vmatprep.subr.mxu0 0.0
    %4360 = vmatpush1.msra.mxu0 0.0
    %4361 = vmatprep.subr.mxu0 0.0
    %4362 = vmatpush1.msra.mxu0 0.0
    %4363 = vmatprep.subr.mxu0 0.0
    %4364 = vmatpush1.msra.mxu0 0.0
    %4365 = vmatprep.subr.mxu0 0.0
    %4366 = vmatpush1.msra.mxu0 0.0
    %4367 = vmatprep.subr.mxu0 0.0
    %4368 = vmatpush1.msra.mxu0 0.0
    %4369 = vmatprep.subr.mxu0 0.0
    %4370 = vmatpush1.msra.mxu0 0.0
    %4371 = vmatprep.subr.mxu0 0.0
    %4372 = vmatpush1.msra.mxu0 0.0
    %4373 = vmatprep.subr.mxu0 0.0
    %4374 = vmatpush1.msra.mxu0 0.0
    %4375 = vmatprep.subr.mxu0 0.0
    %4376 = vmatpush1.msra.mxu0 0.0
    %4377 = vmatprep.subr.mxu0 0.0
    %4378 = vmatpush1.msra.mxu0 0.0
    %4379 = vmatprep.mubr.f32.mxu0 0.0
    %4380 = vmatmul.mubr.f32.gmra.mrb[0].mxu0 %v4313
    %v4381 = vpop.f32.mrb[0].mxu0
    %v4382 = vadd.f32 0.0, %v4381
    %v4383 = vpop.f32.mrb[0].mxu0
    %4384 = vdwg.mxu0
    %v4385 = vadd.f32 %v2683, %v4382
    %v4386 = vxor.u32 %v4385, 2147483648
    %v4387 = vmul.f32 %v4386, 1.442695
    %v4388 = vpow.pop %v4387
    %v4389 = vadd.f32 %v4388, 1.0
    %v4390 = vrcp.pop %v4389
    %v4391 = vmul.f32 1.0, %v4390
    %v4392 = vadd.f32 %v4382, %v2882
    %4394 = vrot.lane.b32.xlu0 %v4392, 80
    %v4395 = vpop.permute.xlu0 %4394
    %v4397 = vmul.f32 %v4391, %v4395
    %4399 = vrot.lane.b32.xlu0 %v4397, 48
    %v4400 = vpop.permute.xlu0 %4399
    %v4402 = vadd.f32 %v2683, %v4400
    %v4403 = vtanh.pop %v4402
    %v4404 = vsub.f32 1.0, %v4391
    %4406 = vrot.lane.b32.xlu0 %v4403, 104
    %v4407 = vpop.permute.xlu0 %4406
    %v4409 = vmul.f32 %v4404, %v4407
    %v4411 = vmul.f32 %v4391, %v4310
    %v4412 = vadd.f32 %v4409, %v4411
    %v4413 = vsel %vm2476, %v2795, %v3012
    %v4414 = vsel %vm366, %v4413, %v3230
    %v4415 = vsel %vm2479, %v4414, %v3448
    %v4416 = vsel %vm2476, %v3656, %v3872
    %v4417 = vsel %vm366, %v4416, %v4090
    %v4418 = vsel %vm2479, %v4417, %v4308
    %v4419 = vsel %vm2476, %v4412, %v4199
    %v4420 = vsel %vm366, %v4419, %v3981
    %v4421 = vsel %vm2479, %v4420, %v3764
    %v4422 = vsel %vm2476, %v3552, %v3339
    %v4423 = vsel %vm366, %v4422, %v3121
    %v4424 = vsel %vm2479, %v4423, %v2904
    %4427 = vrot.lane.b32.xlu0 %v4415, 104
    %v4428 = vpop.permute.xlu0 %4427
    %4429 = vrot.lane.b32.xlu0 %v4418, 104
    %v4430 = vpop.permute.xlu0 %4429
    %v4433 = vsel %vm750, %v4428, %v4421
    %v4434 = vsel %vm750, %v4430, %v4424
    %v4435 = vld [vmem:[%s17] sm:$0xff]
    %v4436 = vld [vmem:[%s17 + $0x8] sm:$0xff]
    %v4437 = vld [vmem:[%s17 + $0x10] sm:$0xff]
    %v4438 = vld [vmem:[%s17 + $0x18] sm:$0xff]
    %v4439 = vld [vmem:[%s17 + $0x20] sm:$0xff]
    %v4440 = vld [vmem:[%s17 + $0x28] sm:$0xff]
    %v4441 = vld [vmem:[%s17 + $0x30] sm:$0xff]
    %v4442 = vld [vmem:[%s17 + $0x38] sm:$0xff]
    %v4443 = vld [vmem:[%s17 + $0x40] sm:$0xff]
    %v4444 = vld [vmem:[%s17 + $0x48] sm:$0xff]
    %v4445 = vld [vmem:[%s17 + $0x50] sm:$0xff]
    %v4446 = vld [vmem:[%s17 + $0x58] sm:$0xff]
    %v4447 = vld [vmem:[%s18] sm:$0xff]
    %v4448 = vld [vmem:[%s18 + $0x8] sm:$0xff]
    %v4449 = vld [vmem:[%s18 + $0x10] sm:$0xff]
    %v4450 = vld [vmem:[%s18 + $0x18] sm:$0xff]
    %v4451 = vld [vmem:[%s18 + $0x20] sm:$0xff]
    %v4452 = vld [vmem:[%s18 + $0x28] sm:$0xff]
    %v4453 = vld [vmem:[#allocation17] sm:$0x1]
    %v4454 = vld [vmem:[#allocation17 + $0x1] sm:$0x1]
    %v4455 = vld [vmem:[#allocation19] sm:$0x1]
    %v4456 = vld [vmem:[#allocation19 + $0x1] sm:$0x1]
    %v4458 = vlaneseq
    %v4459 = vshrl.u32 %v4458, 7
    %v4460 = vsub.s32 0, %v4459
    %v4461 = vrot.slane %v4453, %v4460
    %v4464 = vsel %vm2528, %v4433, 0
    %v4467 = vsel %vm2528, %v4434, 0
    %4469 = vmatprep.subr.mxu0 0.0
    %4470 = vmatpush1.msra.mxu0 %v4435
    %4471 = vmatprep.subr.mxu0 0.0
    %4472 = vmatpush1.msra.mxu0 %v4436
    %4473 = vmatprep.subr.mxu0 0.0
    %4474 = vmatpush1.msra.mxu0 %v4437
    %4475 = vmatprep.subr.mxu0 0.0
    %4476 = vmatpush1.msra.mxu0 %v4438
    %4477 = vmatprep.subr.mxu0 0.0
    %4478 = vmatpush1.msra.mxu0 %v4439
    %4479 = vmatprep.subr.mxu0 0.0
    %4480 = vmatpush1.msra.mxu0 %v4440
    %4481 = vmatprep.subr.mxu0 0.0
    %4482 = vmatpush1.msra.mxu0 0.0
    %4483 = vmatprep.subr.mxu0 0.0
    %4484 = vmatpush1.msra.mxu0 0.0
    %4485 = vmatprep.subr.mxu0 0.0
    %4486 = vmatpush1.msra.mxu0 0.0
    %4487 = vmatprep.subr.mxu0 0.0
    %4488 = vmatpush1.msra.mxu0 0.0
    %4489 = vmatprep.subr.mxu0 0.0
    %4490 = vmatpush1.msra.mxu0 0.0
    %4491 = vmatprep.subr.mxu0 0.0
    %4492 = vmatpush1.msra.mxu0 0.0
    %4493 = vmatprep.subr.mxu0 0.0
    %4494 = vmatpush1.msra.mxu0 0.0
    %4495 = vmatprep.subr.mxu0 0.0
    %4496 = vmatpush1.msra.mxu0 0.0
    %4497 = vmatprep.subr.mxu0 0.0
    %4498 = vmatpush1.msra.mxu0 0.0
    %4499 = vmatprep.subr.mxu0 0.0
    %4500 = vmatpush1.msra.mxu0 0.0
    %4501 = vmatprep.subr.mxu0 0.0
    %4502 = vmatpush1.msra.mxu0 0.0
    %4503 = vmatprep.subr.mxu0 0.0
    %4504 = vmatpush1.msra.mxu0 0.0
    %4505 = vmatprep.subr.mxu0 0.0
    %4506 = vmatpush1.msra.mxu0 0.0
    %4507 = vmatprep.subr.mxu0 0.0
    %4508 = vmatpush1.msra.mxu0 0.0
    %4509 = vmatprep.subr.mxu0 0.0
    %4510 = vmatpush1.msra.mxu0 0.0
    %4511 = vmatprep.subr.mxu0 0.0
    %4512 = vmatpush1.msra.mxu0 0.0
    %4513 = vmatprep.subr.mxu0 0.0
    %4514 = vmatpush1.msra.mxu0 0.0
    %4515 = vmatprep.subr.mxu0 0.0
    %4516 = vmatpush1.msra.mxu0 0.0
    %4517 = vmatprep.subr.mxu0 0.0
    %4518 = vmatpush1.msra.mxu0 0.0
    %4519 = vmatprep.subr.mxu0 0.0
    %4520 = vmatpush1.msra.mxu0 0.0
    %4521 = vmatprep.subr.mxu0 0.0
    %4522 = vmatpush1.msra.mxu0 0.0
    %4523 = vmatprep.subr.mxu0 0.0
    %4524 = vmatpush1.msra.mxu0 0.0
    %4525 = vmatprep.subr.mxu0 0.0
    %4526 = vmatpush1.msra.mxu0 0.0
    %4527 = vmatprep.subr.mxu0 0.0
    %4528 = vmatpush1.msra.mxu0 0.0
    %4529 = vmatprep.subr.mxu0 0.0
    %4530 = vmatpush1.msra.mxu0 0.0
    %4531 = vmatprep.subr.mxu0 0.0
    %4532 = vmatpush1.msra.mxu0 0.0
    %4533 = vmatprep.mubr.f32.mxu0 0.0
    %4534 = vmatmul.mubr.f32.gmra.mrb[0].mxu0 %v4464
    %v4535 = vpop.f32.mrb[0].mxu0
    %v4536 = vadd.f32 %v4461, %v4535
    %v4537 = vpop.f32.mrb[0].mxu0
    %4538 = vmatprep.mubr.f32.mxu0 0.0
    %4539 = vmatmul.mubr.f32.gmra.mrb[0].mxu0 %v4467
    %v4540 = vpop.f32.mrb[0].mxu0
    %v4541 = vadd.f32 %v4461, %v4540
    %v4542 = vpop.f32.mrb[0].mxu0
    %4543 = vdwg.mxu0
    %v4545 = vlaneseq
    %v4546 = vshrl.u32 %v4545, 7
    %v4547 = vsub.s32 0, %v4546
    %v4548 = vrot.slane %v4454, %v4547
    %4550 = vmatprep.subr.mxu0 0.0
    %4551 = vmatpush1.msra.mxu0 %v4441
    %4552 = vmatprep.subr.mxu0 0.0
    %4553 = vmatpush1.msra.mxu0 %v4442
    %4554 = vmatprep.subr.mxu0 0.0
    %4555 = vmatpush1.msra.mxu0 %v4443
    %4556 = vmatprep.subr.mxu0 0.0
    %4557 = vmatpush1.msra.mxu0 %v4444
    %4558 = vmatprep.subr.mxu0 0.0
    %4559 = vmatpush1.msra.mxu0 %v4445
    %4560 = vmatprep.subr.mxu0 0.0
    %4561 = vmatpush1.msra.mxu0 %v4446
    %4562 = vmatprep.subr.mxu0 0.0
    %4563 = vmatpush1.msra.mxu0 0.0
    %4564 = vmatprep.subr.mxu0 0.0
    %4565 = vmatpush1.msra.mxu0 0.0
    %4566 = vmatprep.subr.mxu0 0.0
    %4567 = vmatpush1.msra.mxu0 0.0
    %4568 = vmatprep.subr.mxu0 0.0
    %4569 = vmatpush1.msra.mxu0 0.0
    %4570 = vmatprep.subr.mxu0 0.0
    %4571 = vmatpush1.msra.mxu0 0.0
    %4572 = vmatprep.subr.mxu0 0.0
    %4573 = vmatpush1.msra.mxu0 0.0
    %4574 = vmatprep.subr.mxu0 0.0
    %4575 = vmatpush1.msra.mxu0 0.0
    %4576 = vmatprep.subr.mxu0 0.0
    %4577 = vmatpush1.msra.mxu0 0.0
    %4578 = vmatprep.subr.mxu0 0.0
    %4579 = vmatpush1.msra.mxu0 0.0
    %4580 = vmatprep.subr.mxu0 0.0
    %4581 = vmatpush1.msra.mxu0 0.0
    %4582 = vmatprep.subr.mxu0 0.0
    %4583 = vmatpush1.msra.mxu0 0.0
    %4584 = vmatprep.subr.mxu0 0.0
    %4585 = vmatpush1.msra.mxu0 0.0
    %4586 = vmatprep.subr.mxu0 0.0
    %4587 = vmatpush1.msra.mxu0 0.0
    %4588 = vmatprep.subr.mxu0 0.0
    %4589 = vmatpush1.msra.mxu0 0.0
    %4590 = vmatprep.subr.mxu0 0.0
    %4591 = vmatpush1.msra.mxu0 0.0
    %4592 = vmatprep.subr.mxu0 0.0
    %4593 = vmatpush1.msra.mxu0 0.0
    %4594 = vmatprep.subr.mxu0 0.0
    %4595 = vmatpush1.msra.mxu0 0.0
    %4596 = vmatprep.subr.mxu0 0.0
    %4597 = vmatpush1.msra.mxu0 0.0
    %4598 = vmatprep.subr.mxu0 0.0
    %4599 = vmatpush1.msra.mxu0 0.0
    %4600 = vmatprep.subr.mxu0 0.0
    %4601 = vmatpush1.msra.mxu0 0.0
    %4602 = vmatprep.subr.mxu0 0.0
    %4603 = vmatpush1.msra.mxu0 0.0
    %4604 = vmatprep.subr.mxu0 0.0
    %4605 = vmatpush1.msra.mxu0 0.0
    %4606 = vmatprep.subr.mxu0 0.0
    %4607 = vmatpush1.msra.mxu0 0.0
    %4608 = vmatprep.subr.mxu0 0.0
    %4609 = vmatpush1.msra.mxu0 0.0
    %4610 = vmatprep.subr.mxu0 0.0
    %4611 = vmatpush1.msra.mxu0 0.0
    %4612 = vmatprep.subr.mxu0 0.0
    %4613 = vmatpush1.msra.mxu0 0.0
    %4614 = vmatprep.mubr.f32.mxu0 0.0
    %4615 = vmatmul.mubr.f32.gmra.mrb[0].mxu0 %v4464
    %v4616 = vpop.f32.mrb[0].mxu0
    %v4617 = vadd.f32 %v4548, %v4616
    %v4618 = vpop.f32.mrb[0].mxu0
    %4619 = vmatprep.mubr.f32.mxu0 0.0
    %4620 = vmatmul.mubr.f32.gmra.mrb[0].mxu0 %v4467
    %v4621 = vpop.f32.mrb[0].mxu0
    %v4622 = vadd.f32 %v4548, %v4621
    %v4623 = vpop.f32.mrb[0].mxu0
    %4624 = vdwg.mxu0
    %4625 = vmatprep.subr.mxu0 0.0
    %4626 = vmatpush1.msra.mxu0 %v4447
    %4627 = vmatprep.subr.mxu0 0.0
    %4628 = vmatpush1.msra.mxu0 %v4448
    %4629 = vmatprep.subr.mxu0 0.0
    %4630 = vmatpush1.msra.mxu0 %v4449
    %4631 = vmatprep.subr.mxu0 0.0
    %4632 = vmatpush1.msra.mxu0 0.0
    %4633 = vmatprep.subr.mxu0 0.0
    %4634 = vmatpush1.msra.mxu0 0.0
    %4635 = vmatprep.subr.mxu0 0.0
    %4636 = vmatpush1.msra.mxu0 0.0
    %4637 = vmatprep.subr.mxu0 0.0
    %4638 = vmatpush1.msra.mxu0 0.0
    %4639 = vmatprep.subr.mxu0 0.0
    %4640 = vmatpush1.msra.mxu0 0.0
    %4641 = vmatprep.subr.mxu0 0.0
    %4642 = vmatpush1.msra.mxu0 0.0
    %4643 = vmatprep.subr.mxu0 0.0
    %4644 = vmatpush1.msra.mxu0 0.0
    %4645 = vmatprep.subr.mxu0 0.0
    %4646 = vmatpush1.msra.mxu0 0.0
    %4647 = vmatprep.subr.mxu0 0.0
    %4648 = vmatpush1.msra.mxu0 0.0
    %4649 = vmatprep.subr.mxu0 0.0
    %4650 = vmatpush1.msra.mxu0 0.0
    %4651 = vmatprep.subr.mxu0 0.0
    %4652 = vmatpush1.msra.mxu0 0.0
    %4653 = vmatprep.subr.mxu0 0.0
    %4654 = vmatpush1.msra.mxu0 0.0
    %4655 = vmatprep.subr.mxu0 0.0
    %4656 = vmatpush1.msra.mxu0 0.0
    %4657 = vmatprep.subr.mxu0 0.0
    %4658 = vmatpush1.msra.mxu0 0.0
    %4659 = vmatprep.subr.mxu0 0.0
    %4660 = vmatpush1.msra.mxu0 0.0
    %4661 = vmatprep.subr.mxu0 0.0
    %4662 = vmatpush1.msra.mxu0 0.0
    %4663 = vmatprep.subr.mxu0 0.0
    %4664 = vmatpush1.msra.mxu0 0.0
    %4665 = vmatprep.subr.mxu0 0.0
    %4666 = vmatpush1.msra.mxu0 0.0
    %4667 = vmatprep.subr.mxu0 0.0
    %4668 = vmatpush1.msra.mxu0 0.0
    %4669 = vmatprep.subr.mxu0 0.0
    %4670 = vmatpush1.msra.mxu0 0.0
    %4671 = vmatprep.subr.mxu0 0.0
    %4672 = vmatpush1.msra.mxu0 0.0
    %4673 = vmatprep.subr.mxu0 0.0
    %4674 = vmatpush1.msra.mxu0 0.0
    %4675 = vmatprep.subr.mxu0 0.0
    %4676 = vmatpush1.msra.mxu0 0.0
    %4677 = vmatprep.subr.mxu0 0.0
    %4678 = vmatpush1.msra.mxu0 0.0
    %4679 = vmatprep.subr.mxu0 0.0
    %4680 = vmatpush1.msra.mxu0 0.0
    %4681 = vmatprep.subr.mxu0 0.0
    %4682 = vmatpush1.msra.mxu0 0.0
    %4683 = vmatprep.subr.mxu0 0.0
    %4684 = vmatpush1.msra.mxu0 0.0
    %4685 = vmatprep.subr.mxu0 0.0
    %4686 = vmatpush1.msra.mxu0 0.0
    %4687 = vmatprep.subr.mxu0 0.0
    %4688 = vmatpush1.msra.mxu0 0.0
    %4689 = vmatprep.mubr.f32.mxu0 0.0
    %4690 = vmatmul.mubr.f32.gmra.mrb[0].mxu0 %v752
    %v4691 = vpop.f32.mrb[0].mxu0
    %v4692 = vadd.f32 0.0, %v4691
    %v4693 = vpop.f32.mrb[0].mxu0
    %4694 = vdwg.mxu0
    %v4695 = vadd.f32 %v4536, %v4692
    %v4696 = vxor.u32 %v4695, 2147483648
    %v4697 = vmul.f32 %v4696, 1.442695
    %v4698 = vpow.pop %v4697
    %v4699 = vadd.f32 %v4698, 1.0
    %v4700 = vrcp.pop %v4699
    %v4701 = vmul.f32 1.0, %v4700
    %v4703 = vlaneseq
    %v4704 = vshrl.u32 %v4703, 7
    %v4705 = vsub.s32 0, %v4704
    %v4706 = vrot.slane %v4455, %v4705
    %4707 = vrot.lane.b32.xlu0 %v4706, 48
    %v4708 = vpop.permute.xlu0 %4707
    %v4710 = vadd.f32 %v4692, %v4708
    %4712 = vrot.lane.b32.xlu0 %v4710, 80
    %v4713 = vpop.permute.xlu0 %4712
    %v4715 = vmul.f32 %v4701, %v4713
    %4717 = vrot.lane.b32.xlu0 %v4715, 48
    %v4718 = vpop.permute.xlu0 %4717
    %v4720 = vadd.f32 %v4536, %v4718
    %v4721 = vtanh.pop %v4720
    %v4722 = vsub.f32 1.0, %v4701
    %4724 = vrot.lane.b32.xlu0 %v4721, 104
    %v4725 = vpop.permute.xlu0 %4724
    %v4727 = vmul.f32 %v4722, %v4725
    %v4728 = vmul.f32 %v4701, 0.0
    %v4729 = vadd.f32 %v4727, %v4728
    %4730 = vmatprep.subr.mxu0 0.0
    %4731 = vmatpush1.msra.mxu0 %v4450
    %4732 = vmatprep.subr.mxu0 0.0
    %4733 = vmatpush1.msra.mxu0 %v4451
    %4734 = vmatprep.subr.mxu0 0.0
    %4735 = vmatpush1.msra.mxu0 %v4452
    %4736 = vmatprep.subr.mxu0 0.0
    %4737 = vmatpush1.msra.mxu0 0.0
    %4738 = vmatprep.subr.mxu0 0.0
    %4739 = vmatpush1.msra.mxu0 0.0
    %4740 = vmatprep.subr.mxu0 0.0
    %4741 = vmatpush1.msra.mxu0 0.0
    %4742 = vmatprep.subr.mxu0 0.0
    %4743 = vmatpush1.msra.mxu0 0.0
    %4744 = vmatprep.subr.mxu0 0.0
    %4745 = vmatpush1.msra.mxu0 0.0
    %4746 = vmatprep.subr.mxu0 0.0
    %4747 = vmatpush1.msra.mxu0 0.0
    %4748 = vmatprep.subr.mxu0 0.0
    %4749 = vmatpush1.msra.mxu0 0.0
    %4750 = vmatprep.subr.mxu0 0.0
    %4751 = vmatpush1.msra.mxu0 0.0
    %4752 = vmatprep.subr.mxu0 0.0
    %4753 = vmatpush1.msra.mxu0 0.0
    %4754 = vmatprep.subr.mxu0 0.0
    %4755 = vmatpush1.msra.mxu0 0.0
    %4756 = vmatprep.subr.mxu0 0.0
    %4757 = vmatpush1.msra.mxu0 0.0
    %4758 = vmatprep.subr.mxu0 0.0
    %4759 = vmatpush1.msra.mxu0 0.0
    %4760 = vmatprep.subr.mxu0 0.0
    %4761 = vmatpush1.msra.mxu0 0.0
    %4762 = vmatprep.subr.mxu0 0.0
    %4763 = vmatpush1.msra.mxu0 0.0
    %4764 = vmatprep.subr.mxu0 0.0
    %4765 = vmatpush1.msra.mxu0 0.0
    %4766 = vmatprep.subr.mxu0 0.0
    %4767 = vmatpush1.msra.mxu0 0.0
    %4768 = vmatprep.subr.mxu0 0.0
    %4769 = vmatpush1.msra.mxu0 0.0
    %4770 = vmatprep.subr.mxu0 0.0
    %4771 = vmatpush1.msra.mxu0 0.0
    %4772 = vmatprep.subr.mxu0 0.0
    %4773 = vmatpush1.msra.mxu0 0.0
    %4774 = vmatprep.subr.mxu0 0.0
    %4775 = vmatpush1.msra.mxu0 0.0
    %4776 = vmatprep.subr.mxu0 0.0
    %4777 = vmatpush1.msra.mxu0 0.0
    %4778 = vmatprep.subr.mxu0 0.0
    %4779 = vmatpush1.msra.mxu0 0.0
    %4780 = vmatprep.subr.mxu0 0.0
    %4781 = vmatpush1.msra.mxu0 0.0
    %4782 = vmatprep.subr.mxu0 0.0
    %4783 = vmatpush1.msra.mxu0 0.0
    %4784 = vmatprep.subr.mxu0 0.0
    %4785 = vmatpush1.msra.mxu0 0.0
    %4786 = vmatprep.subr.mxu0 0.0
    %4787 = vmatpush1.msra.mxu0 0.0
    %4788 = vmatprep.subr.mxu0 0.0
    %4789 = vmatpush1.msra.mxu0 0.0
    %4790 = vmatprep.subr.mxu0 0.0
    %4791 = vmatpush1.msra.mxu0 0.0
    %4792 = vmatprep.subr.mxu0 0.0
    %4793 = vmatpush1.msra.mxu0 0.0
    %4794 = vmatprep.mubr.f32.mxu0 0.0
    %4795 = vmatmul.mubr.f32.gmra.mrb[0].mxu0 %v752
    %v4796 = vpop.f32.mrb[0].mxu0
    %v4797 = vadd.f32 0.0, %v4796
    %v4798 = vpop.f32.mrb[0].mxu0
    %4799 = vdwg.mxu0
    %v4801 = vrot.slane %v4797, 2
    %v4803 = vadd.f32 %v4622, %v4801
    %v4804 = vxor.u32 %v4803, 2147483648
    %v4805 = vmul.f32 %v4804, 1.442695
    %v4806 = vpow.pop %v4805
    %v4807 = vadd.f32 %v4806, 1.0
    %v4808 = vrcp.pop %v4807
    %v4809 = vmul.f32 1.0, %v4808
    %v4811 = vlaneseq
    %v4812 = vshrl.u32 %v4811, 7
    %v4813 = vsub.s32 0, %v4812
    %v4814 = vrot.slane %v4456, %v4813
    %4815 = vrot.lane.b32.xlu0 %v4814, 48
    %v4816 = vpop.permute.xlu0 %4815
    %v4818 = vadd.f32 %v4797, %v4816
    %v4820 = vrot.slane %v4818, 2
    %4821 = vrot.lane.b32.xlu0 %v4820, 80
    %v4822 = vpop.permute.xlu0 %4821
    %v4824 = vmul.f32 %v4809, %v4822
    %4826 = vrot.lane.b32.xlu0 %v4824, 48
    %v4827 = vpop.permute.xlu0 %4826
    %v4829 = vadd.f32 %v4622, %v4827
    %v4830 = vtanh.pop %v4829
    %v4831 = vsub.f32 1.0, %v4809
    %4833 = vrot.lane.b32.xlu0 %v4830, 104
    %v4834 = vpop.permute.xlu0 %4833
    %v4836 = vmul.f32 %v4831, %v4834
    %v4837 = vmul.f32 %v4809, 0.0
    %v4838 = vadd.f32 %v4836, %v4837
    %4840 = vrot.lane.b32.xlu0 %v4729, 104
    %v4841 = vpop.permute.xlu0 %4840
    %v4842 = vsel %vm750, %v4841, 0
    %4844 = vmatprep.subr.mxu0 0.0
    %4845 = vmatpush1.msra.mxu0 %v4447
    %4846 = vmatprep.subr.mxu0 0.0
    %4847 = vmatpush1.msra.mxu0 %v4448
    %4848 = vmatprep.subr.mxu0 0.0
    %4849 = vmatpush1.msra.mxu0 %v4449
    %4850 = vmatprep.subr.mxu0 0.0
    %4851 = vmatpush1.msra.mxu0 0.0
    %4852 = vmatprep.subr.mxu0 0.0
    %4853 = vmatpush1.msra.mxu0 0.0
    %4854 = vmatprep.subr.mxu0 0.0
    %4855 = vmatpush1.msra.mxu0 0.0
    %4856 = vmatprep.subr.mxu0 0.0
    %4857 = vmatpush1.msra.mxu0 0.0
    %4858 = vmatprep.subr.mxu0 0.0
    %4859 = vmatpush1.msra.mxu0 0.0
    %4860 = vmatprep.subr.mxu0 0.0
    %4861 = vmatpush1.msra.mxu0 0.0
    %4862 = vmatprep.subr.mxu0 0.0
    %4863 = vmatpush1.msra.mxu0 0.0
    %4864 = vmatprep.subr.mxu0 0.0
    %4865 = vmatpush1.msra.mxu0 0.0
    %4866 = vmatprep.subr.mxu0 0.0
    %4867 = vmatpush1.msra.mxu0 0.0
    %4868 = vmatprep.subr.mxu0 0.0
    %4869 = vmatpush1.msra.mxu0 0.0
    %4870 = vmatprep.subr.mxu0 0.0
    %4871 = vmatpush1.msra.mxu0 0.0
    %4872 = vmatprep.subr.mxu0 0.0
    %4873 = vmatpush1.msra.mxu0 0.0
    %4874 = vmatprep.subr.mxu0 0.0
    %4875 = vmatpush1.msra.mxu0 0.0
    %4876 = vmatprep.subr.mxu0 0.0
    %4877 = vmatpush1.msra.mxu0 0.0
    %4878 = vmatprep.subr.mxu0 0.0
    %4879 = vmatpush1.msra.mxu0 0.0
    %4880 = vmatprep.subr.mxu0 0.0
    %4881 = vmatpush1.msra.mxu0 0.0
    %4882 = vmatprep.subr.mxu0 0.0
    %4883 = vmatpush1.msra.mxu0 0.0
    %4884 = vmatprep.subr.mxu0 0.0
    %4885 = vmatpush1.msra.mxu0 0.0
    %4886 = vmatprep.subr.mxu0 0.0
    %4887 = vmatpush1.msra.mxu0 0.0
    %4888 = vmatprep.subr.mxu0 0.0
    %4889 = vmatpush1.msra.mxu0 0.0
    %4890 = vmatprep.subr.mxu0 0.0
    %4891 = vmatpush1.msra.mxu0 0.0
    %4892 = vmatprep.subr.mxu0 0.0
    %4893 = vmatpush1.msra.mxu0 0.0
    %4894 = vmatprep.subr.mxu0 0.0
    %4895 = vmatpush1.msra.mxu0 0.0
    %4896 = vmatprep.subr.mxu0 0.0
    %4897 = vmatpush1.msra.mxu0 0.0
    %4898 = vmatprep.subr.mxu0 0.0
    %4899 = vmatpush1.msra.mxu0 0.0
    %4900 = vmatprep.subr.mxu0 0.0
    %4901 = vmatpush1.msra.mxu0 0.0
    %4902 = vmatprep.subr.mxu0 0.0
    %4903 = vmatpush1.msra.mxu0 0.0
    %4904 = vmatprep.subr.mxu0 0.0
    %4905 = vmatpush1.msra.mxu0 0.0
    %4906 = vmatprep.subr.mxu0 0.0
    %4907 = vmatpush1.msra.mxu0 0.0
    %4908 = vmatprep.mubr.f32.mxu0 0.0
    %4909 = vmatmul.mubr.f32.gmra.mrb[0].mxu0 %v4842
    %v4910 = vpop.f32.mrb[0].mxu0
    %v4911 = vadd.f32 0.0, %v4910
    %v4912 = vpop.f32.mrb[0].mxu0
    %4913 = vdwg.mxu0
    %v4915 = vrot.slane %v4911, 6
    %v4917 = vadd.f32 %v4536, %v4915
    %v4918 = vxor.u32 %v4917, 2147483648
    %v4919 = vmul.f32 %v4918, 1.442695
    %v4920 = vpow.pop %v4919
    %v4921 = vadd.f32 %v4920, 1.0
    %v4922 = vrcp.pop %v4921
    %v4923 = vmul.f32 1.0, %v4922
    %v4924 = vadd.f32 %v4911, %v4708
    %v4926 = vrot.slane %v4924, 6
    %4927 = vrot.lane.b32.xlu0 %v4926, 80
    %v4928 = vpop.permute.xlu0 %4927
    %v4930 = vmul.f32 %v4923, %v4928
    %4932 = vrot.lane.b32.xlu0 %v4930, 48
    %v4933 = vpop.permute.xlu0 %4932
    %v4935 = vadd.f32 %v4536, %v4933
    %v4936 = vtanh.pop %v4935
    %v4937 = vsub.f32 1.0, %v4923
    %4939 = vrot.lane.b32.xlu0 %v4936, 104
    %v4940 = vpop.permute.xlu0 %4939
    %v4942 = vmul.f32 %v4937, %v4940
    %v4943 = vrot.slane %v4729, 6
    %v4945 = vmul.f32 %v4923, %v4943
    %v4946 = vadd.f32 %v4942, %v4945
    %v4948 = vrot.slane %v4838, 6
    %4949 = vrot.lane.b32.xlu0 %v4948, 104
    %v4950 = vpop.permute.xlu0 %4949
    %v4951 = vsel %vm750, %v4950, 0
    %4953 = vmatprep.subr.mxu0 0.0
    %4954 = vmatpush1.msra.mxu0 %v4450
    %4955 = vmatprep.subr.mxu0 0.0
    %4956 = vmatpush1.msra.mxu0 %v4451
    %4957 = vmatprep.subr.mxu0 0.0
    %4958 = vmatpush1.msra.mxu0 %v4452
    %4959 = vmatprep.subr.mxu0 0.0
    %4960 = vmatpush1.msra.mxu0 0.0
    %4961 = vmatprep.subr.mxu0 0.0
    %4962 = vmatpush1.msra.mxu0 0.0
    %4963 = vmatprep.subr.mxu0 0.0
    %4964 = vmatpush1.msra.mxu0 0.0
    %4965 = vmatprep.subr.mxu0 0.0
    %4966 = vmatpush1.msra.mxu0 0.0
    %4967 = vmatprep.subr.mxu0 0.0
    %4968 = vmatpush1.msra.mxu0 0.0
    %4969 = vmatprep.subr.mxu0 0.0
    %4970 = vmatpush1.msra.mxu0 0.0
    %4971 = vmatprep.subr.mxu0 0.0
    %4972 = vmatpush1.msra.mxu0 0.0
    %4973 = vmatprep.subr.mxu0 0.0
    %4974 = vmatpush1.msra.mxu0 0.0
    %4975 = vmatprep.subr.mxu0 0.0
    %4976 = vmatpush1.msra.mxu0 0.0
    %4977 = vmatprep.subr.mxu0 0.0
    %4978 = vmatpush1.msra.mxu0 0.0
    %4979 = vmatprep.subr.mxu0 0.0
    %4980 = vmatpush1.msra.mxu0 0.0
    %4981 = vmatprep.subr.mxu0 0.0
    %4982 = vmatpush1.msra.mxu0 0.0
    %4983 = vmatprep.subr.mxu0 0.0
    %4984 = vmatpush1.msra.mxu0 0.0
    %4985 = vmatprep.subr.mxu0 0.0
    %4986 = vmatpush1.msra.mxu0 0.0
    %4987 = vmatprep.subr.mxu0 0.0
    %4988 = vmatpush1.msra.mxu0 0.0
    %4989 = vmatprep.subr.mxu0 0.0
    %4990 = vmatpush1.msra.mxu0 0.0
    %4991 = vmatprep.subr.mxu0 0.0
    %4992 = vmatpush1.msra.mxu0 0.0
    %4993 = vmatprep.subr.mxu0 0.0
    %4994 = vmatpush1.msra.mxu0 0.0
    %4995 = vmatprep.subr.mxu0 0.0
    %4996 = vmatpush1.msra.mxu0 0.0
    %4997 = vmatprep.subr.mxu0 0.0
    %4998 = vmatpush1.msra.mxu0 0.0
    %4999 = vmatprep.subr.mxu0 0.0
    %5000 = vmatpush1.msra.mxu0 0.0
    %5001 = vmatprep.subr.mxu0 0.0
    %5002 = vmatpush1.msra.mxu0 0.0
    %5003 = vmatprep.subr.mxu0 0.0
    %5004 = vmatpush1.msra.mxu0 0.0
    %5005 = vmatprep.subr.mxu0 0.0
    %5006 = vmatpush1.msra.mxu0 0.0
    %5007 = vmatprep.subr.mxu0 0.0
    %5008 = vmatpush1.msra.mxu0 0.0
    %5009 = vmatprep.subr.mxu0 0.0
    %5010 = vmatpush1.msra.mxu0 0.0
    %5011 = vmatprep.subr.mxu0 0.0
    %5012 = vmatpush1.msra.mxu0 0.0
    %5013 = vmatprep.subr.mxu0 0.0
    %5014 = vmatpush1.msra.mxu0 0.0
    %5015 = vmatprep.subr.mxu0 0.0
    %5016 = vmatpush1.msra.mxu0 0.0
    %5017 = vmatprep.mubr.f32.mxu0 0.0
    %5018 = vmatmul.mubr.f32.gmra.mrb[0].mxu0 %v4951
    %v5019 = vpop.f32.mrb[0].mxu0
    %v5020 = vadd.f32 0.0, %v5019
    %v5021 = vpop.f32.mrb[0].mxu0
    %5022 = vdwg.mxu0
    %v5024 = vrot.slane %v5020, 4
    %v5026 = vadd.f32 %v4622, %v5024
    %v5027 = vxor.u32 %v5026, 2147483648
    %v5028 = vmul.f32 %v5027, 1.442695
    %v5029 = vpow.pop %v5028
    %v5030 = vadd.f32 %v5029, 1.0
    %v5031 = vrcp.pop %v5030
    %v5032 = vmul.f32 1.0, %v5031
    %v5033 = vadd.f32 %v5020, %v4816
    %v5035 = vrot.slane %v5033, 4
    %5036 = vrot.lane.b32.xlu0 %v5035, 80
    %v5037 = vpop.permute.xlu0 %5036
    %v5039 = vmul.f32 %v5032, %v5037
    %5041 = vrot.lane.b32.xlu0 %v5039, 48
    %v5042 = vpop.permute.xlu0 %5041
    %v5044 = vadd.f32 %v4622, %v5042
    %v5045 = vtanh.pop %v5044
    %v5046 = vsub.f32 1.0, %v5032
    %5048 = vrot.lane.b32.xlu0 %v5045, 104
    %v5049 = vpop.permute.xlu0 %5048
    %v5051 = vmul.f32 %v5046, %v5049
    %v5052 = vrot.slane %v4838, 2
    %v5054 = vmul.f32 %v5032, %v5052
    %v5055 = vadd.f32 %v5051, %v5054
    %v5057 = vrot.slane %v4946, 2
    %5058 = vrot.lane.b32.xlu0 %v5057, 104
    %v5059 = vpop.permute.xlu0 %5058
    %v5060 = vsel %vm750, %v5059, 0
    %5062 = vmatprep.subr.mxu0 0.0
    %5063 = vmatpush1.msra.mxu0 %v4447
    %5064 = vmatprep.subr.mxu0 0.0
    %5065 = vmatpush1.msra.mxu0 %v4448
    %5066 = vmatprep.subr.mxu0 0.0
    %5067 = vmatpush1.msra.mxu0 %v4449
    %5068 = vmatprep.subr.mxu0 0.0
    %5069 = vmatpush1.msra.mxu0 0.0
    %5070 = vmatprep.subr.mxu0 0.0
    %5071 = vmatpush1.msra.mxu0 0.0
    %5072 = vmatprep.subr.mxu0 0.0
    %5073 = vmatpush1.msra.mxu0 0.0
    %5074 = vmatprep.subr.mxu0 0.0
    %5075 = vmatpush1.msra.mxu0 0.0
    %5076 = vmatprep.subr.mxu0 0.0
    %5077 = vmatpush1.msra.mxu0 0.0
    %5078 = vmatprep.subr.mxu0 0.0
    %5079 = vmatpush1.msra.mxu0 0.0
    %5080 = vmatprep.subr.mxu0 0.0
    %5081 = vmatpush1.msra.mxu0 0.0
    %5082 = vmatprep.subr.mxu0 0.0
    %5083 = vmatpush1.msra.mxu0 0.0
    %5084 = vmatprep.subr.mxu0 0.0
    %5085 = vmatpush1.msra.mxu0 0.0
    %5086 = vmatprep.subr.mxu0 0.0
    %5087 = vmatpush1.msra.mxu0 0.0
    %5088 = vmatprep.subr.mxu0 0.0
    %5089 = vmatpush1.msra.mxu0 0.0
    %5090 = vmatprep.subr.mxu0 0.0
    %5091 = vmatpush1.msra.mxu0 0.0
    %5092 = vmatprep.subr.mxu0 0.0
    %5093 = vmatpush1.msra.mxu0 0.0
    %5094 = vmatprep.subr.mxu0 0.0
    %5095 = vmatpush1.msra.mxu0 0.0
    %5096 = vmatprep.subr.mxu0 0.0
    %5097 = vmatpush1.msra.mxu0 0.0
    %5098 = vmatprep.subr.mxu0 0.0
    %5099 = vmatpush1.msra.mxu0 0.0
    %5100 = vmatprep.subr.mxu0 0.0
    %5101 = vmatpush1.msra.mxu0 0.0
    %5102 = vmatprep.subr.mxu0 0.0
    %5103 = vmatpush1.msra.mxu0 0.0
    %5104 = vmatprep.subr.mxu0 0.0
    %5105 = vmatpush1.msra.mxu0 0.0
    %5106 = vmatprep.subr.mxu0 0.0
    %5107 = vmatpush1.msra.mxu0 0.0
    %5108 = vmatprep.subr.mxu0 0.0
    %5109 = vmatpush1.msra.mxu0 0.0
    %5110 = vmatprep.subr.mxu0 0.0
    %5111 = vmatpush1.msra.mxu0 0.0
    %5112 = vmatprep.subr.mxu0 0.0
    %5113 = vmatpush1.msra.mxu0 0.0
    %5114 = vmatprep.subr.mxu0 0.0
    %5115 = vmatpush1.msra.mxu0 0.0
    %5116 = vmatprep.subr.mxu0 0.0
    %5117 = vmatpush1.msra.mxu0 0.0
    %5118 = vmatprep.subr.mxu0 0.0
    %5119 = vmatpush1.msra.mxu0 0.0
    %5120 = vmatprep.subr.mxu0 0.0
    %5121 = vmatpush1.msra.mxu0 0.0
    %5122 = vmatprep.subr.mxu0 0.0
    %5123 = vmatpush1.msra.mxu0 0.0
    %5124 = vmatprep.subr.mxu0 0.0
    %5125 = vmatpush1.msra.mxu0 0.0
    %5126 = vmatprep.mubr.f32.mxu0 0.0
    %5127 = vmatmul.mubr.f32.gmra.mrb[0].mxu0 %v5060
    %v5128 = vpop.f32.mrb[0].mxu0
    %v5129 = vadd.f32 0.0, %v5128
    %v5130 = vpop.f32.mrb[0].mxu0
    %5131 = vdwg.mxu0
    %v5133 = vrot.slane %v5129, 4
    %v5135 = vadd.f32 %v4536, %v5133
    %v5136 = vxor.u32 %v5135, 2147483648
    %v5137 = vmul.f32 %v5136, 1.442695
    %v5138 = vpow.pop %v5137
    %v5139 = vadd.f32 %v5138, 1.0
    %v5140 = vrcp.pop %v5139
    %v5141 = vmul.f32 1.0, %v5140
    %v5142 = vadd.f32 %v5129, %v4708
    %v5144 = vrot.slane %v5142, 4
    %5145 = vrot.lane.b32.xlu0 %v5144, 80
    %v5146 = vpop.permute.xlu0 %5145
    %v5148 = vmul.f32 %v5141, %v5146
    %5150 = vrot.lane.b32.xlu0 %v5148, 48
    %v5151 = vpop.permute.xlu0 %5150
    %v5153 = vadd.f32 %v4536, %v5151
    %v5154 = vtanh.pop %v5153
    %v5155 = vsub.f32 1.0, %v5141
    %5157 = vrot.lane.b32.xlu0 %v5154, 104
    %v5158 = vpop.permute.xlu0 %5157
    %v5160 = vmul.f32 %v5155, %v5158
    %v5161 = vrot.slane %v4946, 6
    %v5163 = vmul.f32 %v5141, %v5161
    %v5164 = vadd.f32 %v5160, %v5163
    %v5166 = vrot.slane %v5055, 4
    %5167 = vrot.lane.b32.xlu0 %v5166, 104
    %v5168 = vpop.permute.xlu0 %5167
    %v5169 = vsel %vm750, %v5168, 0
    %5171 = vmatprep.subr.mxu0 0.0
    %5172 = vmatpush1.msra.mxu0 %v4450
    %5173 = vmatprep.subr.mxu0 0.0
    %5174 = vmatpush1.msra.mxu0 %v4451
    %5175 = vmatprep.subr.mxu0 0.0
    %5176 = vmatpush1.msra.mxu0 %v4452
    %5177 = vmatprep.subr.mxu0 0.0
    %5178 = vmatpush1.msra.mxu0 0.0
    %5179 = vmatprep.subr.mxu0 0.0
    %5180 = vmatpush1.msra.mxu0 0.0
    %5181 = vmatprep.subr.mxu0 0.0
    %5182 = vmatpush1.msra.mxu0 0.0
    %5183 = vmatprep.subr.mxu0 0.0
    %5184 = vmatpush1.msra.mxu0 0.0
    %5185 = vmatprep.subr.mxu0 0.0
    %5186 = vmatpush1.msra.mxu0 0.0
    %5187 = vmatprep.subr.mxu0 0.0
    %5188 = vmatpush1.msra.mxu0 0.0
    %5189 = vmatprep.subr.mxu0 0.0
    %5190 = vmatpush1.msra.mxu0 0.0
    %5191 = vmatprep.subr.mxu0 0.0
    %5192 = vmatpush1.msra.mxu0 0.0
    %5193 = vmatprep.subr.mxu0 0.0
    %5194 = vmatpush1.msra.mxu0 0.0
    %5195 = vmatprep.subr.mxu0 0.0
    %5196 = vmatpush1.msra.mxu0 0.0
    %5197 = vmatprep.subr.mxu0 0.0
    %5198 = vmatpush1.msra.mxu0 0.0
    %5199 = vmatprep.subr.mxu0 0.0
    %5200 = vmatpush1.msra.mxu0 0.0
    %5201 = vmatprep.subr.mxu0 0.0
    %5202 = vmatpush1.msra.mxu0 0.0
    %5203 = vmatprep.subr.mxu0 0.0
    %5204 = vmatpush1.msra.mxu0 0.0
    %5205 = vmatprep.subr.mxu0 0.0
    %5206 = vmatpush1.msra.mxu0 0.0
    %5207 = vmatprep.subr.mxu0 0.0
    %5208 = vmatpush1.msra.mxu0 0.0
    %5209 = vmatprep.subr.mxu0 0.0
    %5210 = vmatpush1.msra.mxu0 0.0
    %5211 = vmatprep.subr.mxu0 0.0
    %5212 = vmatpush1.msra.mxu0 0.0
    %5213 = vmatprep.subr.mxu0 0.0
    %5214 = vmatpush1.msra.mxu0 0.0
    %5215 = vmatprep.subr.mxu0 0.0
    %5216 = vmatpush1.msra.mxu0 0.0
    %5217 = vmatprep.subr.mxu0 0.0
    %5218 = vmatpush1.msra.mxu0 0.0
    %5219 = vmatprep.subr.mxu0 0.0
    %5220 = vmatpush1.msra.mxu0 0.0
    %5221 = vmatprep.subr.mxu0 0.0
    %5222 = vmatpush1.msra.mxu0 0.0
    %5223 = vmatprep.subr.mxu0 0.0
    %5224 = vmatpush1.msra.mxu0 0.0
    %5225 = vmatprep.subr.mxu0 0.0
    %5226 = vmatpush1.msra.mxu0 0.0
    %5227 = vmatprep.subr.mxu0 0.0
    %5228 = vmatpush1.msra.mxu0 0.0
    %5229 = vmatprep.subr.mxu0 0.0
    %5230 = vmatpush1.msra.mxu0 0.0
    %5231 = vmatprep.subr.mxu0 0.0
    %5232 = vmatpush1.msra.mxu0 0.0
    %5233 = vmatprep.subr.mxu0 0.0
    %5234 = vmatpush1.msra.mxu0 0.0
    %5235 = vmatprep.mubr.f32.mxu0 0.0
    %5236 = vmatmul.mubr.f32.gmra.mrb[0].mxu0 %v5169
    %v5237 = vpop.f32.mrb[0].mxu0
    %v5238 = vadd.f32 0.0, %v5237
    %v5239 = vpop.f32.mrb[0].mxu0
    %5240 = vdwg.mxu0
    %v5242 = vrot.slane %v5238, 6
    %v5244 = vadd.f32 %v4622, %v5242
    %v5245 = vxor.u32 %v5244, 2147483648
    %v5246 = vmul.f32 %v5245, 1.442695
    %v5247 = vpow.pop %v5246
    %v5248 = vadd.f32 %v5247, 1.0
    %v5249 = vrcp.pop %v5248
    %v5250 = vmul.f32 1.0, %v5249
    %v5251 = vadd.f32 %v5238, %v4816
    %v5253 = vrot.slane %v5251, 6
    %5254 = vrot.lane.b32.xlu0 %v5253, 80
    %v5255 = vpop.permute.xlu0 %5254
    %v5257 = vmul.f32 %v5250, %v5255
    %5259 = vrot.lane.b32.xlu0 %v5257, 48
    %v5260 = vpop.permute.xlu0 %5259
    %v5262 = vadd.f32 %v4622, %v5260
    %v5263 = vtanh.pop %v5262
    %v5264 = vsub.f32 1.0, %v5250
    %5266 = vrot.lane.b32.xlu0 %v5263, 104
    %v5267 = vpop.permute.xlu0 %5266
    %v5269 = vmul.f32 %v5264, %v5267
    %v5270 = vrot.slane %v5055, 2
    %v5272 = vmul.f32 %v5250, %v5270
    %v5273 = vadd.f32 %v5269, %v5272
    %v5275 = vrot.slane %v5164, 4
    %5276 = vrot.lane.b32.xlu0 %v5275, 104
    %v5277 = vpop.permute.xlu0 %5276
    %v5278 = vsel %vm750, %v5277, 0
    %5280 = vmatprep.subr.mxu0 0.0
    %5281 = vmatpush1.msra.mxu0 %v4447
    %5282 = vmatprep.subr.mxu0 0.0
    %5283 = vmatpush1.msra.mxu0 %v4448
    %5284 = vmatprep.subr.mxu0 0.0
    %5285 = vmatpush1.msra.mxu0 %v4449
    %5286 = vmatprep.subr.mxu0 0.0
    %5287 = vmatpush1.msra.mxu0 0.0
    %5288 = vmatprep.subr.mxu0 0.0
    %5289 = vmatpush1.msra.mxu0 0.0
    %5290 = vmatprep.subr.mxu0 0.0
    %5291 = vmatpush1.msra.mxu0 0.0
    %5292 = vmatprep.subr.mxu0 0.0
    %5293 = vmatpush1.msra.mxu0 0.0
    %5294 = vmatprep.subr.mxu0 0.0
    %5295 = vmatpush1.msra.mxu0 0.0
    %5296 = vmatprep.subr.mxu0 0.0
    %5297 = vmatpush1.msra.mxu0 0.0
    %5298 = vmatprep.subr.mxu0 0.0
    %5299 = vmatpush1.msra.mxu0 0.0
    %5300 = vmatprep.subr.mxu0 0.0
    %5301 = vmatpush1.msra.mxu0 0.0
    %5302 = vmatprep.subr.mxu0 0.0
    %5303 = vmatpush1.msra.mxu0 0.0
    %5304 = vmatprep.subr.mxu0 0.0
    %5305 = vmatpush1.msra.mxu0 0.0
    %5306 = vmatprep.subr.mxu0 0.0
    %5307 = vmatpush1.msra.mxu0 0.0
    %5308 = vmatprep.subr.mxu0 0.0
    %5309 = vmatpush1.msra.mxu0 0.0
    %5310 = vmatprep.subr.mxu0 0.0
    %5311 = vmatpush1.msra.mxu0 0.0
    %5312 = vmatprep.subr.mxu0 0.0
    %5313 = vmatpush1.msra.mxu0 0.0
    %5314 = vmatprep.subr.mxu0 0.0
    %5315 = vmatpush1.msra.mxu0 0.0
    %5316 = vmatprep.subr.mxu0 0.0
    %5317 = vmatpush1.msra.mxu0 0.0
    %5318 = vmatprep.subr.mxu0 0.0
    %5319 = vmatpush1.msra.mxu0 0.0
    %5320 = vmatprep.subr.mxu0 0.0
    %5321 = vmatpush1.msra.mxu0 0.0
    %5322 = vmatprep.subr.mxu0 0.0
    %5323 = vmatpush1.msra.mxu0 0.0
    %5324 = vmatprep.subr.mxu0 0.0
    %5325 = vmatpush1.msra.mxu0 0.0
    %5326 = vmatprep.subr.mxu0 0.0
    %5327 = vmatpush1.msra.mxu0 0.0
    %5328 = vmatprep.subr.mxu0 0.0
    %5329 = vmatpush1.msra.mxu0 0.0
    %5330 = vmatprep.subr.mxu0 0.0
    %5331 = vmatpush1.msra.mxu0 0.0
    %5332 = vmatprep.subr.mxu0 0.0
    %5333 = vmatpush1.msra.mxu0 0.0
    %5334 = vmatprep.subr.mxu0 0.0
    %5335 = vmatpush1.msra.mxu0 0.0
    %5336 = vmatprep.subr.mxu0 0.0
    %5337 = vmatpush1.msra.mxu0 0.0
    %5338 = vmatprep.subr.mxu0 0.0
    %5339 = vmatpush1.msra.mxu0 0.0
    %5340 = vmatprep.subr.mxu0 0.0
    %5341 = vmatpush1.msra.mxu0 0.0
    %5342 = vmatprep.subr.mxu0 0.0
    %5343 = vmatpush1.msra.mxu0 0.0
    %5344 = vmatprep.mubr.f32.mxu0 0.0
    %5345 = vmatmul.mubr.f32.gmra.mrb[0].mxu0 %v5278
    %v5346 = vpop.f32.mrb[0].mxu0
    %v5347 = vadd.f32 0.0, %v5346
    %v5348 = vpop.f32.mrb[0].mxu0
    %5349 = vdwg.mxu0
    %v5351 = vrot.slane %v5347, 2
    %v5353 = vadd.f32 %v4536, %v5351
    %v5354 = vxor.u32 %v5353, 2147483648
    %v5355 = vmul.f32 %v5354, 1.442695
    %v5356 = vpow.pop %v5355
    %v5357 = vadd.f32 %v5356, 1.0
    %v5358 = vrcp.pop %v5357
    %v5359 = vmul.f32 1.0, %v5358
    %v5360 = vadd.f32 %v5347, %v4708
    %v5362 = vrot.slane %v5360, 2
    %5363 = vrot.lane.b32.xlu0 %v5362, 80
    %v5364 = vpop.permute.xlu0 %5363
    %v5366 = vmul.f32 %v5359, %v5364
    %5368 = vrot.lane.b32.xlu0 %v5366, 48
    %v5369 = vpop.permute.xlu0 %5368
    %v5371 = vadd.f32 %v4536, %v5369
    %v5372 = vtanh.pop %v5371
    %v5373 = vsub.f32 1.0, %v5359
    %5375 = vrot.lane.b32.xlu0 %v5372, 104
    %v5376 = vpop.permute.xlu0 %5375
    %v5378 = vmul.f32 %v5373, %v5376
    %v5379 = vrot.slane %v5164, 6
    %v5381 = vmul.f32 %v5359, %v5379
    %v5382 = vadd.f32 %v5378, %v5381
    %v5384 = vrot.slane %v5273, 2
    %5385 = vrot.lane.b32.xlu0 %v5384, 104
    %v5386 = vpop.permute.xlu0 %5385
    %v5387 = vsel %vm750, %v5386, 0
    %5389 = vmatprep.subr.mxu0 0.0
    %5390 = vmatpush1.msra.mxu0 %v4450
    %5391 = vmatprep.subr.mxu0 0.0
    %5392 = vmatpush1.msra.mxu0 %v4451
    %5393 = vmatprep.subr.mxu0 0.0
    %5394 = vmatpush1.msra.mxu0 %v4452
    %5395 = vmatprep.subr.mxu0 0.0
    %5396 = vmatpush1.msra.mxu0 0.0
    %5397 = vmatprep.subr.mxu0 0.0
    %5398 = vmatpush1.msra.mxu0 0.0
    %5399 = vmatprep.subr.mxu0 0.0
    %5400 = vmatpush1.msra.mxu0 0.0
    %5401 = vmatprep.subr.mxu0 0.0
    %5402 = vmatpush1.msra.mxu0 0.0
    %5403 = vmatprep.subr.mxu0 0.0
    %5404 = vmatpush1.msra.mxu0 0.0
    %5405 = vmatprep.subr.mxu0 0.0
    %5406 = vmatpush1.msra.mxu0 0.0
    %5407 = vmatprep.subr.mxu0 0.0
    %5408 = vmatpush1.msra.mxu0 0.0
    %5409 = vmatprep.subr.mxu0 0.0
    %5410 = vmatpush1.msra.mxu0 0.0
    %5411 = vmatprep.subr.mxu0 0.0
    %5412 = vmatpush1.msra.mxu0 0.0
    %5413 = vmatprep.subr.mxu0 0.0
    %5414 = vmatpush1.msra.mxu0 0.0
    %5415 = vmatprep.subr.mxu0 0.0
    %5416 = vmatpush1.msra.mxu0 0.0
    %5417 = vmatprep.subr.mxu0 0.0
    %5418 = vmatpush1.msra.mxu0 0.0
    %5419 = vmatprep.subr.mxu0 0.0
    %5420 = vmatpush1.msra.mxu0 0.0
    %5421 = vmatprep.subr.mxu0 0.0
    %5422 = vmatpush1.msra.mxu0 0.0
    %5423 = vmatprep.subr.mxu0 0.0
    %5424 = vmatpush1.msra.mxu0 0.0
    %5425 = vmatprep.subr.mxu0 0.0
    %5426 = vmatpush1.msra.mxu0 0.0
    %5427 = vmatprep.subr.mxu0 0.0
    %5428 = vmatpush1.msra.mxu0 0.0
    %5429 = vmatprep.subr.mxu0 0.0
    %5430 = vmatpush1.msra.mxu0 0.0
    %5431 = vmatprep.subr.mxu0 0.0
    %5432 = vmatpush1.msra.mxu0 0.0
    %5433 = vmatprep.subr.mxu0 0.0
    %5434 = vmatpush1.msra.mxu0 0.0
    %5435 = vmatprep.subr.mxu0 0.0
    %5436 = vmatpush1.msra.mxu0 0.0
    %5437 = vmatprep.subr.mxu0 0.0
    %5438 = vmatpush1.msra.mxu0 0.0
    %5439 = vmatprep.subr.mxu0 0.0
    %5440 = vmatpush1.msra.mxu0 0.0
    %5441 = vmatprep.subr.mxu0 0.0
    %5442 = vmatpush1.msra.mxu0 0.0
    %5443 = vmatprep.subr.mxu0 0.0
    %5444 = vmatpush1.msra.mxu0 0.0
    %5445 = vmatprep.subr.mxu0 0.0
    %5446 = vmatpush1.msra.mxu0 0.0
    %5447 = vmatprep.subr.mxu0 0.0
    %5448 = vmatpush1.msra.mxu0 0.0
    %5449 = vmatprep.subr.mxu0 0.0
    %5450 = vmatpush1.msra.mxu0 0.0
    %5451 = vmatprep.subr.mxu0 0.0
    %5452 = vmatpush1.msra.mxu0 0.0
    %5453 = vmatprep.mubr.f32.mxu0 0.0
    %5454 = vmatmul.mubr.f32.gmra.mrb[0].mxu0 %v5387
    %v5455 = vpop.f32.mrb[0].mxu0
    %v5456 = vadd.f32 0.0, %v5455
    %v5457 = vpop.f32.mrb[0].mxu0
    %5458 = vdwg.mxu0
    %v5459 = vadd.f32 %v4622, %v5456
    %v5460 = vxor.u32 %v5459, 2147483648
    %v5461 = vmul.f32 %v5460, 1.442695
    %v5462 = vpow.pop %v5461
    %v5463 = vadd.f32 %v5462, 1.0
    %v5464 = vrcp.pop %v5463
    %v5465 = vmul.f32 1.0, %v5464
    %v5466 = vadd.f32 %v5456, %v4816
    %5468 = vrot.lane.b32.xlu0 %v5466, 80
    %v5469 = vpop.permute.xlu0 %5468
    %v5471 = vmul.f32 %v5465, %v5469
    %5473 = vrot.lane.b32.xlu0 %v5471, 48
    %v5474 = vpop.permute.xlu0 %5473
    %v5476 = vadd.f32 %v4622, %v5474
    %v5477 = vtanh.pop %v5476
    %v5478 = vsub.f32 1.0, %v5465
    %5480 = vrot.lane.b32.xlu0 %v5477, 104
    %v5481 = vpop.permute.xlu0 %5480
    %v5483 = vmul.f32 %v5478, %v5481
    %v5485 = vmul.f32 %v5465, %v5384
    %v5486 = vadd.f32 %v5483, %v5485
    %v5488 = vrot.slane %v5382, 6
    %5489 = vrot.lane.b32.xlu0 %v5488, 104
    %v5490 = vpop.permute.xlu0 %5489
    %v5491 = vsel %vm750, %v5490, 0
    %5493 = vmatprep.subr.mxu0 0.0
    %5494 = vmatpush1.msra.mxu0 %v4447
    %5495 = vmatprep.subr.mxu0 0.0
    %5496 = vmatpush1.msra.mxu0 %v4448
    %5497 = vmatprep.subr.mxu0 0.0
    %5498 = vmatpush1.msra.mxu0 %v4449
    %5499 = vmatprep.subr.mxu0 0.0
    %5500 = vmatpush1.msra.mxu0 0.0
    %5501 = vmatprep.subr.mxu0 0.0
    %5502 = vmatpush1.msra.mxu0 0.0
    %5503 = vmatprep.subr.mxu0 0.0
    %5504 = vmatpush1.msra.mxu0 0.0
    %5505 = vmatprep.subr.mxu0 0.0
    %5506 = vmatpush1.msra.mxu0 0.0
    %5507 = vmatprep.subr.mxu0 0.0
    %5508 = vmatpush1.msra.mxu0 0.0
    %5509 = vmatprep.subr.mxu0 0.0
    %5510 = vmatpush1.msra.mxu0 0.0
    %5511 = vmatprep.subr.mxu0 0.0
    %5512 = vmatpush1.msra.mxu0 0.0
    %5513 = vmatprep.subr.mxu0 0.0
    %5514 = vmatpush1.msra.mxu0 0.0
    %5515 = vmatprep.subr.mxu0 0.0
    %5516 = vmatpush1.msra.mxu0 0.0
    %5517 = vmatprep.subr.mxu0 0.0
    %5518 = vmatpush1.msra.mxu0 0.0
    %5519 = vmatprep.subr.mxu0 0.0
    %5520 = vmatpush1.msra.mxu0 0.0
    %5521 = vmatprep.subr.mxu0 0.0
    %5522 = vmatpush1.msra.mxu0 0.0
    %5523 = vmatprep.subr.mxu0 0.0
    %5524 = vmatpush1.msra.mxu0 0.0
    %5525 = vmatprep.subr.mxu0 0.0
    %5526 = vmatpush1.msra.mxu0 0.0
    %5527 = vmatprep.subr.mxu0 0.0
    %5528 = vmatpush1.msra.mxu0 0.0
    %5529 = vmatprep.subr.mxu0 0.0
    %5530 = vmatpush1.msra.mxu0 0.0
    %5531 = vmatprep.subr.mxu0 0.0
    %5532 = vmatpush1.msra.mxu0 0.0
    %5533 = vmatprep.subr.mxu0 0.0
    %5534 = vmatpush1.msra.mxu0 0.0
    %5535 = vmatprep.subr.mxu0 0.0
    %5536 = vmatpush1.msra.mxu0 0.0
    %5537 = vmatprep.subr.mxu0 0.0
    %5538 = vmatpush1.msra.mxu0 0.0
    %5539 = vmatprep.subr.mxu0 0.0
    %5540 = vmatpush1.msra.mxu0 0.0
    %5541 = vmatprep.subr.mxu0 0.0
    %5542 = vmatpush1.msra.mxu0 0.0
    %5543 = vmatprep.subr.mxu0 0.0
    %5544 = vmatpush1.msra.mxu0 0.0
    %5545 = vmatprep.subr.mxu0 0.0
    %5546 = vmatpush1.msra.mxu0 0.0
    %5547 = vmatprep.subr.mxu0 0.0
    %5548 = vmatpush1.msra.mxu0 0.0
    %5549 = vmatprep.subr.mxu0 0.0
    %5550 = vmatpush1.msra.mxu0 0.0
    %5551 = vmatprep.subr.mxu0 0.0
    %5552 = vmatpush1.msra.mxu0 0.0
    %5553 = vmatprep.subr.mxu0 0.0
    %5554 = vmatpush1.msra.mxu0 0.0
    %5555 = vmatprep.subr.mxu0 0.0
    %5556 = vmatpush1.msra.mxu0 0.0
    %5557 = vmatprep.mubr.f32.mxu0 0.0
    %5558 = vmatmul.mubr.f32.gmra.mrb[0].mxu0 %v5491
    %v5559 = vpop.f32.mrb[0].mxu0
    %v5560 = vadd.f32 0.0, %v5559
    %v5561 = vpop.f32.mrb[0].mxu0
    %5562 = vdwg.mxu0
    %v5563 = vadd.f32 %v4541, %v5560
    %v5564 = vxor.u32 %v5563, 2147483648
    %v5565 = vmul.f32 %v5564, 1.442695
    %v5566 = vpow.pop %v5565
    %v5567 = vadd.f32 %v5566, 1.0
    %v5568 = vrcp.pop %v5567
    %v5569 = vmul.f32 1.0, %v5568
    %v5570 = vadd.f32 %v5560, %v4708
    %5572 = vrot.lane.b32.xlu0 %v5570, 80
    %v5573 = vpop.permute.xlu0 %5572
    %v5575 = vmul.f32 %v5569, %v5573
    %5577 = vrot.lane.b32.xlu0 %v5575, 48
    %v5578 = vpop.permute.xlu0 %5577
    %v5580 = vadd.f32 %v4541, %v5578
    %v5581 = vtanh.pop %v5580
    %v5582 = vsub.f32 1.0, %v5569
    %5584 = vrot.lane.b32.xlu0 %v5581, 104
    %v5585 = vpop.permute.xlu0 %5584
    %v5587 = vmul.f32 %v5582, %v5585
    %v5589 = vmul.f32 %v5569, %v5488
    %v5590 = vadd.f32 %v5587, %v5589
    %5592 = vrot.lane.b32.xlu0 %v5486, 104
    %v5593 = vpop.permute.xlu0 %5592
    %v5594 = vsel %vm750, %v5593, 0
    %5596 = vmatprep.subr.mxu0 0.0
    %5597 = vmatpush1.msra.mxu0 %v4450
    %5598 = vmatprep.subr.mxu0 0.0
    %5599 = vmatpush1.msra.mxu0 %v4451
    %5600 = vmatprep.subr.mxu0 0.0
    %5601 = vmatpush1.msra.mxu0 %v4452
    %5602 = vmatprep.subr.mxu0 0.0
    %5603 = vmatpush1.msra.mxu0 0.0
    %5604 = vmatprep.subr.mxu0 0.0
    %5605 = vmatpush1.msra.mxu0 0.0
    %5606 = vmatprep.subr.mxu0 0.0
    %5607 = vmatpush1.msra.mxu0 0.0
    %5608 = vmatprep.subr.mxu0 0.0
    %5609 = vmatpush1.msra.mxu0 0.0
    %5610 = vmatprep.subr.mxu0 0.0
    %5611 = vmatpush1.msra.mxu0 0.0
    %5612 = vmatprep.subr.mxu0 0.0
    %5613 = vmatpush1.msra.mxu0 0.0
    %5614 = vmatprep.subr.mxu0 0.0
    %5615 = vmatpush1.msra.mxu0 0.0
    %5616 = vmatprep.subr.mxu0 0.0
    %5617 = vmatpush1.msra.mxu0 0.0
    %5618 = vmatprep.subr.mxu0 0.0
    %5619 = vmatpush1.msra.mxu0 0.0
    %5620 = vmatprep.subr.mxu0 0.0
    %5621 = vmatpush1.msra.mxu0 0.0
    %5622 = vmatprep.subr.mxu0 0.0
    %5623 = vmatpush1.msra.mxu0 0.0
    %5624 = vmatprep.subr.mxu0 0.0
    %5625 = vmatpush1.msra.mxu0 0.0
    %5626 = vmatprep.subr.mxu0 0.0
    %5627 = vmatpush1.msra.mxu0 0.0
    %5628 = vmatprep.subr.mxu0 0.0
    %5629 = vmatpush1.msra.mxu0 0.0
    %5630 = vmatprep.subr.mxu0 0.0
    %5631 = vmatpush1.msra.mxu0 0.0
    %5632 = vmatprep.subr.mxu0 0.0
    %5633 = vmatpush1.msra.mxu0 0.0
    %5634 = vmatprep.subr.mxu0 0.0
    %5635 = vmatpush1.msra.mxu0 0.0
    %5636 = vmatprep.subr.mxu0 0.0
    %5637 = vmatpush1.msra.mxu0 0.0
    %5638 = vmatprep.subr.mxu0 0.0
    %5639 = vmatpush1.msra.mxu0 0.0
    %5640 = vmatprep.subr.mxu0 0.0
    %5641 = vmatpush1.msra.mxu0 0.0
    %5642 = vmatprep.subr.mxu0 0.0
    %5643 = vmatpush1.msra.mxu0 0.0
    %5644 = vmatprep.subr.mxu0 0.0
    %5645 = vmatpush1.msra.mxu0 0.0
    %5646 = vmatprep.subr.mxu0 0.0
    %5647 = vmatpush1.msra.mxu0 0.0
    %5648 = vmatprep.subr.mxu0 0.0
    %5649 = vmatpush1.msra.mxu0 0.0
    %5650 = vmatprep.subr.mxu0 0.0
    %5651 = vmatpush1.msra.mxu0 0.0
    %5652 = vmatprep.subr.mxu0 0.0
    %5653 = vmatpush1.msra.mxu0 0.0
    %5654 = vmatprep.subr.mxu0 0.0
    %5655 = vmatpush1.msra.mxu0 0.0
    %5656 = vmatprep.subr.mxu0 0.0
    %5657 = vmatpush1.msra.mxu0 0.0
    %5658 = vmatprep.subr.mxu0 0.0
    %5659 = vmatpush1.msra.mxu0 0.0
    %5660 = vmatprep.mubr.f32.mxu0 0.0
    %5661 = vmatmul.mubr.f32.gmra.mrb[0].mxu0 %v5594
    %v5662 = vpop.f32.mrb[0].mxu0
    %v5663 = vadd.f32 0.0, %v5662
    %v5664 = vpop.f32.mrb[0].mxu0
    %5665 = vdwg.mxu0
    %v5667 = vrot.slane %v5663, 2
    %v5669 = vadd.f32 %v4617, %v5667
    %v5670 = vxor.u32 %v5669, 2147483648
    %v5671 = vmul.f32 %v5670, 1.442695
    %v5672 = vpow.pop %v5671
    %v5673 = vadd.f32 %v5672, 1.0
    %v5674 = vrcp.pop %v5673
    %v5675 = vmul.f32 1.0, %v5674
    %v5676 = vadd.f32 %v5663, %v4816
    %v5678 = vrot.slane %v5676, 2
    %5679 = vrot.lane.b32.xlu0 %v5678, 80
    %v5680 = vpop.permute.xlu0 %5679
    %v5682 = vmul.f32 %v5675, %v5680
    %5684 = vrot.lane.b32.xlu0 %v5682, 48
    %v5685 = vpop.permute.xlu0 %5684
    %v5687 = vadd.f32 %v4617, %v5685
    %v5688 = vtanh.pop %v5687
    %v5689 = vsub.f32 1.0, %v5675
    %5691 = vrot.lane.b32.xlu0 %v5688, 104
    %v5692 = vpop.permute.xlu0 %5691
    %v5694 = vmul.f32 %v5689, %v5692
    %v5695 = vrot.slane %v5486, 2
    %v5697 = vmul.f32 %v5675, %v5695
    %v5698 = vadd.f32 %v5694, %v5697
    %5700 = vrot.lane.b32.xlu0 %v5590, 104
    %v5701 = vpop.permute.xlu0 %5700
    %v5702 = vsel %vm750, %v5701, 0
    %5704 = vmatprep.subr.mxu0 0.0
    %5705 = vmatpush1.msra.mxu0 %v4447
    %5706 = vmatprep.subr.mxu0 0.0
    %5707 = vmatpush1.msra.mxu0 %v4448
    %5708 = vmatprep.subr.mxu0 0.0
    %5709 = vmatpush1.msra.mxu0 %v4449
    %5710 = vmatprep.subr.mxu0 0.0
    %5711 = vmatpush1.msra.mxu0 0.0
    %5712 = vmatprep.subr.mxu0 0.0
    %5713 = vmatpush1.msra.mxu0 0.0
    %5714 = vmatprep.subr.mxu0 0.0
    %5715 = vmatpush1.msra.mxu0 0.0
    %5716 = vmatprep.subr.mxu0 0.0
    %5717 = vmatpush1.msra.mxu0 0.0
    %5718 = vmatprep.subr.mxu0 0.0
    %5719 = vmatpush1.msra.mxu0 0.0
    %5720 = vmatprep.subr.mxu0 0.0
    %5721 = vmatpush1.msra.mxu0 0.0
    %5722 = vmatprep.subr.mxu0 0.0
    %5723 = vmatpush1.msra.mxu0 0.0
    %5724 = vmatprep.subr.mxu0 0.0
    %5725 = vmatpush1.msra.mxu0 0.0
    %5726 = vmatprep.subr.mxu0 0.0
    %5727 = vmatpush1.msra.mxu0 0.0
    %5728 = vmatprep.subr.mxu0 0.0
    %5729 = vmatpush1.msra.mxu0 0.0
    %5730 = vmatprep.subr.mxu0 0.0
    %5731 = vmatpush1.msra.mxu0 0.0
    %5732 = vmatprep.subr.mxu0 0.0
    %5733 = vmatpush1.msra.mxu0 0.0
    %5734 = vmatprep.subr.mxu0 0.0
    %5735 = vmatpush1.msra.mxu0 0.0
    %5736 = vmatprep.subr.mxu0 0.0
    %5737 = vmatpush1.msra.mxu0 0.0
    %5738 = vmatprep.subr.mxu0 0.0
    %5739 = vmatpush1.msra.mxu0 0.0
    %5740 = vmatprep.subr.mxu0 0.0
    %5741 = vmatpush1.msra.mxu0 0.0
    %5742 = vmatprep.subr.mxu0 0.0
    %5743 = vmatpush1.msra.mxu0 0.0
    %5744 = vmatprep.subr.mxu0 0.0
    %5745 = vmatpush1.msra.mxu0 0.0
    %5746 = vmatprep.subr.mxu0 0.0
    %5747 = vmatpush1.msra.mxu0 0.0
    %5748 = vmatprep.subr.mxu0 0.0
    %5749 = vmatpush1.msra.mxu0 0.0
    %5750 = vmatprep.subr.mxu0 0.0
    %5751 = vmatpush1.msra.mxu0 0.0
    %5752 = vmatprep.subr.mxu0 0.0
    %5753 = vmatpush1.msra.mxu0 0.0
    %5754 = vmatprep.subr.mxu0 0.0
    %5755 = vmatpush1.msra.mxu0 0.0
    %5756 = vmatprep.subr.mxu0 0.0
    %5757 = vmatpush1.msra.mxu0 0.0
    %5758 = vmatprep.subr.mxu0 0.0
    %5759 = vmatpush1.msra.mxu0 0.0
    %5760 = vmatprep.subr.mxu0 0.0
    %5761 = vmatpush1.msra.mxu0 0.0
    %5762 = vmatprep.subr.mxu0 0.0
    %5763 = vmatpush1.msra.mxu0 0.0
    %5764 = vmatprep.subr.mxu0 0.0
    %5765 = vmatpush1.msra.mxu0 0.0
    %5766 = vmatprep.subr.mxu0 0.0
    %5767 = vmatpush1.msra.mxu0 0.0
    %5768 = vmatprep.mubr.f32.mxu0 0.0
    %5769 = vmatmul.mubr.f32.gmra.mrb[0].mxu0 %v5702
    %v5770 = vpop.f32.mrb[0].mxu0
    %v5771 = vadd.f32 0.0, %v5770
    %v5772 = vpop.f32.mrb[0].mxu0
    %5773 = vdwg.mxu0
    %v5775 = vrot.slane %v5771, 6
    %v5777 = vadd.f32 %v4541, %v5775
    %v5778 = vxor.u32 %v5777, 2147483648
    %v5779 = vmul.f32 %v5778, 1.442695
    %v5780 = vpow.pop %v5779
    %v5781 = vadd.f32 %v5780, 1.0
    %v5782 = vrcp.pop %v5781
    %v5783 = vmul.f32 1.0, %v5782
    %v5784 = vadd.f32 %v5771, %v4708
    %v5786 = vrot.slane %v5784, 6
    %5787 = vrot.lane.b32.xlu0 %v5786, 80
    %v5788 = vpop.permute.xlu0 %5787
    %v5790 = vmul.f32 %v5783, %v5788
    %5792 = vrot.lane.b32.xlu0 %v5790, 48
    %v5793 = vpop.permute.xlu0 %5792
    %v5795 = vadd.f32 %v4541, %v5793
    %v5796 = vtanh.pop %v5795
    %v5797 = vsub.f32 1.0, %v5783
    %5799 = vrot.lane.b32.xlu0 %v5796, 104
    %v5800 = vpop.permute.xlu0 %5799
    %v5802 = vmul.f32 %v5797, %v5800
    %v5803 = vrot.slane %v5590, 6
    %v5805 = vmul.f32 %v5783, %v5803
    %v5806 = vadd.f32 %v5802, %v5805
    %v5808 = vrot.slane %v5698, 6
    %5809 = vrot.lane.b32.xlu0 %v5808, 104
    %v5810 = vpop.permute.xlu0 %5809
    %v5811 = vsel %vm750, %v5810, 0
    %5813 = vmatprep.subr.mxu0 0.0
    %5814 = vmatpush1.msra.mxu0 %v4450
    %5815 = vmatprep.subr.mxu0 0.0
    %5816 = vmatpush1.msra.mxu0 %v4451
    %5817 = vmatprep.subr.mxu0 0.0
    %5818 = vmatpush1.msra.mxu0 %v4452
    %5819 = vmatprep.subr.mxu0 0.0
    %5820 = vmatpush1.msra.mxu0 0.0
    %5821 = vmatprep.subr.mxu0 0.0
    %5822 = vmatpush1.msra.mxu0 0.0
    %5823 = vmatprep.subr.mxu0 0.0
    %5824 = vmatpush1.msra.mxu0 0.0
    %5825 = vmatprep.subr.mxu0 0.0
    %5826 = vmatpush1.msra.mxu0 0.0
    %5827 = vmatprep.subr.mxu0 0.0
    %5828 = vmatpush1.msra.mxu0 0.0
    %5829 = vmatprep.subr.mxu0 0.0
    %5830 = vmatpush1.msra.mxu0 0.0
    %5831 = vmatprep.subr.mxu0 0.0
    %5832 = vmatpush1.msra.mxu0 0.0
    %5833 = vmatprep.subr.mxu0 0.0
    %5834 = vmatpush1.msra.mxu0 0.0
    %5835 = vmatprep.subr.mxu0 0.0
    %5836 = vmatpush1.msra.mxu0 0.0
    %5837 = vmatprep.subr.mxu0 0.0
    %5838 = vmatpush1.msra.mxu0 0.0
    %5839 = vmatprep.subr.mxu0 0.0
    %5840 = vmatpush1.msra.mxu0 0.0
    %5841 = vmatprep.subr.mxu0 0.0
    %5842 = vmatpush1.msra.mxu0 0.0
    %5843 = vmatprep.subr.mxu0 0.0
    %5844 = vmatpush1.msra.mxu0 0.0
    %5845 = vmatprep.subr.mxu0 0.0
    %5846 = vmatpush1.msra.mxu0 0.0
    %5847 = vmatprep.subr.mxu0 0.0
    %5848 = vmatpush1.msra.mxu0 0.0
    %5849 = vmatprep.subr.mxu0 0.0
    %5850 = vmatpush1.msra.mxu0 0.0
    %5851 = vmatprep.subr.mxu0 0.0
    %5852 = vmatpush1.msra.mxu0 0.0
    %5853 = vmatprep.subr.mxu0 0.0
    %5854 = vmatpush1.msra.mxu0 0.0
    %5855 = vmatprep.subr.mxu0 0.0
    %5856 = vmatpush1.msra.mxu0 0.0
    %5857 = vmatprep.subr.mxu0 0.0
    %5858 = vmatpush1.msra.mxu0 0.0
    %5859 = vmatprep.subr.mxu0 0.0
    %5860 = vmatpush1.msra.mxu0 0.0
    %5861 = vmatprep.subr.mxu0 0.0
    %5862 = vmatpush1.msra.mxu0 0.0
    %5863 = vmatprep.subr.mxu0 0.0
    %5864 = vmatpush1.msra.mxu0 0.0
    %5865 = vmatprep.subr.mxu0 0.0
    %5866 = vmatpush1.msra.mxu0 0.0
    %5867 = vmatprep.subr.mxu0 0.0
    %5868 = vmatpush1.msra.mxu0 0.0
    %5869 = vmatprep.subr.mxu0 0.0
    %5870 = vmatpush1.msra.mxu0 0.0
    %5871 = vmatprep.subr.mxu0 0.0
    %5872 = vmatpush1.msra.mxu0 0.0
    %5873 = vmatprep.subr.mxu0 0.0
    %5874 = vmatpush1.msra.mxu0 0.0
    %5875 = vmatprep.subr.mxu0 0.0
    %5876 = vmatpush1.msra.mxu0 0.0
    %5877 = vmatprep.mubr.f32.mxu0 0.0
    %5878 = vmatmul.mubr.f32.gmra.mrb[0].mxu0 %v5811
    %v5879 = vpop.f32.mrb[0].mxu0
    %v5880 = vadd.f32 0.0, %v5879
    %v5881 = vpop.f32.mrb[0].mxu0
    %5882 = vdwg.mxu0
    %v5884 = vrot.slane %v5880, 4
    %v5886 = vadd.f32 %v4617, %v5884
    %v5887 = vxor.u32 %v5886, 2147483648
    %v5888 = vmul.f32 %v5887, 1.442695
    %v5889 = vpow.pop %v5888
    %v5890 = vadd.f32 %v5889, 1.0
    %v5891 = vrcp.pop %v5890
    %v5892 = vmul.f32 1.0, %v5891
    %v5893 = vadd.f32 %v5880, %v4816
    %v5895 = vrot.slane %v5893, 4
    %5896 = vrot.lane.b32.xlu0 %v5895, 80
    %v5897 = vpop.permute.xlu0 %5896
    %v5899 = vmul.f32 %v5892, %v5897
    %5901 = vrot.lane.b32.xlu0 %v5899, 48
    %v5902 = vpop.permute.xlu0 %5901
    %v5904 = vadd.f32 %v4617, %v5902
    %v5905 = vtanh.pop %v5904
    %v5906 = vsub.f32 1.0, %v5892
    %5908 = vrot.lane.b32.xlu0 %v5905, 104
    %v5909 = vpop.permute.xlu0 %5908
    %v5911 = vmul.f32 %v5906, %v5909
    %v5912 = vrot.slane %v5698, 2
    %v5914 = vmul.f32 %v5892, %v5912
    %v5915 = vadd.f32 %v5911, %v5914
    %v5917 = vrot.slane %v5806, 2
    %5918 = vrot.lane.b32.xlu0 %v5917, 104
    %v5919 = vpop.permute.xlu0 %5918
    %v5920 = vsel %vm750, %v5919, 0
    %5922 = vmatprep.subr.mxu0 0.0
    %5923 = vmatpush1.msra.mxu0 %v4447
    %5924 = vmatprep.subr.mxu0 0.0
    %5925 = vmatpush1.msra.mxu0 %v4448
    %5926 = vmatprep.subr.mxu0 0.0
    %5927 = vmatpush1.msra.mxu0 %v4449
    %5928 = vmatprep.subr.mxu0 0.0
    %5929 = vmatpush1.msra.mxu0 0.0
    %5930 = vmatprep.subr.mxu0 0.0
    %5931 = vmatpush1.msra.mxu0 0.0
    %5932 = vmatprep.subr.mxu0 0.0
    %5933 = vmatpush1.msra.mxu0 0.0
    %5934 = vmatprep.subr.mxu0 0.0
    %5935 = vmatpush1.msra.mxu0 0.0
    %5936 = vmatprep.subr.mxu0 0.0
    %5937 = vmatpush1.msra.mxu0 0.0
    %5938 = vmatprep.subr.mxu0 0.0
    %5939 = vmatpush1.msra.mxu0 0.0
    %5940 = vmatprep.subr.mxu0 0.0
    %5941 = vmatpush1.msra.mxu0 0.0
    %5942 = vmatprep.subr.mxu0 0.0
    %5943 = vmatpush1.msra.mxu0 0.0
    %5944 = vmatprep.subr.mxu0 0.0
    %5945 = vmatpush1.msra.mxu0 0.0
    %5946 = vmatprep.subr.mxu0 0.0
    %5947 = vmatpush1.msra.mxu0 0.0
    %5948 = vmatprep.subr.mxu0 0.0
    %5949 = vmatpush1.msra.mxu0 0.0
    %5950 = vmatprep.subr.mxu0 0.0
    %5951 = vmatpush1.msra.mxu0 0.0
    %5952 = vmatprep.subr.mxu0 0.0
    %5953 = vmatpush1.msra.mxu0 0.0
    %5954 = vmatprep.subr.mxu0 0.0
    %5955 = vmatpush1.msra.mxu0 0.0
    %5956 = vmatprep.subr.mxu0 0.0
    %5957 = vmatpush1.msra.mxu0 0.0
    %5958 = vmatprep.subr.mxu0 0.0
    %5959 = vmatpush1.msra.mxu0 0.0
    %5960 = vmatprep.subr.mxu0 0.0
    %5961 = vmatpush1.msra.mxu0 0.0
    %5962 = vmatprep.subr.mxu0 0.0
    %5963 = vmatpush1.msra.mxu0 0.0
    %5964 = vmatprep.subr.mxu0 0.0
    %5965 = vmatpush1.msra.mxu0 0.0
    %5966 = vmatprep.subr.mxu0 0.0
    %5967 = vmatpush1.msra.mxu0 0.0
    %5968 = vmatprep.subr.mxu0 0.0
    %5969 = vmatpush1.msra.mxu0 0.0
    %5970 = vmatprep.subr.mxu0 0.0
    %5971 = vmatpush1.msra.mxu0 0.0
    %5972 = vmatprep.subr.mxu0 0.0
    %5973 = vmatpush1.msra.mxu0 0.0
    %5974 = vmatprep.subr.mxu0 0.0
    %5975 = vmatpush1.msra.mxu0 0.0
    %5976 = vmatprep.subr.mxu0 0.0
    %5977 = vmatpush1.msra.mxu0 0.0
    %5978 = vmatprep.subr.mxu0 0.0
    %5979 = vmatpush1.msra.mxu0 0.0
    %5980 = vmatprep.subr.mxu0 0.0
    %5981 = vmatpush1.msra.mxu0 0.0
    %5982 = vmatprep.subr.mxu0 0.0
    %5983 = vmatpush1.msra.mxu0 0.0
    %5984 = vmatprep.subr.mxu0 0.0
    %5985 = vmatpush1.msra.mxu0 0.0
    %5986 = vmatprep.mubr.f32.mxu0 0.0
    %5987 = vmatmul.mubr.f32.gmra.mrb[0].mxu0 %v5920
    %v5988 = vpop.f32.mrb[0].mxu0
    %v5989 = vadd.f32 0.0, %v5988
    %v5990 = vpop.f32.mrb[0].mxu0
    %5991 = vdwg.mxu0
    %v5993 = vrot.slane %v5989, 4
    %v5995 = vadd.f32 %v4541, %v5993
    %v5996 = vxor.u32 %v5995, 2147483648
    %v5997 = vmul.f32 %v5996, 1.442695
    %v5998 = vpow.pop %v5997
    %v5999 = vadd.f32 %v5998, 1.0
    %v6000 = vrcp.pop %v5999
    %v6001 = vmul.f32 1.0, %v6000
    %v6002 = vadd.f32 %v5989, %v4708
    %v6004 = vrot.slane %v6002, 4
    %6005 = vrot.lane.b32.xlu0 %v6004, 80
    %v6006 = vpop.permute.xlu0 %6005
    %v6008 = vmul.f32 %v6001, %v6006
    %6010 = vrot.lane.b32.xlu0 %v6008, 48
    %v6011 = vpop.permute.xlu0 %6010
    %v6013 = vadd.f32 %v4541, %v6011
    %v6014 = vtanh.pop %v6013
    %v6015 = vsub.f32 1.0, %v6001
    %6017 = vrot.lane.b32.xlu0 %v6014, 104
    %v6018 = vpop.permute.xlu0 %6017
    %v6020 = vmul.f32 %v6015, %v6018
    %v6021 = vrot.slane %v5806, 6
    %v6023 = vmul.f32 %v6001, %v6021
    %v6024 = vadd.f32 %v6020, %v6023
    %v6026 = vrot.slane %v5915, 4
    %6027 = vrot.lane.b32.xlu0 %v6026, 104
    %v6028 = vpop.permute.xlu0 %6027
    %v6029 = vsel %vm750, %v6028, 0
    %6031 = vmatprep.subr.mxu0 0.0
    %6032 = vmatpush1.msra.mxu0 %v4450
    %6033 = vmatprep.subr.mxu0 0.0
    %6034 = vmatpush1.msra.mxu0 %v4451
    %6035 = vmatprep.subr.mxu0 0.0
    %6036 = vmatpush1.msra.mxu0 %v4452
    %6037 = vmatprep.subr.mxu0 0.0
    %6038 = vmatpush1.msra.mxu0 0.0
    %6039 = vmatprep.subr.mxu0 0.0
    %6040 = vmatpush1.msra.mxu0 0.0
    %6041 = vmatprep.subr.mxu0 0.0
    %6042 = vmatpush1.msra.mxu0 0.0
    %6043 = vmatprep.subr.mxu0 0.0
    %6044 = vmatpush1.msra.mxu0 0.0
    %6045 = vmatprep.subr.mxu0 0.0
    %6046 = vmatpush1.msra.mxu0 0.0
    %6047 = vmatprep.subr.mxu0 0.0
    %6048 = vmatpush1.msra.mxu0 0.0
    %6049 = vmatprep.subr.mxu0 0.0
    %6050 = vmatpush1.msra.mxu0 0.0
    %6051 = vmatprep.subr.mxu0 0.0
    %6052 = vmatpush1.msra.mxu0 0.0
    %6053 = vmatprep.subr.mxu0 0.0
    %6054 = vmatpush1.msra.mxu0 0.0
    %6055 = vmatprep.subr.mxu0 0.0
    %6056 = vmatpush1.msra.mxu0 0.0
    %6057 = vmatprep.subr.mxu0 0.0
    %6058 = vmatpush1.msra.mxu0 0.0
    %6059 = vmatprep.subr.mxu0 0.0
    %6060 = vmatpush1.msra.mxu0 0.0
    %6061 = vmatprep.subr.mxu0 0.0
    %6062 = vmatpush1.msra.mxu0 0.0
    %6063 = vmatprep.subr.mxu0 0.0
    %6064 = vmatpush1.msra.mxu0 0.0
    %6065 = vmatprep.subr.mxu0 0.0
    %6066 = vmatpush1.msra.mxu0 0.0
    %6067 = vmatprep.subr.mxu0 0.0
    %6068 = vmatpush1.msra.mxu0 0.0
    %6069 = vmatprep.subr.mxu0 0.0
    %6070 = vmatpush1.msra.mxu0 0.0
    %6071 = vmatprep.subr.mxu0 0.0
    %6072 = vmatpush1.msra.mxu0 0.0
    %6073 = vmatprep.subr.mxu0 0.0
    %6074 = vmatpush1.msra.mxu0 0.0
    %6075 = vmatprep.subr.mxu0 0.0
    %6076 = vmatpush1.msra.mxu0 0.0
    %6077 = vmatprep.subr.mxu0 0.0
    %6078 = vmatpush1.msra.mxu0 0.0
    %6079 = vmatprep.subr.mxu0 0.0
    %6080 = vmatpush1.msra.mxu0 0.0
    %6081 = vmatprep.subr.mxu0 0.0
    %6082 = vmatpush1.msra.mxu0 0.0
    %6083 = vmatprep.subr.mxu0 0.0
    %6084 = vmatpush1.msra.mxu0 0.0
    %6085 = vmatprep.subr.mxu0 0.0
    %6086 = vmatpush1.msra.mxu0 0.0
    %6087 = vmatprep.subr.mxu0 0.0
    %6088 = vmatpush1.msra.mxu0 0.0
    %6089 = vmatprep.subr.mxu0 0.0
    %6090 = vmatpush1.msra.mxu0 0.0
    %6091 = vmatprep.subr.mxu0 0.0
    %6092 = vmatpush1.msra.mxu0 0.0
    %6093 = vmatprep.subr.mxu0 0.0
    %6094 = vmatpush1.msra.mxu0 0.0
    %6095 = vmatprep.mubr.f32.mxu0 0.0
    %6096 = vmatmul.mubr.f32.gmra.mrb[0].mxu0 %v6029
    %v6097 = vpop.f32.mrb[0].mxu0
    %v6098 = vadd.f32 0.0, %v6097
    %v6099 = vpop.f32.mrb[0].mxu0
    %6100 = vdwg.mxu0
    %v6102 = vrot.slane %v6098, 6
    %v6104 = vadd.f32 %v4617, %v6102
    %v6105 = vxor.u32 %v6104, 2147483648
    %v6106 = vmul.f32 %v6105, 1.442695
    %v6107 = vpow.pop %v6106
    %v6108 = vadd.f32 %v6107, 1.0
    %v6109 = vrcp.pop %v6108
    %v6110 = vmul.f32 1.0, %v6109
    %v6111 = vadd.f32 %v6098, %v4816
    %v6113 = vrot.slane %v6111, 6
    %6114 = vrot.lane.b32.xlu0 %v6113, 80
    %v6115 = vpop.permute.xlu0 %6114
    %v6117 = vmul.f32 %v6110, %v6115
    %6119 = vrot.lane.b32.xlu0 %v6117, 48
    %v6120 = vpop.permute.xlu0 %6119
    %v6122 = vadd.f32 %v4617, %v6120
    %v6123 = vtanh.pop %v6122
    %v6124 = vsub.f32 1.0, %v6110
    %6126 = vrot.lane.b32.xlu0 %v6123, 104
    %v6127 = vpop.permute.xlu0 %6126
    %v6129 = vmul.f32 %v6124, %v6127
    %v6130 = vrot.slane %v5915, 2
    %v6132 = vmul.f32 %v6110, %v6130
    %v6133 = vadd.f32 %v6129, %v6132
    %v6135 = vrot.slane %v6024, 4
    %6136 = vrot.lane.b32.xlu0 %v6135, 104
    %v6137 = vpop.permute.xlu0 %6136
    %v6138 = vsel %vm750, %v6137, 0
    %6140 = vmatprep.subr.mxu0 0.0
    %6141 = vmatpush1.msra.mxu0 %v4447
    %6142 = vmatprep.subr.mxu0 0.0
    %6143 = vmatpush1.msra.mxu0 %v4448
    %6144 = vmatprep.subr.mxu0 0.0
    %6145 = vmatpush1.msra.mxu0 %v4449
    %6146 = vmatprep.subr.mxu0 0.0
    %6147 = vmatpush1.msra.mxu0 0.0
    %6148 = vmatprep.subr.mxu0 0.0
    %6149 = vmatpush1.msra.mxu0 0.0
    %6150 = vmatprep.subr.mxu0 0.0
    %6151 = vmatpush1.msra.mxu0 0.0
    %6152 = vmatprep.subr.mxu0 0.0
    %6153 = vmatpush1.msra.mxu0 0.0
    %6154 = vmatprep.subr.mxu0 0.0
    %6155 = vmatpush1.msra.mxu0 0.0
    %6156 = vmatprep.subr.mxu0 0.0
    %6157 = vmatpush1.msra.mxu0 0.0
    %6158 = vmatprep.subr.mxu0 0.0
    %6159 = vmatpush1.msra.mxu0 0.0
    %6160 = vmatprep.subr.mxu0 0.0
    %6161 = vmatpush1.msra.mxu0 0.0
    %6162 = vmatprep.subr.mxu0 0.0
    %6163 = vmatpush1.msra.mxu0 0.0
    %6164 = vmatprep.subr.mxu0 0.0
    %6165 = vmatpush1.msra.mxu0 0.0
    %6166 = vmatprep.subr.mxu0 0.0
    %6167 = vmatpush1.msra.mxu0 0.0
    %6168 = vmatprep.subr.mxu0 0.0
    %6169 = vmatpush1.msra.mxu0 0.0
    %6170 = vmatprep.subr.mxu0 0.0
    %6171 = vmatpush1.msra.mxu0 0.0
    %6172 = vmatprep.subr.mxu0 0.0
    %6173 = vmatpush1.msra.mxu0 0.0
    %6174 = vmatprep.subr.mxu0 0.0
    %6175 = vmatpush1.msra.mxu0 0.0
    %6176 = vmatprep.subr.mxu0 0.0
    %6177 = vmatpush1.msra.mxu0 0.0
    %6178 = vmatprep.subr.mxu0 0.0
    %6179 = vmatpush1.msra.mxu0 0.0
    %6180 = vmatprep.subr.mxu0 0.0
    %6181 = vmatpush1.msra.mxu0 0.0
    %6182 = vmatprep.subr.mxu0 0.0
    %6183 = vmatpush1.msra.mxu0 0.0
    %6184 = vmatprep.subr.mxu0 0.0
    %6185 = vmatpush1.msra.mxu0 0.0
    %6186 = vmatprep.subr.mxu0 0.0
    %6187 = vmatpush1.msra.mxu0 0.0
    %6188 = vmatprep.subr.mxu0 0.0
    %6189 = vmatpush1.msra.mxu0 0.0
    %6190 = vmatprep.subr.mxu0 0.0
    %6191 = vmatpush1.msra.mxu0 0.0
    %6192 = vmatprep.subr.mxu0 0.0
    %6193 = vmatpush1.msra.mxu0 0.0
    %6194 = vmatprep.subr.mxu0 0.0
    %6195 = vmatpush1.msra.mxu0 0.0
    %6196 = vmatprep.subr.mxu0 0.0
    %6197 = vmatpush1.msra.mxu0 0.0
    %6198 = vmatprep.subr.mxu0 0.0
    %6199 = vmatpush1.msra.mxu0 0.0
    %6200 = vmatprep.subr.mxu0 0.0
    %6201 = vmatpush1.msra.mxu0 0.0
    %6202 = vmatprep.subr.mxu0 0.0
    %6203 = vmatpush1.msra.mxu0 0.0
    %6204 = vmatprep.mubr.f32.mxu0 0.0
    %6205 = vmatmul.mubr.f32.gmra.mrb[0].mxu0 %v6138
    %v6206 = vpop.f32.mrb[0].mxu0
    %v6207 = vadd.f32 0.0, %v6206
    %v6208 = vpop.f32.mrb[0].mxu0
    %6209 = vdwg.mxu0
    %v6211 = vrot.slane %v6207, 2
    %v6213 = vadd.f32 %v4541, %v6211
    %v6214 = vxor.u32 %v6213, 2147483648
    %v6215 = vmul.f32 %v6214, 1.442695
    %v6216 = vpow.pop %v6215
    %v6217 = vadd.f32 %v6216, 1.0
    %v6218 = vrcp.pop %v6217
    %v6219 = vmul.f32 1.0, %v6218
    %v6220 = vadd.f32 %v6207, %v4708
    %v6222 = vrot.slane %v6220, 2
    %6223 = vrot.lane.b32.xlu0 %v6222, 80
    %v6224 = vpop.permute.xlu0 %6223
    %v6226 = vmul.f32 %v6219, %v6224
    %6228 = vrot.lane.b32.xlu0 %v6226, 48
    %v6229 = vpop.permute.xlu0 %6228
    %v6231 = vadd.f32 %v4541, %v6229
    %v6232 = vtanh.pop %v6231
    %v6233 = vsub.f32 1.0, %v6219
    %6235 = vrot.lane.b32.xlu0 %v6232, 104
    %v6236 = vpop.permute.xlu0 %6235
    %v6238 = vmul.f32 %v6233, %v6236
    %v6239 = vrot.slane %v6024, 6
    %v6241 = vmul.f32 %v6219, %v6239
    %v6242 = vadd.f32 %v6238, %v6241
    %v6244 = vrot.slane %v6133, 2
    %6245 = vrot.lane.b32.xlu0 %v6244, 104
    %v6246 = vpop.permute.xlu0 %6245
    %v6247 = vsel %vm750, %v6246, 0
    %6249 = vmatprep.subr.mxu0 0.0
    %6250 = vmatpush1.msra.mxu0 %v4450
    %6251 = vmatprep.subr.mxu0 0.0
    %6252 = vmatpush1.msra.mxu0 %v4451
    %6253 = vmatprep.subr.mxu0 0.0
    %6254 = vmatpush1.msra.mxu0 %v4452
    %6255 = vmatprep.subr.mxu0 0.0
    %6256 = vmatpush1.msra.mxu0 0.0
    %6257 = vmatprep.subr.mxu0 0.0
    %6258 = vmatpush1.msra.mxu0 0.0
    %6259 = vmatprep.subr.mxu0 0.0
    %6260 = vmatpush1.msra.mxu0 0.0
    %6261 = vmatprep.subr.mxu0 0.0
    %6262 = vmatpush1.msra.mxu0 0.0
    %6263 = vmatprep.subr.mxu0 0.0
    %6264 = vmatpush1.msra.mxu0 0.0
    %6265 = vmatprep.subr.mxu0 0.0
    %6266 = vmatpush1.msra.mxu0 0.0
    %6267 = vmatprep.subr.mxu0 0.0
    %6268 = vmatpush1.msra.mxu0 0.0
    %6269 = vmatprep.subr.mxu0 0.0
    %6270 = vmatpush1.msra.mxu0 0.0
    %6271 = vmatprep.subr.mxu0 0.0
    %6272 = vmatpush1.msra.mxu0 0.0
    %6273 = vmatprep.subr.mxu0 0.0
    %6274 = vmatpush1.msra.mxu0 0.0
    %6275 = vmatprep.subr.mxu0 0.0
    %6276 = vmatpush1.msra.mxu0 0.0
    %6277 = vmatprep.subr.mxu0 0.0
    %6278 = vmatpush1.msra.mxu0 0.0
    %6279 = vmatprep.subr.mxu0 0.0
    %6280 = vmatpush1.msra.mxu0 0.0
    %6281 = vmatprep.subr.mxu0 0.0
    %6282 = vmatpush1.msra.mxu0 0.0
    %6283 = vmatprep.subr.mxu0 0.0
    %6284 = vmatpush1.msra.mxu0 0.0
    %6285 = vmatprep.subr.mxu0 0.0
    %6286 = vmatpush1.msra.mxu0 0.0
    %6287 = vmatprep.subr.mxu0 0.0
    %6288 = vmatpush1.msra.mxu0 0.0
    %6289 = vmatprep.subr.mxu0 0.0
    %6290 = vmatpush1.msra.mxu0 0.0
    %6291 = vmatprep.subr.mxu0 0.0
    %6292 = vmatpush1.msra.mxu0 0.0
    %6293 = vmatprep.subr.mxu0 0.0
    %6294 = vmatpush1.msra.mxu0 0.0
    %6295 = vmatprep.subr.mxu0 0.0
    %6296 = vmatpush1.msra.mxu0 0.0
    %6297 = vmatprep.subr.mxu0 0.0
    %6298 = vmatpush1.msra.mxu0 0.0
    %6299 = vmatprep.subr.mxu0 0.0
    %6300 = vmatpush1.msra.mxu0 0.0
    %6301 = vmatprep.subr.mxu0 0.0
    %6302 = vmatpush1.msra.mxu0 0.0
    %6303 = vmatprep.subr.mxu0 0.0
    %6304 = vmatpush1.msra.mxu0 0.0
    %6305 = vmatprep.subr.mxu0 0.0
    %6306 = vmatpush1.msra.mxu0 0.0
    %6307 = vmatprep.subr.mxu0 0.0
    %6308 = vmatpush1.msra.mxu0 0.0
    %6309 = vmatprep.subr.mxu0 0.0
    %6310 = vmatpush1.msra.mxu0 0.0
    %6311 = vmatprep.subr.mxu0 0.0
    %6312 = vmatpush1.msra.mxu0 0.0
    %6313 = vmatprep.mubr.f32.mxu0 0.0
    %6314 = vmatmul.mubr.f32.gmra.mrb[0].mxu0 %v6247
    %v6315 = vpop.f32.mrb[0].mxu0
    %v6316 = vadd.f32 0.0, %v6315
    %v6317 = vpop.f32.mrb[0].mxu0
    %6318 = vdwg.mxu0
    %v6319 = vadd.f32 %v4617, %v6316
    %v6320 = vxor.u32 %v6319, 2147483648
    %v6321 = vmul.f32 %v6320, 1.442695
    %v6322 = vpow.pop %v6321
    %v6323 = vadd.f32 %v6322, 1.0
    %v6324 = vrcp.pop %v6323
    %v6325 = vmul.f32 1.0, %v6324
    %v6326 = vadd.f32 %v6316, %v4816
    %6328 = vrot.lane.b32.xlu0 %v6326, 80
    %v6329 = vpop.permute.xlu0 %6328
    %v6331 = vmul.f32 %v6325, %v6329
    %6333 = vrot.lane.b32.xlu0 %v6331, 48
    %v6334 = vpop.permute.xlu0 %6333
    %v6336 = vadd.f32 %v4617, %v6334
    %v6337 = vtanh.pop %v6336
    %v6338 = vsub.f32 1.0, %v6325
    %6340 = vrot.lane.b32.xlu0 %v6337, 104
    %v6341 = vpop.permute.xlu0 %6340
    %v6343 = vmul.f32 %v6338, %v6341
    %v6345 = vmul.f32 %v6325, %v6244
    %v6346 = vadd.f32 %v6343, %v6345
    %v6347 = vsel %vm2476, %v4729, %v4946
    %v6348 = vsel %vm366, %v6347, %v5164
    %v6349 = vsel %vm2479, %v6348, %v5382
    %v6350 = vsel %vm2476, %v5590, %v5806
    %v6351 = vsel %vm366, %v6350, %v6024
    %v6352 = vsel %vm2479, %v6351, %v6242
    %v6353 = vsel %vm2476, %v6346, %v6133
    %v6354 = vsel %vm366, %v6353, %v5915
    %v6355 = vsel %vm2479, %v6354, %v5698
    %v6356 = vsel %vm2476, %v5486, %v5273
    %v6357 = vsel %vm366, %v6356, %v5055
    %v6358 = vsel %vm2479, %v6357, %v4838
    %6361 = vrot.lane.b32.xlu0 %v6349, 104
    %v6362 = vpop.permute.xlu0 %6361
    %6363 = vrot.lane.b32.xlu0 %v6352, 104
    %v6364 = vpop.permute.xlu0 %6363
    %v6367 = vsel %vm750, %v6362, %v6355
    %v6368 = vsel %vm750, %v6364, %v6358
    %v6369 = vld [vmem:[%s21] sm:$0xff]
    %v6370 = vld [vmem:[%s21 + $0x8] sm:$0xff]
    %v6371 = vld [vmem:[%s21 + $0x10] sm:$0xff]
    %v6372 = vld [vmem:[%s21 + $0x18] sm:$0xff]
    %v6373 = vld [vmem:[%s21 + $0x20] sm:$0xff]
    %v6374 = vld [vmem:[%s21 + $0x28] sm:$0xff]
    %v6375 = vld [vmem:[#allocation20] sm:$0x1]
    %v6377 = vlaneseq
    %v6378 = vshrl.u32 %v6377, 7
    %v6379 = vsub.s32 0, %v6378
    %v6380 = vrot.slane %v6375, %v6379
    %v6383 = vsel %vm2528, %v6367, 0
    %v6386 = vsel %vm2528, %v6368, 0
    %6388 = vmatprep.subr.mxu0 0.0
    %6389 = vmatpush1.msra.mxu0 %v6369
    %6390 = vmatprep.subr.mxu0 0.0
    %6391 = vmatpush1.msra.mxu0 %v6370
    %6392 = vmatprep.subr.mxu0 0.0
    %6393 = vmatpush1.msra.mxu0 %v6371
    %6394 = vmatprep.subr.mxu0 0.0
    %6395 = vmatpush1.msra.mxu0 %v6372
    %6396 = vmatprep.subr.mxu0 0.0
    %6397 = vmatpush1.msra.mxu0 %v6373
    %6398 = vmatprep.subr.mxu0 0.0
    %6399 = vmatpush1.msra.mxu0 %v6374
    %6400 = vmatprep.subr.mxu0 0.0
    %6401 = vmatpush1.msra.mxu0 0.0
    %6402 = vmatprep.subr.mxu0 0.0
    %6403 = vmatpush1.msra.mxu0 0.0
    %6404 = vmatprep.subr.mxu0 0.0
    %6405 = vmatpush1.msra.mxu0 0.0
    %6406 = vmatprep.subr.mxu0 0.0
    %6407 = vmatpush1.msra.mxu0 0.0
    %6408 = vmatprep.subr.mxu0 0.0
    %6409 = vmatpush1.msra.mxu0 0.0
    %6410 = vmatprep.subr.mxu0 0.0
    %6411 = vmatpush1.msra.mxu0 0.0
    %6412 = vmatprep.subr.mxu0 0.0
    %6413 = vmatpush1.msra.mxu0 0.0
    %6414 = vmatprep.subr.mxu0 0.0
    %6415 = vmatpush1.msra.mxu0 0.0
    %6416 = vmatprep.subr.mxu0 0.0
    %6417 = vmatpush1.msra.mxu0 0.0
    %6418 = vmatprep.subr.mxu0 0.0
    %6419 = vmatpush1.msra.mxu0 0.0
    %6420 = vmatprep.subr.mxu0 0.0
    %6421 = vmatpush1.msra.mxu0 0.0
    %6422 = vmatprep.subr.mxu0 0.0
    %6423 = vmatpush1.msra.mxu0 0.0
    %6424 = vmatprep.subr.mxu0 0.0
    %6425 = vmatpush1.msra.mxu0 0.0
    %6426 = vmatprep.subr.mxu0 0.0
    %6427 = vmatpush1.msra.mxu0 0.0
    %6428 = vmatprep.subr.mxu0 0.0
    %6429 = vmatpush1.msra.mxu0 0.0
    %6430 = vmatprep.subr.mxu0 0.0
    %6431 = vmatpush1.msra.mxu0 0.0
    %6432 = vmatprep.subr.mxu0 0.0
    %6433 = vmatpush1.msra.mxu0 0.0
    %6434 = vmatprep.subr.mxu0 0.0
    %6435 = vmatpush1.msra.mxu0 0.0
    %6436 = vmatprep.subr.mxu0 0.0
    %6437 = vmatpush1.msra.mxu0 0.0
    %6438 = vmatprep.subr.mxu0 0.0
    %6439 = vmatpush1.msra.mxu0 0.0
    %6440 = vmatprep.subr.mxu0 0.0
    %6441 = vmatpush1.msra.mxu0 0.0
    %6442 = vmatprep.subr.mxu0 0.0
    %6443 = vmatpush1.msra.mxu0 0.0
    %6444 = vmatprep.subr.mxu0 0.0
    %6445 = vmatpush1.msra.mxu0 0.0
    %6446 = vmatprep.subr.mxu0 0.0
    %6447 = vmatpush1.msra.mxu0 0.0
    %6448 = vmatprep.subr.mxu0 0.0
    %6449 = vmatpush1.msra.mxu0 0.0
    %6450 = vmatprep.subr.mxu0 0.0
    %6451 = vmatpush1.msra.mxu0 0.0
    %6452 = vmatprep.mubr.f32.mxu0 0.0
    %6453 = vmatmul.mubr.f32.gmra.mrb[0].mxu0 %v6383
    %v6454 = vpop.f32.mrb[0].mxu0
    %v6455 = vadd.f32 %v6380, %v6454
    %v6456 = vpop.f32.mrb[0].mxu0
    %6457 = vmatprep.mubr.f32.mxu0 0.0
    %6458 = vmatmul.mubr.f32.gmra.mrb[0].mxu0 %v6386
    %v6459 = vpop.f32.mrb[0].mxu0
    %v6460 = vadd.f32 %v6380, %v6459
    %v6461 = vpop.f32.mrb[0].mxu0
    %6462 = vdwg.mxu0
    %v6463 = vadd.f32 %v6455, 1e-05
    %v6464 = vadd.f32 %v6460, 1e-05
    %6465 = vst.msk [vmem:[%s23] sm:$0xff] %vm247, %v6463
    %6466 = vst.msk [vmem:[%s23 + $0x8] sm:$0xff] %vm247, %v6464
    %v6467 = vld [vmem:[%s1] sm:$0xff]
    %v6468 = vld [vmem:[%s1 + $0x8] sm:$0xff]
    %v6469 = vld [vmem:[%s2] sm:$0x1]
    %v6470 = vlaneseq
    %v6471 = vand.u32 %v6470, 127
    %6472 = vset.pattern.permute.xlu0 0
    %6473 = vperm.xlu0 %6472, %v6467
    %v6474 = vpop.permute.xlu0 %6473
    %6475 = vset.pattern.permute.xlu0 0
    %6476 = vperm.xlu0 %6475, %v6468
    %v6477 = vpop.permute.xlu0 %6476
    %vm6478 = vcmp.eq.s32.totalorder %v6471, %v6474
    %vm6479 = vcmp.eq.s32.totalorder %v6471, %v6477
    %v6480 = vsel %vm6478, 1, 0
    %v6481 = vsel %vm6479, 1, 0
    %v6482 = vcvt.s32.f32 %v6480
    %v6483 = vcvt.s32.f32 %v6481
    %vm6484 = vcmp.ne.s32.totalorder %v6467, 4294967295
    %vm6485 = vcmp.ne.s32.totalorder %v6468, 4294967295
    %v6486 = vsel %vm6484, 1, 0
    %v6487 = vsel %vm6485, 1, 0
    %v6488 = vcvt.s32.f32 %v6486
    %v6489 = vcvt.s32.f32 %v6487
    %v6490 = vsel %vm247, %v6463, -inf
    %6491 = vmax.xlane.f32.xlu0 %v6490
    %v6492 = vpop.xlane.xlu0 %6491
    %v6493 = vsel %vm247, %v6464, -inf
    %6494 = vmax.xlane.f32.xlu0 %v6493
    %v6495 = vpop.xlane.xlu0 %6494
    %v6496 = vsub.f32 %v6463, %v6492
    %v6497 = vsub.f32 %v6464, %v6495
    %v6498 = vmul.f32 %v6496, 1.442695
    %v6499 = vpow.pop %v6498
    %v6500 = vmul.f32 %v6497, 1.442695
    %v6501 = vpow.pop %v6500
    %v6502 = vsel %vm247, %v6499, 0.0
    %6503 = vadd.xlane.f32.xlu0 %v6502
    %v6504 = vpop.xlane.xlu0 %6503
    %v6505 = vsel %vm247, %v6501, 0.0
    %6506 = vadd.xlane.f32.xlu0 %v6505
    %v6507 = vpop.xlane.xlu0 %6506
    %v6508 = vlog2.pop %v6504
    %v6509 = vmul.f32 %v6508, 0.6931472
    %v6510 = vlog2.pop %v6507
    %v6511 = vmul.f32 %v6510, 0.6931472
    %v6512 = vsub.f32 %v6496, %v6509
    %v6513 = vsub.f32 %v6497, %v6511
    %v6514 = vrcp.pop %v6504
    %v6515 = vmul.f32 %v6499, %v6514
    %v6516 = vrcp.pop %v6507
    %v6517 = vmul.f32 %v6501, %v6516
    %v6519 = vlaneseq
    %v6520 = vshrl.u32 %v6519, 7
    %v6521 = vsub.s32 0, %v6520
    %v6522 = vrot.slane %v6469, %v6521
    %v6524 = vmul.f32 %v6482, %v6522
    %v6525 = vmul.f32 %v6483, %v6522
    %v6526 = vsel %vm247, %v6524, 0.0
    %6527 = vadd.xlane.f32.xlu0 %v6526
    %v6528 = vpop.xlane.xlu0 %6527
    %v6529 = vsel %vm247, %v6525, 0.0
    %6530 = vadd.xlane.f32.xlu0 %v6529
    %v6531 = vpop.xlane.xlu0 %6530
    %v6532 = vmul.f32 %v6528, %v6488
    %v6533 = vmul.f32 %v6531, %v6489
    %v6534 = vmul.f32 %v6482, %v6512
    %v6535 = vmul.f32 %v6483, %v6513
    %v6536 = vsel %vm247, %v6534, 0.0
    %6537 = vadd.xlane.f32.xlu0 %v6536
    %v6538 = vpop.xlane.xlu0 %6537
    %v6539 = vsel %vm247, %v6535, 0.0
    %6540 = vadd.xlane.f32.xlu0 %v6539
    %v6541 = vpop.xlane.xlu0 %6540
    %v6542 = vsub.f32 0.0, %v6538
    %v6543 = vsub.f32 0.0, %v6541
    %v6544 = vmul.f32 %v6532, %v6542
    %v6545 = vmul.f32 %v6533, %v6543
    %vm6546 = vcmask 7168
    %v6547 = vsel %vm6546, %v6544, 0.0
    %v6548 = vsel %vm6546, %v6545, 0.0
    %v6549 = vadd.f32 %v6547, %v6548
    %6550 = vadd.xlane.f32.xlu0 %v6549
    %v6551 = vpop.xlane.xlu0 %6550
    %v6552 = vrot.slane %v6551, 4
    %v6553 = vadd.f32 %v6551, %v6552
    %v6554 = vrot.slane %v6553, 2
    %v6555 = vadd.f32 %v6553, %v6554
    %v6556 = vrot.slane %v6555, 1
    %v6557 = vadd.f32 %v6555, %v6556
    %s6558 = vtos %v6557
    %v6559 = vstv %s6558
    %v6560 = vsel %vm6546, %v6532, 0.0
    %v6561 = vsel %vm6546, %v6533, 0.0
    %v6562 = vadd.f32 %v6560, %v6561
    %6563 = vadd.xlane.f32.xlu0 %v6562
    %v6564 = vpop.xlane.xlu0 %6563
    %v6565 = vrot.slane %v6564, 4
    %v6566 = vadd.f32 %v6564, %v6565
    %v6567 = vrot.slane %v6566, 2
    %v6568 = vadd.f32 %v6566, %v6567
    %v6569 = vrot.slane %v6568, 1
    %v6570 = vadd.f32 %v6568, %v6569
    %s6571 = vtos %v6570
    %v6572 = vstv %s6571
    %v6573 = vmax.f32 %v6572, 1e-12
    %v6574 = vrcp.pop %v6573
    %v6575 = vmul.f32 %v6559, %v6574
    %v6576 = vmul.f32 %v6515, %v6482
    %v6577 = vmul.f32 %v6517, %v6483
    %6579 = vset.pattern.permute.xlu0 0
    %6580 = vperm.xlu0 %6579, %v6488
    %v6581 = vpop.permute.xlu0 %6580
    %6584 = vset.pattern.permute.xlu0 0
    %6585 = vperm.xlu0 %6584, %v6489
    %v6586 = vpop.permute.xlu0 %6585
    %v6588 = vmul.f32 %v6576, %v6581
    %v6589 = vmul.f32 %v6577, %v6586
    %v6590 = vsel %vm247, %v6588, 0.0
    %v6591 = vsel %vm247, %v6589, 0.0
    %v6592 = vadd.f32 %v6590, %v6591
    %v6593 = vrot.slane %v6592, 4
    %v6594 = vadd.f32 %v6592, %v6593
    %v6595 = vrot.slane %v6594, 2
    %v6596 = vadd.f32 %v6594, %v6595
    %v6597 = vrot.slane %v6596, 1
    %v6598 = vadd.f32 %v6596, %v6597
    %v6599 = vmul.f32 %v6515, %v6581
    %v6600 = vmul.f32 %v6517, %v6586
    %v6601 = vsel %vm247, %v6599, 0.0
    %v6602 = vsel %vm247, %v6600, 0.0
    %v6603 = vadd.f32 %v6601, %v6602
    %v6604 = vrot.slane %v6603, 4
    %v6605 = vadd.f32 %v6603, %v6604
    %v6606 = vrot.slane %v6605, 2
    %v6607 = vadd.f32 %v6605, %v6606
    %v6608 = vrot.slane %v6607, 1
    %v6609 = vadd.f32 %v6607, %v6608
    %v6610 = vmul.f32 %v6482, %v6581
    %v6611 = vmul.f32 %v6483, %v6586
    %v6612 = vsel %vm247, %v6610, 0.0
    %v6613 = vsel %vm247, %v6611, 0.0
    %v6614 = vadd.f32 %v6612, %v6613
    %v6615 = vrot.slane %v6614, 4
    %v6616 = vadd.f32 %v6614, %v6615
    %v6617 = vrot.slane %v6616, 2
    %v6618 = vadd.f32 %v6616, %v6617
    %v6619 = vrot.slane %v6618, 1
    %v6620 = vadd.f32 %v6618, %v6619
    %v6621 = vadd.f32 %v6609, %v6620
    %v6622 = vmul.f32 %v6598, 2.0
    %v6623 = vadd.f32 %v6622, 1e-06
    %v6624 = vadd.f32 %v6621, 1e-06
    %v6625 = vrcp.pop %v6624
    %v6626 = vmul.f32 %v6623, %v6625
    %vm6627 = vcmask 16384
    %v6628 = vsel %vm6627, %v6626, 0.0
    %6629 = vadd.xlane.f32.xlu0 %v6628
    %v6630 = vpop.xlane.xlu0 %6629
    %v6631 = vrot.slane %v6630, 4
    %v6632 = vadd.f32 %v6630, %v6631
    %v6633 = vrot.slane %v6632, 2
    %v6634 = vadd.f32 %v6632, %v6633
    %v6635 = vrot.slane %v6634, 1
    %v6636 = vadd.f32 %v6634, %v6635
    %s6637 = vtos %v6636
    %v6638 = vstv %s6637
    %v6639 = vrcp.pop 3.0
    %v6640 = vmul.f32 %v6638, %v6639
    %v6641 = vsub.f32 1.0, %v6640
    %vm6642 = vcmask 0
    %6643 = vst.msk [vmem:[#allocation23] sm:$0x1] %vm6642, %v6575
    %6644 = vst.msk [vmem:[#allocation25] sm:$0x1] %vm6642, %v6641
    %v6645 = vadd.f32 %v6575, %v6641
    %6646 = vst.msk [vmem:[#allocation22] sm:$0x1] %vm6642, %v6645
    // Predicated region
    $region142: #{forward.1} parent=1 // pred_check
      _
    $region143: #{forward.1} parent=1 // pred_check_branch
      %6648 = sbr.rel (0) target = $region145
    $region144: #{forward.1} parent=1 // pred_region
      _
    $region145: #{forward.1} parent=1 // pred_fallthru
      _
    // Predicated region
    $region146: #{forward.1} parent=1 // pred_check
      _
    $region147: #{forward.1} parent=1 // pred_check_branch
      %6650 = sbr.rel (0) target = $region149
    $region148: #{forward.1} parent=1 // pred_region
      %s6652 = ssub.s32 16, 16
      %6653 = vsyncadd [#allocation4], %s6652
      %s6655 = sshll.u32 [#allocation22], 4
      %s6656 = int_to_ptr.vmem [resolvable:$true] %s6655
      %6658 = dma.vmem_to_hbm [thread:$0]  %s6656, 16, %s24, [#allocation4]
    $region149: #{forward.1} parent=1 // pred_fallthru
      _
    // Predicated region
    $region150: #{forward.1} parent=1 // pred_check
      _
    $region151: #{forward.1} parent=1 // pred_check_branch
      %6660 = sbr.rel (0) target = $region153
    $region152: #{forward.1} parent=1 // pred_region
      %s6662 = ssub.s32 16, 16
      %6663 = vsyncadd [#allocation24], %s6662
      %s6665 = sshll.u32 [#allocation23], 4
      %s6666 = int_to_ptr.vmem [resolvable:$true] %s6665
      %6668 = dma.vmem_to_hbm [thread:$0]  %s6666, 16, %s25, [#allocation24]
    $region153: #{forward.1} parent=1 // pred_fallthru
      _
    // Predicated region
    $region154: #{forward.1} parent=1 // pred_check
      _
    $region155: #{forward.1} parent=1 // pred_check_branch
      %6670 = sbr.rel (0) target = $region157
    $region156: #{forward.1} parent=1 // pred_region
      %s6672 = ssub.s32 16, 16
      %6673 = vsyncadd [#allocation24], %s6672
      %s6675 = sshll.u32 [#allocation25], 4
      %s6676 = int_to_ptr.vmem [resolvable:$true] %s6675
      %6678 = dma.vmem_to_hbm [thread:$0]  %s6676, 16, %s26, [#allocation24]
    $region157: #{forward.1} parent=1 // pred_fallthru
      _
    // Predicated region
    $region158: #{forward.1} parent=1 // pred_check
      _
    $region159: #{forward.1} parent=1 // pred_check_branch
      %6680 = sbr.rel (0) target = $region161
    $region160: #{forward.1} parent=1 // pred_region
      _
    $region161: #{forward.1} parent=1 // pred_fallthru
      _
    // Predicated region
    $region162: #{forward.1} parent=1 // pred_check
      _
    $region163: #{forward.1} parent=1 // pred_check_branch
      %6682 = sbr.rel (0) target = $region165
    $region164: #{forward.1} parent=1 // pred_region
      %6683 = dma.done [#allocation4], 16
    $region165: #{forward.1} parent=1 // pred_fallthru
      _
    // Predicated region
    $region166: #{forward.1} parent=1 // pred_check
      _
    $region167: #{forward.1} parent=1 // pred_check_branch
      %6685 = sbr.rel (0) target = $region169
    $region168: #{forward.1} parent=1 // pred_region
      %6686 = dma.done [#allocation24], 16
    $region169: #{forward.1} parent=1 // pred_fallthru
      _
    // Predicated region
    $region170: #{forward.1} parent=1 // pred_check
      _
    $region171: #{forward.1} parent=1 // pred_check_branch
      %6688 = sbr.rel (0) target = $region173
    $region172: #{forward.1} parent=1 // pred_region
      %6689 = dma.done [#allocation24], 16
    $region173: #{forward.1} parent=1 // pred_fallthru
      _
    %6690 = vsyncpa [#allocation3], 1
    %6691 = vsyncpa [#allocation6], 1
    %6692 = vsyncpa [#allocation9], 1
    %6693 = vsyncpa [#allocation12], 1
    %6694 = vsyncpa [#allocation15], 1
    %6695 = vsyncpa [#allocation18], 1
    %6696 = vsyncpa [#allocation21], 1
    %6697 = vsyncpa [#allocation4], 1
    %6698 = vsyncpa [#allocation24], 1

</llo_original>
